<compile_context>
chip_gen: v5e
topology: v5e:2x2
jax: 0.10.0
libtpu: 0.0.40
codegen_flags: <defaults>
</compile_context>

<pallas_src>
import jax
import jax.numpy as jnp
from jax.experimental import pallas as pl
from jax.experimental.pallas import tpu as pltpu

_MXU_DTYPE = jnp.float32      # set to jnp.bfloat16 on v6e/v7x for half DMA bytes on the dots
_ROW_TILE = 512               # M-tile for row-wise matmuls / epilogue (multiple of 8)
_BN_EPS = 1e-5


def _round_up(x, m):
    return (x + m - 1) // m * m


# ---------------------------------------------------------------------------
# 3x3 convolutions: grid over batch, in-kernel im2col (single K = 9*Cin MXU dot)
# ---------------------------------------------------------------------------

def entry_conv3x3(x, w_hwio, bias):
    """self.conv: Conv2d(C, C, 3, padding=1) zero pad, bias. x: (B,H,W,C) -> (B,H,W,Cout)."""
    B, H, W, C = x.shape
    Cout = w_hwio.shape[-1]
    xp = jnp.pad(x, ((0, 0), (1, 1), (1, 1), (0, 0)))          # zero pad (cheap, ~1.27x)
    wm = w_hwio.reshape(9 * C, Cout)
    bm = bias.reshape(1, Cout)

    def kernel(xp_ref, w_ref, b_ref, o_ref):
        # in-kernel im2col: 9 haloed taps -> (H*W, 9C), then ONE MXU dot
        taps = [xp_ref[0, kh:kh + H, kw:kw + W, :] for kh in range(3) for kw in range(3)]
        patches = jnp.concatenate(taps, axis=-1).reshape(H * W, 9 * C)
        acc = jnp.dot(patches.astype(_MXU_DTYPE), w_ref[...].astype(_MXU_DTYPE),
                      preferred_element_type=jnp.float32) + b_ref[...]
        o_ref[0] = acc.reshape(H, W, Cout).astype(o_ref.dtype)

    return pl.pallas_call(
        kernel,
        out_shape=jax.ShapeDtypeStruct((B, H, W, Cout), x.dtype),
        grid=(B,),
        in_specs=[pl.BlockSpec((1, H + 2, W + 2, C), lambda b: (b, 0, 0, 0)),
                  pl.BlockSpec((9 * C, Cout), lambda b: (0, 0)),
                  pl.BlockSpec((1, Cout), lambda b: (0, 0))],
        out_specs=pl.BlockSpec((1, H, W, Cout), lambda b: (b, 0, 0, 0)),
        compiler_params=pltpu.CompilerParams(dimension_semantics=("parallel",)),
    )(xp, wm, bm)


def ffc_fused_conv3x3(x, w_block, out_cl, out_cg, half):
    """Fused convl2l+convg2l, convl2g and SpectralTransform.conv1 (centre tap), reflect pad.

    x: (B,H,W,C).  w_block: (9C, out_cl+out_cg+half).
    Returns (xl_raw, l2g, y_raw) row-major activations plus BN partial stats
    (per-image sum / sum-of-squares) for xl_raw and y_raw.
    """
    B, H, W, C = x.shape
    HW = H * W
    xr = jnp.pad(x, ((0, 0), (1, 1), (1, 1), (0, 0)), mode="reflect")

    def kernel(xr_ref, w_ref, oxl_ref, ol2g_ref, oy_ref, xls_ref, xlq_ref, ys_ref, yq_ref):
        taps = [xr_ref[0, kh:kh + H, kw:kw + W, :] for kh in range(3) for kw in range(3)]
        patches = jnp.concatenate(taps, axis=-1).reshape(HW, 9 * C)
        acc = jnp.dot(patches.astype(_MXU_DTYPE), w_ref[...].astype(_MXU_DTYPE),
                      preferred_element_type=jnp.float32)
        xl = acc[:, :out_cl]                                   # convl2l(x_l) + convg2l(x_g)
        l2g = acc[:, out_cl:out_cl + out_cg]                   # convl2g(x_l)
        yr = acc[:, out_cl + out_cg:]                          # SpectralTransform.conv1(x_g)
        oxl_ref[0] = xl.astype(oxl_ref.dtype)
        ol2g_ref[0] = l2g.astype(ol2g_ref.dtype)
        oy_ref[0] = yr.astype(oy_ref.dtype)
        # BN batch-stat partials folded into the producer (no HBM re-read pass)
        xls_ref[0] = jnp.sum(xl, axis=0, keepdims=True)
        xlq_ref[0] = jnp.sum(xl * xl, axis=0, keepdims=True)
        ys_ref[0] = jnp.sum(yr, axis=0, keepdims=True)
        yq_ref[0] = jnp.sum(yr * yr, axis=0, keepdims=True)

    out_shape = (jax.ShapeDtypeStruct((B, HW, out_cl), x.dtype),
                 jax.ShapeDtypeStruct((B, HW, out_cg), x.dtype),
                 jax.ShapeDtypeStruct((B, HW, half), x.dtype),
                 jax.ShapeDtypeStruct((B, 1, out_cl), jnp.float32),
                 jax.ShapeDtypeStruct((B, 1, out_cl), jnp.float32),
                 jax.ShapeDtypeStruct((B, 1, half), jnp.float32),
                 jax.ShapeDtypeStruct((B, 1, half), jnp.float32))
    out_specs = (pl.BlockSpec((1, HW, out_cl), lambda b: (b, 0, 0)),
                 pl.BlockSpec((1, HW, out_cg), lambda b: (b, 0, 0)),
                 pl.BlockSpec((1, HW, half), lambda b: (b, 0, 0)),
                 pl.BlockSpec((1, 1, out_cl), lambda b: (b, 0, 0)),
                 pl.BlockSpec((1, 1, out_cl), lambda b: (b, 0, 0)),
                 pl.BlockSpec((1, 1, half), lambda b: (b, 0, 0)),
                 pl.BlockSpec((1, 1, half), lambda b: (b, 0, 0)))
    return pl.pallas_call(
        kernel,
        out_shape=out_shape,
        grid=(B,),
        in_specs=[pl.BlockSpec((1, H + 2, W + 2, C), lambda b: (b, 0, 0, 0)),
                  pl.BlockSpec(w_block.shape, lambda b: (0, 0))],
        out_specs=out_specs,
        compiler_params=pltpu.CompilerParams(dimension_semantics=("parallel",)),
    )(xr, w_block)


# ---------------------------------------------------------------------------
# M-tiled row-wise matmul (1x1 convs) with optional addend and fused BN partial stats
# ---------------------------------------------------------------------------

def mm_rows_stats(x, w, add=None, tm=_ROW_TILE):
    """out = x @ w [+ add]; also returns per-channel sum / sum-of-squares of out.

    x: (M, K) f32, w: (K, N), add: (M, N) or None (bias-free convs only -> zero-padded rows
    contribute zero to the stats, so padding is stats-safe).
    """
    M, K = x.shape
    N = w.shape[1]
    if M <= tm:
        tm_eff, Mp = M, M
    else:
        tm_eff = tm
        Mp = _round_up(M, tm_eff)
    grid = Mp // tm_eff
    if Mp != M:
        x = jnp.pad(x, ((0, Mp - M), (0, 0)))
        if add is not None:
            add = jnp.pad(add, ((0, Mp - M), (0, 0)))
    has_add = add is not None

    def kernel(*refs):
        if has_add:
            x_ref, w_ref, a_ref, o_ref, s_ref, q_ref = refs
        else:
            x_ref, w_ref, o_ref, s_ref, q_ref = refs
        acc = jnp.dot(x_ref[...].astype(_MXU_DTYPE), w_ref[...].astype(_MXU_DTYPE),
                      preferred_element_type=jnp.float32)
        if has_add:
            acc = acc + a_ref[...]
        o_ref[...] = acc.astype(o_ref.dtype)
        s_ref[0] = jnp.sum(acc, axis=0, keepdims=True)
        q_ref[0] = jnp.sum(acc * acc, axis=0, keepdims=True)

    in_specs = [pl.BlockSpec((tm_eff, K), lambda i: (i, 0)),
                pl.BlockSpec((K, N), lambda i: (0, 0))]
    operands = [x, w]
    if has_add:
        in_specs.append(pl.BlockSpec((tm_eff, N), lambda i: (i, 0)))
        operands.append(add)
    out, s_p, q_p = pl.pallas_call(
        kernel,
        out_shape=(jax.ShapeDtypeStruct((Mp, N), x.dtype),
                   jax.ShapeDtypeStruct((grid, 1, N), jnp.float32),
                   jax.ShapeDtypeStruct((grid, 1, N), jnp.float32)),
        grid=(grid,),
        in_specs=in_specs,
        out_specs=(pl.BlockSpec((tm_eff, N), lambda i: (i, 0)),
                   pl.BlockSpec((1, 1, N), lambda i: (i, 0, 0)),
                   pl.BlockSpec((1, 1, N), lambda i: (i, 0, 0))),
        compiler_params=pltpu.CompilerParams(dimension_semantics=("parallel",)),
    )(*operands)
    if Mp != M:
        out = out[:M]
    return out, jnp.sum(s_p, axis=(0, 1)), jnp.sum(q_p, axis=(0, 1))


# ---------------------------------------------------------------------------
# Fused FFC_BN_ACT epilogue: BN affine + ReLU + residual + shared self.conv2, both branches
# ---------------------------------------------------------------------------

def fused_epilogue(xl_raw, xg_raw, conv_rows, aff, w, b, tm=_ROW_TILE):
    """out_b = (relu(raw_b * s_b + t_b) + residual_b) @ w + bias  for b in {local, global}.

    xl_raw / xg_raw: (M, Cc); conv_rows: (M, 2Cc) (residual source, channel-split in-kernel);
    aff: (4, Cc) = [s_l; t_l; s_g; t_g]; w: (Cc, Cc); b: (Cc,).  Returns out_l, out_g (M, Cc).
    """
    M, Cc = xl_raw.shape
    if M <= tm:
        tm_eff, Mp = M, M
    else:
        tm_eff = tm
        Mp = _round_up(M, tm_eff)
    grid = Mp // tm_eff
    if Mp != M:
        pad = ((0, Mp - M), (0, 0))
        xl_raw = jnp.pad(xl_raw, pad)
        xg_raw = jnp.pad(xg_raw, pad)
        conv_rows = jnp.pad(conv_rows, pad)
    bm = b.reshape(1, Cc)

    def kernel(xl_ref, xg_ref, cr_ref, aff_ref, w_ref, b_ref, ol_ref, og_ref):
        u_l = jnp.maximum(xl_ref[...] * aff_ref[0:1, :] + aff_ref[1:2, :], 0.0) + cr_ref[:, :Cc]
        u_g = jnp.maximum(xg_ref[...] * aff_ref[2:3, :] + aff_ref[3:4, :], 0.0) + cr_ref[:, Cc:]
        u = jnp.concatenate([u_l, u_g], axis=0)                # stack along M: ONE MXU dot
        v = jnp.dot(u.astype(_MXU_DTYPE), w_ref[...].astype(_MXU_DTYPE),
                    preferred_element_type=jnp.float32) + b_ref[...]
        ol_ref[...] = v[:tm_eff].astype(ol_ref.dtype)
        og_ref[...] = v[tm_eff:].astype(og_ref.dtype)

    out_l, out_g = pl.pallas_call(
        kernel,
        out_shape=(jax.ShapeDtypeStruct((Mp, Cc), xl_raw.dtype),
                   jax.ShapeDtypeStruct((Mp, Cc), xl_raw.dtype)),
        grid=(grid,),
        in_specs=[pl.BlockSpec((tm_eff, Cc), lambda i: (i, 0)),
                  pl.BlockSpec((tm_eff, Cc), lambda i: (i, 0)),
                  pl.BlockSpec((tm_eff, 2 * Cc), lambda i: (i, 0)),
                  pl.BlockSpec((4, Cc), lambda i: (0, 0)),
                  pl.BlockSpec((Cc, Cc), lambda i: (0, 0)),
                  pl.BlockSpec((1, Cc), lambda i: (0, 0))],
        out_specs=(pl.BlockSpec((tm_eff, Cc), lambda i: (i, 0)),
                   pl.BlockSpec((tm_eff, Cc), lambda i: (i, 0))),
        compiler_params=pltpu.CompilerParams(dimension_semantics=("parallel",)),
    )(xl_raw, xg_raw, conv_rows, aff, w, bm)
    if Mp != M:
        out_l, out_g = out_l[:M], out_g[:M]
    return out_l, out_g


# ---------------------------------------------------------------------------
# BN (training-mode batch stats, gamma=1, beta=0) from fused partial sums
# ---------------------------------------------------------------------------

def _bn_from_stats(s, q, count, eps=_BN_EPS):
    mean = s / count
    var = jnp.maximum(q / count - mean * mean, 0.0)            # biased, matches PyTorch BN
    scale = jax.lax.rsqrt(var + eps)
    return scale, -mean * scale


# ---------------------------------------------------------------------------
# Model pieces (mirroring the PyTorch modules)
# ---------------------------------------------------------------------------

def fourier_unit(x, w_conv):
    # TODO(synk): rfftn/irfftn have no Pallas primitive and stay in jnp.fft (f32); the
    # frequency-domain 1x1 conv runs on the MXU via the M-tiled Pallas matmul with its BN
    # stats folded into the same kernel.
    B, H, W, C = x.shape
    ff = jnp.fft.rfftn(x, axes=(1, 2), norm="ortho")              # (B, H, Wr, C) complex
    Wr = ff.shape[2]
    # channel packing matches PyTorch: channel index c*2 + {0: re, 1: im}
    st = jnp.stack([jnp.real(ff), jnp.imag(ff)], axis=-1).reshape(B * H * Wr, 2 * C)
    st = st.astype(x.dtype)
    conv, s, q = mm_rows_stats(st, w_conv)                        # 1x1 conv, no bias (Pallas)
    scale, shift = _bn_from_stats(s, q, B * H * Wr)
    y = jnp.maximum(conv * scale + shift, 0.0)                    # BN + ReLU (XLA-fused glue)
    y = y.reshape(B, H, Wr, y.shape[-1] // 2, 2)
    comp = jax.lax.complex(y[..., 0], y[..., 1])
    out = jnp.fft.irfftn(comp, s=(H, W), axes=(1, 2), norm="ortho")
    return out.astype(x.dtype)


def spectral_branch(y, l2g_rows, p):
    # SpectralTransform tail: fu + lfu + (y + fu + lfu) -> conv2 (1x1, no bias), with the FFC
    # "out_xg = convl2g(x_l) + convg2g(x_g)" add fused into conv2's Pallas epilogue and BN_g
    # partial stats emitted by the same kernel.
    B, H, W, C = y.shape
    fu_out = fourier_unit(y, p["fu_w"])
    # local Fourier unit (enable_lfu=True): quadrant split of the first C//4 channels
    s = H // 2
    xs = y[..., : C // 4]
    xs = jnp.concatenate([xs[:, :s], xs[:, s:]], axis=-1)
    xs = jnp.concatenate([xs[:, :, :s], xs[:, :, s:]], axis=-1)
    xs = fourier_unit(xs, p["lfu_w"])
    xs = jnp.tile(xs, (1, 2, 2, 1))
    z = (y + fu_out + xs).reshape(B * H * W, C)
    return mm_rows_stats(z, p["st_conv2_w"], add=l2g_rows)        # (out_xg_raw, sum, sumsq)


def model_forward(x_nchw, p):
    """self.conv -> FFC_BN_ACT (ratio 0.5/0.5, BN+ReLU) -> residual -> shared conv2 -> concat."""
    x = jnp.transpose(x_nchw, (0, 2, 3, 1))                       # NCHW -> NHWC
    B, H, W, C = x.shape
    M = B * H * W

    # self.conv : Conv2d(in_ch, in_ch, 3, padding=1), zero pad, bias — in-kernel im2col.
    conv_out = entry_conv3x3(x, p["conv_w"], p["conv_b"])
    conv_rows = conv_out.reshape(M, C)                            # residual source (both halves)

    in_cg = p["global_in_num"]
    in_cl = C - in_cg
    out_cl = p["l2l_w"].shape[-1]
    out_cg = p["l2g_w"].shape[-1]
    half = p["st_conv1_w"].shape[-1]
    assert in_cl == out_cl == out_cg == p["conv2_w"].shape[0]

    # --- FFC 3x3 reflect convs + SpectralTransform.conv1 fused into ONE im2col matmul ---
    # (st_conv1 is 1x1 == centre tap of the padded 3x3; the block weight is ~40% structural
    # zeros — fine while memory-bound, split only if the kernel ever becomes MXU-bound.)
    Ctot = out_cl + out_cg + half
    wb = jnp.zeros((3, 3, C, Ctot), x.dtype)
    wb = wb.at[:, :, :in_cl, :out_cl].set(p["l2l_w"])
    wb = wb.at[:, :, in_cl:, :out_cl].set(p["g2l_w"])
    wb = wb.at[:, :, :in_cl, out_cl:out_cl + out_cg].set(p["l2g_w"])
    wb = wb.at[1, 1, in_cl:, out_cl + out_cg:].set(p["st_conv1_w"])

    (xl_raw, l2g, y_raw,
     xl_s, xl_q, y_s, y_q) = ffc_fused_conv3x3(conv_out, wb.reshape(9 * C, Ctot),
                                               out_cl, out_cg, half)
    xl_rows = xl_raw.reshape(M, out_cl)                           # convl2l(x_l) + convg2l(x_g)
    l2g_rows = l2g.reshape(M, out_cg)                             # convl2g(x_l)

    # SpectralTransform.conv1 BN + ReLU (stats came from the conv kernel; the elementwise
    # affine+ReLU glue is fused by XLA with the FFT prologue that consumes it).
    s1, t1 = _bn_from_stats(jnp.sum(y_s, axis=(0, 1)), jnp.sum(y_q, axis=(0, 1)), M)
    y = jnp.maximum(y_raw.reshape(M, half) * s1 + t1, 0.0).reshape(B, H, W, half)

    xg_rows, xg_s, xg_q = spectral_branch(y, l2g_rows, p)         # convl2g(x_l) + convg2g(x_g)

    # --- FFC_BN_ACT BN+ReLU, residual add and shared self.conv2 : ONE fused Pallas kernel ---
    sl, tl = _bn_from_stats(jnp.sum(xl_s, axis=(0, 1)), jnp.sum(xl_q, axis=(0, 1)), M)
    sg, tg = _bn_from_stats(xg_s, xg_q, M)
    aff = jnp.stack([sl, tl, sg, tg], axis=0)                     # (4, out_cl)
    out_l, out_g = fused_epilogue(xl_rows, xg_rows, conv_rows, aff,
                                  p["conv2_w"], p["conv2_b"])

    out = jnp.concatenate([out_l, out_g], axis=-1).reshape(B, H, W, 2 * out_cl)
    return jnp.transpose(out, (0, 3, 1, 2))                       # NHWC -> NCHW


# ---------------------------------------------------------------------------
# Deterministic parameter init (shapes follow the modules' __init__)
# ---------------------------------------------------------------------------

def make_params(dim, in_ch):
    assert dim == in_ch and dim % 16 == 0
    key = jax.random.PRNGKey(0)
    ks = jax.random.split(key, 12)

    def w(k, shape, s=0.1):
        return (s * jax.random.normal(k, shape)).astype(jnp.float32)

    in_cg = int(dim * 0.5)       # global input channels  (= global_in_num)
    in_cl = dim - in_cg
    out_cg = int(dim * 0.5)
    out_cl = dim - out_cg
    half = out_cg // 2           # SpectralTransform hidden channels

    return {
        "global_in_num": in_cg,
        # self.conv : (3,3, in_ch, in_ch) + bias          (HWIO layout)
        "conv_w": w(ks[0], (3, 3, in_ch, in_ch)),
        "conv_b": w(ks[1], (in_ch,)),
        # FFC 3x3 reflect convs (bias-free)
        "l2l_w": w(ks[2], (3, 3, in_cl, out_cl)),
        "g2l_w": w(ks[3], (3, 3, in_cg, out_cl)),
        "l2g_w": w(ks[4], (3, 3, in_cl, out_cg)),
        # SpectralTransform
        "st_conv1_w": w(ks[5], (in_cg, half)),             # 1x1, no bias
        "fu_w": w(ks[6], (2 * half, 2 * half)),            # FourierUnit conv_layer
        "lfu_w": w(ks[7], (2 * half, 2 * half)),           # local FourierUnit conv_layer
        "st_conv2_w": w(ks[8], (half, out_cg)),            # 1x1, no bias
        # self.conv2 : 1x1 with bias (shared for x_l and x_g)
        "conv2_w": w(ks[9], (in_ch // 2, in_ch // 2)),
        "conv2_b": w(ks[10], (in_ch // 2,)),
    }


# ---------------------------------------------------------------------------

if __name__ == "__main__":
    dim = in_ch = 16
    B, H, W = 2, 16, 16

    params = make_params(dim, in_ch)
    x = jax.random.normal(jax.random.PRNGKey(0), (B, in_ch, H, W), dtype=jnp.float32)

    fwd = jax.jit(lambda xx: model_forward(xx, params))   # params closed over -> constant-fold
    out = fwd(x)
    jax.block_until_ready(out)
    assert out.shape == (B, in_ch, H, W), out.shape
    assert out.dtype == jnp.float32
    print("KERNEL_OK")
</pallas_src>

<mosaic_0001>
module attributes {stable_mosaic.version = 11 : i64} {
  func.func @kernel(%arg0: i32, %arg1: memref<1x18x18x16xf32, #tpu.memory_space<vmem>>, %arg2: memref<144x16xf32, #tpu.memory_space<vmem>>, %arg3: memref<1x16xf32, #tpu.memory_space<vmem>>, %arg4: memref<1x16x16x16xf32, #tpu.memory_space<vmem>>) attributes {dimension_semantics = [#tpu.dimension_semantics<parallel>], iteration_bounds = array<i64: 2>, scalar_prefetch = 0 : i64, scratch_operands = 0 : i64, tpu.core_type = #tpu.core_type<tc>, window_params = [{transform_indices = @transform_0, window_bounds = array<i64: 1, 18, 18, 16>}, {pipeline_mode = #tpu.pipeline_mode<synchronous>, transform_indices = @transform_1, window_bounds = array<i64: 144, 16>}, {pipeline_mode = #tpu.pipeline_mode<synchronous>, transform_indices = @transform_2, window_bounds = array<i64: 1, 16>}, {transform_indices = @transform_3, window_bounds = array<i64: 1, 16, 16, 16>}]} {
    %c0 = arith.constant 0 : index
    %c0_0 = arith.constant 0 : index
    %c0_1 = arith.constant 0 : index
    %c0_2 = arith.constant 0 : index
    %0 = vector.load %arg1[%c0, %c0_0, %c0_1, %c0_2] : memref<1x18x18x16xf32, #tpu.memory_space<vmem>>, vector<1x16x16x16xf32>
    %1 = vector.shape_cast %0 : vector<1x16x16x16xf32> to vector<16x16x16xf32>
    %c0_3 = arith.constant 0 : index
    %c0_4 = arith.constant 0 : index
    %c1 = arith.constant 1 : index
    %c0_5 = arith.constant 0 : index
    %2 = vector.load %arg1[%c0_3, %c0_4, %c1, %c0_5] : memref<1x18x18x16xf32, #tpu.memory_space<vmem>>, vector<1x16x16x16xf32>
    %3 = vector.shape_cast %2 : vector<1x16x16x16xf32> to vector<16x16x16xf32>
    %c0_6 = arith.constant 0 : index
    %c0_7 = arith.constant 0 : index
    %c2 = arith.constant 2 : index
    %c0_8 = arith.constant 0 : index
    %4 = vector.load %arg1[%c0_6, %c0_7, %c2, %c0_8] : memref<1x18x18x16xf32, #tpu.memory_space<vmem>>, vector<1x16x16x16xf32>
    %5 = vector.shape_cast %4 : vector<1x16x16x16xf32> to vector<16x16x16xf32>
    %c0_9 = arith.constant 0 : index
    %c1_10 = arith.constant 1 : index
    %c0_11 = arith.constant 0 : index
    %c0_12 = arith.constant 0 : index
    %6 = vector.load %arg1[%c0_9, %c1_10, %c0_11, %c0_12] : memref<1x18x18x16xf32, #tpu.memory_space<vmem>>, vector<1x16x16x16xf32>
    %7 = vector.shape_cast %6 : vector<1x16x16x16xf32> to vector<16x16x16xf32>
    %c0_13 = arith.constant 0 : index
    %c1_14 = arith.constant 1 : index
    %c1_15 = arith.constant 1 : index
    %c0_16 = arith.constant 0 : index
    %8 = vector.load %arg1[%c0_13, %c1_14, %c1_15, %c0_16] : memref<1x18x18x16xf32, #tpu.memory_space<vmem>>, vector<1x16x16x16xf32>
    %9 = vector.shape_cast %8 : vector<1x16x16x16xf32> to vector<16x16x16xf32>
    %c0_17 = arith.constant 0 : index
    %c1_18 = arith.constant 1 : index
    %c2_19 = arith.constant 2 : index
    %c0_20 = arith.constant 0 : index
    %10 = vector.load %arg1[%c0_17, %c1_18, %c2_19, %c0_20] : memref<1x18x18x16xf32, #tpu.memory_space<vmem>>, vector<1x16x16x16xf32>
    %11 = vector.shape_cast %10 : vector<1x16x16x16xf32> to vector<16x16x16xf32>
    %c0_21 = arith.constant 0 : index
    %c2_22 = arith.constant 2 : index
    %c0_23 = arith.constant 0 : index
    %c0_24 = arith.constant 0 : index
    %12 = vector.load %arg1[%c0_21, %c2_22, %c0_23, %c0_24] : memref<1x18x18x16xf32, #tpu.memory_space<vmem>>, vector<1x16x16x16xf32>
    %13 = vector.shape_cast %12 : vector<1x16x16x16xf32> to vector<16x16x16xf32>
    %c0_25 = arith.constant 0 : index
    %c2_26 = arith.constant 2 : index
    %c1_27 = arith.constant 1 : index
    %c0_28 = arith.constant 0 : index
    %14 = vector.load %arg1[%c0_25, %c2_26, %c1_27, %c0_28] : memref<1x18x18x16xf32, #tpu.memory_space<vmem>>, vector<1x16x16x16xf32>
    %15 = vector.shape_cast %14 : vector<1x16x16x16xf32> to vector<16x16x16xf32>
    %c0_29 = arith.constant 0 : index
    %c2_30 = arith.constant 2 : index
    %c2_31 = arith.constant 2 : index
    %c0_32 = arith.constant 0 : index
    %16 = vector.load %arg1[%c0_29, %c2_30, %c2_31, %c0_32] : memref<1x18x18x16xf32, #tpu.memory_space<vmem>>, vector<1x16x16x16xf32>
    %17 = vector.shape_cast %16 : vector<1x16x16x16xf32> to vector<16x16x16xf32>
    %18 = tpu.concatenate %1, %3, %5, %7, %9, %11, %13, %15, %17 in 2 : vector<16x16x16xf32>, vector<16x16x16xf32>, vector<16x16x16xf32>, vector<16x16x16xf32>, vector<16x16x16xf32>, vector<16x16x16xf32>, vector<16x16x16xf32>, vector<16x16x16xf32>, vector<16x16x16xf32> -> vector<16x16x144xf32>
    %19 = vector.shape_cast %18 : vector<16x16x144xf32> to vector<256x144xf32>
    %c0_33 = arith.constant 0 : index
    %c0_34 = arith.constant 0 : index
    %20 = vector.load %arg2[%c0_33, %c0_34] : memref<144x16xf32, #tpu.memory_space<vmem>>, vector<144x16xf32>
    %cst = arith.constant dense<0.000000e+00> : vector<256x16xf32>
    %21 = tpu.matmul %19, %20, %cst {dimension_numbers = #tpu.dot_dimension_numbers<[1], [0], [0], [1], [0, 0, 1, 1], [], []>} : vector<256x144xf32>, vector<144x16xf32>, vector<256x16xf32> -> vector<256x16xf32>
    %c0_35 = arith.constant 0 : index
    %c0_36 = arith.constant 0 : index
    %22 = vector.load %arg3[%c0_35, %c0_36] : memref<1x16xf32, #tpu.memory_space<vmem>>, vector<1x16xf32>
    %23 = vector.broadcast %22 : vector<1x16xf32> to vector<256x16xf32>
    %24 = arith.addf %21, %23 : vector<256x16xf32>
    %25 = vector.shape_cast %24 : vector<256x16xf32> to vector<16x16x16xf32>
    %c0_37 = arith.constant 0 : index
    %c0_38 = arith.constant 0 : index
    %c0_39 = arith.constant 0 : index
    %c0_40 = arith.constant 0 : index
    %26 = vector.load %arg4[%c0_37, %c0_38, %c0_39, %c0_40] : memref<1x16x16x16xf32, #tpu.memory_space<vmem>>, vector<1x16x16x16xf32>
    %27 = vector.shape_cast %26 : vector<1x16x16x16xf32> to vector<16x16x16xf32>
    %28 = vector.shape_cast %25 : vector<16x16x16xf32> to vector<1x16x16x16xf32>
    tpu.vector_store %arg4[%c0_37, %c0_38, %c0_39, %c0_40], %28 {strides = array<i32>} : memref<1x16x16x16xf32, #tpu.memory_space<vmem>>, vector<1x16x16x16xf32>,
    return
  }
  func.func @transform_0(%arg0: i32) -> (i32, i32, i32, i32) {
    %c0_i32 = arith.constant 0 : i32
    %c0_i32_0 = arith.constant 0 : i32
    %c0_i32_1 = arith.constant 0 : i32
    %c0_i32_2 = arith.constant 0 : i32
    return %arg0, %c0_i32, %c0_i32_0, %c0_i32_1 : i32, i32, i32, i32
  }
  func.func @transform_1(%arg0: i32) -> (i32, i32) {
    %c0_i32 = arith.constant 0 : i32
    %c0_i32_0 = arith.constant 0 : i32
    %c0_i32_1 = arith.constant 0 : i32
    return %c0_i32, %c0_i32_0 : i32, i32
  }
  func.func @transform_2(%arg0: i32) -> (i32, i32) {
    %c0_i32 = arith.constant 0 : i32
    %c0_i32_0 = arith.constant 0 : i32
    %c0_i32_1 = arith.constant 0 : i32
    return %c0_i32, %c0_i32_0 : i32, i32
  }
  func.func @transform_3(%arg0: i32) -> (i32, i32, i32, i32) {
    %c0_i32 = arith.constant 0 : i32
    %c0_i32_0 = arith.constant 0 : i32
    %c0_i32_1 = arith.constant 0 : i32
    %c0_i32_2 = arith.constant 0 : i32
    return %arg0, %c0_i32, %c0_i32_0, %c0_i32_1 : i32, i32, i32, i32
  }
}

module attributes {stable_mosaic.version = 11 : i64} {
  func.func @kernel(%arg0: i32, %arg1: memref<1x18x18x16xf32, #tpu.memory_space<vmem>>, %arg2: memref<144x20xf32, #tpu.memory_space<vmem>>, %arg3: memref<1x256x8xf32, #tpu.memory_space<vmem>>, %arg4: memref<1x256x8xf32, #tpu.memory_space<vmem>>, %arg5: memref<1x256x4xf32, #tpu.memory_space<vmem>>, %arg6: memref<1x1x8xf32, #tpu.memory_space<vmem>>, %arg7: memref<1x1x8xf32, #tpu.memory_space<vmem>>, %arg8: memref<1x1x4xf32, #tpu.memory_space<vmem>>, %arg9: memref<1x1x4xf32, #tpu.memory_space<vmem>>) attributes {dimension_semantics = [#tpu.dimension_semantics<parallel>], iteration_bounds = array<i64: 2>, scalar_prefetch = 0 : i64, scratch_operands = 0 : i64, tpu.core_type = #tpu.core_type<tc>, window_params = [{transform_indices = @transform_0, window_bounds = array<i64: 1, 18, 18, 16>}, {pipeline_mode = #tpu.pipeline_mode<synchronous>, transform_indices = @transform_1, window_bounds = array<i64: 144, 20>}, {transform_indices = @transform_2, window_bounds = array<i64: 1, 256, 8>}, {transform_indices = @transform_3, window_bounds = array<i64: 1, 256, 8>}, {transform_indices = @transform_4, window_bounds = array<i64: 1, 256, 4>}, {transform_indices = @transform_5, window_bounds = array<i64: 1, 1, 8>}, {transform_indices = @transform_6, window_bounds = array<i64: 1, 1, 8>}, {transform_indices = @transform_7, window_bounds = array<i64: 1, 1, 4>}, {transform_indices = @transform_8, window_bounds = array<i64: 1, 1, 4>}]} {
    %c0 = arith.constant 0 : index
    %c0_0 = arith.constant 0 : index
    %c0_1 = arith.constant 0 : index
    %c0_2 = arith.constant 0 : index
    %0 = vector.load %arg1[%c0, %c0_0, %c0_1, %c0_2] : memref<1x18x18x16xf32, #tpu.memory_space<vmem>>, vector<1x16x16x16xf32>
    %1 = vector.shape_cast %0 : vector<1x16x16x16xf32> to vector<16x16x16xf32>
    %c0_3 = arith.constant 0 : index
    %c0_4 = arith.constant 0 : index
    %c1 = arith.constant 1 : index
    %c0_5 = arith.constant 0 : index
    %2 = vector.load %arg1[%c0_3, %c0_4, %c1, %c0_5] : memref<1x18x18x16xf32, #tpu.memory_space<vmem>>, vector<1x16x16x16xf32>
    %3 = vector.shape_cast %2 : vector<1x16x16x16xf32> to vector<16x16x16xf32>
    %c0_6 = arith.constant 0 : index
    %c0_7 = arith.constant 0 : index
    %c2 = arith.constant 2 : index
    %c0_8 = arith.constant 0 : index
    %4 = vector.load %arg1[%c0_6, %c0_7, %c2, %c0_8] : memref<1x18x18x16xf32, #tpu.memory_space<vmem>>, vector<1x16x16x16xf32>
    %5 = vector.shape_cast %4 : vector<1x16x16x16xf32> to vector<16x16x16xf32>
    %c0_9 = arith.constant 0 : index
    %c1_10 = arith.constant 1 : index
    %c0_11 = arith.constant 0 : index
    %c0_12 = arith.constant 0 : index
    %6 = vector.load %arg1[%c0_9, %c1_10, %c0_11, %c0_12] : memref<1x18x18x16xf32, #tpu.memory_space<vmem>>, vector<1x16x16x16xf32>
    %7 = vector.shape_cast %6 : vector<1x16x16x16xf32> to vector<16x16x16xf32>
    %c0_13 = arith.constant 0 : index
    %c1_14 = arith.constant 1 : index
    %c1_15 = arith.constant 1 : index
    %c0_16 = arith.constant 0 : index
    %8 = vector.load %arg1[%c0_13, %c1_14, %c1_15, %c0_16] : memref<1x18x18x16xf32, #tpu.memory_space<vmem>>, vector<1x16x16x16xf32>
    %9 = vector.shape_cast %8 : vector<1x16x16x16xf32> to vector<16x16x16xf32>
    %c0_17 = arith.constant 0 : index
    %c1_18 = arith.constant 1 : index
    %c2_19 = arith.constant 2 : index
    %c0_20 = arith.constant 0 : index
    %10 = vector.load %arg1[%c0_17, %c1_18, %c2_19, %c0_20] : memref<1x18x18x16xf32, #tpu.memory_space<vmem>>, vector<1x16x16x16xf32>
    %11 = vector.shape_cast %10 : vector<1x16x16x16xf32> to vector<16x16x16xf32>
    %c0_21 = arith.constant 0 : index
    %c2_22 = arith.constant 2 : index
    %c0_23 = arith.constant 0 : index
    %c0_24 = arith.constant 0 : index
    %12 = vector.load %arg1[%c0_21, %c2_22, %c0_23, %c0_24] : memref<1x18x18x16xf32, #tpu.memory_space<vmem>>, vector<1x16x16x16xf32>
    %13 = vector.shape_cast %12 : vector<1x16x16x16xf32> to vector<16x16x16xf32>
    %c0_25 = arith.constant 0 : index
    %c2_26 = arith.constant 2 : index
    %c1_27 = arith.constant 1 : index
    %c0_28 = arith.constant 0 : index
    %14 = vector.load %arg1[%c0_25, %c2_26, %c1_27, %c0_28] : memref<1x18x18x16xf32, #tpu.memory_space<vmem>>, vector<1x16x16x16xf32>
    %15 = vector.shape_cast %14 : vector<1x16x16x16xf32> to vector<16x16x16xf32>
    %c0_29 = arith.constant 0 : index
    %c2_30 = arith.constant 2 : index
    %c2_31 = arith.constant 2 : index
    %c0_32 = arith.constant 0 : index
    %16 = vector.load %arg1[%c0_29, %c2_30, %c2_31, %c0_32] : memref<1x18x18x16xf32, #tpu.memory_space<vmem>>, vector<1x16x16x16xf32>
    %17 = vector.shape_cast %16 : vector<1x16x16x16xf32> to vector<16x16x16xf32>
    %18 = tpu.concatenate %1, %3, %5, %7, %9, %11, %13, %15, %17 in 2 : vector<16x16x16xf32>, vector<16x16x16xf32>, vector<16x16x16xf32>, vector<16x16x16xf32>, vector<16x16x16xf32>, vector<16x16x16xf32>, vector<16x16x16xf32>, vector<16x16x16xf32>, vector<16x16x16xf32> -> vector<16x16x144xf32>
    %19 = vector.shape_cast %18 : vector<16x16x144xf32> to vector<256x144xf32>
    %c0_33 = arith.constant 0 : index
    %c0_34 = arith.constant 0 : index
    %20 = vector.load %arg2[%c0_33, %c0_34] : memref<144x20xf32, #tpu.memory_space<vmem>>, vector<144x20xf32>
    %cst = arith.constant dense<0.000000e+00> : vector<256x20xf32>
    %21 = tpu.matmul %19, %20, %cst {dimension_numbers = #tpu.dot_dimension_numbers<[1], [0], [0], [1], [0, 0, 1, 1], [], []>} : vector<256x144xf32>, vector<144x20xf32>, vector<256x20xf32> -> vector<256x20xf32>
    %22 = vector.extract_strided_slice %21 {offsets = [0, 0], sizes = [256, 8], strides = [1, 1]} : vector<256x20xf32> to vector<256x8xf32>
    %23 = vector.extract_strided_slice %21 {offsets = [0, 8], sizes = [256, 8], strides = [1, 1]} : vector<256x20xf32> to vector<256x8xf32>
    %24 = vector.extract_strided_slice %21 {offsets = [0, 16], sizes = [256, 4], strides = [1, 1]} : vector<256x20xf32> to vector<256x4xf32>
    %c0_35 = arith.constant 0 : index
    %c0_36 = arith.constant 0 : index
    %c0_37 = arith.constant 0 : index
    %25 = vector.load %arg3[%c0_35, %c0_36, %c0_37] : memref<1x256x8xf32, #tpu.memory_space<vmem>>, vector<1x256x8xf32>
    %26 = vector.shape_cast %25 : vector<1x256x8xf32> to vector<256x8xf32>
    %27 = vector.shape_cast %22 : vector<256x8xf32> to vector<1x256x8xf32>
    tpu.vector_store %arg3[%c0_35, %c0_36, %c0_37], %27 {strides = array<i32>} : memref<1x256x8xf32, #tpu.memory_space<vmem>>, vector<1x256x8xf32>,
    %c0_38 = arith.constant 0 : index
    %c0_39 = arith.constant 0 : index
    %c0_40 = arith.constant 0 : index
    %28 = vector.load %arg4[%c0_38, %c0_39, %c0_40] : memref<1x256x8xf32, #tpu.memory_space<vmem>>, vector<1x256x8xf32>
    %29 = vector.shape_cast %28 : vector<1x256x8xf32> to vector<256x8xf32>
    %30 = vector.shape_cast %23 : vector<256x8xf32> to vector<1x256x8xf32>
    tpu.vector_store %arg4[%c0_38, %c0_39, %c0_40], %30 {strides = array<i32>} : memref<1x256x8xf32, #tpu.memory_space<vmem>>, vector<1x256x8xf32>,
    %c0_41 = arith.constant 0 : index
    %c0_42 = arith.constant 0 : index
    %c0_43 = arith.constant 0 : index
    %31 = vector.load %arg5[%c0_41, %c0_42, %c0_43] : memref<1x256x4xf32, #tpu.memory_space<vmem>>, vector<1x256x4xf32>
    %32 = vector.shape_cast %31 : vector<1x256x4xf32> to vector<256x4xf32>
    %33 = vector.shape_cast %24 : vector<256x4xf32> to vector<1x256x4xf32>
    tpu.vector_store %arg5[%c0_41, %c0_42, %c0_43], %33 {strides = array<i32>} : memref<1x256x4xf32, #tpu.memory_space<vmem>>, vector<1x256x4xf32>,
    %cst_44 = arith.constant dense<0.000000e+00> : vector<8xf32>
    %34 = vector.multi_reduction <add>, %22, %cst_44 [0] : vector<256x8xf32> to vector<8xf32>
    %35 = vector.shape_cast %34 : vector<8xf32> to vector<1x8xf32>
    %c0_45 = arith.constant 0 : index
    %c0_46 = arith.constant 0 : index
    %c0_47 = arith.constant 0 : index
    %36 = vector.load %arg6[%c0_45, %c0_46, %c0_47] : memref<1x1x8xf32, #tpu.memory_space<vmem>>, vector<1x1x8xf32>
    %37 = vector.shape_cast %36 : vector<1x1x8xf32> to vector<1x8xf32>
    %38 = vector.shape_cast %35 : vector<1x8xf32> to vector<1x1x8xf32>
    tpu.vector_store %arg6[%c0_45, %c0_46, %c0_47], %38 {strides = array<i32>} : memref<1x1x8xf32, #tpu.memory_space<vmem>>, vector<1x1x8xf32>,
    %39 = arith.mulf %22, %22 : vector<256x8xf32>
    %cst_48 = arith.constant dense<0.000000e+00> : vector<8xf32>
    %40 = vector.multi_reduction <add>, %39, %cst_48 [0] : vector<256x8xf32> to vector<8xf32>
    %41 = vector.shape_cast %40 : vector<8xf32> to vector<1x8xf32>
    %c0_49 = arith.constant 0 : index
    %c0_50 = arith.constant 0 : index
    %c0_51 = arith.constant 0 : index
    %42 = vector.load %arg7[%c0_49, %c0_50, %c0_51] : memref<1x1x8xf32, #tpu.memory_space<vmem>>, vector<1x1x8xf32>
    %43 = vector.shape_cast %42 : vector<1x1x8xf32> to vector<1x8xf32>
    %44 = vector.shape_cast %41 : vector<1x8xf32> to vector<1x1x8xf32>
    tpu.vector_store %arg7[%c0_49, %c0_50, %c0_51], %44 {strides = array<i32>} : memref<1x1x8xf32, #tpu.memory_space<vmem>>, vector<1x1x8xf32>,
    %cst_52 = arith.constant dense<0.000000e+00> : vector<4xf32>
    %45 = vector.multi_reduction <add>, %24, %cst_52 [0] : vector<256x4xf32> to vector<4xf32>
    %46 = vector.shape_cast %45 : vector<4xf32> to vector<1x4xf32>
    %c0_53 = arith.constant 0 : index
    %c0_54 = arith.constant 0 : index
    %c0_55 = arith.constant 0 : index
    %47 = vector.load %arg8[%c0_53, %c0_54, %c0_55] : memref<1x1x4xf32, #tpu.memory_space<vmem>>, vector<1x1x4xf32>
    %48 = vector.shape_cast %47 : vector<1x1x4xf32> to vector<1x4xf32>
    %49 = vector.shape_cast %46 : vector<1x4xf32> to vector<1x1x4xf32>
    tpu.vector_store %arg8[%c0_53, %c0_54, %c0_55], %49 {strides = array<i32>} : memref<1x1x4xf32, #tpu.memory_space<vmem>>, vector<1x1x4xf32>,
    %50 = arith.mulf %24, %24 : vector<256x4xf32>
    %cst_56 = arith.constant dense<0.000000e+00> : vector<4xf32>
    %51 = vector.multi_reduction <add>, %50, %cst_56 [0] : vector<256x4xf32> to vector<4xf32>
    %52 = vector.shape_cast %51 : vector<4xf32> to vector<1x4xf32>
    %c0_57 = arith.constant 0 : index
    %c0_58 = arith.constant 0 : index
    %c0_59 = arith.constant 0 : index
    %53 = vector.load %arg9[%c0_57, %c0_58, %c0_59] : memref<1x1x4xf32, #tpu.memory_space<vmem>>, vector<1x1x4xf32>
    %54 = vector.shape_cast %53 : vector<1x1x4xf32> to vector<1x4xf32>
    %55 = vector.shape_cast %52 : vector<1x4xf32> to vector<1x1x4xf32>
    tpu.vector_store %arg9[%c0_57, %c0_58, %c0_59], %55 {strides = array<i32>} : memref<1x1x4xf32, #tpu.memory_space<vmem>>, vector<1x1x4xf32>,
    return
  }
  func.func @transform_0(%arg0: i32) -> (i32, i32, i32, i32) {
    %c0_i32 = arith.constant 0 : i32
    %c0_i32_0 = arith.constant 0 : i32
    %c0_i32_1 = arith.constant 0 : i32
    %c0_i32_2 = arith.constant 0 : i32
    return %arg0, %c0_i32, %c0_i32_0, %c0_i32_1 : i32, i32, i32, i32
  }
  func.func @transform_1(%arg0: i32) -> (i32, i32) {
    %c0_i32 = arith.constant 0 : i32
    %c0_i32_0 = arith.constant 0 : i32
    %c0_i32_1 = arith.constant 0 : i32
    return %c0_i32, %c0_i32_0 : i32, i32
  }
  func.func @transform_2(%arg0: i32) -> (i32, i32, i32) {
    %c0_i32 = arith.constant 0 : i32
    %c0_i32_0 = arith.constant 0 : i32
    %c0_i32_1 = arith.constant 0 : i32
    return %arg0, %c0_i32, %c0_i32_0 : i32, i32, i32
  }
  func.func @transform_3(%arg0: i32) -> (i32, i32, i32) {
    %c0_i32 = arith.constant 0 : i32
    %c0_i32_0 = arith.constant 0 : i32
    %c0_i32_1 = arith.constant 0 : i32
    return %arg0, %c0_i32, %c0_i32_0 : i32, i32, i32
  }
  func.func @transform_4(%arg0: i32) -> (i32, i32, i32) {
    %c0_i32 = arith.constant 0 : i32
    %c0_i32_0 = arith.constant 0 : i32
    %c0_i32_1 = arith.constant 0 : i32
    return %arg0, %c0_i32, %c0_i32_0 : i32, i32, i32
  }
  func.func @transform_5(%arg0: i32) -> (i32, i32, i32) {
    %c0_i32 = arith.constant 0 : i32
    %c0_i32_0 = arith.constant 0 : i32
    %c0_i32_1 = arith.constant 0 : i32
    return %arg0, %c0_i32, %c0_i32_0 : i32, i32, i32
  }
  func.func @transform_6(%arg0: i32) -> (i32, i32, i32) {
    %c0_i32 = arith.constant 0 : i32
    %c0_i32_0 = arith.constant 0 : i32
    %c0_i32_1 = arith.constant 0 : i32
    return %arg0, %c0_i32, %c0_i32_0 : i32, i32, i32
  }
  func.func @transform_7(%arg0: i32) -> (i32, i32, i32) {
    %c0_i32 = arith.constant 0 : i32
    %c0_i32_0 = arith.constant 0 : i32
    %c0_i32_1 = arith.constant 0 : i32
    return %arg0, %c0_i32, %c0_i32_0 : i32, i32, i32
  }
  func.func @transform_8(%arg0: i32) -> (i32, i32, i32) {
    %c0_i32 = arith.constant 0 : i32
    %c0_i32_0 = arith.constant 0 : i32
    %c0_i32_1 = arith.constant 0 : i32
    return %arg0, %c0_i32, %c0_i32_0 : i32, i32, i32
  }
}

module attributes {stable_mosaic.version = 11 : i64} {
  func.func @kernel(%arg0: i32, %arg1: memref<288x8xf32, #tpu.memory_space<vmem>>, %arg2: memref<8x8xf32, #tpu.memory_space<vmem>>, %arg3: memref<288x8xf32, #tpu.memory_space<vmem>>, %arg4: memref<1x1x8xf32, #tpu.memory_space<vmem>>, %arg5: memref<1x1x8xf32, #tpu.memory_space<vmem>>) attributes {dimension_semantics = [#tpu.dimension_semantics<parallel>], iteration_bounds = array<i64: 1>, scalar_prefetch = 0 : i64, scratch_operands = 0 : i64, tpu.core_type = #tpu.core_type<tc>, window_params = [{transform_indices = @transform_0, window_bounds = array<i64: 288, 8>}, {pipeline_mode = #tpu.pipeline_mode<synchronous>, transform_indices = @transform_1, window_bounds = array<i64: 8, 8>}, {transform_indices = @transform_2, window_bounds = array<i64: 288, 8>}, {transform_indices = @transform_3, window_bounds = array<i64: 1, 1, 8>}, {transform_indices = @transform_4, window_bounds = array<i64: 1, 1, 8>}]} {
    %c0 = arith.constant 0 : index
    %c0_0 = arith.constant 0 : index
    %0 = vector.load %arg1[%c0, %c0_0] : memref<288x8xf32, #tpu.memory_space<vmem>>, vector<288x8xf32>
    %c0_1 = arith.constant 0 : index
    %c0_2 = arith.constant 0 : index
    %1 = vector.load %arg2[%c0_1, %c0_2] : memref<8x8xf32, #tpu.memory_space<vmem>>, vector<8x8xf32>
    %cst = arith.constant dense<0.000000e+00> : vector<288x8xf32>
    %2 = tpu.matmul %0, %1, %cst {dimension_numbers = #tpu.dot_dimension_numbers<[1], [0], [0], [1], [0, 0, 1, 1], [], []>} : vector<288x8xf32>, vector<8x8xf32>, vector<288x8xf32> -> vector<288x8xf32>
    %c0_3 = arith.constant 0 : index
    %c0_4 = arith.constant 0 : index
    %3 = vector.load %arg3[%c0_3, %c0_4] : memref<288x8xf32, #tpu.memory_space<vmem>>, vector<288x8xf32>
    tpu.vector_store %arg3[%c0_3, %c0_4], %2 {strides = array<i32>} : memref<288x8xf32, #tpu.memory_space<vmem>>, vector<288x8xf32>,
    %cst_5 = arith.constant dense<0.000000e+00> : vector<8xf32>
    %4 = vector.multi_reduction <add>, %2, %cst_5 [0] : vector<288x8xf32> to vector<8xf32>
    %5 = vector.shape_cast %4 : vector<8xf32> to vector<1x8xf32>
    %c0_6 = arith.constant 0 : index
    %c0_7 = arith.constant 0 : index
    %c0_8 = arith.constant 0 : index
    %6 = vector.load %arg4[%c0_6, %c0_7, %c0_8] : memref<1x1x8xf32, #tpu.memory_space<vmem>>, vector<1x1x8xf32>
    %7 = vector.shape_cast %6 : vector<1x1x8xf32> to vector<1x8xf32>
    %8 = vector.shape_cast %5 : vector<1x8xf32> to vector<1x1x8xf32>
    tpu.vector_store %arg4[%c0_6, %c0_7, %c0_8], %8 {strides = array<i32>} : memref<1x1x8xf32, #tpu.memory_space<vmem>>, vector<1x1x8xf32>,
    %9 = arith.mulf %2, %2 : vector<288x8xf32>
    %cst_9 = arith.constant dense<0.000000e+00> : vector<8xf32>
    %10 = vector.multi_reduction <add>, %9, %cst_9 [0] : vector<288x8xf32> to vector<8xf32>
    %11 = vector.shape_cast %10 : vector<8xf32> to vector<1x8xf32>
    %c0_10 = arith.constant 0 : index
    %c0_11 = arith.constant 0 : index
    %c0_12 = arith.constant 0 : index
    %12 = vector.load %arg5[%c0_10, %c0_11, %c0_12] : memref<1x1x8xf32, #tpu.memory_space<vmem>>, vector<1x1x8xf32>
    %13 = vector.shape_cast %12 : vector<1x1x8xf32> to vector<1x8xf32>
    %14 = vector.shape_cast %11 : vector<1x8xf32> to vector<1x1x8xf32>
    tpu.vector_store %arg5[%c0_10, %c0_11, %c0_12], %14 {strides = array<i32>} : memref<1x1x8xf32, #tpu.memory_space<vmem>>, vector<1x1x8xf32>,
    return
  }
  func.func @transform_0(%arg0: i32) -> (i32, i32) {
    %c0_i32 = arith.constant 0 : i32
    %c0_i32_0 = arith.constant 0 : i32
    return %arg0, %c0_i32 : i32, i32
  }
  func.func @transform_1(%arg0: i32) -> (i32, i32) {
    %c0_i32 = arith.constant 0 : i32
    %c0_i32_0 = arith.constant 0 : i32
    %c0_i32_1 = arith.constant 0 : i32
    return %c0_i32, %c0_i32_0 : i32, i32
  }
  func.func @transform_2(%arg0: i32) -> (i32, i32) {
    %c0_i32 = arith.constant 0 : i32
    %c0_i32_0 = arith.constant 0 : i32
    return %arg0, %c0_i32 : i32, i32
  }
  func.func @transform_3(%arg0: i32) -> (i32, i32, i32) {
    %c0_i32 = arith.constant 0 : i32
    %c0_i32_0 = arith.constant 0 : i32
    %c0_i32_1 = arith.constant 0 : i32
    return %arg0, %c0_i32, %c0_i32_0 : i32, i32, i32
  }
  func.func @transform_4(%arg0: i32) -> (i32, i32, i32) {
    %c0_i32 = arith.constant 0 : i32
    %c0_i32_0 = arith.constant 0 : i32
    %c0_i32_1 = arith.constant 0 : i32
    return %arg0, %c0_i32, %c0_i32_0 : i32, i32, i32
  }
}

module attributes {stable_mosaic.version = 11 : i64} {
  func.func @kernel(%arg0: i32, %arg1: memref<80x8xf32, #tpu.memory_space<vmem>>, %arg2: memref<8x8xf32, #tpu.memory_space<vmem>>, %arg3: memref<80x8xf32, #tpu.memory_space<vmem>>, %arg4: memref<1x1x8xf32, #tpu.memory_space<vmem>>, %arg5: memref<1x1x8xf32, #tpu.memory_space<vmem>>) attributes {dimension_semantics = [#tpu.dimension_semantics<parallel>], iteration_bounds = array<i64: 1>, scalar_prefetch = 0 : i64, scratch_operands = 0 : i64, tpu.core_type = #tpu.core_type<tc>, window_params = [{transform_indices = @transform_0, window_bounds = array<i64: 80, 8>}, {pipeline_mode = #tpu.pipeline_mode<synchronous>, transform_indices = @transform_1, window_bounds = array<i64: 8, 8>}, {transform_indices = @transform_2, window_bounds = array<i64: 80, 8>}, {transform_indices = @transform_3, window_bounds = array<i64: 1, 1, 8>}, {transform_indices = @transform_4, window_bounds = array<i64: 1, 1, 8>}]} {
    %c0 = arith.constant 0 : index
    %c0_0 = arith.constant 0 : index
    %0 = vector.load %arg1[%c0, %c0_0] : memref<80x8xf32, #tpu.memory_space<vmem>>, vector<80x8xf32>
    %c0_1 = arith.constant 0 : index
    %c0_2 = arith.constant 0 : index
    %1 = vector.load %arg2[%c0_1, %c0_2] : memref<8x8xf32, #tpu.memory_space<vmem>>, vector<8x8xf32>
    %cst = arith.constant dense<0.000000e+00> : vector<80x8xf32>
    %2 = tpu.matmul %0, %1, %cst {dimension_numbers = #tpu.dot_dimension_numbers<[1], [0], [0], [1], [0, 0, 1, 1], [], []>} : vector<80x8xf32>, vector<8x8xf32>, vector<80x8xf32> -> vector<80x8xf32>
    %c0_3 = arith.constant 0 : index
    %c0_4 = arith.constant 0 : index
    %3 = vector.load %arg3[%c0_3, %c0_4] : memref<80x8xf32, #tpu.memory_space<vmem>>, vector<80x8xf32>
    tpu.vector_store %arg3[%c0_3, %c0_4], %2 {strides = array<i32>} : memref<80x8xf32, #tpu.memory_space<vmem>>, vector<80x8xf32>,
    %cst_5 = arith.constant dense<0.000000e+00> : vector<8xf32>
    %4 = vector.multi_reduction <add>, %2, %cst_5 [0] : vector<80x8xf32> to vector<8xf32>
    %5 = vector.shape_cast %4 : vector<8xf32> to vector<1x8xf32>
    %c0_6 = arith.constant 0 : index
    %c0_7 = arith.constant 0 : index
    %c0_8 = arith.constant 0 : index
    %6 = vector.load %arg4[%c0_6, %c0_7, %c0_8] : memref<1x1x8xf32, #tpu.memory_space<vmem>>, vector<1x1x8xf32>
    %7 = vector.shape_cast %6 : vector<1x1x8xf32> to vector<1x8xf32>
    %8 = vector.shape_cast %5 : vector<1x8xf32> to vector<1x1x8xf32>
    tpu.vector_store %arg4[%c0_6, %c0_7, %c0_8], %8 {strides = array<i32>} : memref<1x1x8xf32, #tpu.memory_space<vmem>>, vector<1x1x8xf32>,
    %9 = arith.mulf %2, %2 : vector<80x8xf32>
    %cst_9 = arith.constant dense<0.000000e+00> : vector<8xf32>
    %10 = vector.multi_reduction <add>, %9, %cst_9 [0] : vector<80x8xf32> to vector<8xf32>
    %11 = vector.shape_cast %10 : vector<8xf32> to vector<1x8xf32>
    %c0_10 = arith.constant 0 : index
    %c0_11 = arith.constant 0 : index
    %c0_12 = arith.constant 0 : index
    %12 = vector.load %arg5[%c0_10, %c0_11, %c0_12] : memref<1x1x8xf32, #tpu.memory_space<vmem>>, vector<1x1x8xf32>
    %13 = vector.shape_cast %12 : vector<1x1x8xf32> to vector<1x8xf32>
    %14 = vector.shape_cast %11 : vector<1x8xf32> to vector<1x1x8xf32>
    tpu.vector_store %arg5[%c0_10, %c0_11, %c0_12], %14 {strides = array<i32>} : memref<1x1x8xf32, #tpu.memory_space<vmem>>, vector<1x1x8xf32>,
    return
  }
  func.func @transform_0(%arg0: i32) -> (i32, i32) {
    %c0_i32 = arith.constant 0 : i32
    %c0_i32_0 = arith.constant 0 : i32
    return %arg0, %c0_i32 : i32, i32
  }
  func.func @transform_1(%arg0: i32) -> (i32, i32) {
    %c0_i32 = arith.constant 0 : i32
    %c0_i32_0 = arith.constant 0 : i32
    %c0_i32_1 = arith.constant 0 : i32
    return %c0_i32, %c0_i32_0 : i32, i32
  }
  func.func @transform_2(%arg0: i32) -> (i32, i32) {
    %c0_i32 = arith.constant 0 : i32
    %c0_i32_0 = arith.constant 0 : i32
    return %arg0, %c0_i32 : i32, i32
  }
  func.func @transform_3(%arg0: i32) -> (i32, i32, i32) {
    %c0_i32 = arith.constant 0 : i32
    %c0_i32_0 = arith.constant 0 : i32
    %c0_i32_1 = arith.constant 0 : i32
    return %arg0, %c0_i32, %c0_i32_0 : i32, i32, i32
  }
  func.func @transform_4(%arg0: i32) -> (i32, i32, i32) {
    %c0_i32 = arith.constant 0 : i32
    %c0_i32_0 = arith.constant 0 : i32
    %c0_i32_1 = arith.constant 0 : i32
    return %arg0, %c0_i32, %c0_i32_0 : i32, i32, i32
  }
}

module attributes {stable_mosaic.version = 11 : i64} {
  func.func @kernel(%arg0: i32, %arg1: memref<512x4xf32, #tpu.memory_space<vmem>>, %arg2: memref<4x8xf32, #tpu.memory_space<vmem>>, %arg3: memref<512x8xf32, #tpu.memory_space<vmem>>, %arg4: memref<512x8xf32, #tpu.memory_space<vmem>>, %arg5: memref<1x1x8xf32, #tpu.memory_space<vmem>>, %arg6: memref<1x1x8xf32, #tpu.memory_space<vmem>>) attributes {dimension_semantics = [#tpu.dimension_semantics<parallel>], iteration_bounds = array<i64: 1>, scalar_prefetch = 0 : i64, scratch_operands = 0 : i64, tpu.core_type = #tpu.core_type<tc>, window_params = [{transform_indices = @transform_0, window_bounds = array<i64: 512, 4>}, {pipeline_mode = #tpu.pipeline_mode<synchronous>, transform_indices = @transform_1, window_bounds = array<i64: 4, 8>}, {transform_indices = @transform_2, window_bounds = array<i64: 512, 8>}, {transform_indices = @transform_3, window_bounds = array<i64: 512, 8>}, {transform_indices = @transform_4, window_bounds = array<i64: 1, 1, 8>}, {transform_indices = @transform_5, window_bounds = array<i64: 1, 1, 8>}]} {
    %c0 = arith.constant 0 : index
    %c0_0 = arith.constant 0 : index
    %0 = vector.load %arg1[%c0, %c0_0] : memref<512x4xf32, #tpu.memory_space<vmem>>, vector<512x4xf32>
    %c0_1 = arith.constant 0 : index
    %c0_2 = arith.constant 0 : index
    %1 = vector.load %arg2[%c0_1, %c0_2] : memref<4x8xf32, #tpu.memory_space<vmem>>, vector<4x8xf32>
    %cst = arith.constant dense<0.000000e+00> : vector<512x8xf32>
    %2 = tpu.matmul %0, %1, %cst {dimension_numbers = #tpu.dot_dimension_numbers<[1], [0], [0], [1], [0, 0, 1, 1], [], []>} : vector<512x4xf32>, vector<4x8xf32>, vector<512x8xf32> -> vector<512x8xf32>
    %c0_3 = arith.constant 0 : index
    %c0_4 = arith.constant 0 : index
    %3 = vector.load %arg3[%c0_3, %c0_4] : memref<512x8xf32, #tpu.memory_space<vmem>>, vector<512x8xf32>
    %4 = arith.addf %2, %3 : vector<512x8xf32>
    %c0_5 = arith.constant 0 : index
    %c0_6 = arith.constant 0 : index
    %5 = vector.load %arg4[%c0_5, %c0_6] : memref<512x8xf32, #tpu.memory_space<vmem>>, vector<512x8xf32>
    tpu.vector_store %arg4[%c0_5, %c0_6], %4 {strides = array<i32>} : memref<512x8xf32, #tpu.memory_space<vmem>>, vector<512x8xf32>,
    %cst_7 = arith.constant dense<0.000000e+00> : vector<8xf32>
    %6 = vector.multi_reduction <add>, %4, %cst_7 [0] : vector<512x8xf32> to vector<8xf32>
    %7 = vector.shape_cast %6 : vector<8xf32> to vector<1x8xf32>
    %c0_8 = arith.constant 0 : index
    %c0_9 = arith.constant 0 : index
    %c0_10 = arith.constant 0 : index
    %8 = vector.load %arg5[%c0_8, %c0_9, %c0_10] : memref<1x1x8xf32, #tpu.memory_space<vmem>>, vector<1x1x8xf32>
    %9 = vector.shape_cast %8 : vector<1x1x8xf32> to vector<1x8xf32>
    %10 = vector.shape_cast %7 : vector<1x8xf32> to vector<1x1x8xf32>
    tpu.vector_store %arg5[%c0_8, %c0_9, %c0_10], %10 {strides = array<i32>} : memref<1x1x8xf32, #tpu.memory_space<vmem>>, vector<1x1x8xf32>,
    %11 = arith.mulf %4, %4 : vector<512x8xf32>
    %cst_11 = arith.constant dense<0.000000e+00> : vector<8xf32>
    %12 = vector.multi_reduction <add>, %11, %cst_11 [0] : vector<512x8xf32> to vector<8xf32>
    %13 = vector.shape_cast %12 : vector<8xf32> to vector<1x8xf32>
    %c0_12 = arith.constant 0 : index
    %c0_13 = arith.constant 0 : index
    %c0_14 = arith.constant 0 : index
    %14 = vector.load %arg6[%c0_12, %c0_13, %c0_14] : memref<1x1x8xf32, #tpu.memory_space<vmem>>, vector<1x1x8xf32>
    %15 = vector.shape_cast %14 : vector<1x1x8xf32> to vector<1x8xf32>
    %16 = vector.shape_cast %13 : vector<1x8xf32> to vector<1x1x8xf32>
    tpu.vector_store %arg6[%c0_12, %c0_13, %c0_14], %16 {strides = array<i32>} : memref<1x1x8xf32, #tpu.memory_space<vmem>>, vector<1x1x8xf32>,
    return
  }
  func.func @transform_0(%arg0: i32) -> (i32, i32) {
    %c0_i32 = arith.constant 0 : i32
    %c0_i32_0 = arith.constant 0 : i32
    return %arg0, %c0_i32 : i32, i32
  }
  func.func @transform_1(%arg0: i32) -> (i32, i32) {
    %c0_i32 = arith.constant 0 : i32
    %c0_i32_0 = arith.constant 0 : i32
    %c0_i32_1 = arith.constant 0 : i32
    return %c0_i32, %c0_i32_0 : i32, i32
  }
  func.func @transform_2(%arg0: i32) -> (i32, i32) {
    %c0_i32 = arith.constant 0 : i32
    %c0_i32_0 = arith.constant 0 : i32
    return %arg0, %c0_i32 : i32, i32
  }
  func.func @transform_3(%arg0: i32) -> (i32, i32) {
    %c0_i32 = arith.constant 0 : i32
    %c0_i32_0 = arith.constant 0 : i32
    return %arg0, %c0_i32 : i32, i32
  }
  func.func @transform_4(%arg0: i32) -> (i32, i32, i32) {
    %c0_i32 = arith.constant 0 : i32
    %c0_i32_0 = arith.constant 0 : i32
    %c0_i32_1 = arith.constant 0 : i32
    return %arg0, %c0_i32, %c0_i32_0 : i32, i32, i32
  }
  func.func @transform_5(%arg0: i32) -> (i32, i32, i32) {
    %c0_i32 = arith.constant 0 : i32
    %c0_i32_0 = arith.constant 0 : i32
    %c0_i32_1 = arith.constant 0 : i32
    return %arg0, %c0_i32, %c0_i32_0 : i32, i32, i32
  }
}

module attributes {stable_mosaic.version = 11 : i64} {
  func.func @kernel(%arg0: i32, %arg1: memref<512x8xf32, #tpu.memory_space<vmem>>, %arg2: memref<512x8xf32, #tpu.memory_space<vmem>>, %arg3: memref<512x16xf32, #tpu.memory_space<vmem>>, %arg4: memref<4x8xf32, #tpu.memory_space<vmem>>, %arg5: memref<8x8xf32, #tpu.memory_space<vmem>>, %arg6: memref<1x8xf32, #tpu.memory_space<vmem>>, %arg7: memref<512x8xf32, #tpu.memory_space<vmem>>, %arg8: memref<512x8xf32, #tpu.memory_space<vmem>>) attributes {dimension_semantics = [#tpu.dimension_semantics<parallel>], iteration_bounds = array<i64: 1>, scalar_prefetch = 0 : i64, scratch_operands = 0 : i64, tpu.core_type = #tpu.core_type<tc>, window_params = [{transform_indices = @transform_0, window_bounds = array<i64: 512, 8>}, {transform_indices = @transform_1, window_bounds = array<i64: 512, 8>}, {transform_indices = @transform_2, window_bounds = array<i64: 512, 16>}, {pipeline_mode = #tpu.pipeline_mode<synchronous>, transform_indices = @transform_3, window_bounds = array<i64: 4, 8>}, {pipeline_mode = #tpu.pipeline_mode<synchronous>, transform_indices = @transform_4, window_bounds = array<i64: 8, 8>}, {pipeline_mode = #tpu.pipeline_mode<synchronous>, transform_indices = @transform_5, window_bounds = array<i64: 1, 8>}, {transform_indices = @transform_6, window_bounds = array<i64: 512, 8>}, {transform_indices = @transform_7, window_bounds = array<i64: 512, 8>}]} {
    %c0 = arith.constant 0 : index
    %c0_0 = arith.constant 0 : index
    %0 = vector.load %arg1[%c0, %c0_0] : memref<512x8xf32, #tpu.memory_space<vmem>>, vector<512x8xf32>
    %c0_1 = arith.constant 0 : index
    %c0_2 = arith.constant 0 : index
    %1 = vector.load %arg4[%c0_1, %c0_2] : memref<4x8xf32, #tpu.memory_space<vmem>>, vector<1x8xf32>
    %2 = vector.broadcast %1 : vector<1x8xf32> to vector<512x8xf32>
    %3 = arith.mulf %0, %2 : vector<512x8xf32>
    %c1 = arith.constant 1 : index
    %c0_3 = arith.constant 0 : index
    %4 = vector.load %arg4[%c1, %c0_3] : memref<4x8xf32, #tpu.memory_space<vmem>>, vector<1x8xf32>
    %5 = vector.broadcast %4 : vector<1x8xf32> to vector<512x8xf32>
    %6 = arith.addf %3, %5 : vector<512x8xf32>
    %cst = arith.constant 0.000000e+00 : f32
    %7 = vector.broadcast %cst : f32 to vector<512x8xf32>
    %8 = arith.maximumf %6, %7 : vector<512x8xf32>
    %c0_4 = arith.constant 0 : index
    %c0_5 = arith.constant 0 : index
    %9 = vector.load %arg3[%c0_4, %c0_5] : memref<512x16xf32, #tpu.memory_space<vmem>>, vector<512x8xf32>
    %10 = arith.addf %8, %9 : vector<512x8xf32>
    %c0_6 = arith.constant 0 : index
    %c0_7 = arith.constant 0 : index
    %11 = vector.load %arg2[%c0_6, %c0_7] : memref<512x8xf32, #tpu.memory_space<vmem>>, vector<512x8xf32>
    %c2 = arith.constant 2 : index
    %c0_8 = arith.constant 0 : index
    %12 = vector.load %arg4[%c2, %c0_8] : memref<4x8xf32, #tpu.memory_space<vmem>>, vector<1x8xf32>
    %13 = vector.broadcast %12 : vector<1x8xf32> to vector<512x8xf32>
    %14 = arith.mulf %11, %13 : vector<512x8xf32>
    %c3 = arith.constant 3 : index
    %c0_9 = arith.constant 0 : index
    %15 = vector.load %arg4[%c3, %c0_9] : memref<4x8xf32, #tpu.memory_space<vmem>>, vector<1x8xf32>
    %16 = vector.broadcast %15 : vector<1x8xf32> to vector<512x8xf32>
    %17 = arith.addf %14, %16 : vector<512x8xf32>
    %cst_10 = arith.constant 0.000000e+00 : f32
    %18 = vector.broadcast %cst_10 : f32 to vector<512x8xf32>
    %19 = arith.maximumf %17, %18 : vector<512x8xf32>
    %c0_11 = arith.constant 0 : index
    %c8 = arith.constant 8 : index
    %20 = vector.load %arg3[%c0_11, %c8] : memref<512x16xf32, #tpu.memory_space<vmem>>, vector<512x8xf32>
    %21 = arith.addf %19, %20 : vector<512x8xf32>
    %22 = tpu.concatenate %10, %21 in 0 : vector<512x8xf32>, vector<512x8xf32> -> vector<1024x8xf32>
    %c0_12 = arith.constant 0 : index
    %c0_13 = arith.constant 0 : index
    %23 = vector.load %arg5[%c0_12, %c0_13] : memref<8x8xf32, #tpu.memory_space<vmem>>, vector<8x8xf32>
    %cst_14 = arith.constant dense<0.000000e+00> : vector<1024x8xf32>
    %24 = tpu.matmul %22, %23, %cst_14 {dimension_numbers = #tpu.dot_dimension_numbers<[1], [0], [0], [1], [0, 0, 1, 1], [], []>} : vector<1024x8xf32>, vector<8x8xf32>, vector<1024x8xf32> -> vector<1024x8xf32>
    %c0_15 = arith.constant 0 : index
    %c0_16 = arith.constant 0 : index
    %25 = vector.load %arg6[%c0_15, %c0_16] : memref<1x8xf32, #tpu.memory_space<vmem>>, vector<1x8xf32>
    %26 = vector.broadcast %25 : vector<1x8xf32> to vector<1024x8xf32>
    %27 = arith.addf %24, %26 : vector<1024x8xf32>
    %28 = vector.extract_strided_slice %27 {offsets = [0, 0], sizes = [512, 8], strides = [1, 1]} : vector<1024x8xf32> to vector<512x8xf32>
    %c0_17 = arith.constant 0 : index
    %c0_18 = arith.constant 0 : index
    %29 = vector.load %arg7[%c0_17, %c0_18] : memref<512x8xf32, #tpu.memory_space<vmem>>, vector<512x8xf32>
    tpu.vector_store %arg7[%c0_17, %c0_18], %28 {strides = array<i32>} : memref<512x8xf32, #tpu.memory_space<vmem>>, vector<512x8xf32>,
    %30 = vector.extract_strided_slice %27 {offsets = [512, 0], sizes = [512, 8], strides = [1, 1]} : vector<1024x8xf32> to vector<512x8xf32>
    %c0_19 = arith.constant 0 : index
    %c0_20 = arith.constant 0 : index
    %31 = vector.load %arg8[%c0_19, %c0_20] : memref<512x8xf32, #tpu.memory_space<vmem>>, vector<512x8xf32>
    tpu.vector_store %arg8[%c0_19, %c0_20], %30 {strides = array<i32>} : memref<512x8xf32, #tpu.memory_space<vmem>>, vector<512x8xf32>,
    return
  }
  func.func @transform_0(%arg0: i32) -> (i32, i32) {
    %c0_i32 = arith.constant 0 : i32
    %c0_i32_0 = arith.constant 0 : i32
    return %arg0, %c0_i32 : i32, i32
  }
  func.func @transform_1(%arg0: i32) -> (i32, i32) {
    %c0_i32 = arith.constant 0 : i32
    %c0_i32_0 = arith.constant 0 : i32
    return %arg0, %c0_i32 : i32, i32
  }
  func.func @transform_2(%arg0: i32) -> (i32, i32) {
    %c0_i32 = arith.constant 0 : i32
    %c0_i32_0 = arith.constant 0 : i32
    return %arg0, %c0_i32 : i32, i32
  }
  func.func @transform_3(%arg0: i32) -> (i32, i32) {
    %c0_i32 = arith.constant 0 : i32
    %c0_i32_0 = arith.constant 0 : i32
    %c0_i32_1 = arith.constant 0 : i32
    return %c0_i32, %c0_i32_0 : i32, i32
  }
  func.func @transform_4(%arg0: i32) -> (i32, i32) {
    %c0_i32 = arith.constant 0 : i32
    %c0_i32_0 = arith.constant 0 : i32
    %c0_i32_1 = arith.constant 0 : i32
    return %c0_i32, %c0_i32_0 : i32, i32
  }
  func.func @transform_5(%arg0: i32) -> (i32, i32) {
    %c0_i32 = arith.constant 0 : i32
    %c0_i32_0 = arith.constant 0 : i32
    %c0_i32_1 = arith.constant 0 : i32
    return %c0_i32, %c0_i32_0 : i32, i32
  }
  func.func @transform_6(%arg0: i32) -> (i32, i32) {
    %c0_i32 = arith.constant 0 : i32
    %c0_i32_0 = arith.constant 0 : i32
    return %arg0, %c0_i32 : i32, i32
  }
  func.func @transform_7(%arg0: i32) -> (i32, i32) {
    %c0_i32 = arith.constant 0 : i32
    %c0_i32_0 = arith.constant 0 : i32
    return %arg0, %c0_i32 : i32, i32
  }
}

</mosaic_0001>

<llo_original>
// kernel: _lambda_.6
$region0: #{_lambda_.6}
  #allocation0 [shape = 'u32[]', space=smem, size = 0x4, offset = 0x4, fixed_abs, tag = 'smem constant byte address 0x4 - core index']
  #allocation1 [shape = 'u32[72,128]{1,0:T(1,128)}', space=vmem, size = 0x9000, scoped, tag = 'internal scratch']
  %s0 = inlined_call_operand.vmem [shape: f32[2,18,18,16], index: 0, kind: input, shape index: {}]
  %s1 = inlined_call_operand.vmem [shape: f32[144,16], index: 1, kind: input, shape index: {}]
  %s2 = inlined_call_operand.vmem [shape: f32[1,16], index: 2, kind: input, shape index: {}]
  %s3 = inlined_call_operand.vmem [shape: f32[2,16,16,16], index: 3, kind: output, shape index: {}]
  %s4 = sld [smem:[#allocation0]]
  $region45: #{_lambda_.6} parent=0
    _
  %s6 = ssub.s32 1, %s4
  %s7 = scalar_select 0, %s6, %s4
  loop: start=0, step=1, limit=4
  $region2: #{_lambda_.6} parent=0 // loop_pre_header
    _
  $region3: #{_lambda_.6} parent=0 // loop_header
    %s9 = sphi 0, %s13
    %p10 = scmp.ge.s32.totalorder %s9, 4
    %s19 = sphi 0, %s21
    %s22 = sphi 0, %s19
    %s23 = sphi 0, %s22
    %s39 = sphi 0, %s23
    %s43 = sphi 0, %s43
    %s45 = sphi 0, %s43
    %s46 = sphi 0, %s45
    %s60 = sphi 0, %s46
    %s64 = sphi 0, %s64
    %s66 = sphi 0, %s64
    %s67 = sphi 0, %s66
    %s81 = sphi 0, %s67
    %s87 = sphi 0, %s89
    %s90 = sphi 0, %s87
    %s91 = sphi 0, %s90
    %s107 = sphi 0, %s91
  $region4: #{_lambda_.6} parent=0 // loop_header_branch
    %12 = sbr.rel (%p10) target = $region8
  $region5: #{_lambda_.6} parent=0 // loop_body
    %s14 = ssub.s32 %s9, 1
    %s15 = ssub.s32 %s9, 2
    %s16 = sadd.s32 %s9, 1
    %s17 = ssub.s32 %s9, %s16
    %p18 = scmp.eq.s32.totalorder %s17, 0
    %s20 = sadd.s32 %s19, 1
    %s21 = scalar_select %p18, %s19, %s20
    %p24 = pneg %p18
    %p25 = scmp.eq.s32.totalorder %s9, 1
    %p26 = por %p24, %p25
    %p27 = scmp.ne.s32.totalorder %s19, %s22
    %p28 = scmp.eq.s32.totalorder %s9, 0
    %p29 = por %p27, %p28
    %p30 = scmp.ne.s32.totalorder %s19, %s22
    %p31 = scmp.eq.s32.totalorder %s14, 1
    %p32 = por %p30, %p31
    %p33 = scmp.ne.s32.totalorder %s22, %s23
    %p34 = scmp.eq.s32.totalorder %s14, 0
    %p35 = por %p33, %p34
    %p36 = scmp.ne.s32.totalorder %s22, %s23
    %p37 = scmp.eq.s32.totalorder %s15, 1
    %p38 = por %p36, %p37
    %p40 = scmp.ne.s32.totalorder %s23, %s39
    %p41 = scmp.eq.s32.totalorder %s15, 0
    %p42 = por %p40, %p41
    %s44 = sadd.s32 %s43, 1
    %p47 = scmp.eq.s32.totalorder %s9, 1
    %p48 = scmp.ne.s32.totalorder %s43, %s45
    %p49 = scmp.eq.s32.totalorder %s9, 0
    %p50 = por %p48, %p49
    %p51 = scmp.ne.s32.totalorder %s43, %s45
    %p52 = scmp.eq.s32.totalorder %s14, 1
    %p53 = por %p51, %p52
    %p54 = scmp.ne.s32.totalorder %s45, %s46
    %p55 = scmp.eq.s32.totalorder %s14, 0
    %p56 = por %p54, %p55
    %p57 = scmp.ne.s32.totalorder %s45, %s46
    %p58 = scmp.eq.s32.totalorder %s15, 1
    %p59 = por %p57, %p58
    %p61 = scmp.ne.s32.totalorder %s46, %s60
    %p62 = scmp.eq.s32.totalorder %s15, 0
    %p63 = por %p61, %p62
    %s65 = sadd.s32 %s64, 1
    %p68 = scmp.eq.s32.totalorder %s9, 1
    %p69 = scmp.ne.s32.totalorder %s64, %s66
    %p70 = scmp.eq.s32.totalorder %s9, 0
    %p71 = por %p69, %p70
    %p72 = scmp.ne.s32.totalorder %s64, %s66
    %p73 = scmp.eq.s32.totalorder %s14, 1
    %p74 = por %p72, %p73
    %p75 = scmp.ne.s32.totalorder %s66, %s67
    %p76 = scmp.eq.s32.totalorder %s14, 0
    %p77 = por %p75, %p76
    %p78 = scmp.ne.s32.totalorder %s66, %s67
    %p79 = scmp.eq.s32.totalorder %s15, 1
    %p80 = por %p78, %p79
    %p82 = scmp.ne.s32.totalorder %s67, %s81
    %p83 = scmp.eq.s32.totalorder %s15, 0
    %p84 = por %p82, %p83
    %s85 = ssub.s32 %s9, %s16
    %p86 = scmp.eq.s32.totalorder %s85, 0
    %s88 = sadd.s32 %s87, 1
    %s89 = scalar_select %p86, %s87, %s88
    %p92 = pneg %p86
    %p93 = scmp.eq.s32.totalorder %s9, 1
    %p94 = por %p92, %p93
    %p95 = scmp.ne.s32.totalorder %s87, %s90
    %p96 = scmp.eq.s32.totalorder %s9, 0
    %p97 = por %p95, %p96
    %p98 = scmp.ne.s32.totalorder %s87, %s90
    %p99 = scmp.eq.s32.totalorder %s14, 1
    %p100 = por %p98, %p99
    %p101 = scmp.ne.s32.totalorder %s90, %s91
    %p102 = scmp.eq.s32.totalorder %s14, 0
    %p103 = por %p101, %p102
    %p104 = scmp.ne.s32.totalorder %s90, %s91
    %p105 = scmp.eq.s32.totalorder %s15, 1
    %p106 = por %p104, %p105
    %p108 = scmp.ne.s32.totalorder %s91, %s107
    %p109 = scmp.eq.s32.totalorder %s15, 0
    %p110 = por %p108, %p109
    %p111 = scmp.le.s32.totalorder 1, %s9
    %p112 = scmp.lt.s32.totalorder %s9, 3
    %p113 = pnand %p111, %p112
    %p114 = pneg %p113
    // Predicated region
    $region9: #{_lambda_.6} parent=5 // pred_check
      _
    $region10: #{_lambda_.6} parent=5 // pred_check_branch
      %116 = sbr.rel (%p113) target = $region12
    $region11: #{_lambda_.6} parent=5 // pred_region
      %s117 = ssub.s32 %s9, 1
      // Predicated region
      $region13: #{_lambda_.6} parent=11 // pred_check
        %p118 = pneg %p56
      $region14: #{_lambda_.6} parent=11 // pred_check_branch
        %120 = sbr.rel (%p118) target = $region16
      $region15: #{_lambda_.6} parent=11 // pred_region
        _
      $region16: #{_lambda_.6} parent=11 // pred_fallthru
        _
      // Predicated region
      $region17: #{_lambda_.6} parent=11 // pred_check
        %p121 = pneg %p77
      $region18: #{_lambda_.6} parent=11 // pred_check_branch
        %123 = sbr.rel (%p121) target = $region20
      $region19: #{_lambda_.6} parent=11 // pred_region
        _
      $region20: #{_lambda_.6} parent=11 // pred_fallthru
        _
    $region12: #{_lambda_.6} parent=5 // pred_fallthru
      _
    %p124 = scmp.lt.s32.totalorder %s9, 2
    // Predicated region
    $region21: #{_lambda_.6} parent=5 // pred_check
      %p125 = pneg %p124
    $region22: #{_lambda_.6} parent=5 // pred_check_branch
      %127 = sbr.rel (%p125) target = $region24
    $region23: #{_lambda_.6} parent=5 // pred_region
      // Predicated region
      $region25: #{_lambda_.6} parent=23 // pred_check
        %p128 = pneg %p29
      $region26: #{_lambda_.6} parent=23 // pred_check_branch
        %130 = sbr.rel (%p128) target = $region28
      $region27: #{_lambda_.6} parent=23 // pred_region
        %p131 = scmp.lt.s32.totalorder %s9, 1
        %s132 = scalar_select %p131, %s9, 1
        %s133 = smul.addr %s132, 54
        %s134 = smul.addr %s133, 8
        %s135 = scalar_lea.vmem %s0, %s134
      $region28: #{_lambda_.6} parent=23 // pred_fallthru
        _
    $region24: #{_lambda_.6} parent=5 // pred_fallthru
      _
    %p136 = scmp.le.s32.totalorder 1, %s9
    %p137 = scmp.lt.s32.totalorder %s9, 3
    %p138 = pnand %p136, %p137
    %p139 = pneg %p138
    // Predicated region
    $region29: #{_lambda_.6} parent=5 // pred_check
      _
    $region30: #{_lambda_.6} parent=5 // pred_check_branch
      %141 = sbr.rel (%p138) target = $region32
    $region31: #{_lambda_.6} parent=5 // pred_region
      %s142 = ssub.s32 %s9, 1
      %p143 = scmp.lt.s32.totalorder %s14, 1
      %s144 = scalar_select %p143, %s14, 1
      %s145 = smul.addr %s144, 54
      %s146 = smul.addr %s145, 8
      %s147 = scalar_lea.vmem %s0, %s146
      %p148 = pneg %p35
      %p149 = pneg %p32
      %p150 = pneg %p56
      %p151 = pneg %p53
      %p152 = pneg %p77
      %p153 = pneg %p74
      %p154 = pneg %p103
      %p155 = pneg %p100
      %p156 = scmp.lt.s32.totalorder %s14, 1
      %s157 = scalar_select %p156, %s14, 1
      %s158 = smul.addr %s157, 32
      %s159 = smul.addr %s158, 8
      %s160 = scalar_lea.vmem %s3, %s159
      %p161 = scmp.lt.s32.totalorder %s14, 1
      %s162 = scalar_select %p161, %s14, 1
      %s163 = smul.addr %s162, 54
      %s164 = smul.addr %s163, 8
      %s165 = scalar_lea.vmem %s0, %s164
      %p166 = scmp.lt.s32.totalorder %s14, 1
      %s167 = scalar_select %p166, %s14, 1
      %s168 = smul.addr %s167, 32
      %s169 = smul.addr %s168, 8
      %s170 = scalar_lea.vmem %s3, %s169
      %v171 = vld [vmem:[%s165] sm:$0xff]
      %v172 = vld [vmem:[%s165 + $0x8] sm:$0xff]
      %v173 = vld [vmem:[%s165 + $0x18] sm:$0xff]
      %v174 = vld [vmem:[%s165 + $0x20] sm:$0xff]
      %v175 = vld [vmem:[%s165 + $0x30] sm:$0xff]
      %v176 = vld [vmem:[%s165 + $0x38] sm:$0xff]
      %v177 = vld [vmem:[%s165 + $0x48] sm:$0xff]
      %v178 = vld [vmem:[%s165 + $0x50] sm:$0xff]
      %v179 = vld [vmem:[%s165 + $0x60] sm:$0xff]
      %v180 = vld [vmem:[%s165 + $0x68] sm:$0xff]
      %v181 = vld [vmem:[%s165 + $0x78] sm:$0xff]
      %v182 = vld [vmem:[%s165 + $0x80] sm:$0xff]
      %v183 = vld [vmem:[%s165 + $0x90] sm:$0xff]
      %v184 = vld [vmem:[%s165 + $0x98] sm:$0xff]
      %v185 = vld [vmem:[%s165 + $0xa8] sm:$0xff]
      %v186 = vld [vmem:[%s165 + $0xb0] sm:$0xff]
      %v187 = vld [vmem:[%s165 + $0xc0] sm:$0xff]
      %v188 = vld [vmem:[%s165 + $0xc8] sm:$0xff]
      %v189 = vld [vmem:[%s165 + $0xd8] sm:$0xff]
      %v190 = vld [vmem:[%s165 + $0xe0] sm:$0xff]
      %v191 = vld [vmem:[%s165 + $0xf0] sm:$0xff]
      %v192 = vld [vmem:[%s165 + $0xf8] sm:$0xff]
      %v193 = vld [vmem:[%s165 + $0x108] sm:$0xff]
      %v194 = vld [vmem:[%s165 + $0x110] sm:$0xff]
      %v195 = vld [vmem:[%s165 + $0x120] sm:$0xff]
      %v196 = vld [vmem:[%s165 + $0x128] sm:$0xff]
      %v197 = vld [vmem:[%s165 + $0x138] sm:$0xff]
      %v198 = vld [vmem:[%s165 + $0x140] sm:$0xff]
      %v199 = vld [vmem:[%s165 + $0x150] sm:$0xff]
      %v200 = vld [vmem:[%s165 + $0x158] sm:$0xff]
      %v201 = vld [vmem:[%s165 + $0x168] sm:$0xff]
      %v202 = vld [vmem:[%s165 + $0x170] sm:$0xff]
      %v203 = vld [vmem:[%s165 + $0x1] sm:$0xff]
      %v204 = vld [vmem:[%s165 + $0x9] sm:$0xff]
      %v205 = vld [vmem:[%s165 + $0x19] sm:$0xff]
      %v206 = vld [vmem:[%s165 + $0x21] sm:$0xff]
      %v207 = vld [vmem:[%s165 + $0x31] sm:$0xff]
      %v208 = vld [vmem:[%s165 + $0x39] sm:$0xff]
      %v209 = vld [vmem:[%s165 + $0x49] sm:$0xff]
      %v210 = vld [vmem:[%s165 + $0x51] sm:$0xff]
      %v211 = vld [vmem:[%s165 + $0x61] sm:$0xff]
      %v212 = vld [vmem:[%s165 + $0x69] sm:$0xff]
      %v213 = vld [vmem:[%s165 + $0x79] sm:$0xff]
      %v214 = vld [vmem:[%s165 + $0x81] sm:$0xff]
      %v215 = vld [vmem:[%s165 + $0x91] sm:$0xff]
      %v216 = vld [vmem:[%s165 + $0x99] sm:$0xff]
      %v217 = vld [vmem:[%s165 + $0xa9] sm:$0xff]
      %v218 = vld [vmem:[%s165 + $0xb1] sm:$0xff]
      %v219 = vld [vmem:[%s165 + $0xc1] sm:$0xff]
      %v220 = vld [vmem:[%s165 + $0xc9] sm:$0xff]
      %v221 = vld [vmem:[%s165 + $0xd9] sm:$0xff]
      %v222 = vld [vmem:[%s165 + $0xe1] sm:$0xff]
      %v223 = vld [vmem:[%s165 + $0xf1] sm:$0xff]
      %v224 = vld [vmem:[%s165 + $0xf9] sm:$0xff]
      %v225 = vld [vmem:[%s165 + $0x109] sm:$0xff]
      %v226 = vld [vmem:[%s165 + $0x111] sm:$0xff]
      %v227 = vld [vmem:[%s165 + $0x121] sm:$0xff]
      %v228 = vld [vmem:[%s165 + $0x129] sm:$0xff]
      %v229 = vld [vmem:[%s165 + $0x139] sm:$0xff]
      %v230 = vld [vmem:[%s165 + $0x141] sm:$0xff]
      %v231 = vld [vmem:[%s165 + $0x151] sm:$0xff]
      %v232 = vld [vmem:[%s165 + $0x159] sm:$0xff]
      %v233 = vld [vmem:[%s165 + $0x169] sm:$0xff]
      %v234 = vld [vmem:[%s165 + $0x171] sm:$0xff]
      %v235 = vld [vmem:[%s165 + $0x2] sm:$0xff]
      %v236 = vld [vmem:[%s165 + $0xa] sm:$0xff]
      %v237 = vld [vmem:[%s165 + $0x1a] sm:$0xff]
      %v238 = vld [vmem:[%s165 + $0x22] sm:$0xff]
      %v239 = vld [vmem:[%s165 + $0x32] sm:$0xff]
      %v240 = vld [vmem:[%s165 + $0x3a] sm:$0xff]
      %v241 = vld [vmem:[%s165 + $0x4a] sm:$0xff]
      %v242 = vld [vmem:[%s165 + $0x52] sm:$0xff]
      %v243 = vld [vmem:[%s165 + $0x62] sm:$0xff]
      %v244 = vld [vmem:[%s165 + $0x6a] sm:$0xff]
      %v245 = vld [vmem:[%s165 + $0x7a] sm:$0xff]
      %v246 = vld [vmem:[%s165 + $0x82] sm:$0xff]
      %v247 = vld [vmem:[%s165 + $0x92] sm:$0xff]
      %v248 = vld [vmem:[%s165 + $0x9a] sm:$0xff]
      %v249 = vld [vmem:[%s165 + $0xaa] sm:$0xff]
      %v250 = vld [vmem:[%s165 + $0xb2] sm:$0xff]
      %v251 = vld [vmem:[%s165 + $0xc2] sm:$0xff]
      %v252 = vld [vmem:[%s165 + $0xca] sm:$0xff]
      %v253 = vld [vmem:[%s165 + $0xda] sm:$0xff]
      %v254 = vld [vmem:[%s165 + $0xe2] sm:$0xff]
      %v255 = vld [vmem:[%s165 + $0xf2] sm:$0xff]
      %v256 = vld [vmem:[%s165 + $0xfa] sm:$0xff]
      %v257 = vld [vmem:[%s165 + $0x10a] sm:$0xff]
      %v258 = vld [vmem:[%s165 + $0x112] sm:$0xff]
      %v259 = vld [vmem:[%s165 + $0x122] sm:$0xff]
      %v260 = vld [vmem:[%s165 + $0x12a] sm:$0xff]
      %v261 = vld [vmem:[%s165 + $0x13a] sm:$0xff]
      %v262 = vld [vmem:[%s165 + $0x142] sm:$0xff]
      %v263 = vld [vmem:[%s165 + $0x152] sm:$0xff]
      %v264 = vld [vmem:[%s165 + $0x15a] sm:$0xff]
      %v265 = vld [vmem:[%s165 + $0x16a] sm:$0xff]
      %v266 = vld [vmem:[%s165 + $0x172] sm:$0xff]
      %s267 = scalar_lea.vmem %s165, 24
      %v268 = vld [vmem:[%s267] sm:$0xff]
      %v269 = vld [vmem:[%s267 + $0x8] sm:$0xff]
      %v270 = vld [vmem:[%s267 + $0x18] sm:$0xff]
      %v271 = vld [vmem:[%s267 + $0x20] sm:$0xff]
      %v272 = vld [vmem:[%s267 + $0x30] sm:$0xff]
      %v273 = vld [vmem:[%s267 + $0x38] sm:$0xff]
      %v274 = vld [vmem:[%s267 + $0x48] sm:$0xff]
      %v275 = vld [vmem:[%s267 + $0x50] sm:$0xff]
      %v276 = vld [vmem:[%s267 + $0x60] sm:$0xff]
      %v277 = vld [vmem:[%s267 + $0x68] sm:$0xff]
      %v278 = vld [vmem:[%s267 + $0x78] sm:$0xff]
      %v279 = vld [vmem:[%s267 + $0x80] sm:$0xff]
      %v280 = vld [vmem:[%s267 + $0x90] sm:$0xff]
      %v281 = vld [vmem:[%s267 + $0x98] sm:$0xff]
      %v282 = vld [vmem:[%s267 + $0xa8] sm:$0xff]
      %v283 = vld [vmem:[%s267 + $0xb0] sm:$0xff]
      %v284 = vld [vmem:[%s267 + $0xc0] sm:$0xff]
      %v285 = vld [vmem:[%s267 + $0xc8] sm:$0xff]
      %v286 = vld [vmem:[%s267 + $0xd8] sm:$0xff]
      %v287 = vld [vmem:[%s267 + $0xe0] sm:$0xff]
      %v288 = vld [vmem:[%s267 + $0xf0] sm:$0xff]
      %v289 = vld [vmem:[%s267 + $0xf8] sm:$0xff]
      %v290 = vld [vmem:[%s267 + $0x108] sm:$0xff]
      %v291 = vld [vmem:[%s267 + $0x110] sm:$0xff]
      %v292 = vld [vmem:[%s267 + $0x120] sm:$0xff]
      %v293 = vld [vmem:[%s267 + $0x128] sm:$0xff]
      %v294 = vld [vmem:[%s267 + $0x138] sm:$0xff]
      %v295 = vld [vmem:[%s267 + $0x140] sm:$0xff]
      %v296 = vld [vmem:[%s267 + $0x150] sm:$0xff]
      %v297 = vld [vmem:[%s267 + $0x158] sm:$0xff]
      %v298 = vld [vmem:[%s267 + $0x168] sm:$0xff]
      %v299 = vld [vmem:[%s267 + $0x170] sm:$0xff]
      %v300 = vld [vmem:[%s267 + $0x1] sm:$0xff]
      %v301 = vld [vmem:[%s267 + $0x9] sm:$0xff]
      %v302 = vld [vmem:[%s267 + $0x19] sm:$0xff]
      %v303 = vld [vmem:[%s267 + $0x21] sm:$0xff]
      %v304 = vld [vmem:[%s267 + $0x31] sm:$0xff]
      %v305 = vld [vmem:[%s267 + $0x39] sm:$0xff]
      %v306 = vld [vmem:[%s267 + $0x49] sm:$0xff]
      %v307 = vld [vmem:[%s267 + $0x51] sm:$0xff]
      %v308 = vld [vmem:[%s267 + $0x61] sm:$0xff]
      %v309 = vld [vmem:[%s267 + $0x69] sm:$0xff]
      %v310 = vld [vmem:[%s267 + $0x79] sm:$0xff]
      %v311 = vld [vmem:[%s267 + $0x81] sm:$0xff]
      %v312 = vld [vmem:[%s267 + $0x91] sm:$0xff]
      %v313 = vld [vmem:[%s267 + $0x99] sm:$0xff]
      %v314 = vld [vmem:[%s267 + $0xa9] sm:$0xff]
      %v315 = vld [vmem:[%s267 + $0xb1] sm:$0xff]
      %v316 = vld [vmem:[%s267 + $0xc1] sm:$0xff]
      %v317 = vld [vmem:[%s267 + $0xc9] sm:$0xff]
      %v318 = vld [vmem:[%s267 + $0xd9] sm:$0xff]
      %v319 = vld [vmem:[%s267 + $0xe1] sm:$0xff]
      %v320 = vld [vmem:[%s267 + $0xf1] sm:$0xff]
      %v321 = vld [vmem:[%s267 + $0xf9] sm:$0xff]
      %v322 = vld [vmem:[%s267 + $0x109] sm:$0xff]
      %v323 = vld [vmem:[%s267 + $0x111] sm:$0xff]
      %v324 = vld [vmem:[%s267 + $0x121] sm:$0xff]
      %v325 = vld [vmem:[%s267 + $0x129] sm:$0xff]
      %v326 = vld [vmem:[%s267 + $0x139] sm:$0xff]
      %v327 = vld [vmem:[%s267 + $0x141] sm:$0xff]
      %v328 = vld [vmem:[%s267 + $0x151] sm:$0xff]
      %v329 = vld [vmem:[%s267 + $0x159] sm:$0xff]
      %v330 = vld [vmem:[%s267 + $0x169] sm:$0xff]
      %v331 = vld [vmem:[%s267 + $0x171] sm:$0xff]
      %v332 = vld [vmem:[%s267 + $0x2] sm:$0xff]
      %v333 = vld [vmem:[%s267 + $0xa] sm:$0xff]
      %v334 = vld [vmem:[%s267 + $0x1a] sm:$0xff]
      %v335 = vld [vmem:[%s267 + $0x22] sm:$0xff]
      %v336 = vld [vmem:[%s267 + $0x32] sm:$0xff]
      %v337 = vld [vmem:[%s267 + $0x3a] sm:$0xff]
      %v338 = vld [vmem:[%s267 + $0x4a] sm:$0xff]
      %v339 = vld [vmem:[%s267 + $0x52] sm:$0xff]
      %v340 = vld [vmem:[%s267 + $0x62] sm:$0xff]
      %v341 = vld [vmem:[%s267 + $0x6a] sm:$0xff]
      %v342 = vld [vmem:[%s267 + $0x7a] sm:$0xff]
      %v343 = vld [vmem:[%s267 + $0x82] sm:$0xff]
      %v344 = vld [vmem:[%s267 + $0x92] sm:$0xff]
      %v345 = vld [vmem:[%s267 + $0x9a] sm:$0xff]
      %v346 = vld [vmem:[%s267 + $0xaa] sm:$0xff]
      %v347 = vld [vmem:[%s267 + $0xb2] sm:$0xff]
      %v348 = vld [vmem:[%s267 + $0xc2] sm:$0xff]
      %v349 = vld [vmem:[%s267 + $0xca] sm:$0xff]
      %v350 = vld [vmem:[%s267 + $0xda] sm:$0xff]
      %v351 = vld [vmem:[%s267 + $0xe2] sm:$0xff]
      %v352 = vld [vmem:[%s267 + $0xf2] sm:$0xff]
      %v353 = vld [vmem:[%s267 + $0xfa] sm:$0xff]
      %v354 = vld [vmem:[%s267 + $0x10a] sm:$0xff]
      %v355 = vld [vmem:[%s267 + $0x112] sm:$0xff]
      %v356 = vld [vmem:[%s267 + $0x122] sm:$0xff]
      %v357 = vld [vmem:[%s267 + $0x12a] sm:$0xff]
      %v358 = vld [vmem:[%s267 + $0x13a] sm:$0xff]
      %v359 = vld [vmem:[%s267 + $0x142] sm:$0xff]
      %v360 = vld [vmem:[%s267 + $0x152] sm:$0xff]
      %v361 = vld [vmem:[%s267 + $0x15a] sm:$0xff]
      %v362 = vld [vmem:[%s267 + $0x16a] sm:$0xff]
      %v363 = vld [vmem:[%s267 + $0x172] sm:$0xff]
      %s364 = scalar_lea.vmem %s165, 48
      %v365 = vld [vmem:[%s364] sm:$0xff]
      %v366 = vld [vmem:[%s364 + $0x8] sm:$0xff]
      %v367 = vld [vmem:[%s364 + $0x18] sm:$0xff]
      %v368 = vld [vmem:[%s364 + $0x20] sm:$0xff]
      %v369 = vld [vmem:[%s364 + $0x30] sm:$0xff]
      %v370 = vld [vmem:[%s364 + $0x38] sm:$0xff]
      %v371 = vld [vmem:[%s364 + $0x48] sm:$0xff]
      %v372 = vld [vmem:[%s364 + $0x50] sm:$0xff]
      %v373 = vld [vmem:[%s364 + $0x60] sm:$0xff]
      %v374 = vld [vmem:[%s364 + $0x68] sm:$0xff]
      %v375 = vld [vmem:[%s364 + $0x78] sm:$0xff]
      %v376 = vld [vmem:[%s364 + $0x80] sm:$0xff]
      %v377 = vld [vmem:[%s364 + $0x90] sm:$0xff]
      %v378 = vld [vmem:[%s364 + $0x98] sm:$0xff]
      %v379 = vld [vmem:[%s364 + $0xa8] sm:$0xff]
      %v380 = vld [vmem:[%s364 + $0xb0] sm:$0xff]
      %v381 = vld [vmem:[%s364 + $0xc0] sm:$0xff]
      %v382 = vld [vmem:[%s364 + $0xc8] sm:$0xff]
      %v383 = vld [vmem:[%s364 + $0xd8] sm:$0xff]
      %v384 = vld [vmem:[%s364 + $0xe0] sm:$0xff]
      %v385 = vld [vmem:[%s364 + $0xf0] sm:$0xff]
      %v386 = vld [vmem:[%s364 + $0xf8] sm:$0xff]
      %v387 = vld [vmem:[%s364 + $0x108] sm:$0xff]
      %v388 = vld [vmem:[%s364 + $0x110] sm:$0xff]
      %v389 = vld [vmem:[%s364 + $0x120] sm:$0xff]
      %v390 = vld [vmem:[%s364 + $0x128] sm:$0xff]
      %v391 = vld [vmem:[%s364 + $0x138] sm:$0xff]
      %v392 = vld [vmem:[%s364 + $0x140] sm:$0xff]
      %v393 = vld [vmem:[%s364 + $0x150] sm:$0xff]
      %v394 = vld [vmem:[%s364 + $0x158] sm:$0xff]
      %v395 = vld [vmem:[%s364 + $0x168] sm:$0xff]
      %v396 = vld [vmem:[%s364 + $0x170] sm:$0xff]
      %v397 = vld [vmem:[%s364 + $0x1] sm:$0xff]
      %v398 = vld [vmem:[%s364 + $0x9] sm:$0xff]
      %v399 = vld [vmem:[%s364 + $0x19] sm:$0xff]
      %v400 = vld [vmem:[%s364 + $0x21] sm:$0xff]
      %v401 = vld [vmem:[%s364 + $0x31] sm:$0xff]
      %v402 = vld [vmem:[%s364 + $0x39] sm:$0xff]
      %v403 = vld [vmem:[%s364 + $0x49] sm:$0xff]
      %v404 = vld [vmem:[%s364 + $0x51] sm:$0xff]
      %v405 = vld [vmem:[%s364 + $0x61] sm:$0xff]
      %v406 = vld [vmem:[%s364 + $0x69] sm:$0xff]
      %v407 = vld [vmem:[%s364 + $0x79] sm:$0xff]
      %v408 = vld [vmem:[%s364 + $0x81] sm:$0xff]
      %v409 = vld [vmem:[%s364 + $0x91] sm:$0xff]
      %v410 = vld [vmem:[%s364 + $0x99] sm:$0xff]
      %v411 = vld [vmem:[%s364 + $0xa9] sm:$0xff]
      %v412 = vld [vmem:[%s364 + $0xb1] sm:$0xff]
      %v413 = vld [vmem:[%s364 + $0xc1] sm:$0xff]
      %v414 = vld [vmem:[%s364 + $0xc9] sm:$0xff]
      %v415 = vld [vmem:[%s364 + $0xd9] sm:$0xff]
      %v416 = vld [vmem:[%s364 + $0xe1] sm:$0xff]
      %v417 = vld [vmem:[%s364 + $0xf1] sm:$0xff]
      %v418 = vld [vmem:[%s364 + $0xf9] sm:$0xff]
      %v419 = vld [vmem:[%s364 + $0x109] sm:$0xff]
      %v420 = vld [vmem:[%s364 + $0x111] sm:$0xff]
      %v421 = vld [vmem:[%s364 + $0x121] sm:$0xff]
      %v422 = vld [vmem:[%s364 + $0x129] sm:$0xff]
      %v423 = vld [vmem:[%s364 + $0x139] sm:$0xff]
      %v424 = vld [vmem:[%s364 + $0x141] sm:$0xff]
      %v425 = vld [vmem:[%s364 + $0x151] sm:$0xff]
      %v426 = vld [vmem:[%s364 + $0x159] sm:$0xff]
      %v427 = vld [vmem:[%s364 + $0x169] sm:$0xff]
      %v428 = vld [vmem:[%s364 + $0x171] sm:$0xff]
      %v429 = vld [vmem:[%s364 + $0x2] sm:$0xff]
      %v430 = vld [vmem:[%s364 + $0xa] sm:$0xff]
      %v431 = vld [vmem:[%s364 + $0x1a] sm:$0xff]
      %v432 = vld [vmem:[%s364 + $0x22] sm:$0xff]
      %v433 = vld [vmem:[%s364 + $0x32] sm:$0xff]
      %v434 = vld [vmem:[%s364 + $0x3a] sm:$0xff]
      %v435 = vld [vmem:[%s364 + $0x4a] sm:$0xff]
      %v436 = vld [vmem:[%s364 + $0x52] sm:$0xff]
      %v437 = vld [vmem:[%s364 + $0x62] sm:$0xff]
      %v438 = vld [vmem:[%s364 + $0x6a] sm:$0xff]
      %v439 = vld [vmem:[%s364 + $0x7a] sm:$0xff]
      %v440 = vld [vmem:[%s364 + $0x82] sm:$0xff]
      %v441 = vld [vmem:[%s364 + $0x92] sm:$0xff]
      %v442 = vld [vmem:[%s364 + $0x9a] sm:$0xff]
      %v443 = vld [vmem:[%s364 + $0xaa] sm:$0xff]
      %v444 = vld [vmem:[%s364 + $0xb2] sm:$0xff]
      %v445 = vld [vmem:[%s364 + $0xc2] sm:$0xff]
      %v446 = vld [vmem:[%s364 + $0xca] sm:$0xff]
      %v447 = vld [vmem:[%s364 + $0xda] sm:$0xff]
      %v448 = vld [vmem:[%s364 + $0xe2] sm:$0xff]
      %v449 = vld [vmem:[%s364 + $0xf2] sm:$0xff]
      %v450 = vld [vmem:[%s364 + $0xfa] sm:$0xff]
      %v451 = vld [vmem:[%s364 + $0x10a] sm:$0xff]
      %v452 = vld [vmem:[%s364 + $0x112] sm:$0xff]
      %v453 = vld [vmem:[%s364 + $0x122] sm:$0xff]
      %v454 = vld [vmem:[%s364 + $0x12a] sm:$0xff]
      %v455 = vld [vmem:[%s364 + $0x13a] sm:$0xff]
      %v456 = vld [vmem:[%s364 + $0x142] sm:$0xff]
      %v457 = vld [vmem:[%s364 + $0x152] sm:$0xff]
      %v458 = vld [vmem:[%s364 + $0x15a] sm:$0xff]
      %v459 = vld [vmem:[%s364 + $0x16a] sm:$0xff]
      %v460 = vld [vmem:[%s364 + $0x172] sm:$0xff]
      %493 = vrot.lane.b32.xlu0 %v203, 16
      %v494 = vpop.permute.xlu0 %493
      %495 = vrot.lane.b32.xlu0 %v204, 16
      %v496 = vpop.permute.xlu0 %495
      %497 = vrot.lane.b32.xlu0 %v205, 16
      %v498 = vpop.permute.xlu0 %497
      %499 = vrot.lane.b32.xlu0 %v206, 16
      %v500 = vpop.permute.xlu0 %499
      %501 = vrot.lane.b32.xlu0 %v207, 16
      %v502 = vpop.permute.xlu0 %501
      %503 = vrot.lane.b32.xlu0 %v208, 16
      %v504 = vpop.permute.xlu0 %503
      %505 = vrot.lane.b32.xlu0 %v209, 16
      %v506 = vpop.permute.xlu0 %505
      %507 = vrot.lane.b32.xlu0 %v210, 16
      %v508 = vpop.permute.xlu0 %507
      %509 = vrot.lane.b32.xlu0 %v211, 16
      %v510 = vpop.permute.xlu0 %509
      %511 = vrot.lane.b32.xlu0 %v212, 16
      %v512 = vpop.permute.xlu0 %511
      %513 = vrot.lane.b32.xlu0 %v213, 16
      %v514 = vpop.permute.xlu0 %513
      %515 = vrot.lane.b32.xlu0 %v214, 16
      %v516 = vpop.permute.xlu0 %515
      %517 = vrot.lane.b32.xlu0 %v215, 16
      %v518 = vpop.permute.xlu0 %517
      %519 = vrot.lane.b32.xlu0 %v216, 16
      %v520 = vpop.permute.xlu0 %519
      %521 = vrot.lane.b32.xlu0 %v217, 16
      %v522 = vpop.permute.xlu0 %521
      %523 = vrot.lane.b32.xlu0 %v218, 16
      %v524 = vpop.permute.xlu0 %523
      %525 = vrot.lane.b32.xlu0 %v219, 16
      %v526 = vpop.permute.xlu0 %525
      %527 = vrot.lane.b32.xlu0 %v220, 16
      %v528 = vpop.permute.xlu0 %527
      %529 = vrot.lane.b32.xlu0 %v221, 16
      %v530 = vpop.permute.xlu0 %529
      %531 = vrot.lane.b32.xlu0 %v222, 16
      %v532 = vpop.permute.xlu0 %531
      %533 = vrot.lane.b32.xlu0 %v223, 16
      %v534 = vpop.permute.xlu0 %533
      %535 = vrot.lane.b32.xlu0 %v224, 16
      %v536 = vpop.permute.xlu0 %535
      %537 = vrot.lane.b32.xlu0 %v225, 16
      %v538 = vpop.permute.xlu0 %537
      %539 = vrot.lane.b32.xlu0 %v226, 16
      %v540 = vpop.permute.xlu0 %539
      %541 = vrot.lane.b32.xlu0 %v227, 16
      %v542 = vpop.permute.xlu0 %541
      %543 = vrot.lane.b32.xlu0 %v228, 16
      %v544 = vpop.permute.xlu0 %543
      %545 = vrot.lane.b32.xlu0 %v229, 16
      %v546 = vpop.permute.xlu0 %545
      %547 = vrot.lane.b32.xlu0 %v230, 16
      %v548 = vpop.permute.xlu0 %547
      %549 = vrot.lane.b32.xlu0 %v231, 16
      %v550 = vpop.permute.xlu0 %549
      %551 = vrot.lane.b32.xlu0 %v232, 16
      %v552 = vpop.permute.xlu0 %551
      %553 = vrot.lane.b32.xlu0 %v233, 16
      %v554 = vpop.permute.xlu0 %553
      %555 = vrot.lane.b32.xlu0 %v234, 16
      %v556 = vpop.permute.xlu0 %555
      %621 = vrot.lane.b32.xlu0 %v235, 32
      %v622 = vpop.permute.xlu0 %621
      %623 = vrot.lane.b32.xlu0 %v236, 32
      %v624 = vpop.permute.xlu0 %623
      %625 = vrot.lane.b32.xlu0 %v237, 32
      %v626 = vpop.permute.xlu0 %625
      %627 = vrot.lane.b32.xlu0 %v238, 32
      %v628 = vpop.permute.xlu0 %627
      %629 = vrot.lane.b32.xlu0 %v239, 32
      %v630 = vpop.permute.xlu0 %629
      %631 = vrot.lane.b32.xlu0 %v240, 32
      %v632 = vpop.permute.xlu0 %631
      %633 = vrot.lane.b32.xlu0 %v241, 32
      %v634 = vpop.permute.xlu0 %633
      %635 = vrot.lane.b32.xlu0 %v242, 32
      %v636 = vpop.permute.xlu0 %635
      %637 = vrot.lane.b32.xlu0 %v243, 32
      %v638 = vpop.permute.xlu0 %637
      %639 = vrot.lane.b32.xlu0 %v244, 32
      %v640 = vpop.permute.xlu0 %639
      %641 = vrot.lane.b32.xlu0 %v245, 32
      %v642 = vpop.permute.xlu0 %641
      %643 = vrot.lane.b32.xlu0 %v246, 32
      %v644 = vpop.permute.xlu0 %643
      %645 = vrot.lane.b32.xlu0 %v247, 32
      %v646 = vpop.permute.xlu0 %645
      %647 = vrot.lane.b32.xlu0 %v248, 32
      %v648 = vpop.permute.xlu0 %647
      %649 = vrot.lane.b32.xlu0 %v249, 32
      %v650 = vpop.permute.xlu0 %649
      %651 = vrot.lane.b32.xlu0 %v250, 32
      %v652 = vpop.permute.xlu0 %651
      %653 = vrot.lane.b32.xlu0 %v251, 32
      %v654 = vpop.permute.xlu0 %653
      %655 = vrot.lane.b32.xlu0 %v252, 32
      %v656 = vpop.permute.xlu0 %655
      %657 = vrot.lane.b32.xlu0 %v253, 32
      %v658 = vpop.permute.xlu0 %657
      %659 = vrot.lane.b32.xlu0 %v254, 32
      %v660 = vpop.permute.xlu0 %659
      %661 = vrot.lane.b32.xlu0 %v255, 32
      %v662 = vpop.permute.xlu0 %661
      %663 = vrot.lane.b32.xlu0 %v256, 32
      %v664 = vpop.permute.xlu0 %663
      %665 = vrot.lane.b32.xlu0 %v257, 32
      %v666 = vpop.permute.xlu0 %665
      %667 = vrot.lane.b32.xlu0 %v258, 32
      %v668 = vpop.permute.xlu0 %667
      %669 = vrot.lane.b32.xlu0 %v259, 32
      %v670 = vpop.permute.xlu0 %669
      %671 = vrot.lane.b32.xlu0 %v260, 32
      %v672 = vpop.permute.xlu0 %671
      %673 = vrot.lane.b32.xlu0 %v261, 32
      %v674 = vpop.permute.xlu0 %673
      %675 = vrot.lane.b32.xlu0 %v262, 32
      %v676 = vpop.permute.xlu0 %675
      %677 = vrot.lane.b32.xlu0 %v263, 32
      %v678 = vpop.permute.xlu0 %677
      %679 = vrot.lane.b32.xlu0 %v264, 32
      %v680 = vpop.permute.xlu0 %679
      %681 = vrot.lane.b32.xlu0 %v265, 32
      %v682 = vpop.permute.xlu0 %681
      %683 = vrot.lane.b32.xlu0 %v266, 32
      %v684 = vpop.permute.xlu0 %683
      %749 = vrot.lane.b32.xlu0 %v268, 48
      %v750 = vpop.permute.xlu0 %749
      %751 = vrot.lane.b32.xlu0 %v269, 48
      %v752 = vpop.permute.xlu0 %751
      %753 = vrot.lane.b32.xlu0 %v270, 48
      %v754 = vpop.permute.xlu0 %753
      %755 = vrot.lane.b32.xlu0 %v271, 48
      %v756 = vpop.permute.xlu0 %755
      %757 = vrot.lane.b32.xlu0 %v272, 48
      %v758 = vpop.permute.xlu0 %757
      %759 = vrot.lane.b32.xlu0 %v273, 48
      %v760 = vpop.permute.xlu0 %759
      %761 = vrot.lane.b32.xlu0 %v274, 48
      %v762 = vpop.permute.xlu0 %761
      %763 = vrot.lane.b32.xlu0 %v275, 48
      %v764 = vpop.permute.xlu0 %763
      %765 = vrot.lane.b32.xlu0 %v276, 48
      %v766 = vpop.permute.xlu0 %765
      %767 = vrot.lane.b32.xlu0 %v277, 48
      %v768 = vpop.permute.xlu0 %767
      %769 = vrot.lane.b32.xlu0 %v278, 48
      %v770 = vpop.permute.xlu0 %769
      %771 = vrot.lane.b32.xlu0 %v279, 48
      %v772 = vpop.permute.xlu0 %771
      %773 = vrot.lane.b32.xlu0 %v280, 48
      %v774 = vpop.permute.xlu0 %773
      %775 = vrot.lane.b32.xlu0 %v281, 48
      %v776 = vpop.permute.xlu0 %775
      %777 = vrot.lane.b32.xlu0 %v282, 48
      %v778 = vpop.permute.xlu0 %777
      %779 = vrot.lane.b32.xlu0 %v283, 48
      %v780 = vpop.permute.xlu0 %779
      %781 = vrot.lane.b32.xlu0 %v284, 48
      %v782 = vpop.permute.xlu0 %781
      %783 = vrot.lane.b32.xlu0 %v285, 48
      %v784 = vpop.permute.xlu0 %783
      %785 = vrot.lane.b32.xlu0 %v286, 48
      %v786 = vpop.permute.xlu0 %785
      %787 = vrot.lane.b32.xlu0 %v287, 48
      %v788 = vpop.permute.xlu0 %787
      %789 = vrot.lane.b32.xlu0 %v288, 48
      %v790 = vpop.permute.xlu0 %789
      %791 = vrot.lane.b32.xlu0 %v289, 48
      %v792 = vpop.permute.xlu0 %791
      %793 = vrot.lane.b32.xlu0 %v290, 48
      %v794 = vpop.permute.xlu0 %793
      %795 = vrot.lane.b32.xlu0 %v291, 48
      %v796 = vpop.permute.xlu0 %795
      %797 = vrot.lane.b32.xlu0 %v292, 48
      %v798 = vpop.permute.xlu0 %797
      %799 = vrot.lane.b32.xlu0 %v293, 48
      %v800 = vpop.permute.xlu0 %799
      %801 = vrot.lane.b32.xlu0 %v294, 48
      %v802 = vpop.permute.xlu0 %801
      %803 = vrot.lane.b32.xlu0 %v295, 48
      %v804 = vpop.permute.xlu0 %803
      %805 = vrot.lane.b32.xlu0 %v296, 48
      %v806 = vpop.permute.xlu0 %805
      %807 = vrot.lane.b32.xlu0 %v297, 48
      %v808 = vpop.permute.xlu0 %807
      %809 = vrot.lane.b32.xlu0 %v298, 48
      %v810 = vpop.permute.xlu0 %809
      %811 = vrot.lane.b32.xlu0 %v299, 48
      %v812 = vpop.permute.xlu0 %811
      %877 = vrot.lane.b32.xlu0 %v300, 64
      %v878 = vpop.permute.xlu0 %877
      %879 = vrot.lane.b32.xlu0 %v301, 64
      %v880 = vpop.permute.xlu0 %879
      %881 = vrot.lane.b32.xlu0 %v302, 64
      %v882 = vpop.permute.xlu0 %881
      %883 = vrot.lane.b32.xlu0 %v303, 64
      %v884 = vpop.permute.xlu0 %883
      %885 = vrot.lane.b32.xlu0 %v304, 64
      %v886 = vpop.permute.xlu0 %885
      %887 = vrot.lane.b32.xlu0 %v305, 64
      %v888 = vpop.permute.xlu0 %887
      %889 = vrot.lane.b32.xlu0 %v306, 64
      %v890 = vpop.permute.xlu0 %889
      %891 = vrot.lane.b32.xlu0 %v307, 64
      %v892 = vpop.permute.xlu0 %891
      %893 = vrot.lane.b32.xlu0 %v308, 64
      %v894 = vpop.permute.xlu0 %893
      %895 = vrot.lane.b32.xlu0 %v309, 64
      %v896 = vpop.permute.xlu0 %895
      %897 = vrot.lane.b32.xlu0 %v310, 64
      %v898 = vpop.permute.xlu0 %897
      %899 = vrot.lane.b32.xlu0 %v311, 64
      %v900 = vpop.permute.xlu0 %899
      %901 = vrot.lane.b32.xlu0 %v312, 64
      %v902 = vpop.permute.xlu0 %901
      %903 = vrot.lane.b32.xlu0 %v313, 64
      %v904 = vpop.permute.xlu0 %903
      %905 = vrot.lane.b32.xlu0 %v314, 64
      %v906 = vpop.permute.xlu0 %905
      %907 = vrot.lane.b32.xlu0 %v315, 64
      %v908 = vpop.permute.xlu0 %907
      %909 = vrot.lane.b32.xlu0 %v316, 64
      %v910 = vpop.permute.xlu0 %909
      %911 = vrot.lane.b32.xlu0 %v317, 64
      %v912 = vpop.permute.xlu0 %911
      %913 = vrot.lane.b32.xlu0 %v318, 64
      %v914 = vpop.permute.xlu0 %913
      %915 = vrot.lane.b32.xlu0 %v319, 64
      %v916 = vpop.permute.xlu0 %915
      %917 = vrot.lane.b32.xlu0 %v320, 64
      %v918 = vpop.permute.xlu0 %917
      %919 = vrot.lane.b32.xlu0 %v321, 64
      %v920 = vpop.permute.xlu0 %919
      %921 = vrot.lane.b32.xlu0 %v322, 64
      %v922 = vpop.permute.xlu0 %921
      %923 = vrot.lane.b32.xlu0 %v323, 64
      %v924 = vpop.permute.xlu0 %923
      %925 = vrot.lane.b32.xlu0 %v324, 64
      %v926 = vpop.permute.xlu0 %925
      %927 = vrot.lane.b32.xlu0 %v325, 64
      %v928 = vpop.permute.xlu0 %927
      %929 = vrot.lane.b32.xlu0 %v326, 64
      %v930 = vpop.permute.xlu0 %929
      %931 = vrot.lane.b32.xlu0 %v327, 64
      %v932 = vpop.permute.xlu0 %931
      %933 = vrot.lane.b32.xlu0 %v328, 64
      %v934 = vpop.permute.xlu0 %933
      %935 = vrot.lane.b32.xlu0 %v329, 64
      %v936 = vpop.permute.xlu0 %935
      %937 = vrot.lane.b32.xlu0 %v330, 64
      %v938 = vpop.permute.xlu0 %937
      %939 = vrot.lane.b32.xlu0 %v331, 64
      %v940 = vpop.permute.xlu0 %939
      %1005 = vrot.lane.b32.xlu0 %v332, 80
      %v1006 = vpop.permute.xlu0 %1005
      %1007 = vrot.lane.b32.xlu0 %v333, 80
      %v1008 = vpop.permute.xlu0 %1007
      %1009 = vrot.lane.b32.xlu0 %v334, 80
      %v1010 = vpop.permute.xlu0 %1009
      %1011 = vrot.lane.b32.xlu0 %v335, 80
      %v1012 = vpop.permute.xlu0 %1011
      %1013 = vrot.lane.b32.xlu0 %v336, 80
      %v1014 = vpop.permute.xlu0 %1013
      %1015 = vrot.lane.b32.xlu0 %v337, 80
      %v1016 = vpop.permute.xlu0 %1015
      %1017 = vrot.lane.b32.xlu0 %v338, 80
      %v1018 = vpop.permute.xlu0 %1017
      %1019 = vrot.lane.b32.xlu0 %v339, 80
      %v1020 = vpop.permute.xlu0 %1019
      %1021 = vrot.lane.b32.xlu0 %v340, 80
      %v1022 = vpop.permute.xlu0 %1021
      %1023 = vrot.lane.b32.xlu0 %v341, 80
      %v1024 = vpop.permute.xlu0 %1023
      %1025 = vrot.lane.b32.xlu0 %v342, 80
      %v1026 = vpop.permute.xlu0 %1025
      %1027 = vrot.lane.b32.xlu0 %v343, 80
      %v1028 = vpop.permute.xlu0 %1027
      %1029 = vrot.lane.b32.xlu0 %v344, 80
      %v1030 = vpop.permute.xlu0 %1029
      %1031 = vrot.lane.b32.xlu0 %v345, 80
      %v1032 = vpop.permute.xlu0 %1031
      %1033 = vrot.lane.b32.xlu0 %v346, 80
      %v1034 = vpop.permute.xlu0 %1033
      %1035 = vrot.lane.b32.xlu0 %v347, 80
      %v1036 = vpop.permute.xlu0 %1035
      %1037 = vrot.lane.b32.xlu0 %v348, 80
      %v1038 = vpop.permute.xlu0 %1037
      %1039 = vrot.lane.b32.xlu0 %v349, 80
      %v1040 = vpop.permute.xlu0 %1039
      %1041 = vrot.lane.b32.xlu0 %v350, 80
      %v1042 = vpop.permute.xlu0 %1041
      %1043 = vrot.lane.b32.xlu0 %v351, 80
      %v1044 = vpop.permute.xlu0 %1043
      %1045 = vrot.lane.b32.xlu0 %v352, 80
      %v1046 = vpop.permute.xlu0 %1045
      %1047 = vrot.lane.b32.xlu0 %v353, 80
      %v1048 = vpop.permute.xlu0 %1047
      %1049 = vrot.lane.b32.xlu0 %v354, 80
      %v1050 = vpop.permute.xlu0 %1049
      %1051 = vrot.lane.b32.xlu0 %v355, 80
      %v1052 = vpop.permute.xlu0 %1051
      %1053 = vrot.lane.b32.xlu0 %v356, 80
      %v1054 = vpop.permute.xlu0 %1053
      %1055 = vrot.lane.b32.xlu0 %v357, 80
      %v1056 = vpop.permute.xlu0 %1055
      %1057 = vrot.lane.b32.xlu0 %v358, 80
      %v1058 = vpop.permute.xlu0 %1057
      %1059 = vrot.lane.b32.xlu0 %v359, 80
      %v1060 = vpop.permute.xlu0 %1059
      %1061 = vrot.lane.b32.xlu0 %v360, 80
      %v1062 = vpop.permute.xlu0 %1061
      %1063 = vrot.lane.b32.xlu0 %v361, 80
      %v1064 = vpop.permute.xlu0 %1063
      %1065 = vrot.lane.b32.xlu0 %v362, 80
      %v1066 = vpop.permute.xlu0 %1065
      %1067 = vrot.lane.b32.xlu0 %v363, 80
      %v1068 = vpop.permute.xlu0 %1067
      %1133 = vrot.lane.b32.xlu0 %v365, 96
      %v1134 = vpop.permute.xlu0 %1133
      %1135 = vrot.lane.b32.xlu0 %v366, 96
      %v1136 = vpop.permute.xlu0 %1135
      %1137 = vrot.lane.b32.xlu0 %v367, 96
      %v1138 = vpop.permute.xlu0 %1137
      %1139 = vrot.lane.b32.xlu0 %v368, 96
      %v1140 = vpop.permute.xlu0 %1139
      %1141 = vrot.lane.b32.xlu0 %v369, 96
      %v1142 = vpop.permute.xlu0 %1141
      %1143 = vrot.lane.b32.xlu0 %v370, 96
      %v1144 = vpop.permute.xlu0 %1143
      %1145 = vrot.lane.b32.xlu0 %v371, 96
      %v1146 = vpop.permute.xlu0 %1145
      %1147 = vrot.lane.b32.xlu0 %v372, 96
      %v1148 = vpop.permute.xlu0 %1147
      %1149 = vrot.lane.b32.xlu0 %v373, 96
      %v1150 = vpop.permute.xlu0 %1149
      %1151 = vrot.lane.b32.xlu0 %v374, 96
      %v1152 = vpop.permute.xlu0 %1151
      %1153 = vrot.lane.b32.xlu0 %v375, 96
      %v1154 = vpop.permute.xlu0 %1153
      %1155 = vrot.lane.b32.xlu0 %v376, 96
      %v1156 = vpop.permute.xlu0 %1155
      %1157 = vrot.lane.b32.xlu0 %v377, 96
      %v1158 = vpop.permute.xlu0 %1157
      %1159 = vrot.lane.b32.xlu0 %v378, 96
      %v1160 = vpop.permute.xlu0 %1159
      %1161 = vrot.lane.b32.xlu0 %v379, 96
      %v1162 = vpop.permute.xlu0 %1161
      %1163 = vrot.lane.b32.xlu0 %v380, 96
      %v1164 = vpop.permute.xlu0 %1163
      %1165 = vrot.lane.b32.xlu0 %v381, 96
      %v1166 = vpop.permute.xlu0 %1165
      %1167 = vrot.lane.b32.xlu0 %v382, 96
      %v1168 = vpop.permute.xlu0 %1167
      %1169 = vrot.lane.b32.xlu0 %v383, 96
      %v1170 = vpop.permute.xlu0 %1169
      %1171 = vrot.lane.b32.xlu0 %v384, 96
      %v1172 = vpop.permute.xlu0 %1171
      %1173 = vrot.lane.b32.xlu0 %v385, 96
      %v1174 = vpop.permute.xlu0 %1173
      %1175 = vrot.lane.b32.xlu0 %v386, 96
      %v1176 = vpop.permute.xlu0 %1175
      %1177 = vrot.lane.b32.xlu0 %v387, 96
      %v1178 = vpop.permute.xlu0 %1177
      %1179 = vrot.lane.b32.xlu0 %v388, 96
      %v1180 = vpop.permute.xlu0 %1179
      %1181 = vrot.lane.b32.xlu0 %v389, 96
      %v1182 = vpop.permute.xlu0 %1181
      %1183 = vrot.lane.b32.xlu0 %v390, 96
      %v1184 = vpop.permute.xlu0 %1183
      %1185 = vrot.lane.b32.xlu0 %v391, 96
      %v1186 = vpop.permute.xlu0 %1185
      %1187 = vrot.lane.b32.xlu0 %v392, 96
      %v1188 = vpop.permute.xlu0 %1187
      %1189 = vrot.lane.b32.xlu0 %v393, 96
      %v1190 = vpop.permute.xlu0 %1189
      %1191 = vrot.lane.b32.xlu0 %v394, 96
      %v1192 = vpop.permute.xlu0 %1191
      %1193 = vrot.lane.b32.xlu0 %v395, 96
      %v1194 = vpop.permute.xlu0 %1193
      %1195 = vrot.lane.b32.xlu0 %v396, 96
      %v1196 = vpop.permute.xlu0 %1195
      %1261 = vrot.lane.b32.xlu0 %v397, 112
      %v1262 = vpop.permute.xlu0 %1261
      %1263 = vrot.lane.b32.xlu0 %v398, 112
      %v1264 = vpop.permute.xlu0 %1263
      %1265 = vrot.lane.b32.xlu0 %v399, 112
      %v1266 = vpop.permute.xlu0 %1265
      %1267 = vrot.lane.b32.xlu0 %v400, 112
      %v1268 = vpop.permute.xlu0 %1267
      %1269 = vrot.lane.b32.xlu0 %v401, 112
      %v1270 = vpop.permute.xlu0 %1269
      %1271 = vrot.lane.b32.xlu0 %v402, 112
      %v1272 = vpop.permute.xlu0 %1271
      %1273 = vrot.lane.b32.xlu0 %v403, 112
      %v1274 = vpop.permute.xlu0 %1273
      %1275 = vrot.lane.b32.xlu0 %v404, 112
      %v1276 = vpop.permute.xlu0 %1275
      %1277 = vrot.lane.b32.xlu0 %v405, 112
      %v1278 = vpop.permute.xlu0 %1277
      %1279 = vrot.lane.b32.xlu0 %v406, 112
      %v1280 = vpop.permute.xlu0 %1279
      %1281 = vrot.lane.b32.xlu0 %v407, 112
      %v1282 = vpop.permute.xlu0 %1281
      %1283 = vrot.lane.b32.xlu0 %v408, 112
      %v1284 = vpop.permute.xlu0 %1283
      %1285 = vrot.lane.b32.xlu0 %v409, 112
      %v1286 = vpop.permute.xlu0 %1285
      %1287 = vrot.lane.b32.xlu0 %v410, 112
      %v1288 = vpop.permute.xlu0 %1287
      %1289 = vrot.lane.b32.xlu0 %v411, 112
      %v1290 = vpop.permute.xlu0 %1289
      %1291 = vrot.lane.b32.xlu0 %v412, 112
      %v1292 = vpop.permute.xlu0 %1291
      %1293 = vrot.lane.b32.xlu0 %v413, 112
      %v1294 = vpop.permute.xlu0 %1293
      %1295 = vrot.lane.b32.xlu0 %v414, 112
      %v1296 = vpop.permute.xlu0 %1295
      %1297 = vrot.lane.b32.xlu0 %v415, 112
      %v1298 = vpop.permute.xlu0 %1297
      %1299 = vrot.lane.b32.xlu0 %v416, 112
      %v1300 = vpop.permute.xlu0 %1299
      %1301 = vrot.lane.b32.xlu0 %v417, 112
      %v1302 = vpop.permute.xlu0 %1301
      %1303 = vrot.lane.b32.xlu0 %v418, 112
      %v1304 = vpop.permute.xlu0 %1303
      %1305 = vrot.lane.b32.xlu0 %v419, 112
      %v1306 = vpop.permute.xlu0 %1305
      %1307 = vrot.lane.b32.xlu0 %v420, 112
      %v1308 = vpop.permute.xlu0 %1307
      %1309 = vrot.lane.b32.xlu0 %v421, 112
      %v1310 = vpop.permute.xlu0 %1309
      %1311 = vrot.lane.b32.xlu0 %v422, 112
      %v1312 = vpop.permute.xlu0 %1311
      %1313 = vrot.lane.b32.xlu0 %v423, 112
      %v1314 = vpop.permute.xlu0 %1313
      %1315 = vrot.lane.b32.xlu0 %v424, 112
      %v1316 = vpop.permute.xlu0 %1315
      %1317 = vrot.lane.b32.xlu0 %v425, 112
      %v1318 = vpop.permute.xlu0 %1317
      %1319 = vrot.lane.b32.xlu0 %v426, 112
      %v1320 = vpop.permute.xlu0 %1319
      %1321 = vrot.lane.b32.xlu0 %v427, 112
      %v1322 = vpop.permute.xlu0 %1321
      %1323 = vrot.lane.b32.xlu0 %v428, 112
      %v1324 = vpop.permute.xlu0 %1323
      %vm1357 = vcmask 130048
      %v1358 = vsel %vm1357, %v171, %v494
      %v1359 = vsel %vm1357, %v172, %v496
      %v1360 = vsel %vm1357, %v173, %v498
      %v1361 = vsel %vm1357, %v174, %v500
      %v1362 = vsel %vm1357, %v175, %v502
      %v1363 = vsel %vm1357, %v176, %v504
      %v1364 = vsel %vm1357, %v177, %v506
      %v1365 = vsel %vm1357, %v178, %v508
      %v1366 = vsel %vm1357, %v179, %v510
      %v1367 = vsel %vm1357, %v180, %v512
      %v1368 = vsel %vm1357, %v181, %v514
      %v1369 = vsel %vm1357, %v182, %v516
      %v1370 = vsel %vm1357, %v183, %v518
      %v1371 = vsel %vm1357, %v184, %v520
      %v1372 = vsel %vm1357, %v185, %v522
      %v1373 = vsel %vm1357, %v186, %v524
      %v1374 = vsel %vm1357, %v187, %v526
      %v1375 = vsel %vm1357, %v188, %v528
      %v1376 = vsel %vm1357, %v189, %v530
      %v1377 = vsel %vm1357, %v190, %v532
      %v1378 = vsel %vm1357, %v191, %v534
      %v1379 = vsel %vm1357, %v192, %v536
      %v1380 = vsel %vm1357, %v193, %v538
      %v1381 = vsel %vm1357, %v194, %v540
      %v1382 = vsel %vm1357, %v195, %v542
      %v1383 = vsel %vm1357, %v196, %v544
      %v1384 = vsel %vm1357, %v197, %v546
      %v1385 = vsel %vm1357, %v198, %v548
      %v1386 = vsel %vm1357, %v199, %v550
      %v1387 = vsel %vm1357, %v200, %v552
      %v1388 = vsel %vm1357, %v201, %v554
      %v1389 = vsel %vm1357, %v202, %v556
      %vm1390 = vcmask 261120
      %v1391 = vsel %vm1390, %v1358, %v622
      %v1392 = vsel %vm1390, %v1359, %v624
      %v1393 = vsel %vm1390, %v1360, %v626
      %v1394 = vsel %vm1390, %v1361, %v628
      %v1395 = vsel %vm1390, %v1362, %v630
      %v1396 = vsel %vm1390, %v1363, %v632
      %v1397 = vsel %vm1390, %v1364, %v634
      %v1398 = vsel %vm1390, %v1365, %v636
      %v1399 = vsel %vm1390, %v1366, %v638
      %v1400 = vsel %vm1390, %v1367, %v640
      %v1401 = vsel %vm1390, %v1368, %v642
      %v1402 = vsel %vm1390, %v1369, %v644
      %v1403 = vsel %vm1390, %v1370, %v646
      %v1404 = vsel %vm1390, %v1371, %v648
      %v1405 = vsel %vm1390, %v1372, %v650
      %v1406 = vsel %vm1390, %v1373, %v652
      %v1407 = vsel %vm1390, %v1374, %v654
      %v1408 = vsel %vm1390, %v1375, %v656
      %v1409 = vsel %vm1390, %v1376, %v658
      %v1410 = vsel %vm1390, %v1377, %v660
      %v1411 = vsel %vm1390, %v1378, %v662
      %v1412 = vsel %vm1390, %v1379, %v664
      %v1413 = vsel %vm1390, %v1380, %v666
      %v1414 = vsel %vm1390, %v1381, %v668
      %v1415 = vsel %vm1390, %v1382, %v670
      %v1416 = vsel %vm1390, %v1383, %v672
      %v1417 = vsel %vm1390, %v1384, %v674
      %v1418 = vsel %vm1390, %v1385, %v676
      %v1419 = vsel %vm1390, %v1386, %v678
      %v1420 = vsel %vm1390, %v1387, %v680
      %v1421 = vsel %vm1390, %v1388, %v682
      %v1422 = vsel %vm1390, %v1389, %v684
      %vm1423 = vcmask 392192
      %v1424 = vsel %vm1423, %v1391, %v750
      %v1425 = vsel %vm1423, %v1392, %v752
      %v1426 = vsel %vm1423, %v1393, %v754
      %v1427 = vsel %vm1423, %v1394, %v756
      %v1428 = vsel %vm1423, %v1395, %v758
      %v1429 = vsel %vm1423, %v1396, %v760
      %v1430 = vsel %vm1423, %v1397, %v762
      %v1431 = vsel %vm1423, %v1398, %v764
      %v1432 = vsel %vm1423, %v1399, %v766
      %v1433 = vsel %vm1423, %v1400, %v768
      %v1434 = vsel %vm1423, %v1401, %v770
      %v1435 = vsel %vm1423, %v1402, %v772
      %v1436 = vsel %vm1423, %v1403, %v774
      %v1437 = vsel %vm1423, %v1404, %v776
      %v1438 = vsel %vm1423, %v1405, %v778
      %v1439 = vsel %vm1423, %v1406, %v780
      %v1440 = vsel %vm1423, %v1407, %v782
      %v1441 = vsel %vm1423, %v1408, %v784
      %v1442 = vsel %vm1423, %v1409, %v786
      %v1443 = vsel %vm1423, %v1410, %v788
      %v1444 = vsel %vm1423, %v1411, %v790
      %v1445 = vsel %vm1423, %v1412, %v792
      %v1446 = vsel %vm1423, %v1413, %v794
      %v1447 = vsel %vm1423, %v1414, %v796
      %v1448 = vsel %vm1423, %v1415, %v798
      %v1449 = vsel %vm1423, %v1416, %v800
      %v1450 = vsel %vm1423, %v1417, %v802
      %v1451 = vsel %vm1423, %v1418, %v804
      %v1452 = vsel %vm1423, %v1419, %v806
      %v1453 = vsel %vm1423, %v1420, %v808
      %v1454 = vsel %vm1423, %v1421, %v810
      %v1455 = vsel %vm1423, %v1422, %v812
      %vm1456 = vcmask 523264
      %v1457 = vsel %vm1456, %v1424, %v878
      %v1458 = vsel %vm1456, %v1425, %v880
      %v1459 = vsel %vm1456, %v1426, %v882
      %v1460 = vsel %vm1456, %v1427, %v884
      %v1461 = vsel %vm1456, %v1428, %v886
      %v1462 = vsel %vm1456, %v1429, %v888
      %v1463 = vsel %vm1456, %v1430, %v890
      %v1464 = vsel %vm1456, %v1431, %v892
      %v1465 = vsel %vm1456, %v1432, %v894
      %v1466 = vsel %vm1456, %v1433, %v896
      %v1467 = vsel %vm1456, %v1434, %v898
      %v1468 = vsel %vm1456, %v1435, %v900
      %v1469 = vsel %vm1456, %v1436, %v902
      %v1470 = vsel %vm1456, %v1437, %v904
      %v1471 = vsel %vm1456, %v1438, %v906
      %v1472 = vsel %vm1456, %v1439, %v908
      %v1473 = vsel %vm1456, %v1440, %v910
      %v1474 = vsel %vm1456, %v1441, %v912
      %v1475 = vsel %vm1456, %v1442, %v914
      %v1476 = vsel %vm1456, %v1443, %v916
      %v1477 = vsel %vm1456, %v1444, %v918
      %v1478 = vsel %vm1456, %v1445, %v920
      %v1479 = vsel %vm1456, %v1446, %v922
      %v1480 = vsel %vm1456, %v1447, %v924
      %v1481 = vsel %vm1456, %v1448, %v926
      %v1482 = vsel %vm1456, %v1449, %v928
      %v1483 = vsel %vm1456, %v1450, %v930
      %v1484 = vsel %vm1456, %v1451, %v932
      %v1485 = vsel %vm1456, %v1452, %v934
      %v1486 = vsel %vm1456, %v1453, %v936
      %v1487 = vsel %vm1456, %v1454, %v938
      %v1488 = vsel %vm1456, %v1455, %v940
      %vm1489 = vcmask 654336
      %v1490 = vsel %vm1489, %v1457, %v1006
      %v1491 = vsel %vm1489, %v1458, %v1008
      %v1492 = vsel %vm1489, %v1459, %v1010
      %v1493 = vsel %vm1489, %v1460, %v1012
      %v1494 = vsel %vm1489, %v1461, %v1014
      %v1495 = vsel %vm1489, %v1462, %v1016
      %v1496 = vsel %vm1489, %v1463, %v1018
      %v1497 = vsel %vm1489, %v1464, %v1020
      %v1498 = vsel %vm1489, %v1465, %v1022
      %v1499 = vsel %vm1489, %v1466, %v1024
      %v1500 = vsel %vm1489, %v1467, %v1026
      %v1501 = vsel %vm1489, %v1468, %v1028
      %v1502 = vsel %vm1489, %v1469, %v1030
      %v1503 = vsel %vm1489, %v1470, %v1032
      %v1504 = vsel %vm1489, %v1471, %v1034
      %v1505 = vsel %vm1489, %v1472, %v1036
      %v1506 = vsel %vm1489, %v1473, %v1038
      %v1507 = vsel %vm1489, %v1474, %v1040
      %v1508 = vsel %vm1489, %v1475, %v1042
      %v1509 = vsel %vm1489, %v1476, %v1044
      %v1510 = vsel %vm1489, %v1477, %v1046
      %v1511 = vsel %vm1489, %v1478, %v1048
      %v1512 = vsel %vm1489, %v1479, %v1050
      %v1513 = vsel %vm1489, %v1480, %v1052
      %v1514 = vsel %vm1489, %v1481, %v1054
      %v1515 = vsel %vm1489, %v1482, %v1056
      %v1516 = vsel %vm1489, %v1483, %v1058
      %v1517 = vsel %vm1489, %v1484, %v1060
      %v1518 = vsel %vm1489, %v1485, %v1062
      %v1519 = vsel %vm1489, %v1486, %v1064
      %v1520 = vsel %vm1489, %v1487, %v1066
      %v1521 = vsel %vm1489, %v1488, %v1068
      %vm1522 = vcmask 785408
      %v1523 = vsel %vm1522, %v1490, %v1134
      %v1524 = vsel %vm1522, %v1491, %v1136
      %v1525 = vsel %vm1522, %v1492, %v1138
      %v1526 = vsel %vm1522, %v1493, %v1140
      %v1527 = vsel %vm1522, %v1494, %v1142
      %v1528 = vsel %vm1522, %v1495, %v1144
      %v1529 = vsel %vm1522, %v1496, %v1146
      %v1530 = vsel %vm1522, %v1497, %v1148
      %v1531 = vsel %vm1522, %v1498, %v1150
      %v1532 = vsel %vm1522, %v1499, %v1152
      %v1533 = vsel %vm1522, %v1500, %v1154
      %v1534 = vsel %vm1522, %v1501, %v1156
      %v1535 = vsel %vm1522, %v1502, %v1158
      %v1536 = vsel %vm1522, %v1503, %v1160
      %v1537 = vsel %vm1522, %v1504, %v1162
      %v1538 = vsel %vm1522, %v1505, %v1164
      %v1539 = vsel %vm1522, %v1506, %v1166
      %v1540 = vsel %vm1522, %v1507, %v1168
      %v1541 = vsel %vm1522, %v1508, %v1170
      %v1542 = vsel %vm1522, %v1509, %v1172
      %v1543 = vsel %vm1522, %v1510, %v1174
      %v1544 = vsel %vm1522, %v1511, %v1176
      %v1545 = vsel %vm1522, %v1512, %v1178
      %v1546 = vsel %vm1522, %v1513, %v1180
      %v1547 = vsel %vm1522, %v1514, %v1182
      %v1548 = vsel %vm1522, %v1515, %v1184
      %v1549 = vsel %vm1522, %v1516, %v1186
      %v1550 = vsel %vm1522, %v1517, %v1188
      %v1551 = vsel %vm1522, %v1518, %v1190
      %v1552 = vsel %vm1522, %v1519, %v1192
      %v1553 = vsel %vm1522, %v1520, %v1194
      %v1554 = vsel %vm1522, %v1521, %v1196
      %vm1555 = vcmask 916480
      %v1556 = vsel %vm1555, %v1523, %v1262
      %v1557 = vsel %vm1555, %v1524, %v1264
      %v1558 = vsel %vm1555, %v1525, %v1266
      %v1559 = vsel %vm1555, %v1526, %v1268
      %v1560 = vsel %vm1555, %v1527, %v1270
      %v1561 = vsel %vm1555, %v1528, %v1272
      %v1562 = vsel %vm1555, %v1529, %v1274
      %v1563 = vsel %vm1555, %v1530, %v1276
      %v1564 = vsel %vm1555, %v1531, %v1278
      %v1565 = vsel %vm1555, %v1532, %v1280
      %v1566 = vsel %vm1555, %v1533, %v1282
      %v1567 = vsel %vm1555, %v1534, %v1284
      %v1568 = vsel %vm1555, %v1535, %v1286
      %v1569 = vsel %vm1555, %v1536, %v1288
      %v1570 = vsel %vm1555, %v1537, %v1290
      %v1571 = vsel %vm1555, %v1538, %v1292
      %v1572 = vsel %vm1555, %v1539, %v1294
      %v1573 = vsel %vm1555, %v1540, %v1296
      %v1574 = vsel %vm1555, %v1541, %v1298
      %v1575 = vsel %vm1555, %v1542, %v1300
      %v1576 = vsel %vm1555, %v1543, %v1302
      %v1577 = vsel %vm1555, %v1544, %v1304
      %v1578 = vsel %vm1555, %v1545, %v1306
      %v1579 = vsel %vm1555, %v1546, %v1308
      %v1580 = vsel %vm1555, %v1547, %v1310
      %v1581 = vsel %vm1555, %v1548, %v1312
      %v1582 = vsel %vm1555, %v1549, %v1314
      %v1583 = vsel %vm1555, %v1550, %v1316
      %v1584 = vsel %vm1555, %v1551, %v1318
      %v1585 = vsel %vm1555, %v1552, %v1320
      %v1586 = vsel %vm1555, %v1553, %v1322
      %v1587 = vsel %vm1555, %v1554, %v1324
      %v1588 = vld [vmem:[%s1] sm:$0xff]
      %v1589 = vld [vmem:[%s1 + $0x8] sm:$0xff]
      %v1590 = vld [vmem:[%s1 + $0x10] sm:$0xff]
      %v1591 = vld [vmem:[%s1 + $0x18] sm:$0xff]
      %v1592 = vld [vmem:[%s1 + $0x20] sm:$0xff]
      %v1593 = vld [vmem:[%s1 + $0x28] sm:$0xff]
      %v1594 = vld [vmem:[%s1 + $0x30] sm:$0xff]
      %v1595 = vld [vmem:[%s1 + $0x38] sm:$0xff]
      %v1596 = vld [vmem:[%s1 + $0x40] sm:$0xff]
      %v1597 = vld [vmem:[%s1 + $0x48] sm:$0xff]
      %v1598 = vld [vmem:[%s1 + $0x50] sm:$0xff]
      %v1599 = vld [vmem:[%s1 + $0x58] sm:$0xff]
      %v1600 = vld [vmem:[%s1 + $0x60] sm:$0xff]
      %v1601 = vld [vmem:[%s1 + $0x68] sm:$0xff]
      %v1602 = vld [vmem:[%s1 + $0x70] sm:$0xff]
      %v1603 = vld [vmem:[%s1 + $0x78] sm:$0xff]
      %v1604 = vld [vmem:[%s1 + $0x80] sm:$0xff]
      %v1605 = vld [vmem:[%s1 + $0x88] sm:$0xff]
      %v1606 = vld [vmem:[%s2] sm:$0x1]
      %v1608 = vperm.slane %v1606, 0
      %v1611 = vsel %vm1357, %v429, 0
      %v1614 = vsel %vm1357, %v430, 0
      %v1617 = vsel %vm1357, %v431, 0
      %v1620 = vsel %vm1357, %v432, 0
      %v1623 = vsel %vm1357, %v433, 0
      %v1626 = vsel %vm1357, %v434, 0
      %v1629 = vsel %vm1357, %v435, 0
      %v1632 = vsel %vm1357, %v436, 0
      %v1635 = vsel %vm1357, %v437, 0
      %v1638 = vsel %vm1357, %v438, 0
      %v1641 = vsel %vm1357, %v439, 0
      %v1644 = vsel %vm1357, %v440, 0
      %v1647 = vsel %vm1357, %v441, 0
      %v1650 = vsel %vm1357, %v442, 0
      %v1653 = vsel %vm1357, %v443, 0
      %v1656 = vsel %vm1357, %v444, 0
      %v1659 = vsel %vm1357, %v445, 0
      %v1662 = vsel %vm1357, %v446, 0
      %v1665 = vsel %vm1357, %v447, 0
      %v1668 = vsel %vm1357, %v448, 0
      %v1671 = vsel %vm1357, %v449, 0
      %v1674 = vsel %vm1357, %v450, 0
      %v1677 = vsel %vm1357, %v451, 0
      %v1680 = vsel %vm1357, %v452, 0
      %v1683 = vsel %vm1357, %v453, 0
      %v1686 = vsel %vm1357, %v454, 0
      %v1689 = vsel %vm1357, %v455, 0
      %v1692 = vsel %vm1357, %v456, 0
      %v1695 = vsel %vm1357, %v457, 0
      %v1698 = vsel %vm1357, %v458, 0
      %v1701 = vsel %vm1357, %v459, 0
      %v1704 = vsel %vm1357, %v460, 0
      %1706 = vmatpush.msra.mxu0 %v1603
      %1707 = vmatpush.msra.mxu0 %v1602
      %1708 = vmatpush.msra.mxu0 %v1601
      %1709 = vmatpush.msra.mxu0 %v1600
      %1710 = vmatpush.msra.mxu0 %v1599
      %1711 = vmatpush.msra.mxu0 %v1598
      %1712 = vmatpush.msra.mxu0 %v1597
      %1713 = vmatpush.msra.mxu0 %v1596
      %1714 = vmatpush.msra.mxu0 %v1595
      %1715 = vmatpush.msra.mxu0 %v1594
      %1716 = vmatpush.msra.mxu0 %v1593
      %1717 = vmatpush.msra.mxu0 %v1592
      %1718 = vmatpush.msra.mxu0 %v1591
      %1719 = vmatpush.msra.mxu0 %v1590
      %1720 = vmatpush.msra.mxu0 %v1589
      %1721 = vmatpush.msra.mxu0 %v1588
      %1722 = vmatmul.f32.gmra.mxu0 %v1556
      %v1723 = vpop.f32.mrf.mxu0
      %v1724 = vadd.f32 %v1608, %v1723
      %1725 = vmatmul.f32.gmra.mxu0 %v1557
      %v1726 = vpop.f32.mrf.mxu0
      %v1727 = vadd.f32 %v1608, %v1726
      %1728 = vmatmul.f32.gmra.mxu0 %v1558
      %v1729 = vpop.f32.mrf.mxu0
      %v1730 = vadd.f32 %v1608, %v1729
      %1731 = vmatmul.f32.gmra.mxu0 %v1559
      %v1732 = vpop.f32.mrf.mxu0
      %v1733 = vadd.f32 %v1608, %v1732
      %1734 = vmatmul.f32.gmra.mxu0 %v1560
      %v1735 = vpop.f32.mrf.mxu0
      %v1736 = vadd.f32 %v1608, %v1735
      %1737 = vmatmul.f32.gmra.mxu0 %v1561
      %v1738 = vpop.f32.mrf.mxu0
      %v1739 = vadd.f32 %v1608, %v1738
      %1740 = vmatmul.f32.gmra.mxu0 %v1562
      %v1741 = vpop.f32.mrf.mxu0
      %v1742 = vadd.f32 %v1608, %v1741
      %1743 = vmatmul.f32.gmra.mxu0 %v1563
      %v1744 = vpop.f32.mrf.mxu0
      %v1745 = vadd.f32 %v1608, %v1744
      %1746 = vmatmul.f32.gmra.mxu0 %v1564
      %v1747 = vpop.f32.mrf.mxu0
      %v1748 = vadd.f32 %v1608, %v1747
      %1749 = vmatmul.f32.gmra.mxu0 %v1565
      %v1750 = vpop.f32.mrf.mxu0
      %v1751 = vadd.f32 %v1608, %v1750
      %1752 = vmatmul.f32.gmra.mxu0 %v1566
      %v1753 = vpop.f32.mrf.mxu0
      %v1754 = vadd.f32 %v1608, %v1753
      %1755 = vmatmul.f32.gmra.mxu0 %v1567
      %v1756 = vpop.f32.mrf.mxu0
      %v1757 = vadd.f32 %v1608, %v1756
      %1758 = vmatmul.f32.gmra.mxu0 %v1568
      %v1759 = vpop.f32.mrf.mxu0
      %v1760 = vadd.f32 %v1608, %v1759
      %1761 = vmatmul.f32.gmra.mxu0 %v1569
      %v1762 = vpop.f32.mrf.mxu0
      %v1763 = vadd.f32 %v1608, %v1762
      %1764 = vmatmul.f32.gmra.mxu0 %v1570
      %v1765 = vpop.f32.mrf.mxu0
      %v1766 = vadd.f32 %v1608, %v1765
      %1767 = vmatmul.f32.gmra.mxu0 %v1571
      %v1768 = vpop.f32.mrf.mxu0
      %v1769 = vadd.f32 %v1608, %v1768
      %1770 = vmatmul.f32.gmra.mxu0 %v1572
      %v1771 = vpop.f32.mrf.mxu0
      %v1772 = vadd.f32 %v1608, %v1771
      %1773 = vmatmul.f32.gmra.mxu0 %v1573
      %v1774 = vpop.f32.mrf.mxu0
      %v1775 = vadd.f32 %v1608, %v1774
      %1776 = vmatmul.f32.gmra.mxu0 %v1574
      %v1777 = vpop.f32.mrf.mxu0
      %v1778 = vadd.f32 %v1608, %v1777
      %1779 = vmatmul.f32.gmra.mxu0 %v1575
      %v1780 = vpop.f32.mrf.mxu0
      %v1781 = vadd.f32 %v1608, %v1780
      %1782 = vmatmul.f32.gmra.mxu0 %v1576
      %v1783 = vpop.f32.mrf.mxu0
      %v1784 = vadd.f32 %v1608, %v1783
      %1785 = vmatmul.f32.gmra.mxu0 %v1577
      %v1786 = vpop.f32.mrf.mxu0
      %v1787 = vadd.f32 %v1608, %v1786
      %1788 = vmatmul.f32.gmra.mxu0 %v1578
      %v1789 = vpop.f32.mrf.mxu0
      %v1790 = vadd.f32 %v1608, %v1789
      %1791 = vmatmul.f32.gmra.mxu0 %v1579
      %v1792 = vpop.f32.mrf.mxu0
      %v1793 = vadd.f32 %v1608, %v1792
      %1794 = vmatmul.f32.gmra.mxu0 %v1580
      %v1795 = vpop.f32.mrf.mxu0
      %v1796 = vadd.f32 %v1608, %v1795
      %1797 = vmatmul.f32.gmra.mxu0 %v1581
      %v1798 = vpop.f32.mrf.mxu0
      %v1799 = vadd.f32 %v1608, %v1798
      %1800 = vmatmul.f32.gmra.mxu0 %v1582
      %v1801 = vpop.f32.mrf.mxu0
      %v1802 = vadd.f32 %v1608, %v1801
      %1803 = vmatmul.f32.gmra.mxu0 %v1583
      %v1804 = vpop.f32.mrf.mxu0
      %v1805 = vadd.f32 %v1608, %v1804
      %1806 = vmatmul.f32.gmra.mxu0 %v1584
      %v1807 = vpop.f32.mrf.mxu0
      %v1808 = vadd.f32 %v1608, %v1807
      %1809 = vmatmul.f32.gmra.mxu0 %v1585
      %v1810 = vpop.f32.mrf.mxu0
      %v1811 = vadd.f32 %v1608, %v1810
      %1812 = vmatmul.f32.gmra.mxu0 %v1586
      %v1813 = vpop.f32.mrf.mxu0
      %v1814 = vadd.f32 %v1608, %v1813
      %1815 = vmatmul.f32.gmra.mxu0 %v1587
      %v1816 = vpop.f32.mrf.mxu0
      %v1817 = vadd.f32 %v1608, %v1816
      %1818 = vdwg.mxu0
      %1819 = vmatpush.msra.mxu0 0.0
      %1820 = vmatpush.msra.mxu0 0.0
      %1821 = vmatpush.msra.mxu0 0.0
      %1822 = vmatpush.msra.mxu0 0.0
      %1823 = vmatpush.msra.mxu0 0.0
      %1824 = vmatpush.msra.mxu0 0.0
      %1825 = vmatpush.msra.mxu0 0.0
      %1826 = vmatpush.msra.mxu0 0.0
      %1827 = vmatpush.msra.mxu0 0.0
      %1828 = vmatpush.msra.mxu0 0.0
      %1829 = vmatpush.msra.mxu0 0.0
      %1830 = vmatpush.msra.mxu0 0.0
      %1831 = vmatpush.msra.mxu0 0.0
      %1832 = vmatpush.msra.mxu0 0.0
      %1833 = vmatpush.msra.mxu0 %v1605
      %1834 = vmatpush.msra.mxu0 %v1604
      %1835 = vmatmul.f32.gmra.mxu0 %v1611
      %v1836 = vpop.f32.mrf.mxu0
      %v1837 = vadd.f32 %v1724, %v1836
      %1838 = vmatmul.f32.gmra.mxu0 %v1614
      %v1839 = vpop.f32.mrf.mxu0
      %v1840 = vadd.f32 %v1727, %v1839
      %1841 = vmatmul.f32.gmra.mxu0 %v1617
      %v1842 = vpop.f32.mrf.mxu0
      %v1843 = vadd.f32 %v1730, %v1842
      %1844 = vmatmul.f32.gmra.mxu0 %v1620
      %v1845 = vpop.f32.mrf.mxu0
      %v1846 = vadd.f32 %v1733, %v1845
      %1847 = vmatmul.f32.gmra.mxu0 %v1623
      %v1848 = vpop.f32.mrf.mxu0
      %v1849 = vadd.f32 %v1736, %v1848
      %1850 = vmatmul.f32.gmra.mxu0 %v1626
      %v1851 = vpop.f32.mrf.mxu0
      %v1852 = vadd.f32 %v1739, %v1851
      %1853 = vmatmul.f32.gmra.mxu0 %v1629
      %v1854 = vpop.f32.mrf.mxu0
      %v1855 = vadd.f32 %v1742, %v1854
      %1856 = vmatmul.f32.gmra.mxu0 %v1632
      %v1857 = vpop.f32.mrf.mxu0
      %v1858 = vadd.f32 %v1745, %v1857
      %1859 = vmatmul.f32.gmra.mxu0 %v1635
      %v1860 = vpop.f32.mrf.mxu0
      %v1861 = vadd.f32 %v1748, %v1860
      %1862 = vmatmul.f32.gmra.mxu0 %v1638
      %v1863 = vpop.f32.mrf.mxu0
      %v1864 = vadd.f32 %v1751, %v1863
      %1865 = vmatmul.f32.gmra.mxu0 %v1641
      %v1866 = vpop.f32.mrf.mxu0
      %v1867 = vadd.f32 %v1754, %v1866
      %1868 = vmatmul.f32.gmra.mxu0 %v1644
      %v1869 = vpop.f32.mrf.mxu0
      %v1870 = vadd.f32 %v1757, %v1869
      %1871 = vmatmul.f32.gmra.mxu0 %v1647
      %v1872 = vpop.f32.mrf.mxu0
      %v1873 = vadd.f32 %v1760, %v1872
      %1874 = vmatmul.f32.gmra.mxu0 %v1650
      %v1875 = vpop.f32.mrf.mxu0
      %v1876 = vadd.f32 %v1763, %v1875
      %1877 = vmatmul.f32.gmra.mxu0 %v1653
      %v1878 = vpop.f32.mrf.mxu0
      %v1879 = vadd.f32 %v1766, %v1878
      %1880 = vmatmul.f32.gmra.mxu0 %v1656
      %v1881 = vpop.f32.mrf.mxu0
      %v1882 = vadd.f32 %v1769, %v1881
      %1883 = vmatmul.f32.gmra.mxu0 %v1659
      %v1884 = vpop.f32.mrf.mxu0
      %v1885 = vadd.f32 %v1772, %v1884
      %1886 = vmatmul.f32.gmra.mxu0 %v1662
      %v1887 = vpop.f32.mrf.mxu0
      %v1888 = vadd.f32 %v1775, %v1887
      %1889 = vmatmul.f32.gmra.mxu0 %v1665
      %v1890 = vpop.f32.mrf.mxu0
      %v1891 = vadd.f32 %v1778, %v1890
      %1892 = vmatmul.f32.gmra.mxu0 %v1668
      %v1893 = vpop.f32.mrf.mxu0
      %v1894 = vadd.f32 %v1781, %v1893
      %1895 = vmatmul.f32.gmra.mxu0 %v1671
      %v1896 = vpop.f32.mrf.mxu0
      %v1897 = vadd.f32 %v1784, %v1896
      %1898 = vmatmul.f32.gmra.mxu0 %v1674
      %v1899 = vpop.f32.mrf.mxu0
      %v1900 = vadd.f32 %v1787, %v1899
      %1901 = vmatmul.f32.gmra.mxu0 %v1677
      %v1902 = vpop.f32.mrf.mxu0
      %v1903 = vadd.f32 %v1790, %v1902
      %1904 = vmatmul.f32.gmra.mxu0 %v1680
      %v1905 = vpop.f32.mrf.mxu0
      %v1906 = vadd.f32 %v1793, %v1905
      %1907 = vmatmul.f32.gmra.mxu0 %v1683
      %v1908 = vpop.f32.mrf.mxu0
      %v1909 = vadd.f32 %v1796, %v1908
      %1910 = vmatmul.f32.gmra.mxu0 %v1686
      %v1911 = vpop.f32.mrf.mxu0
      %v1912 = vadd.f32 %v1799, %v1911
      %1913 = vmatmul.f32.gmra.mxu0 %v1689
      %v1914 = vpop.f32.mrf.mxu0
      %v1915 = vadd.f32 %v1802, %v1914
      %1916 = vmatmul.f32.gmra.mxu0 %v1692
      %v1917 = vpop.f32.mrf.mxu0
      %v1918 = vadd.f32 %v1805, %v1917
      %1919 = vmatmul.f32.gmra.mxu0 %v1695
      %v1920 = vpop.f32.mrf.mxu0
      %v1921 = vadd.f32 %v1808, %v1920
      %1922 = vmatmul.f32.gmra.mxu0 %v1698
      %v1923 = vpop.f32.mrf.mxu0
      %v1924 = vadd.f32 %v1811, %v1923
      %1925 = vmatmul.f32.gmra.mxu0 %v1701
      %v1926 = vpop.f32.mrf.mxu0
      %v1927 = vadd.f32 %v1814, %v1926
      %1928 = vmatmul.f32.gmra.mxu0 %v1704
      %v1929 = vpop.f32.mrf.mxu0
      %v1930 = vadd.f32 %v1817, %v1929
      %1931 = vdwg.mxu0
      %1932 = vst.msk [vmem:[%s170] sm:$0xff] %vm1357, %v1837
      %1933 = vst.msk [vmem:[%s170 + $0x8] sm:$0xff] %vm1357, %v1840
      %1934 = vst.msk [vmem:[%s170 + $0x10] sm:$0xff] %vm1357, %v1843
      %1935 = vst.msk [vmem:[%s170 + $0x18] sm:$0xff] %vm1357, %v1846
      %1936 = vst.msk [vmem:[%s170 + $0x20] sm:$0xff] %vm1357, %v1849
      %1937 = vst.msk [vmem:[%s170 + $0x28] sm:$0xff] %vm1357, %v1852
      %1938 = vst.msk [vmem:[%s170 + $0x30] sm:$0xff] %vm1357, %v1855
      %1939 = vst.msk [vmem:[%s170 + $0x38] sm:$0xff] %vm1357, %v1858
      %1940 = vst.msk [vmem:[%s170 + $0x40] sm:$0xff] %vm1357, %v1861
      %1941 = vst.msk [vmem:[%s170 + $0x48] sm:$0xff] %vm1357, %v1864
      %1942 = vst.msk [vmem:[%s170 + $0x50] sm:$0xff] %vm1357, %v1867
      %1943 = vst.msk [vmem:[%s170 + $0x58] sm:$0xff] %vm1357, %v1870
      %1944 = vst.msk [vmem:[%s170 + $0x60] sm:$0xff] %vm1357, %v1873
      %1945 = vst.msk [vmem:[%s170 + $0x68] sm:$0xff] %vm1357, %v1876
      %1946 = vst.msk [vmem:[%s170 + $0x70] sm:$0xff] %vm1357, %v1879
      %1947 = vst.msk [vmem:[%s170 + $0x78] sm:$0xff] %vm1357, %v1882
      %1948 = vst.msk [vmem:[%s170 + $0x80] sm:$0xff] %vm1357, %v1885
      %1949 = vst.msk [vmem:[%s170 + $0x88] sm:$0xff] %vm1357, %v1888
      %1950 = vst.msk [vmem:[%s170 + $0x90] sm:$0xff] %vm1357, %v1891
      %1951 = vst.msk [vmem:[%s170 + $0x98] sm:$0xff] %vm1357, %v1894
      %1952 = vst.msk [vmem:[%s170 + $0xa0] sm:$0xff] %vm1357, %v1897
      %1953 = vst.msk [vmem:[%s170 + $0xa8] sm:$0xff] %vm1357, %v1900
      %1954 = vst.msk [vmem:[%s170 + $0xb0] sm:$0xff] %vm1357, %v1903
      %1955 = vst.msk [vmem:[%s170 + $0xb8] sm:$0xff] %vm1357, %v1906
      %1956 = vst.msk [vmem:[%s170 + $0xc0] sm:$0xff] %vm1357, %v1909
      %1957 = vst.msk [vmem:[%s170 + $0xc8] sm:$0xff] %vm1357, %v1912
      %1958 = vst.msk [vmem:[%s170 + $0xd0] sm:$0xff] %vm1357, %v1915
      %1959 = vst.msk [vmem:[%s170 + $0xd8] sm:$0xff] %vm1357, %v1918
      %1960 = vst.msk [vmem:[%s170 + $0xe0] sm:$0xff] %vm1357, %v1921
      %1961 = vst.msk [vmem:[%s170 + $0xe8] sm:$0xff] %vm1357, %v1924
      %1962 = vst.msk [vmem:[%s170 + $0xf0] sm:$0xff] %vm1357, %v1927
      %1963 = vst.msk [vmem:[%s170 + $0xf8] sm:$0xff] %vm1357, %v1930
      %p1964 = scmp.lt.s32.totalorder %s14, 1
      %s1965 = scalar_select %p1964, %s14, 1
      %s1966 = smul.addr %s1965, 32
      %s1967 = smul.addr %s1966, 8
      %s1968 = scalar_lea.vmem %s3, %s1967
      // Predicated region
      $region33: #{_lambda_.6} parent=31 // pred_check
        %p1969 = pneg %p100
      $region34: #{_lambda_.6} parent=31 // pred_check_branch
        %1971 = sbr.rel (%p1969) target = $region36
      $region35: #{_lambda_.6} parent=31 // pred_region
        _
      $region36: #{_lambda_.6} parent=31 // pred_fallthru
        _
    $region32: #{_lambda_.6} parent=5 // pred_fallthru
      _
    %p1972 = scmp.le.s32.totalorder 2, %s9
    // Predicated region
    $region37: #{_lambda_.6} parent=5 // pred_check
      %p1973 = pneg %p1972
    $region38: #{_lambda_.6} parent=5 // pred_check_branch
      %1975 = sbr.rel (%p1973) target = $region40
    $region39: #{_lambda_.6} parent=5 // pred_region
      %s1976 = ssub.s32 %s9, 2
      // Predicated region
      $region41: #{_lambda_.6} parent=39 // pred_check
        %p1977 = pneg %p106
      $region42: #{_lambda_.6} parent=39 // pred_check_branch
        %1979 = sbr.rel (%p1977) target = $region44
      $region43: #{_lambda_.6} parent=39 // pred_region
        %p1980 = scmp.lt.s32.totalorder %s15, 1
        %s1981 = scalar_select %p1980, %s15, 1
        %s1982 = smul.addr %s1981, 32
        %s1983 = smul.addr %s1982, 8
        %s1984 = scalar_lea.vmem %s3, %s1983
      $region44: #{_lambda_.6} parent=39 // pred_fallthru
        _
    $region40: #{_lambda_.6} parent=5 // pred_fallthru
      _
  $region6: #{_lambda_.6} parent=0 // loop_footer
    %s13 = sadd.s32 1, %s9
  $region7: #{_lambda_.6} parent=0 // loop_footer_branch
    %8 = sbr.rel target = $region3
  $region8: #{_lambda_.6} parent=0 // loop_exit
    _

// kernel: _lambda_.7
$region0: #{_lambda_.7}
  #allocation0 [shape = 'u32[]', space=smem, size = 0x4, offset = 0x4, fixed_abs, tag = 'smem constant byte address 0x4 - core index']
  #allocation1 [shape = 'u32[72,128]{1,0:T(1,128)}', space=vmem, size = 0x9000, scoped, tag = 'internal scratch']
  %s0 = inlined_call_operand.vmem [shape: f32[2,18,18,16], index: 0, kind: input, shape index: {}]
  %s1 = inlined_call_operand.vmem [shape: f32[144,20], index: 1, kind: input, shape index: {}]
  %s2 = inlined_call_operand.vmem [shape: f32[2,256,8], index: 2, kind: output, shape index: {0}]
  %s3 = inlined_call_operand.vmem [shape: f32[2,256,8], index: 3, kind: output, shape index: {1}]
  %s4 = inlined_call_operand.vmem [shape: f32[2,256,4], index: 4, kind: output, shape index: {2}]
  %s5 = inlined_call_operand.vmem [shape: f32[2,1,8], index: 5, kind: output, shape index: {3}]
  %s6 = inlined_call_operand.vmem [shape: f32[2,1,8], index: 6, kind: output, shape index: {4}]
  %s7 = inlined_call_operand.vmem [shape: f32[2,1,4], index: 7, kind: output, shape index: {5}]
  %s8 = inlined_call_operand.vmem [shape: f32[2,1,4], index: 8, kind: output, shape index: {6}]
  %9 = xla_tuple %s2, %s3, %s4, %s5, %s6, %s7, %s8
  %s10 = sld [smem:[#allocation0]]
  $region89: #{_lambda_.7} parent=0
    _
  %s12 = ssub.s32 1, %s10
  %s13 = scalar_select 0, %s12, %s10
  loop: start=0, step=1, limit=4
  $region2: #{_lambda_.7} parent=0 // loop_pre_header
    _
  $region3: #{_lambda_.7} parent=0 // loop_header
    %s15 = sphi 0, %s19
    %p16 = scmp.ge.s32.totalorder %s15, 4
    %s25 = sphi 0, %s27
    %s28 = sphi 0, %s25
    %s29 = sphi 0, %s28
    %s45 = sphi 0, %s29
    %s49 = sphi 0, %s49
    %s51 = sphi 0, %s49
    %s52 = sphi 0, %s51
    %s66 = sphi 0, %s52
    %s72 = sphi 0, %s74
    %s75 = sphi 0, %s72
    %s76 = sphi 0, %s75
    %s92 = sphi 0, %s76
    %s98 = sphi 0, %s100
    %s101 = sphi 0, %s98
    %s102 = sphi 0, %s101
    %s118 = sphi 0, %s102
    %s124 = sphi 0, %s126
    %s127 = sphi 0, %s124
    %s128 = sphi 0, %s127
    %s144 = sphi 0, %s128
    %s150 = sphi 0, %s152
    %s153 = sphi 0, %s150
    %s154 = sphi 0, %s153
    %s170 = sphi 0, %s154
    %s176 = sphi 0, %s178
    %s179 = sphi 0, %s176
    %s180 = sphi 0, %s179
    %s196 = sphi 0, %s180
    %s202 = sphi 0, %s204
    %s205 = sphi 0, %s202
    %s206 = sphi 0, %s205
    %s222 = sphi 0, %s206
    %s228 = sphi 0, %s230
    %s231 = sphi 0, %s228
    %s232 = sphi 0, %s231
    %s248 = sphi 0, %s232
  $region4: #{_lambda_.7} parent=0 // loop_header_branch
    %18 = sbr.rel (%p16) target = $region8
  $region5: #{_lambda_.7} parent=0 // loop_body
    %s20 = ssub.s32 %s15, 1
    %s21 = ssub.s32 %s15, 2
    %s22 = sadd.s32 %s15, 1
    %s23 = ssub.s32 %s15, %s22
    %p24 = scmp.eq.s32.totalorder %s23, 0
    %s26 = sadd.s32 %s25, 1
    %s27 = scalar_select %p24, %s25, %s26
    %p30 = pneg %p24
    %p31 = scmp.eq.s32.totalorder %s15, 1
    %p32 = por %p30, %p31
    %p33 = scmp.ne.s32.totalorder %s25, %s28
    %p34 = scmp.eq.s32.totalorder %s15, 0
    %p35 = por %p33, %p34
    %p36 = scmp.ne.s32.totalorder %s25, %s28
    %p37 = scmp.eq.s32.totalorder %s20, 1
    %p38 = por %p36, %p37
    %p39 = scmp.ne.s32.totalorder %s28, %s29
    %p40 = scmp.eq.s32.totalorder %s20, 0
    %p41 = por %p39, %p40
    %p42 = scmp.ne.s32.totalorder %s28, %s29
    %p43 = scmp.eq.s32.totalorder %s21, 1
    %p44 = por %p42, %p43
    %p46 = scmp.ne.s32.totalorder %s29, %s45
    %p47 = scmp.eq.s32.totalorder %s21, 0
    %p48 = por %p46, %p47
    %s50 = sadd.s32 %s49, 1
    %p53 = scmp.eq.s32.totalorder %s15, 1
    %p54 = scmp.ne.s32.totalorder %s49, %s51
    %p55 = scmp.eq.s32.totalorder %s15, 0
    %p56 = por %p54, %p55
    %p57 = scmp.ne.s32.totalorder %s49, %s51
    %p58 = scmp.eq.s32.totalorder %s20, 1
    %p59 = por %p57, %p58
    %p60 = scmp.ne.s32.totalorder %s51, %s52
    %p61 = scmp.eq.s32.totalorder %s20, 0
    %p62 = por %p60, %p61
    %p63 = scmp.ne.s32.totalorder %s51, %s52
    %p64 = scmp.eq.s32.totalorder %s21, 1
    %p65 = por %p63, %p64
    %p67 = scmp.ne.s32.totalorder %s52, %s66
    %p68 = scmp.eq.s32.totalorder %s21, 0
    %p69 = por %p67, %p68
    %s70 = ssub.s32 %s15, %s22
    %p71 = scmp.eq.s32.totalorder %s70, 0
    %s73 = sadd.s32 %s72, 1
    %s74 = scalar_select %p71, %s72, %s73
    %p77 = pneg %p71
    %p78 = scmp.eq.s32.totalorder %s15, 1
    %p79 = por %p77, %p78
    %p80 = scmp.ne.s32.totalorder %s72, %s75
    %p81 = scmp.eq.s32.totalorder %s15, 0
    %p82 = por %p80, %p81
    %p83 = scmp.ne.s32.totalorder %s72, %s75
    %p84 = scmp.eq.s32.totalorder %s20, 1
    %p85 = por %p83, %p84
    %p86 = scmp.ne.s32.totalorder %s75, %s76
    %p87 = scmp.eq.s32.totalorder %s20, 0
    %p88 = por %p86, %p87
    %p89 = scmp.ne.s32.totalorder %s75, %s76
    %p90 = scmp.eq.s32.totalorder %s21, 1
    %p91 = por %p89, %p90
    %p93 = scmp.ne.s32.totalorder %s76, %s92
    %p94 = scmp.eq.s32.totalorder %s21, 0
    %p95 = por %p93, %p94
    %s96 = ssub.s32 %s15, %s22
    %p97 = scmp.eq.s32.totalorder %s96, 0
    %s99 = sadd.s32 %s98, 1
    %s100 = scalar_select %p97, %s98, %s99
    %p103 = pneg %p97
    %p104 = scmp.eq.s32.totalorder %s15, 1
    %p105 = por %p103, %p104
    %p106 = scmp.ne.s32.totalorder %s98, %s101
    %p107 = scmp.eq.s32.totalorder %s15, 0
    %p108 = por %p106, %p107
    %p109 = scmp.ne.s32.totalorder %s98, %s101
    %p110 = scmp.eq.s32.totalorder %s20, 1
    %p111 = por %p109, %p110
    %p112 = scmp.ne.s32.totalorder %s101, %s102
    %p113 = scmp.eq.s32.totalorder %s20, 0
    %p114 = por %p112, %p113
    %p115 = scmp.ne.s32.totalorder %s101, %s102
    %p116 = scmp.eq.s32.totalorder %s21, 1
    %p117 = por %p115, %p116
    %p119 = scmp.ne.s32.totalorder %s102, %s118
    %p120 = scmp.eq.s32.totalorder %s21, 0
    %p121 = por %p119, %p120
    %s122 = ssub.s32 %s15, %s22
    %p123 = scmp.eq.s32.totalorder %s122, 0
    %s125 = sadd.s32 %s124, 1
    %s126 = scalar_select %p123, %s124, %s125
    %p129 = pneg %p123
    %p130 = scmp.eq.s32.totalorder %s15, 1
    %p131 = por %p129, %p130
    %p132 = scmp.ne.s32.totalorder %s124, %s127
    %p133 = scmp.eq.s32.totalorder %s15, 0
    %p134 = por %p132, %p133
    %p135 = scmp.ne.s32.totalorder %s124, %s127
    %p136 = scmp.eq.s32.totalorder %s20, 1
    %p137 = por %p135, %p136
    %p138 = scmp.ne.s32.totalorder %s127, %s128
    %p139 = scmp.eq.s32.totalorder %s20, 0
    %p140 = por %p138, %p139
    %p141 = scmp.ne.s32.totalorder %s127, %s128
    %p142 = scmp.eq.s32.totalorder %s21, 1
    %p143 = por %p141, %p142
    %p145 = scmp.ne.s32.totalorder %s128, %s144
    %p146 = scmp.eq.s32.totalorder %s21, 0
    %p147 = por %p145, %p146
    %s148 = ssub.s32 %s15, %s22
    %p149 = scmp.eq.s32.totalorder %s148, 0
    %s151 = sadd.s32 %s150, 1
    %s152 = scalar_select %p149, %s150, %s151
    %p155 = pneg %p149
    %p156 = scmp.eq.s32.totalorder %s15, 1
    %p157 = por %p155, %p156
    %p158 = scmp.ne.s32.totalorder %s150, %s153
    %p159 = scmp.eq.s32.totalorder %s15, 0
    %p160 = por %p158, %p159
    %p161 = scmp.ne.s32.totalorder %s150, %s153
    %p162 = scmp.eq.s32.totalorder %s20, 1
    %p163 = por %p161, %p162
    %p164 = scmp.ne.s32.totalorder %s153, %s154
    %p165 = scmp.eq.s32.totalorder %s20, 0
    %p166 = por %p164, %p165
    %p167 = scmp.ne.s32.totalorder %s153, %s154
    %p168 = scmp.eq.s32.totalorder %s21, 1
    %p169 = por %p167, %p168
    %p171 = scmp.ne.s32.totalorder %s154, %s170
    %p172 = scmp.eq.s32.totalorder %s21, 0
    %p173 = por %p171, %p172
    %s174 = ssub.s32 %s15, %s22
    %p175 = scmp.eq.s32.totalorder %s174, 0
    %s177 = sadd.s32 %s176, 1
    %s178 = scalar_select %p175, %s176, %s177
    %p181 = pneg %p175
    %p182 = scmp.eq.s32.totalorder %s15, 1
    %p183 = por %p181, %p182
    %p184 = scmp.ne.s32.totalorder %s176, %s179
    %p185 = scmp.eq.s32.totalorder %s15, 0
    %p186 = por %p184, %p185
    %p187 = scmp.ne.s32.totalorder %s176, %s179
    %p188 = scmp.eq.s32.totalorder %s20, 1
    %p189 = por %p187, %p188
    %p190 = scmp.ne.s32.totalorder %s179, %s180
    %p191 = scmp.eq.s32.totalorder %s20, 0
    %p192 = por %p190, %p191
    %p193 = scmp.ne.s32.totalorder %s179, %s180
    %p194 = scmp.eq.s32.totalorder %s21, 1
    %p195 = por %p193, %p194
    %p197 = scmp.ne.s32.totalorder %s180, %s196
    %p198 = scmp.eq.s32.totalorder %s21, 0
    %p199 = por %p197, %p198
    %s200 = ssub.s32 %s15, %s22
    %p201 = scmp.eq.s32.totalorder %s200, 0
    %s203 = sadd.s32 %s202, 1
    %s204 = scalar_select %p201, %s202, %s203
    %p207 = pneg %p201
    %p208 = scmp.eq.s32.totalorder %s15, 1
    %p209 = por %p207, %p208
    %p210 = scmp.ne.s32.totalorder %s202, %s205
    %p211 = scmp.eq.s32.totalorder %s15, 0
    %p212 = por %p210, %p211
    %p213 = scmp.ne.s32.totalorder %s202, %s205
    %p214 = scmp.eq.s32.totalorder %s20, 1
    %p215 = por %p213, %p214
    %p216 = scmp.ne.s32.totalorder %s205, %s206
    %p217 = scmp.eq.s32.totalorder %s20, 0
    %p218 = por %p216, %p217
    %p219 = scmp.ne.s32.totalorder %s205, %s206
    %p220 = scmp.eq.s32.totalorder %s21, 1
    %p221 = por %p219, %p220
    %p223 = scmp.ne.s32.totalorder %s206, %s222
    %p224 = scmp.eq.s32.totalorder %s21, 0
    %p225 = por %p223, %p224
    %s226 = ssub.s32 %s15, %s22
    %p227 = scmp.eq.s32.totalorder %s226, 0
    %s229 = sadd.s32 %s228, 1
    %s230 = scalar_select %p227, %s228, %s229
    %p233 = pneg %p227
    %p234 = scmp.eq.s32.totalorder %s15, 1
    %p235 = por %p233, %p234
    %p236 = scmp.ne.s32.totalorder %s228, %s231
    %p237 = scmp.eq.s32.totalorder %s15, 0
    %p238 = por %p236, %p237
    %p239 = scmp.ne.s32.totalorder %s228, %s231
    %p240 = scmp.eq.s32.totalorder %s20, 1
    %p241 = por %p239, %p240
    %p242 = scmp.ne.s32.totalorder %s231, %s232
    %p243 = scmp.eq.s32.totalorder %s20, 0
    %p244 = por %p242, %p243
    %p245 = scmp.ne.s32.totalorder %s231, %s232
    %p246 = scmp.eq.s32.totalorder %s21, 1
    %p247 = por %p245, %p246
    %p249 = scmp.ne.s32.totalorder %s232, %s248
    %p250 = scmp.eq.s32.totalorder %s21, 0
    %p251 = por %p249, %p250
    %p252 = scmp.le.s32.totalorder 1, %s15
    %p253 = scmp.lt.s32.totalorder %s15, 3
    %p254 = pnand %p252, %p253
    %p255 = pneg %p254
    // Predicated region
    $region9: #{_lambda_.7} parent=5 // pred_check
      _
    $region10: #{_lambda_.7} parent=5 // pred_check_branch
      %257 = sbr.rel (%p254) target = $region12
    $region11: #{_lambda_.7} parent=5 // pred_region
      %s258 = ssub.s32 %s15, 1
      // Predicated region
      $region13: #{_lambda_.7} parent=11 // pred_check
        %p259 = pneg %p62
      $region14: #{_lambda_.7} parent=11 // pred_check_branch
        %261 = sbr.rel (%p259) target = $region16
      $region15: #{_lambda_.7} parent=11 // pred_region
        _
      $region16: #{_lambda_.7} parent=11 // pred_fallthru
        _
    $region12: #{_lambda_.7} parent=5 // pred_fallthru
      _
    %p262 = scmp.lt.s32.totalorder %s15, 2
    // Predicated region
    $region17: #{_lambda_.7} parent=5 // pred_check
      %p263 = pneg %p262
    $region18: #{_lambda_.7} parent=5 // pred_check_branch
      %265 = sbr.rel (%p263) target = $region20
    $region19: #{_lambda_.7} parent=5 // pred_region
      // Predicated region
      $region21: #{_lambda_.7} parent=19 // pred_check
        %p266 = pneg %p35
      $region22: #{_lambda_.7} parent=19 // pred_check_branch
        %268 = sbr.rel (%p266) target = $region24
      $region23: #{_lambda_.7} parent=19 // pred_region
        %p269 = scmp.lt.s32.totalorder %s15, 1
        %s270 = scalar_select %p269, %s15, 1
        %s271 = smul.addr %s270, 54
        %s272 = smul.addr %s271, 8
        %s273 = scalar_lea.vmem %s0, %s272
      $region24: #{_lambda_.7} parent=19 // pred_fallthru
        _
    $region20: #{_lambda_.7} parent=5 // pred_fallthru
      _
    %p274 = scmp.le.s32.totalorder 1, %s15
    %p275 = scmp.lt.s32.totalorder %s15, 3
    %p276 = pnand %p274, %p275
    %p277 = pneg %p276
    // Predicated region
    $region25: #{_lambda_.7} parent=5 // pred_check
      _
    $region26: #{_lambda_.7} parent=5 // pred_check_branch
      %279 = sbr.rel (%p276) target = $region28
    $region27: #{_lambda_.7} parent=5 // pred_region
      %s280 = ssub.s32 %s15, 1
      %p281 = scmp.lt.s32.totalorder %s20, 1
      %s282 = scalar_select %p281, %s20, 1
      %s283 = smul.addr %s282, 54
      %s284 = smul.addr %s283, 8
      %s285 = scalar_lea.vmem %s0, %s284
      %p286 = pneg %p41
      %p287 = pneg %p38
      %p288 = pneg %p62
      %p289 = pneg %p59
      %p290 = pneg %p88
      %p291 = pneg %p85
      %p292 = scmp.lt.s32.totalorder %s20, 1
      %s293 = scalar_select %p292, %s20, 1
      %s294 = smul.addr %s293, 32
      %s295 = smul.addr %s294, 8
      %s296 = scalar_lea.vmem %s2, %s295
      %p297 = pneg %p114
      %p298 = pneg %p111
      %p299 = scmp.lt.s32.totalorder %s20, 1
      %s300 = scalar_select %p299, %s20, 1
      %s301 = smul.addr %s300, 32
      %s302 = smul.addr %s301, 8
      %s303 = scalar_lea.vmem %s3, %s302
      %p304 = pneg %p140
      %p305 = pneg %p137
      %p306 = scmp.lt.s32.totalorder %s20, 1
      %s307 = scalar_select %p306, %s20, 1
      %s308 = smul.addr %s307, 32
      %s309 = smul.addr %s308, 8
      %s310 = scalar_lea.vmem %s4, %s309
      %p311 = pneg %p166
      %p312 = pneg %p163
      %p313 = scmp.lt.s32.totalorder %s20, 1
      %s314 = scalar_select %p313, %s20, 1
      %s315 = scalar_lea.vmem %s5, %s314
      %p316 = pneg %p192
      %p317 = pneg %p189
      %p318 = scmp.lt.s32.totalorder %s20, 1
      %s319 = scalar_select %p318, %s20, 1
      %s320 = scalar_lea.vmem %s6, %s319
      %p321 = pneg %p218
      %p322 = pneg %p215
      %p323 = scmp.lt.s32.totalorder %s20, 1
      %s324 = scalar_select %p323, %s20, 1
      %s325 = scalar_lea.vmem %s7, %s324
      %p326 = pneg %p244
      %p327 = pneg %p241
      %p328 = scmp.lt.s32.totalorder %s20, 1
      %s329 = scalar_select %p328, %s20, 1
      %s330 = scalar_lea.vmem %s8, %s329
      %p331 = scmp.lt.s32.totalorder %s20, 1
      %s332 = scalar_select %p331, %s20, 1
      %s333 = smul.addr %s332, 54
      %s334 = smul.addr %s333, 8
      %s335 = scalar_lea.vmem %s0, %s334
      %p336 = scmp.lt.s32.totalorder %s20, 1
      %s337 = scalar_select %p336, %s20, 1
      %s338 = smul.addr %s337, 32
      %s339 = smul.addr %s338, 8
      %s340 = scalar_lea.vmem %s2, %s339
      %p341 = scmp.lt.s32.totalorder %s20, 1
      %s342 = scalar_select %p341, %s20, 1
      %s343 = smul.addr %s342, 32
      %s344 = smul.addr %s343, 8
      %s345 = scalar_lea.vmem %s3, %s344
      %p346 = scmp.lt.s32.totalorder %s20, 1
      %s347 = scalar_select %p346, %s20, 1
      %s348 = smul.addr %s347, 32
      %s349 = smul.addr %s348, 8
      %s350 = scalar_lea.vmem %s4, %s349
      %p351 = scmp.lt.s32.totalorder %s20, 1
      %s352 = scalar_select %p351, %s20, 1
      %s353 = scalar_lea.vmem %s5, %s352
      %p354 = scmp.lt.s32.totalorder %s20, 1
      %s355 = scalar_select %p354, %s20, 1
      %s356 = scalar_lea.vmem %s6, %s355
      %p357 = scmp.lt.s32.totalorder %s20, 1
      %s358 = scalar_select %p357, %s20, 1
      %s359 = scalar_lea.vmem %s7, %s358
      %p360 = scmp.lt.s32.totalorder %s20, 1
      %s361 = scalar_select %p360, %s20, 1
      %s362 = scalar_lea.vmem %s8, %s361
      %v363 = vld [vmem:[%s335] sm:$0xff]
      %v364 = vld [vmem:[%s335 + $0x8] sm:$0xff]
      %v365 = vld [vmem:[%s335 + $0x18] sm:$0xff]
      %v366 = vld [vmem:[%s335 + $0x20] sm:$0xff]
      %v367 = vld [vmem:[%s335 + $0x30] sm:$0xff]
      %v368 = vld [vmem:[%s335 + $0x38] sm:$0xff]
      %v369 = vld [vmem:[%s335 + $0x48] sm:$0xff]
      %v370 = vld [vmem:[%s335 + $0x50] sm:$0xff]
      %v371 = vld [vmem:[%s335 + $0x60] sm:$0xff]
      %v372 = vld [vmem:[%s335 + $0x68] sm:$0xff]
      %v373 = vld [vmem:[%s335 + $0x78] sm:$0xff]
      %v374 = vld [vmem:[%s335 + $0x80] sm:$0xff]
      %v375 = vld [vmem:[%s335 + $0x90] sm:$0xff]
      %v376 = vld [vmem:[%s335 + $0x98] sm:$0xff]
      %v377 = vld [vmem:[%s335 + $0xa8] sm:$0xff]
      %v378 = vld [vmem:[%s335 + $0xb0] sm:$0xff]
      %v379 = vld [vmem:[%s335 + $0xc0] sm:$0xff]
      %v380 = vld [vmem:[%s335 + $0xc8] sm:$0xff]
      %v381 = vld [vmem:[%s335 + $0xd8] sm:$0xff]
      %v382 = vld [vmem:[%s335 + $0xe0] sm:$0xff]
      %v383 = vld [vmem:[%s335 + $0xf0] sm:$0xff]
      %v384 = vld [vmem:[%s335 + $0xf8] sm:$0xff]
      %v385 = vld [vmem:[%s335 + $0x108] sm:$0xff]
      %v386 = vld [vmem:[%s335 + $0x110] sm:$0xff]
      %v387 = vld [vmem:[%s335 + $0x120] sm:$0xff]
      %v388 = vld [vmem:[%s335 + $0x128] sm:$0xff]
      %v389 = vld [vmem:[%s335 + $0x138] sm:$0xff]
      %v390 = vld [vmem:[%s335 + $0x140] sm:$0xff]
      %v391 = vld [vmem:[%s335 + $0x150] sm:$0xff]
      %v392 = vld [vmem:[%s335 + $0x158] sm:$0xff]
      %v393 = vld [vmem:[%s335 + $0x168] sm:$0xff]
      %v394 = vld [vmem:[%s335 + $0x170] sm:$0xff]
      %v395 = vld [vmem:[%s335 + $0x1] sm:$0xff]
      %v396 = vld [vmem:[%s335 + $0x9] sm:$0xff]
      %v397 = vld [vmem:[%s335 + $0x19] sm:$0xff]
      %v398 = vld [vmem:[%s335 + $0x21] sm:$0xff]
      %v399 = vld [vmem:[%s335 + $0x31] sm:$0xff]
      %v400 = vld [vmem:[%s335 + $0x39] sm:$0xff]
      %v401 = vld [vmem:[%s335 + $0x49] sm:$0xff]
      %v402 = vld [vmem:[%s335 + $0x51] sm:$0xff]
      %v403 = vld [vmem:[%s335 + $0x61] sm:$0xff]
      %v404 = vld [vmem:[%s335 + $0x69] sm:$0xff]
      %v405 = vld [vmem:[%s335 + $0x79] sm:$0xff]
      %v406 = vld [vmem:[%s335 + $0x81] sm:$0xff]
      %v407 = vld [vmem:[%s335 + $0x91] sm:$0xff]
      %v408 = vld [vmem:[%s335 + $0x99] sm:$0xff]
      %v409 = vld [vmem:[%s335 + $0xa9] sm:$0xff]
      %v410 = vld [vmem:[%s335 + $0xb1] sm:$0xff]
      %v411 = vld [vmem:[%s335 + $0xc1] sm:$0xff]
      %v412 = vld [vmem:[%s335 + $0xc9] sm:$0xff]
      %v413 = vld [vmem:[%s335 + $0xd9] sm:$0xff]
      %v414 = vld [vmem:[%s335 + $0xe1] sm:$0xff]
      %v415 = vld [vmem:[%s335 + $0xf1] sm:$0xff]
      %v416 = vld [vmem:[%s335 + $0xf9] sm:$0xff]
      %v417 = vld [vmem:[%s335 + $0x109] sm:$0xff]
      %v418 = vld [vmem:[%s335 + $0x111] sm:$0xff]
      %v419 = vld [vmem:[%s335 + $0x121] sm:$0xff]
      %v420 = vld [vmem:[%s335 + $0x129] sm:$0xff]
      %v421 = vld [vmem:[%s335 + $0x139] sm:$0xff]
      %v422 = vld [vmem:[%s335 + $0x141] sm:$0xff]
      %v423 = vld [vmem:[%s335 + $0x151] sm:$0xff]
      %v424 = vld [vmem:[%s335 + $0x159] sm:$0xff]
      %v425 = vld [vmem:[%s335 + $0x169] sm:$0xff]
      %v426 = vld [vmem:[%s335 + $0x171] sm:$0xff]
      %v427 = vld [vmem:[%s335 + $0x2] sm:$0xff]
      %v428 = vld [vmem:[%s335 + $0xa] sm:$0xff]
      %v429 = vld [vmem:[%s335 + $0x1a] sm:$0xff]
      %v430 = vld [vmem:[%s335 + $0x22] sm:$0xff]
      %v431 = vld [vmem:[%s335 + $0x32] sm:$0xff]
      %v432 = vld [vmem:[%s335 + $0x3a] sm:$0xff]
      %v433 = vld [vmem:[%s335 + $0x4a] sm:$0xff]
      %v434 = vld [vmem:[%s335 + $0x52] sm:$0xff]
      %v435 = vld [vmem:[%s335 + $0x62] sm:$0xff]
      %v436 = vld [vmem:[%s335 + $0x6a] sm:$0xff]
      %v437 = vld [vmem:[%s335 + $0x7a] sm:$0xff]
      %v438 = vld [vmem:[%s335 + $0x82] sm:$0xff]
      %v439 = vld [vmem:[%s335 + $0x92] sm:$0xff]
      %v440 = vld [vmem:[%s335 + $0x9a] sm:$0xff]
      %v441 = vld [vmem:[%s335 + $0xaa] sm:$0xff]
      %v442 = vld [vmem:[%s335 + $0xb2] sm:$0xff]
      %v443 = vld [vmem:[%s335 + $0xc2] sm:$0xff]
      %v444 = vld [vmem:[%s335 + $0xca] sm:$0xff]
      %v445 = vld [vmem:[%s335 + $0xda] sm:$0xff]
      %v446 = vld [vmem:[%s335 + $0xe2] sm:$0xff]
      %v447 = vld [vmem:[%s335 + $0xf2] sm:$0xff]
      %v448 = vld [vmem:[%s335 + $0xfa] sm:$0xff]
      %v449 = vld [vmem:[%s335 + $0x10a] sm:$0xff]
      %v450 = vld [vmem:[%s335 + $0x112] sm:$0xff]
      %v451 = vld [vmem:[%s335 + $0x122] sm:$0xff]
      %v452 = vld [vmem:[%s335 + $0x12a] sm:$0xff]
      %v453 = vld [vmem:[%s335 + $0x13a] sm:$0xff]
      %v454 = vld [vmem:[%s335 + $0x142] sm:$0xff]
      %v455 = vld [vmem:[%s335 + $0x152] sm:$0xff]
      %v456 = vld [vmem:[%s335 + $0x15a] sm:$0xff]
      %v457 = vld [vmem:[%s335 + $0x16a] sm:$0xff]
      %v458 = vld [vmem:[%s335 + $0x172] sm:$0xff]
      %s459 = scalar_lea.vmem %s335, 24
      %v460 = vld [vmem:[%s459] sm:$0xff]
      %v461 = vld [vmem:[%s459 + $0x8] sm:$0xff]
      %v462 = vld [vmem:[%s459 + $0x18] sm:$0xff]
      %v463 = vld [vmem:[%s459 + $0x20] sm:$0xff]
      %v464 = vld [vmem:[%s459 + $0x30] sm:$0xff]
      %v465 = vld [vmem:[%s459 + $0x38] sm:$0xff]
      %v466 = vld [vmem:[%s459 + $0x48] sm:$0xff]
      %v467 = vld [vmem:[%s459 + $0x50] sm:$0xff]
      %v468 = vld [vmem:[%s459 + $0x60] sm:$0xff]
      %v469 = vld [vmem:[%s459 + $0x68] sm:$0xff]
      %v470 = vld [vmem:[%s459 + $0x78] sm:$0xff]
      %v471 = vld [vmem:[%s459 + $0x80] sm:$0xff]
      %v472 = vld [vmem:[%s459 + $0x90] sm:$0xff]
      %v473 = vld [vmem:[%s459 + $0x98] sm:$0xff]
      %v474 = vld [vmem:[%s459 + $0xa8] sm:$0xff]
      %v475 = vld [vmem:[%s459 + $0xb0] sm:$0xff]
      %v476 = vld [vmem:[%s459 + $0xc0] sm:$0xff]
      %v477 = vld [vmem:[%s459 + $0xc8] sm:$0xff]
      %v478 = vld [vmem:[%s459 + $0xd8] sm:$0xff]
      %v479 = vld [vmem:[%s459 + $0xe0] sm:$0xff]
      %v480 = vld [vmem:[%s459 + $0xf0] sm:$0xff]
      %v481 = vld [vmem:[%s459 + $0xf8] sm:$0xff]
      %v482 = vld [vmem:[%s459 + $0x108] sm:$0xff]
      %v483 = vld [vmem:[%s459 + $0x110] sm:$0xff]
      %v484 = vld [vmem:[%s459 + $0x120] sm:$0xff]
      %v485 = vld [vmem:[%s459 + $0x128] sm:$0xff]
      %v486 = vld [vmem:[%s459 + $0x138] sm:$0xff]
      %v487 = vld [vmem:[%s459 + $0x140] sm:$0xff]
      %v488 = vld [vmem:[%s459 + $0x150] sm:$0xff]
      %v489 = vld [vmem:[%s459 + $0x158] sm:$0xff]
      %v490 = vld [vmem:[%s459 + $0x168] sm:$0xff]
      %v491 = vld [vmem:[%s459 + $0x170] sm:$0xff]
      %v492 = vld [vmem:[%s459 + $0x1] sm:$0xff]
      %v493 = vld [vmem:[%s459 + $0x9] sm:$0xff]
      %v494 = vld [vmem:[%s459 + $0x19] sm:$0xff]
      %v495 = vld [vmem:[%s459 + $0x21] sm:$0xff]
      %v496 = vld [vmem:[%s459 + $0x31] sm:$0xff]
      %v497 = vld [vmem:[%s459 + $0x39] sm:$0xff]
      %v498 = vld [vmem:[%s459 + $0x49] sm:$0xff]
      %v499 = vld [vmem:[%s459 + $0x51] sm:$0xff]
      %v500 = vld [vmem:[%s459 + $0x61] sm:$0xff]
      %v501 = vld [vmem:[%s459 + $0x69] sm:$0xff]
      %v502 = vld [vmem:[%s459 + $0x79] sm:$0xff]
      %v503 = vld [vmem:[%s459 + $0x81] sm:$0xff]
      %v504 = vld [vmem:[%s459 + $0x91] sm:$0xff]
      %v505 = vld [vmem:[%s459 + $0x99] sm:$0xff]
      %v506 = vld [vmem:[%s459 + $0xa9] sm:$0xff]
      %v507 = vld [vmem:[%s459 + $0xb1] sm:$0xff]
      %v508 = vld [vmem:[%s459 + $0xc1] sm:$0xff]
      %v509 = vld [vmem:[%s459 + $0xc9] sm:$0xff]
      %v510 = vld [vmem:[%s459 + $0xd9] sm:$0xff]
      %v511 = vld [vmem:[%s459 + $0xe1] sm:$0xff]
      %v512 = vld [vmem:[%s459 + $0xf1] sm:$0xff]
      %v513 = vld [vmem:[%s459 + $0xf9] sm:$0xff]
      %v514 = vld [vmem:[%s459 + $0x109] sm:$0xff]
      %v515 = vld [vmem:[%s459 + $0x111] sm:$0xff]
      %v516 = vld [vmem:[%s459 + $0x121] sm:$0xff]
      %v517 = vld [vmem:[%s459 + $0x129] sm:$0xff]
      %v518 = vld [vmem:[%s459 + $0x139] sm:$0xff]
      %v519 = vld [vmem:[%s459 + $0x141] sm:$0xff]
      %v520 = vld [vmem:[%s459 + $0x151] sm:$0xff]
      %v521 = vld [vmem:[%s459 + $0x159] sm:$0xff]
      %v522 = vld [vmem:[%s459 + $0x169] sm:$0xff]
      %v523 = vld [vmem:[%s459 + $0x171] sm:$0xff]
      %v524 = vld [vmem:[%s459 + $0x2] sm:$0xff]
      %v525 = vld [vmem:[%s459 + $0xa] sm:$0xff]
      %v526 = vld [vmem:[%s459 + $0x1a] sm:$0xff]
      %v527 = vld [vmem:[%s459 + $0x22] sm:$0xff]
      %v528 = vld [vmem:[%s459 + $0x32] sm:$0xff]
      %v529 = vld [vmem:[%s459 + $0x3a] sm:$0xff]
      %v530 = vld [vmem:[%s459 + $0x4a] sm:$0xff]
      %v531 = vld [vmem:[%s459 + $0x52] sm:$0xff]
      %v532 = vld [vmem:[%s459 + $0x62] sm:$0xff]
      %v533 = vld [vmem:[%s459 + $0x6a] sm:$0xff]
      %v534 = vld [vmem:[%s459 + $0x7a] sm:$0xff]
      %v535 = vld [vmem:[%s459 + $0x82] sm:$0xff]
      %v536 = vld [vmem:[%s459 + $0x92] sm:$0xff]
      %v537 = vld [vmem:[%s459 + $0x9a] sm:$0xff]
      %v538 = vld [vmem:[%s459 + $0xaa] sm:$0xff]
      %v539 = vld [vmem:[%s459 + $0xb2] sm:$0xff]
      %v540 = vld [vmem:[%s459 + $0xc2] sm:$0xff]
      %v541 = vld [vmem:[%s459 + $0xca] sm:$0xff]
      %v542 = vld [vmem:[%s459 + $0xda] sm:$0xff]
      %v543 = vld [vmem:[%s459 + $0xe2] sm:$0xff]
      %v544 = vld [vmem:[%s459 + $0xf2] sm:$0xff]
      %v545 = vld [vmem:[%s459 + $0xfa] sm:$0xff]
      %v546 = vld [vmem:[%s459 + $0x10a] sm:$0xff]
      %v547 = vld [vmem:[%s459 + $0x112] sm:$0xff]
      %v548 = vld [vmem:[%s459 + $0x122] sm:$0xff]
      %v549 = vld [vmem:[%s459 + $0x12a] sm:$0xff]
      %v550 = vld [vmem:[%s459 + $0x13a] sm:$0xff]
      %v551 = vld [vmem:[%s459 + $0x142] sm:$0xff]
      %v552 = vld [vmem:[%s459 + $0x152] sm:$0xff]
      %v553 = vld [vmem:[%s459 + $0x15a] sm:$0xff]
      %v554 = vld [vmem:[%s459 + $0x16a] sm:$0xff]
      %v555 = vld [vmem:[%s459 + $0x172] sm:$0xff]
      %s556 = scalar_lea.vmem %s335, 48
      %v557 = vld [vmem:[%s556] sm:$0xff]
      %v558 = vld [vmem:[%s556 + $0x8] sm:$0xff]
      %v559 = vld [vmem:[%s556 + $0x18] sm:$0xff]
      %v560 = vld [vmem:[%s556 + $0x20] sm:$0xff]
      %v561 = vld [vmem:[%s556 + $0x30] sm:$0xff]
      %v562 = vld [vmem:[%s556 + $0x38] sm:$0xff]
      %v563 = vld [vmem:[%s556 + $0x48] sm:$0xff]
      %v564 = vld [vmem:[%s556 + $0x50] sm:$0xff]
      %v565 = vld [vmem:[%s556 + $0x60] sm:$0xff]
      %v566 = vld [vmem:[%s556 + $0x68] sm:$0xff]
      %v567 = vld [vmem:[%s556 + $0x78] sm:$0xff]
      %v568 = vld [vmem:[%s556 + $0x80] sm:$0xff]
      %v569 = vld [vmem:[%s556 + $0x90] sm:$0xff]
      %v570 = vld [vmem:[%s556 + $0x98] sm:$0xff]
      %v571 = vld [vmem:[%s556 + $0xa8] sm:$0xff]
      %v572 = vld [vmem:[%s556 + $0xb0] sm:$0xff]
      %v573 = vld [vmem:[%s556 + $0xc0] sm:$0xff]
      %v574 = vld [vmem:[%s556 + $0xc8] sm:$0xff]
      %v575 = vld [vmem:[%s556 + $0xd8] sm:$0xff]
      %v576 = vld [vmem:[%s556 + $0xe0] sm:$0xff]
      %v577 = vld [vmem:[%s556 + $0xf0] sm:$0xff]
      %v578 = vld [vmem:[%s556 + $0xf8] sm:$0xff]
      %v579 = vld [vmem:[%s556 + $0x108] sm:$0xff]
      %v580 = vld [vmem:[%s556 + $0x110] sm:$0xff]
      %v581 = vld [vmem:[%s556 + $0x120] sm:$0xff]
      %v582 = vld [vmem:[%s556 + $0x128] sm:$0xff]
      %v583 = vld [vmem:[%s556 + $0x138] sm:$0xff]
      %v584 = vld [vmem:[%s556 + $0x140] sm:$0xff]
      %v585 = vld [vmem:[%s556 + $0x150] sm:$0xff]
      %v586 = vld [vmem:[%s556 + $0x158] sm:$0xff]
      %v587 = vld [vmem:[%s556 + $0x168] sm:$0xff]
      %v588 = vld [vmem:[%s556 + $0x170] sm:$0xff]
      %v589 = vld [vmem:[%s556 + $0x1] sm:$0xff]
      %v590 = vld [vmem:[%s556 + $0x9] sm:$0xff]
      %v591 = vld [vmem:[%s556 + $0x19] sm:$0xff]
      %v592 = vld [vmem:[%s556 + $0x21] sm:$0xff]
      %v593 = vld [vmem:[%s556 + $0x31] sm:$0xff]
      %v594 = vld [vmem:[%s556 + $0x39] sm:$0xff]
      %v595 = vld [vmem:[%s556 + $0x49] sm:$0xff]
      %v596 = vld [vmem:[%s556 + $0x51] sm:$0xff]
      %v597 = vld [vmem:[%s556 + $0x61] sm:$0xff]
      %v598 = vld [vmem:[%s556 + $0x69] sm:$0xff]
      %v599 = vld [vmem:[%s556 + $0x79] sm:$0xff]
      %v600 = vld [vmem:[%s556 + $0x81] sm:$0xff]
      %v601 = vld [vmem:[%s556 + $0x91] sm:$0xff]
      %v602 = vld [vmem:[%s556 + $0x99] sm:$0xff]
      %v603 = vld [vmem:[%s556 + $0xa9] sm:$0xff]
      %v604 = vld [vmem:[%s556 + $0xb1] sm:$0xff]
      %v605 = vld [vmem:[%s556 + $0xc1] sm:$0xff]
      %v606 = vld [vmem:[%s556 + $0xc9] sm:$0xff]
      %v607 = vld [vmem:[%s556 + $0xd9] sm:$0xff]
      %v608 = vld [vmem:[%s556 + $0xe1] sm:$0xff]
      %v609 = vld [vmem:[%s556 + $0xf1] sm:$0xff]
      %v610 = vld [vmem:[%s556 + $0xf9] sm:$0xff]
      %v611 = vld [vmem:[%s556 + $0x109] sm:$0xff]
      %v612 = vld [vmem:[%s556 + $0x111] sm:$0xff]
      %v613 = vld [vmem:[%s556 + $0x121] sm:$0xff]
      %v614 = vld [vmem:[%s556 + $0x129] sm:$0xff]
      %v615 = vld [vmem:[%s556 + $0x139] sm:$0xff]
      %v616 = vld [vmem:[%s556 + $0x141] sm:$0xff]
      %v617 = vld [vmem:[%s556 + $0x151] sm:$0xff]
      %v618 = vld [vmem:[%s556 + $0x159] sm:$0xff]
      %v619 = vld [vmem:[%s556 + $0x169] sm:$0xff]
      %v620 = vld [vmem:[%s556 + $0x171] sm:$0xff]
      %v621 = vld [vmem:[%s556 + $0x2] sm:$0xff]
      %v622 = vld [vmem:[%s556 + $0xa] sm:$0xff]
      %v623 = vld [vmem:[%s556 + $0x1a] sm:$0xff]
      %v624 = vld [vmem:[%s556 + $0x22] sm:$0xff]
      %v625 = vld [vmem:[%s556 + $0x32] sm:$0xff]
      %v626 = vld [vmem:[%s556 + $0x3a] sm:$0xff]
      %v627 = vld [vmem:[%s556 + $0x4a] sm:$0xff]
      %v628 = vld [vmem:[%s556 + $0x52] sm:$0xff]
      %v629 = vld [vmem:[%s556 + $0x62] sm:$0xff]
      %v630 = vld [vmem:[%s556 + $0x6a] sm:$0xff]
      %v631 = vld [vmem:[%s556 + $0x7a] sm:$0xff]
      %v632 = vld [vmem:[%s556 + $0x82] sm:$0xff]
      %v633 = vld [vmem:[%s556 + $0x92] sm:$0xff]
      %v634 = vld [vmem:[%s556 + $0x9a] sm:$0xff]
      %v635 = vld [vmem:[%s556 + $0xaa] sm:$0xff]
      %v636 = vld [vmem:[%s556 + $0xb2] sm:$0xff]
      %v637 = vld [vmem:[%s556 + $0xc2] sm:$0xff]
      %v638 = vld [vmem:[%s556 + $0xca] sm:$0xff]
      %v639 = vld [vmem:[%s556 + $0xda] sm:$0xff]
      %v640 = vld [vmem:[%s556 + $0xe2] sm:$0xff]
      %v641 = vld [vmem:[%s556 + $0xf2] sm:$0xff]
      %v642 = vld [vmem:[%s556 + $0xfa] sm:$0xff]
      %v643 = vld [vmem:[%s556 + $0x10a] sm:$0xff]
      %v644 = vld [vmem:[%s556 + $0x112] sm:$0xff]
      %v645 = vld [vmem:[%s556 + $0x122] sm:$0xff]
      %v646 = vld [vmem:[%s556 + $0x12a] sm:$0xff]
      %v647 = vld [vmem:[%s556 + $0x13a] sm:$0xff]
      %v648 = vld [vmem:[%s556 + $0x142] sm:$0xff]
      %v649 = vld [vmem:[%s556 + $0x152] sm:$0xff]
      %v650 = vld [vmem:[%s556 + $0x15a] sm:$0xff]
      %v651 = vld [vmem:[%s556 + $0x16a] sm:$0xff]
      %v652 = vld [vmem:[%s556 + $0x172] sm:$0xff]
      %685 = vrot.lane.b32.xlu0 %v395, 16
      %v686 = vpop.permute.xlu0 %685
      %687 = vrot.lane.b32.xlu0 %v396, 16
      %v688 = vpop.permute.xlu0 %687
      %689 = vrot.lane.b32.xlu0 %v397, 16
      %v690 = vpop.permute.xlu0 %689
      %691 = vrot.lane.b32.xlu0 %v398, 16
      %v692 = vpop.permute.xlu0 %691
      %693 = vrot.lane.b32.xlu0 %v399, 16
      %v694 = vpop.permute.xlu0 %693
      %695 = vrot.lane.b32.xlu0 %v400, 16
      %v696 = vpop.permute.xlu0 %695
      %697 = vrot.lane.b32.xlu0 %v401, 16
      %v698 = vpop.permute.xlu0 %697
      %699 = vrot.lane.b32.xlu0 %v402, 16
      %v700 = vpop.permute.xlu0 %699
      %701 = vrot.lane.b32.xlu0 %v403, 16
      %v702 = vpop.permute.xlu0 %701
      %703 = vrot.lane.b32.xlu0 %v404, 16
      %v704 = vpop.permute.xlu0 %703
      %705 = vrot.lane.b32.xlu0 %v405, 16
      %v706 = vpop.permute.xlu0 %705
      %707 = vrot.lane.b32.xlu0 %v406, 16
      %v708 = vpop.permute.xlu0 %707
      %709 = vrot.lane.b32.xlu0 %v407, 16
      %v710 = vpop.permute.xlu0 %709
      %711 = vrot.lane.b32.xlu0 %v408, 16
      %v712 = vpop.permute.xlu0 %711
      %713 = vrot.lane.b32.xlu0 %v409, 16
      %v714 = vpop.permute.xlu0 %713
      %715 = vrot.lane.b32.xlu0 %v410, 16
      %v716 = vpop.permute.xlu0 %715
      %717 = vrot.lane.b32.xlu0 %v411, 16
      %v718 = vpop.permute.xlu0 %717
      %719 = vrot.lane.b32.xlu0 %v412, 16
      %v720 = vpop.permute.xlu0 %719
      %721 = vrot.lane.b32.xlu0 %v413, 16
      %v722 = vpop.permute.xlu0 %721
      %723 = vrot.lane.b32.xlu0 %v414, 16
      %v724 = vpop.permute.xlu0 %723
      %725 = vrot.lane.b32.xlu0 %v415, 16
      %v726 = vpop.permute.xlu0 %725
      %727 = vrot.lane.b32.xlu0 %v416, 16
      %v728 = vpop.permute.xlu0 %727
      %729 = vrot.lane.b32.xlu0 %v417, 16
      %v730 = vpop.permute.xlu0 %729
      %731 = vrot.lane.b32.xlu0 %v418, 16
      %v732 = vpop.permute.xlu0 %731
      %733 = vrot.lane.b32.xlu0 %v419, 16
      %v734 = vpop.permute.xlu0 %733
      %735 = vrot.lane.b32.xlu0 %v420, 16
      %v736 = vpop.permute.xlu0 %735
      %737 = vrot.lane.b32.xlu0 %v421, 16
      %v738 = vpop.permute.xlu0 %737
      %739 = vrot.lane.b32.xlu0 %v422, 16
      %v740 = vpop.permute.xlu0 %739
      %741 = vrot.lane.b32.xlu0 %v423, 16
      %v742 = vpop.permute.xlu0 %741
      %743 = vrot.lane.b32.xlu0 %v424, 16
      %v744 = vpop.permute.xlu0 %743
      %745 = vrot.lane.b32.xlu0 %v425, 16
      %v746 = vpop.permute.xlu0 %745
      %747 = vrot.lane.b32.xlu0 %v426, 16
      %v748 = vpop.permute.xlu0 %747
      %813 = vrot.lane.b32.xlu0 %v427, 32
      %v814 = vpop.permute.xlu0 %813
      %815 = vrot.lane.b32.xlu0 %v428, 32
      %v816 = vpop.permute.xlu0 %815
      %817 = vrot.lane.b32.xlu0 %v429, 32
      %v818 = vpop.permute.xlu0 %817
      %819 = vrot.lane.b32.xlu0 %v430, 32
      %v820 = vpop.permute.xlu0 %819
      %821 = vrot.lane.b32.xlu0 %v431, 32
      %v822 = vpop.permute.xlu0 %821
      %823 = vrot.lane.b32.xlu0 %v432, 32
      %v824 = vpop.permute.xlu0 %823
      %825 = vrot.lane.b32.xlu0 %v433, 32
      %v826 = vpop.permute.xlu0 %825
      %827 = vrot.lane.b32.xlu0 %v434, 32
      %v828 = vpop.permute.xlu0 %827
      %829 = vrot.lane.b32.xlu0 %v435, 32
      %v830 = vpop.permute.xlu0 %829
      %831 = vrot.lane.b32.xlu0 %v436, 32
      %v832 = vpop.permute.xlu0 %831
      %833 = vrot.lane.b32.xlu0 %v437, 32
      %v834 = vpop.permute.xlu0 %833
      %835 = vrot.lane.b32.xlu0 %v438, 32
      %v836 = vpop.permute.xlu0 %835
      %837 = vrot.lane.b32.xlu0 %v439, 32
      %v838 = vpop.permute.xlu0 %837
      %839 = vrot.lane.b32.xlu0 %v440, 32
      %v840 = vpop.permute.xlu0 %839
      %841 = vrot.lane.b32.xlu0 %v441, 32
      %v842 = vpop.permute.xlu0 %841
      %843 = vrot.lane.b32.xlu0 %v442, 32
      %v844 = vpop.permute.xlu0 %843
      %845 = vrot.lane.b32.xlu0 %v443, 32
      %v846 = vpop.permute.xlu0 %845
      %847 = vrot.lane.b32.xlu0 %v444, 32
      %v848 = vpop.permute.xlu0 %847
      %849 = vrot.lane.b32.xlu0 %v445, 32
      %v850 = vpop.permute.xlu0 %849
      %851 = vrot.lane.b32.xlu0 %v446, 32
      %v852 = vpop.permute.xlu0 %851
      %853 = vrot.lane.b32.xlu0 %v447, 32
      %v854 = vpop.permute.xlu0 %853
      %855 = vrot.lane.b32.xlu0 %v448, 32
      %v856 = vpop.permute.xlu0 %855
      %857 = vrot.lane.b32.xlu0 %v449, 32
      %v858 = vpop.permute.xlu0 %857
      %859 = vrot.lane.b32.xlu0 %v450, 32
      %v860 = vpop.permute.xlu0 %859
      %861 = vrot.lane.b32.xlu0 %v451, 32
      %v862 = vpop.permute.xlu0 %861
      %863 = vrot.lane.b32.xlu0 %v452, 32
      %v864 = vpop.permute.xlu0 %863
      %865 = vrot.lane.b32.xlu0 %v453, 32
      %v866 = vpop.permute.xlu0 %865
      %867 = vrot.lane.b32.xlu0 %v454, 32
      %v868 = vpop.permute.xlu0 %867
      %869 = vrot.lane.b32.xlu0 %v455, 32
      %v870 = vpop.permute.xlu0 %869
      %871 = vrot.lane.b32.xlu0 %v456, 32
      %v872 = vpop.permute.xlu0 %871
      %873 = vrot.lane.b32.xlu0 %v457, 32
      %v874 = vpop.permute.xlu0 %873
      %875 = vrot.lane.b32.xlu0 %v458, 32
      %v876 = vpop.permute.xlu0 %875
      %941 = vrot.lane.b32.xlu0 %v460, 48
      %v942 = vpop.permute.xlu0 %941
      %943 = vrot.lane.b32.xlu0 %v461, 48
      %v944 = vpop.permute.xlu0 %943
      %945 = vrot.lane.b32.xlu0 %v462, 48
      %v946 = vpop.permute.xlu0 %945
      %947 = vrot.lane.b32.xlu0 %v463, 48
      %v948 = vpop.permute.xlu0 %947
      %949 = vrot.lane.b32.xlu0 %v464, 48
      %v950 = vpop.permute.xlu0 %949
      %951 = vrot.lane.b32.xlu0 %v465, 48
      %v952 = vpop.permute.xlu0 %951
      %953 = vrot.lane.b32.xlu0 %v466, 48
      %v954 = vpop.permute.xlu0 %953
      %955 = vrot.lane.b32.xlu0 %v467, 48
      %v956 = vpop.permute.xlu0 %955
      %957 = vrot.lane.b32.xlu0 %v468, 48
      %v958 = vpop.permute.xlu0 %957
      %959 = vrot.lane.b32.xlu0 %v469, 48
      %v960 = vpop.permute.xlu0 %959
      %961 = vrot.lane.b32.xlu0 %v470, 48
      %v962 = vpop.permute.xlu0 %961
      %963 = vrot.lane.b32.xlu0 %v471, 48
      %v964 = vpop.permute.xlu0 %963
      %965 = vrot.lane.b32.xlu0 %v472, 48
      %v966 = vpop.permute.xlu0 %965
      %967 = vrot.lane.b32.xlu0 %v473, 48
      %v968 = vpop.permute.xlu0 %967
      %969 = vrot.lane.b32.xlu0 %v474, 48
      %v970 = vpop.permute.xlu0 %969
      %971 = vrot.lane.b32.xlu0 %v475, 48
      %v972 = vpop.permute.xlu0 %971
      %973 = vrot.lane.b32.xlu0 %v476, 48
      %v974 = vpop.permute.xlu0 %973
      %975 = vrot.lane.b32.xlu0 %v477, 48
      %v976 = vpop.permute.xlu0 %975
      %977 = vrot.lane.b32.xlu0 %v478, 48
      %v978 = vpop.permute.xlu0 %977
      %979 = vrot.lane.b32.xlu0 %v479, 48
      %v980 = vpop.permute.xlu0 %979
      %981 = vrot.lane.b32.xlu0 %v480, 48
      %v982 = vpop.permute.xlu0 %981
      %983 = vrot.lane.b32.xlu0 %v481, 48
      %v984 = vpop.permute.xlu0 %983
      %985 = vrot.lane.b32.xlu0 %v482, 48
      %v986 = vpop.permute.xlu0 %985
      %987 = vrot.lane.b32.xlu0 %v483, 48
      %v988 = vpop.permute.xlu0 %987
      %989 = vrot.lane.b32.xlu0 %v484, 48
      %v990 = vpop.permute.xlu0 %989
      %991 = vrot.lane.b32.xlu0 %v485, 48
      %v992 = vpop.permute.xlu0 %991
      %993 = vrot.lane.b32.xlu0 %v486, 48
      %v994 = vpop.permute.xlu0 %993
      %995 = vrot.lane.b32.xlu0 %v487, 48
      %v996 = vpop.permute.xlu0 %995
      %997 = vrot.lane.b32.xlu0 %v488, 48
      %v998 = vpop.permute.xlu0 %997
      %999 = vrot.lane.b32.xlu0 %v489, 48
      %v1000 = vpop.permute.xlu0 %999
      %1001 = vrot.lane.b32.xlu0 %v490, 48
      %v1002 = vpop.permute.xlu0 %1001
      %1003 = vrot.lane.b32.xlu0 %v491, 48
      %v1004 = vpop.permute.xlu0 %1003
      %1069 = vrot.lane.b32.xlu0 %v492, 64
      %v1070 = vpop.permute.xlu0 %1069
      %1071 = vrot.lane.b32.xlu0 %v493, 64
      %v1072 = vpop.permute.xlu0 %1071
      %1073 = vrot.lane.b32.xlu0 %v494, 64
      %v1074 = vpop.permute.xlu0 %1073
      %1075 = vrot.lane.b32.xlu0 %v495, 64
      %v1076 = vpop.permute.xlu0 %1075
      %1077 = vrot.lane.b32.xlu0 %v496, 64
      %v1078 = vpop.permute.xlu0 %1077
      %1079 = vrot.lane.b32.xlu0 %v497, 64
      %v1080 = vpop.permute.xlu0 %1079
      %1081 = vrot.lane.b32.xlu0 %v498, 64
      %v1082 = vpop.permute.xlu0 %1081
      %1083 = vrot.lane.b32.xlu0 %v499, 64
      %v1084 = vpop.permute.xlu0 %1083
      %1085 = vrot.lane.b32.xlu0 %v500, 64
      %v1086 = vpop.permute.xlu0 %1085
      %1087 = vrot.lane.b32.xlu0 %v501, 64
      %v1088 = vpop.permute.xlu0 %1087
      %1089 = vrot.lane.b32.xlu0 %v502, 64
      %v1090 = vpop.permute.xlu0 %1089
      %1091 = vrot.lane.b32.xlu0 %v503, 64
      %v1092 = vpop.permute.xlu0 %1091
      %1093 = vrot.lane.b32.xlu0 %v504, 64
      %v1094 = vpop.permute.xlu0 %1093
      %1095 = vrot.lane.b32.xlu0 %v505, 64
      %v1096 = vpop.permute.xlu0 %1095
      %1097 = vrot.lane.b32.xlu0 %v506, 64
      %v1098 = vpop.permute.xlu0 %1097
      %1099 = vrot.lane.b32.xlu0 %v507, 64
      %v1100 = vpop.permute.xlu0 %1099
      %1101 = vrot.lane.b32.xlu0 %v508, 64
      %v1102 = vpop.permute.xlu0 %1101
      %1103 = vrot.lane.b32.xlu0 %v509, 64
      %v1104 = vpop.permute.xlu0 %1103
      %1105 = vrot.lane.b32.xlu0 %v510, 64
      %v1106 = vpop.permute.xlu0 %1105
      %1107 = vrot.lane.b32.xlu0 %v511, 64
      %v1108 = vpop.permute.xlu0 %1107
      %1109 = vrot.lane.b32.xlu0 %v512, 64
      %v1110 = vpop.permute.xlu0 %1109
      %1111 = vrot.lane.b32.xlu0 %v513, 64
      %v1112 = vpop.permute.xlu0 %1111
      %1113 = vrot.lane.b32.xlu0 %v514, 64
      %v1114 = vpop.permute.xlu0 %1113
      %1115 = vrot.lane.b32.xlu0 %v515, 64
      %v1116 = vpop.permute.xlu0 %1115
      %1117 = vrot.lane.b32.xlu0 %v516, 64
      %v1118 = vpop.permute.xlu0 %1117
      %1119 = vrot.lane.b32.xlu0 %v517, 64
      %v1120 = vpop.permute.xlu0 %1119
      %1121 = vrot.lane.b32.xlu0 %v518, 64
      %v1122 = vpop.permute.xlu0 %1121
      %1123 = vrot.lane.b32.xlu0 %v519, 64
      %v1124 = vpop.permute.xlu0 %1123
      %1125 = vrot.lane.b32.xlu0 %v520, 64
      %v1126 = vpop.permute.xlu0 %1125
      %1127 = vrot.lane.b32.xlu0 %v521, 64
      %v1128 = vpop.permute.xlu0 %1127
      %1129 = vrot.lane.b32.xlu0 %v522, 64
      %v1130 = vpop.permute.xlu0 %1129
      %1131 = vrot.lane.b32.xlu0 %v523, 64
      %v1132 = vpop.permute.xlu0 %1131
      %1197 = vrot.lane.b32.xlu0 %v524, 80
      %v1198 = vpop.permute.xlu0 %1197
      %1199 = vrot.lane.b32.xlu0 %v525, 80
      %v1200 = vpop.permute.xlu0 %1199
      %1201 = vrot.lane.b32.xlu0 %v526, 80
      %v1202 = vpop.permute.xlu0 %1201
      %1203 = vrot.lane.b32.xlu0 %v527, 80
      %v1204 = vpop.permute.xlu0 %1203
      %1205 = vrot.lane.b32.xlu0 %v528, 80
      %v1206 = vpop.permute.xlu0 %1205
      %1207 = vrot.lane.b32.xlu0 %v529, 80
      %v1208 = vpop.permute.xlu0 %1207
      %1209 = vrot.lane.b32.xlu0 %v530, 80
      %v1210 = vpop.permute.xlu0 %1209
      %1211 = vrot.lane.b32.xlu0 %v531, 80
      %v1212 = vpop.permute.xlu0 %1211
      %1213 = vrot.lane.b32.xlu0 %v532, 80
      %v1214 = vpop.permute.xlu0 %1213
      %1215 = vrot.lane.b32.xlu0 %v533, 80
      %v1216 = vpop.permute.xlu0 %1215
      %1217 = vrot.lane.b32.xlu0 %v534, 80
      %v1218 = vpop.permute.xlu0 %1217
      %1219 = vrot.lane.b32.xlu0 %v535, 80
      %v1220 = vpop.permute.xlu0 %1219
      %1221 = vrot.lane.b32.xlu0 %v536, 80
      %v1222 = vpop.permute.xlu0 %1221
      %1223 = vrot.lane.b32.xlu0 %v537, 80
      %v1224 = vpop.permute.xlu0 %1223
      %1225 = vrot.lane.b32.xlu0 %v538, 80
      %v1226 = vpop.permute.xlu0 %1225
      %1227 = vrot.lane.b32.xlu0 %v539, 80
      %v1228 = vpop.permute.xlu0 %1227
      %1229 = vrot.lane.b32.xlu0 %v540, 80
      %v1230 = vpop.permute.xlu0 %1229
      %1231 = vrot.lane.b32.xlu0 %v541, 80
      %v1232 = vpop.permute.xlu0 %1231
      %1233 = vrot.lane.b32.xlu0 %v542, 80
      %v1234 = vpop.permute.xlu0 %1233
      %1235 = vrot.lane.b32.xlu0 %v543, 80
      %v1236 = vpop.permute.xlu0 %1235
      %1237 = vrot.lane.b32.xlu0 %v544, 80
      %v1238 = vpop.permute.xlu0 %1237
      %1239 = vrot.lane.b32.xlu0 %v545, 80
      %v1240 = vpop.permute.xlu0 %1239
      %1241 = vrot.lane.b32.xlu0 %v546, 80
      %v1242 = vpop.permute.xlu0 %1241
      %1243 = vrot.lane.b32.xlu0 %v547, 80
      %v1244 = vpop.permute.xlu0 %1243
      %1245 = vrot.lane.b32.xlu0 %v548, 80
      %v1246 = vpop.permute.xlu0 %1245
      %1247 = vrot.lane.b32.xlu0 %v549, 80
      %v1248 = vpop.permute.xlu0 %1247
      %1249 = vrot.lane.b32.xlu0 %v550, 80
      %v1250 = vpop.permute.xlu0 %1249
      %1251 = vrot.lane.b32.xlu0 %v551, 80
      %v1252 = vpop.permute.xlu0 %1251
      %1253 = vrot.lane.b32.xlu0 %v552, 80
      %v1254 = vpop.permute.xlu0 %1253
      %1255 = vrot.lane.b32.xlu0 %v553, 80
      %v1256 = vpop.permute.xlu0 %1255
      %1257 = vrot.lane.b32.xlu0 %v554, 80
      %v1258 = vpop.permute.xlu0 %1257
      %1259 = vrot.lane.b32.xlu0 %v555, 80
      %v1260 = vpop.permute.xlu0 %1259
      %1325 = vrot.lane.b32.xlu0 %v557, 96
      %v1326 = vpop.permute.xlu0 %1325
      %1327 = vrot.lane.b32.xlu0 %v558, 96
      %v1328 = vpop.permute.xlu0 %1327
      %1329 = vrot.lane.b32.xlu0 %v559, 96
      %v1330 = vpop.permute.xlu0 %1329
      %1331 = vrot.lane.b32.xlu0 %v560, 96
      %v1332 = vpop.permute.xlu0 %1331
      %1333 = vrot.lane.b32.xlu0 %v561, 96
      %v1334 = vpop.permute.xlu0 %1333
      %1335 = vrot.lane.b32.xlu0 %v562, 96
      %v1336 = vpop.permute.xlu0 %1335
      %1337 = vrot.lane.b32.xlu0 %v563, 96
      %v1338 = vpop.permute.xlu0 %1337
      %1339 = vrot.lane.b32.xlu0 %v564, 96
      %v1340 = vpop.permute.xlu0 %1339
      %1341 = vrot.lane.b32.xlu0 %v565, 96
      %v1342 = vpop.permute.xlu0 %1341
      %1343 = vrot.lane.b32.xlu0 %v566, 96
      %v1344 = vpop.permute.xlu0 %1343
      %1345 = vrot.lane.b32.xlu0 %v567, 96
      %v1346 = vpop.permute.xlu0 %1345
      %1347 = vrot.lane.b32.xlu0 %v568, 96
      %v1348 = vpop.permute.xlu0 %1347
      %1349 = vrot.lane.b32.xlu0 %v569, 96
      %v1350 = vpop.permute.xlu0 %1349
      %1351 = vrot.lane.b32.xlu0 %v570, 96
      %v1352 = vpop.permute.xlu0 %1351
      %1353 = vrot.lane.b32.xlu0 %v571, 96
      %v1354 = vpop.permute.xlu0 %1353
      %1355 = vrot.lane.b32.xlu0 %v572, 96
      %v1356 = vpop.permute.xlu0 %1355
      %1357 = vrot.lane.b32.xlu0 %v573, 96
      %v1358 = vpop.permute.xlu0 %1357
      %1359 = vrot.lane.b32.xlu0 %v574, 96
      %v1360 = vpop.permute.xlu0 %1359
      %1361 = vrot.lane.b32.xlu0 %v575, 96
      %v1362 = vpop.permute.xlu0 %1361
      %1363 = vrot.lane.b32.xlu0 %v576, 96
      %v1364 = vpop.permute.xlu0 %1363
      %1365 = vrot.lane.b32.xlu0 %v577, 96
      %v1366 = vpop.permute.xlu0 %1365
      %1367 = vrot.lane.b32.xlu0 %v578, 96
      %v1368 = vpop.permute.xlu0 %1367
      %1369 = vrot.lane.b32.xlu0 %v579, 96
      %v1370 = vpop.permute.xlu0 %1369
      %1371 = vrot.lane.b32.xlu0 %v580, 96
      %v1372 = vpop.permute.xlu0 %1371
      %1373 = vrot.lane.b32.xlu0 %v581, 96
      %v1374 = vpop.permute.xlu0 %1373
      %1375 = vrot.lane.b32.xlu0 %v582, 96
      %v1376 = vpop.permute.xlu0 %1375
      %1377 = vrot.lane.b32.xlu0 %v583, 96
      %v1378 = vpop.permute.xlu0 %1377
      %1379 = vrot.lane.b32.xlu0 %v584, 96
      %v1380 = vpop.permute.xlu0 %1379
      %1381 = vrot.lane.b32.xlu0 %v585, 96
      %v1382 = vpop.permute.xlu0 %1381
      %1383 = vrot.lane.b32.xlu0 %v586, 96
      %v1384 = vpop.permute.xlu0 %1383
      %1385 = vrot.lane.b32.xlu0 %v587, 96
      %v1386 = vpop.permute.xlu0 %1385
      %1387 = vrot.lane.b32.xlu0 %v588, 96
      %v1388 = vpop.permute.xlu0 %1387
      %1453 = vrot.lane.b32.xlu0 %v589, 112
      %v1454 = vpop.permute.xlu0 %1453
      %1455 = vrot.lane.b32.xlu0 %v590, 112
      %v1456 = vpop.permute.xlu0 %1455
      %1457 = vrot.lane.b32.xlu0 %v591, 112
      %v1458 = vpop.permute.xlu0 %1457
      %1459 = vrot.lane.b32.xlu0 %v592, 112
      %v1460 = vpop.permute.xlu0 %1459
      %1461 = vrot.lane.b32.xlu0 %v593, 112
      %v1462 = vpop.permute.xlu0 %1461
      %1463 = vrot.lane.b32.xlu0 %v594, 112
      %v1464 = vpop.permute.xlu0 %1463
      %1465 = vrot.lane.b32.xlu0 %v595, 112
      %v1466 = vpop.permute.xlu0 %1465
      %1467 = vrot.lane.b32.xlu0 %v596, 112
      %v1468 = vpop.permute.xlu0 %1467
      %1469 = vrot.lane.b32.xlu0 %v597, 112
      %v1470 = vpop.permute.xlu0 %1469
      %1471 = vrot.lane.b32.xlu0 %v598, 112
      %v1472 = vpop.permute.xlu0 %1471
      %1473 = vrot.lane.b32.xlu0 %v599, 112
      %v1474 = vpop.permute.xlu0 %1473
      %1475 = vrot.lane.b32.xlu0 %v600, 112
      %v1476 = vpop.permute.xlu0 %1475
      %1477 = vrot.lane.b32.xlu0 %v601, 112
      %v1478 = vpop.permute.xlu0 %1477
      %1479 = vrot.lane.b32.xlu0 %v602, 112
      %v1480 = vpop.permute.xlu0 %1479
      %1481 = vrot.lane.b32.xlu0 %v603, 112
      %v1482 = vpop.permute.xlu0 %1481
      %1483 = vrot.lane.b32.xlu0 %v604, 112
      %v1484 = vpop.permute.xlu0 %1483
      %1485 = vrot.lane.b32.xlu0 %v605, 112
      %v1486 = vpop.permute.xlu0 %1485
      %1487 = vrot.lane.b32.xlu0 %v606, 112
      %v1488 = vpop.permute.xlu0 %1487
      %1489 = vrot.lane.b32.xlu0 %v607, 112
      %v1490 = vpop.permute.xlu0 %1489
      %1491 = vrot.lane.b32.xlu0 %v608, 112
      %v1492 = vpop.permute.xlu0 %1491
      %1493 = vrot.lane.b32.xlu0 %v609, 112
      %v1494 = vpop.permute.xlu0 %1493
      %1495 = vrot.lane.b32.xlu0 %v610, 112
      %v1496 = vpop.permute.xlu0 %1495
      %1497 = vrot.lane.b32.xlu0 %v611, 112
      %v1498 = vpop.permute.xlu0 %1497
      %1499 = vrot.lane.b32.xlu0 %v612, 112
      %v1500 = vpop.permute.xlu0 %1499
      %1501 = vrot.lane.b32.xlu0 %v613, 112
      %v1502 = vpop.permute.xlu0 %1501
      %1503 = vrot.lane.b32.xlu0 %v614, 112
      %v1504 = vpop.permute.xlu0 %1503
      %1505 = vrot.lane.b32.xlu0 %v615, 112
      %v1506 = vpop.permute.xlu0 %1505
      %1507 = vrot.lane.b32.xlu0 %v616, 112
      %v1508 = vpop.permute.xlu0 %1507
      %1509 = vrot.lane.b32.xlu0 %v617, 112
      %v1510 = vpop.permute.xlu0 %1509
      %1511 = vrot.lane.b32.xlu0 %v618, 112
      %v1512 = vpop.permute.xlu0 %1511
      %1513 = vrot.lane.b32.xlu0 %v619, 112
      %v1514 = vpop.permute.xlu0 %1513
      %1515 = vrot.lane.b32.xlu0 %v620, 112
      %v1516 = vpop.permute.xlu0 %1515
      %vm1549 = vcmask 130048
      %v1550 = vsel %vm1549, %v363, %v686
      %v1551 = vsel %vm1549, %v364, %v688
      %v1552 = vsel %vm1549, %v365, %v690
      %v1553 = vsel %vm1549, %v366, %v692
      %v1554 = vsel %vm1549, %v367, %v694
      %v1555 = vsel %vm1549, %v368, %v696
      %v1556 = vsel %vm1549, %v369, %v698
      %v1557 = vsel %vm1549, %v370, %v700
      %v1558 = vsel %vm1549, %v371, %v702
      %v1559 = vsel %vm1549, %v372, %v704
      %v1560 = vsel %vm1549, %v373, %v706
      %v1561 = vsel %vm1549, %v374, %v708
      %v1562 = vsel %vm1549, %v375, %v710
      %v1563 = vsel %vm1549, %v376, %v712
      %v1564 = vsel %vm1549, %v377, %v714
      %v1565 = vsel %vm1549, %v378, %v716
      %v1566 = vsel %vm1549, %v379, %v718
      %v1567 = vsel %vm1549, %v380, %v720
      %v1568 = vsel %vm1549, %v381, %v722
      %v1569 = vsel %vm1549, %v382, %v724
      %v1570 = vsel %vm1549, %v383, %v726
      %v1571 = vsel %vm1549, %v384, %v728
      %v1572 = vsel %vm1549, %v385, %v730
      %v1573 = vsel %vm1549, %v386, %v732
      %v1574 = vsel %vm1549, %v387, %v734
      %v1575 = vsel %vm1549, %v388, %v736
      %v1576 = vsel %vm1549, %v389, %v738
      %v1577 = vsel %vm1549, %v390, %v740
      %v1578 = vsel %vm1549, %v391, %v742
      %v1579 = vsel %vm1549, %v392, %v744
      %v1580 = vsel %vm1549, %v393, %v746
      %v1581 = vsel %vm1549, %v394, %v748
      %vm1582 = vcmask 261120
      %v1583 = vsel %vm1582, %v1550, %v814
      %v1584 = vsel %vm1582, %v1551, %v816
      %v1585 = vsel %vm1582, %v1552, %v818
      %v1586 = vsel %vm1582, %v1553, %v820
      %v1587 = vsel %vm1582, %v1554, %v822
      %v1588 = vsel %vm1582, %v1555, %v824
      %v1589 = vsel %vm1582, %v1556, %v826
      %v1590 = vsel %vm1582, %v1557, %v828
      %v1591 = vsel %vm1582, %v1558, %v830
      %v1592 = vsel %vm1582, %v1559, %v832
      %v1593 = vsel %vm1582, %v1560, %v834
      %v1594 = vsel %vm1582, %v1561, %v836
      %v1595 = vsel %vm1582, %v1562, %v838
      %v1596 = vsel %vm1582, %v1563, %v840
      %v1597 = vsel %vm1582, %v1564, %v842
      %v1598 = vsel %vm1582, %v1565, %v844
      %v1599 = vsel %vm1582, %v1566, %v846
      %v1600 = vsel %vm1582, %v1567, %v848
      %v1601 = vsel %vm1582, %v1568, %v850
      %v1602 = vsel %vm1582, %v1569, %v852
      %v1603 = vsel %vm1582, %v1570, %v854
      %v1604 = vsel %vm1582, %v1571, %v856
      %v1605 = vsel %vm1582, %v1572, %v858
      %v1606 = vsel %vm1582, %v1573, %v860
      %v1607 = vsel %vm1582, %v1574, %v862
      %v1608 = vsel %vm1582, %v1575, %v864
      %v1609 = vsel %vm1582, %v1576, %v866
      %v1610 = vsel %vm1582, %v1577, %v868
      %v1611 = vsel %vm1582, %v1578, %v870
      %v1612 = vsel %vm1582, %v1579, %v872
      %v1613 = vsel %vm1582, %v1580, %v874
      %v1614 = vsel %vm1582, %v1581, %v876
      %vm1615 = vcmask 392192
      %v1616 = vsel %vm1615, %v1583, %v942
      %v1617 = vsel %vm1615, %v1584, %v944
      %v1618 = vsel %vm1615, %v1585, %v946
      %v1619 = vsel %vm1615, %v1586, %v948
      %v1620 = vsel %vm1615, %v1587, %v950
      %v1621 = vsel %vm1615, %v1588, %v952
      %v1622 = vsel %vm1615, %v1589, %v954
      %v1623 = vsel %vm1615, %v1590, %v956
      %v1624 = vsel %vm1615, %v1591, %v958
      %v1625 = vsel %vm1615, %v1592, %v960
      %v1626 = vsel %vm1615, %v1593, %v962
      %v1627 = vsel %vm1615, %v1594, %v964
      %v1628 = vsel %vm1615, %v1595, %v966
      %v1629 = vsel %vm1615, %v1596, %v968
      %v1630 = vsel %vm1615, %v1597, %v970
      %v1631 = vsel %vm1615, %v1598, %v972
      %v1632 = vsel %vm1615, %v1599, %v974
      %v1633 = vsel %vm1615, %v1600, %v976
      %v1634 = vsel %vm1615, %v1601, %v978
      %v1635 = vsel %vm1615, %v1602, %v980
      %v1636 = vsel %vm1615, %v1603, %v982
      %v1637 = vsel %vm1615, %v1604, %v984
      %v1638 = vsel %vm1615, %v1605, %v986
      %v1639 = vsel %vm1615, %v1606, %v988
      %v1640 = vsel %vm1615, %v1607, %v990
      %v1641 = vsel %vm1615, %v1608, %v992
      %v1642 = vsel %vm1615, %v1609, %v994
      %v1643 = vsel %vm1615, %v1610, %v996
      %v1644 = vsel %vm1615, %v1611, %v998
      %v1645 = vsel %vm1615, %v1612, %v1000
      %v1646 = vsel %vm1615, %v1613, %v1002
      %v1647 = vsel %vm1615, %v1614, %v1004
      %vm1648 = vcmask 523264
      %v1649 = vsel %vm1648, %v1616, %v1070
      %v1650 = vsel %vm1648, %v1617, %v1072
      %v1651 = vsel %vm1648, %v1618, %v1074
      %v1652 = vsel %vm1648, %v1619, %v1076
      %v1653 = vsel %vm1648, %v1620, %v1078
      %v1654 = vsel %vm1648, %v1621, %v1080
      %v1655 = vsel %vm1648, %v1622, %v1082
      %v1656 = vsel %vm1648, %v1623, %v1084
      %v1657 = vsel %vm1648, %v1624, %v1086
      %v1658 = vsel %vm1648, %v1625, %v1088
      %v1659 = vsel %vm1648, %v1626, %v1090
      %v1660 = vsel %vm1648, %v1627, %v1092
      %v1661 = vsel %vm1648, %v1628, %v1094
      %v1662 = vsel %vm1648, %v1629, %v1096
      %v1663 = vsel %vm1648, %v1630, %v1098
      %v1664 = vsel %vm1648, %v1631, %v1100
      %v1665 = vsel %vm1648, %v1632, %v1102
      %v1666 = vsel %vm1648, %v1633, %v1104
      %v1667 = vsel %vm1648, %v1634, %v1106
      %v1668 = vsel %vm1648, %v1635, %v1108
      %v1669 = vsel %vm1648, %v1636, %v1110
      %v1670 = vsel %vm1648, %v1637, %v1112
      %v1671 = vsel %vm1648, %v1638, %v1114
      %v1672 = vsel %vm1648, %v1639, %v1116
      %v1673 = vsel %vm1648, %v1640, %v1118
      %v1674 = vsel %vm1648, %v1641, %v1120
      %v1675 = vsel %vm1648, %v1642, %v1122
      %v1676 = vsel %vm1648, %v1643, %v1124
      %v1677 = vsel %vm1648, %v1644, %v1126
      %v1678 = vsel %vm1648, %v1645, %v1128
      %v1679 = vsel %vm1648, %v1646, %v1130
      %v1680 = vsel %vm1648, %v1647, %v1132
      %vm1681 = vcmask 654336
      %v1682 = vsel %vm1681, %v1649, %v1198
      %v1683 = vsel %vm1681, %v1650, %v1200
      %v1684 = vsel %vm1681, %v1651, %v1202
      %v1685 = vsel %vm1681, %v1652, %v1204
      %v1686 = vsel %vm1681, %v1653, %v1206
      %v1687 = vsel %vm1681, %v1654, %v1208
      %v1688 = vsel %vm1681, %v1655, %v1210
      %v1689 = vsel %vm1681, %v1656, %v1212
      %v1690 = vsel %vm1681, %v1657, %v1214
      %v1691 = vsel %vm1681, %v1658, %v1216
      %v1692 = vsel %vm1681, %v1659, %v1218
      %v1693 = vsel %vm1681, %v1660, %v1220
      %v1694 = vsel %vm1681, %v1661, %v1222
      %v1695 = vsel %vm1681, %v1662, %v1224
      %v1696 = vsel %vm1681, %v1663, %v1226
      %v1697 = vsel %vm1681, %v1664, %v1228
      %v1698 = vsel %vm1681, %v1665, %v1230
      %v1699 = vsel %vm1681, %v1666, %v1232
      %v1700 = vsel %vm1681, %v1667, %v1234
      %v1701 = vsel %vm1681, %v1668, %v1236
      %v1702 = vsel %vm1681, %v1669, %v1238
      %v1703 = vsel %vm1681, %v1670, %v1240
      %v1704 = vsel %vm1681, %v1671, %v1242
      %v1705 = vsel %vm1681, %v1672, %v1244
      %v1706 = vsel %vm1681, %v1673, %v1246
      %v1707 = vsel %vm1681, %v1674, %v1248
      %v1708 = vsel %vm1681, %v1675, %v1250
      %v1709 = vsel %vm1681, %v1676, %v1252
      %v1710 = vsel %vm1681, %v1677, %v1254
      %v1711 = vsel %vm1681, %v1678, %v1256
      %v1712 = vsel %vm1681, %v1679, %v1258
      %v1713 = vsel %vm1681, %v1680, %v1260
      %vm1714 = vcmask 785408
      %v1715 = vsel %vm1714, %v1682, %v1326
      %v1716 = vsel %vm1714, %v1683, %v1328
      %v1717 = vsel %vm1714, %v1684, %v1330
      %v1718 = vsel %vm1714, %v1685, %v1332
      %v1719 = vsel %vm1714, %v1686, %v1334
      %v1720 = vsel %vm1714, %v1687, %v1336
      %v1721 = vsel %vm1714, %v1688, %v1338
      %v1722 = vsel %vm1714, %v1689, %v1340
      %v1723 = vsel %vm1714, %v1690, %v1342
      %v1724 = vsel %vm1714, %v1691, %v1344
      %v1725 = vsel %vm1714, %v1692, %v1346
      %v1726 = vsel %vm1714, %v1693, %v1348
      %v1727 = vsel %vm1714, %v1694, %v1350
      %v1728 = vsel %vm1714, %v1695, %v1352
      %v1729 = vsel %vm1714, %v1696, %v1354
      %v1730 = vsel %vm1714, %v1697, %v1356
      %v1731 = vsel %vm1714, %v1698, %v1358
      %v1732 = vsel %vm1714, %v1699, %v1360
      %v1733 = vsel %vm1714, %v1700, %v1362
      %v1734 = vsel %vm1714, %v1701, %v1364
      %v1735 = vsel %vm1714, %v1702, %v1366
      %v1736 = vsel %vm1714, %v1703, %v1368
      %v1737 = vsel %vm1714, %v1704, %v1370
      %v1738 = vsel %vm1714, %v1705, %v1372
      %v1739 = vsel %vm1714, %v1706, %v1374
      %v1740 = vsel %vm1714, %v1707, %v1376
      %v1741 = vsel %vm1714, %v1708, %v1378
      %v1742 = vsel %vm1714, %v1709, %v1380
      %v1743 = vsel %vm1714, %v1710, %v1382
      %v1744 = vsel %vm1714, %v1711, %v1384
      %v1745 = vsel %vm1714, %v1712, %v1386
      %v1746 = vsel %vm1714, %v1713, %v1388
      %vm1747 = vcmask 916480
      %v1748 = vsel %vm1747, %v1715, %v1454
      %v1749 = vsel %vm1747, %v1716, %v1456
      %v1750 = vsel %vm1747, %v1717, %v1458
      %v1751 = vsel %vm1747, %v1718, %v1460
      %v1752 = vsel %vm1747, %v1719, %v1462
      %v1753 = vsel %vm1747, %v1720, %v1464
      %v1754 = vsel %vm1747, %v1721, %v1466
      %v1755 = vsel %vm1747, %v1722, %v1468
      %v1756 = vsel %vm1747, %v1723, %v1470
      %v1757 = vsel %vm1747, %v1724, %v1472
      %v1758 = vsel %vm1747, %v1725, %v1474
      %v1759 = vsel %vm1747, %v1726, %v1476
      %v1760 = vsel %vm1747, %v1727, %v1478
      %v1761 = vsel %vm1747, %v1728, %v1480
      %v1762 = vsel %vm1747, %v1729, %v1482
      %v1763 = vsel %vm1747, %v1730, %v1484
      %v1764 = vsel %vm1747, %v1731, %v1486
      %v1765 = vsel %vm1747, %v1732, %v1488
      %v1766 = vsel %vm1747, %v1733, %v1490
      %v1767 = vsel %vm1747, %v1734, %v1492
      %v1768 = vsel %vm1747, %v1735, %v1494
      %v1769 = vsel %vm1747, %v1736, %v1496
      %v1770 = vsel %vm1747, %v1737, %v1498
      %v1771 = vsel %vm1747, %v1738, %v1500
      %v1772 = vsel %vm1747, %v1739, %v1502
      %v1773 = vsel %vm1747, %v1740, %v1504
      %v1774 = vsel %vm1747, %v1741, %v1506
      %v1775 = vsel %vm1747, %v1742, %v1508
      %v1776 = vsel %vm1747, %v1743, %v1510
      %v1777 = vsel %vm1747, %v1744, %v1512
      %v1778 = vsel %vm1747, %v1745, %v1514
      %v1779 = vsel %vm1747, %v1746, %v1516
      %v1780 = vld [vmem:[%s1] sm:$0xff]
      %v1781 = vld [vmem:[%s1 + $0x8] sm:$0xff]
      %v1782 = vld [vmem:[%s1 + $0x10] sm:$0xff]
      %v1783 = vld [vmem:[%s1 + $0x18] sm:$0xff]
      %v1784 = vld [vmem:[%s1 + $0x20] sm:$0xff]
      %v1785 = vld [vmem:[%s1 + $0x28] sm:$0xff]
      %v1786 = vld [vmem:[%s1 + $0x30] sm:$0xff]
      %v1787 = vld [vmem:[%s1 + $0x38] sm:$0xff]
      %v1788 = vld [vmem:[%s1 + $0x40] sm:$0xff]
      %v1789 = vld [vmem:[%s1 + $0x48] sm:$0xff]
      %v1790 = vld [vmem:[%s1 + $0x50] sm:$0xff]
      %v1791 = vld [vmem:[%s1 + $0x58] sm:$0xff]
      %v1792 = vld [vmem:[%s1 + $0x60] sm:$0xff]
      %v1793 = vld [vmem:[%s1 + $0x68] sm:$0xff]
      %v1794 = vld [vmem:[%s1 + $0x70] sm:$0xff]
      %v1795 = vld [vmem:[%s1 + $0x78] sm:$0xff]
      %v1796 = vld [vmem:[%s1 + $0x80] sm:$0xff]
      %v1797 = vld [vmem:[%s1 + $0x88] sm:$0xff]
      %v1799 = vsel %vm1549, %v621, 0
      %v1802 = vsel %vm1549, %v622, 0
      %v1805 = vsel %vm1549, %v623, 0
      %v1808 = vsel %vm1549, %v624, 0
      %v1811 = vsel %vm1549, %v625, 0
      %v1814 = vsel %vm1549, %v626, 0
      %v1817 = vsel %vm1549, %v627, 0
      %v1820 = vsel %vm1549, %v628, 0
      %v1823 = vsel %vm1549, %v629, 0
      %v1826 = vsel %vm1549, %v630, 0
      %v1829 = vsel %vm1549, %v631, 0
      %v1832 = vsel %vm1549, %v632, 0
      %v1835 = vsel %vm1549, %v633, 0
      %v1838 = vsel %vm1549, %v634, 0
      %v1841 = vsel %vm1549, %v635, 0
      %v1844 = vsel %vm1549, %v636, 0
      %v1847 = vsel %vm1549, %v637, 0
      %v1850 = vsel %vm1549, %v638, 0
      %v1853 = vsel %vm1549, %v639, 0
      %v1856 = vsel %vm1549, %v640, 0
      %v1859 = vsel %vm1549, %v641, 0
      %v1862 = vsel %vm1549, %v642, 0
      %v1865 = vsel %vm1549, %v643, 0
      %v1868 = vsel %vm1549, %v644, 0
      %v1871 = vsel %vm1549, %v645, 0
      %v1874 = vsel %vm1549, %v646, 0
      %v1877 = vsel %vm1549, %v647, 0
      %v1880 = vsel %vm1549, %v648, 0
      %v1883 = vsel %vm1549, %v649, 0
      %v1886 = vsel %vm1549, %v650, 0
      %v1889 = vsel %vm1549, %v651, 0
      %v1892 = vsel %vm1549, %v652, 0
      %1894 = vmatpush.msra.mxu0 %v1795
      %1895 = vmatpush.msra.mxu0 %v1794
      %1896 = vmatpush.msra.mxu0 %v1793
      %1897 = vmatpush.msra.mxu0 %v1792
      %1898 = vmatpush.msra.mxu0 %v1791
      %1899 = vmatpush.msra.mxu0 %v1790
      %1900 = vmatpush.msra.mxu0 %v1789
      %1901 = vmatpush.msra.mxu0 %v1788
      %1902 = vmatpush.msra.mxu0 %v1787
      %1903 = vmatpush.msra.mxu0 %v1786
      %1904 = vmatpush.msra.mxu0 %v1785
      %1905 = vmatpush.msra.mxu0 %v1784
      %1906 = vmatpush.msra.mxu0 %v1783
      %1907 = vmatpush.msra.mxu0 %v1782
      %1908 = vmatpush.msra.mxu0 %v1781
      %1909 = vmatpush.msra.mxu0 %v1780
      %1910 = vmatmul.f32.gmra.mxu0 %v1748
      %v1911 = vpop.f32.mrf.mxu0
      %v1912 = vadd.f32 0.0, %v1911
      %1913 = vmatmul.f32.gmra.mxu0 %v1749
      %v1914 = vpop.f32.mrf.mxu0
      %v1915 = vadd.f32 0.0, %v1914
      %1916 = vmatmul.f32.gmra.mxu0 %v1750
      %v1917 = vpop.f32.mrf.mxu0
      %v1918 = vadd.f32 0.0, %v1917
      %1919 = vmatmul.f32.gmra.mxu0 %v1751
      %v1920 = vpop.f32.mrf.mxu0
      %v1921 = vadd.f32 0.0, %v1920
      %1922 = vmatmul.f32.gmra.mxu0 %v1752
      %v1923 = vpop.f32.mrf.mxu0
      %v1924 = vadd.f32 0.0, %v1923
      %1925 = vmatmul.f32.gmra.mxu0 %v1753
      %v1926 = vpop.f32.mrf.mxu0
      %v1927 = vadd.f32 0.0, %v1926
      %1928 = vmatmul.f32.gmra.mxu0 %v1754
      %v1929 = vpop.f32.mrf.mxu0
      %v1930 = vadd.f32 0.0, %v1929
      %1931 = vmatmul.f32.gmra.mxu0 %v1755
      %v1932 = vpop.f32.mrf.mxu0
      %v1933 = vadd.f32 0.0, %v1932
      %1934 = vmatmul.f32.gmra.mxu0 %v1756
      %v1935 = vpop.f32.mrf.mxu0
      %v1936 = vadd.f32 0.0, %v1935
      %1937 = vmatmul.f32.gmra.mxu0 %v1757
      %v1938 = vpop.f32.mrf.mxu0
      %v1939 = vadd.f32 0.0, %v1938
      %1940 = vmatmul.f32.gmra.mxu0 %v1758
      %v1941 = vpop.f32.mrf.mxu0
      %v1942 = vadd.f32 0.0, %v1941
      %1943 = vmatmul.f32.gmra.mxu0 %v1759
      %v1944 = vpop.f32.mrf.mxu0
      %v1945 = vadd.f32 0.0, %v1944
      %1946 = vmatmul.f32.gmra.mxu0 %v1760
      %v1947 = vpop.f32.mrf.mxu0
      %v1948 = vadd.f32 0.0, %v1947
      %1949 = vmatmul.f32.gmra.mxu0 %v1761
      %v1950 = vpop.f32.mrf.mxu0
      %v1951 = vadd.f32 0.0, %v1950
      %1952 = vmatmul.f32.gmra.mxu0 %v1762
      %v1953 = vpop.f32.mrf.mxu0
      %v1954 = vadd.f32 0.0, %v1953
      %1955 = vmatmul.f32.gmra.mxu0 %v1763
      %v1956 = vpop.f32.mrf.mxu0
      %v1957 = vadd.f32 0.0, %v1956
      %1958 = vmatmul.f32.gmra.mxu0 %v1764
      %v1959 = vpop.f32.mrf.mxu0
      %v1960 = vadd.f32 0.0, %v1959
      %1961 = vmatmul.f32.gmra.mxu0 %v1765
      %v1962 = vpop.f32.mrf.mxu0
      %v1963 = vadd.f32 0.0, %v1962
      %1964 = vmatmul.f32.gmra.mxu0 %v1766
      %v1965 = vpop.f32.mrf.mxu0
      %v1966 = vadd.f32 0.0, %v1965
      %1967 = vmatmul.f32.gmra.mxu0 %v1767
      %v1968 = vpop.f32.mrf.mxu0
      %v1969 = vadd.f32 0.0, %v1968
      %1970 = vmatmul.f32.gmra.mxu0 %v1768
      %v1971 = vpop.f32.mrf.mxu0
      %v1972 = vadd.f32 0.0, %v1971
      %1973 = vmatmul.f32.gmra.mxu0 %v1769
      %v1974 = vpop.f32.mrf.mxu0
      %v1975 = vadd.f32 0.0, %v1974
      %1976 = vmatmul.f32.gmra.mxu0 %v1770
      %v1977 = vpop.f32.mrf.mxu0
      %v1978 = vadd.f32 0.0, %v1977
      %1979 = vmatmul.f32.gmra.mxu0 %v1771
      %v1980 = vpop.f32.mrf.mxu0
      %v1981 = vadd.f32 0.0, %v1980
      %1982 = vmatmul.f32.gmra.mxu0 %v1772
      %v1983 = vpop.f32.mrf.mxu0
      %v1984 = vadd.f32 0.0, %v1983
      %1985 = vmatmul.f32.gmra.mxu0 %v1773
      %v1986 = vpop.f32.mrf.mxu0
      %v1987 = vadd.f32 0.0, %v1986
      %1988 = vmatmul.f32.gmra.mxu0 %v1774
      %v1989 = vpop.f32.mrf.mxu0
      %v1990 = vadd.f32 0.0, %v1989
      %1991 = vmatmul.f32.gmra.mxu0 %v1775
      %v1992 = vpop.f32.mrf.mxu0
      %v1993 = vadd.f32 0.0, %v1992
      %1994 = vmatmul.f32.gmra.mxu0 %v1776
      %v1995 = vpop.f32.mrf.mxu0
      %v1996 = vadd.f32 0.0, %v1995
      %1997 = vmatmul.f32.gmra.mxu0 %v1777
      %v1998 = vpop.f32.mrf.mxu0
      %v1999 = vadd.f32 0.0, %v1998
      %2000 = vmatmul.f32.gmra.mxu0 %v1778
      %v2001 = vpop.f32.mrf.mxu0
      %v2002 = vadd.f32 0.0, %v2001
      %2003 = vmatmul.f32.gmra.mxu0 %v1779
      %v2004 = vpop.f32.mrf.mxu0
      %v2005 = vadd.f32 0.0, %v2004
      %2006 = vdwg.mxu0
      %2007 = vmatpush.msra.mxu0 0.0
      %2008 = vmatpush.msra.mxu0 0.0
      %2009 = vmatpush.msra.mxu0 0.0
      %2010 = vmatpush.msra.mxu0 0.0
      %2011 = vmatpush.msra.mxu0 0.0
      %2012 = vmatpush.msra.mxu0 0.0
      %2013 = vmatpush.msra.mxu0 0.0
      %2014 = vmatpush.msra.mxu0 0.0
      %2015 = vmatpush.msra.mxu0 0.0
      %2016 = vmatpush.msra.mxu0 0.0
      %2017 = vmatpush.msra.mxu0 0.0
      %2018 = vmatpush.msra.mxu0 0.0
      %2019 = vmatpush.msra.mxu0 0.0
      %2020 = vmatpush.msra.mxu0 0.0
      %2021 = vmatpush.msra.mxu0 %v1797
      %2022 = vmatpush.msra.mxu0 %v1796
      %2023 = vmatmul.f32.gmra.mxu0 %v1799
      %v2024 = vpop.f32.mrf.mxu0
      %v2025 = vadd.f32 %v1912, %v2024
      %2026 = vmatmul.f32.gmra.mxu0 %v1802
      %v2027 = vpop.f32.mrf.mxu0
      %v2028 = vadd.f32 %v1915, %v2027
      %2029 = vmatmul.f32.gmra.mxu0 %v1805
      %v2030 = vpop.f32.mrf.mxu0
      %v2031 = vadd.f32 %v1918, %v2030
      %2032 = vmatmul.f32.gmra.mxu0 %v1808
      %v2033 = vpop.f32.mrf.mxu0
      %v2034 = vadd.f32 %v1921, %v2033
      %2035 = vmatmul.f32.gmra.mxu0 %v1811
      %v2036 = vpop.f32.mrf.mxu0
      %v2037 = vadd.f32 %v1924, %v2036
      %2038 = vmatmul.f32.gmra.mxu0 %v1814
      %v2039 = vpop.f32.mrf.mxu0
      %v2040 = vadd.f32 %v1927, %v2039
      %2041 = vmatmul.f32.gmra.mxu0 %v1817
      %v2042 = vpop.f32.mrf.mxu0
      %v2043 = vadd.f32 %v1930, %v2042
      %2044 = vmatmul.f32.gmra.mxu0 %v1820
      %v2045 = vpop.f32.mrf.mxu0
      %v2046 = vadd.f32 %v1933, %v2045
      %2047 = vmatmul.f32.gmra.mxu0 %v1823
      %v2048 = vpop.f32.mrf.mxu0
      %v2049 = vadd.f32 %v1936, %v2048
      %2050 = vmatmul.f32.gmra.mxu0 %v1826
      %v2051 = vpop.f32.mrf.mxu0
      %v2052 = vadd.f32 %v1939, %v2051
      %2053 = vmatmul.f32.gmra.mxu0 %v1829
      %v2054 = vpop.f32.mrf.mxu0
      %v2055 = vadd.f32 %v1942, %v2054
      %2056 = vmatmul.f32.gmra.mxu0 %v1832
      %v2057 = vpop.f32.mrf.mxu0
      %v2058 = vadd.f32 %v1945, %v2057
      %2059 = vmatmul.f32.gmra.mxu0 %v1835
      %v2060 = vpop.f32.mrf.mxu0
      %v2061 = vadd.f32 %v1948, %v2060
      %2062 = vmatmul.f32.gmra.mxu0 %v1838
      %v2063 = vpop.f32.mrf.mxu0
      %v2064 = vadd.f32 %v1951, %v2063
      %2065 = vmatmul.f32.gmra.mxu0 %v1841
      %v2066 = vpop.f32.mrf.mxu0
      %v2067 = vadd.f32 %v1954, %v2066
      %2068 = vmatmul.f32.gmra.mxu0 %v1844
      %v2069 = vpop.f32.mrf.mxu0
      %v2070 = vadd.f32 %v1957, %v2069
      %2071 = vmatmul.f32.gmra.mxu0 %v1847
      %v2072 = vpop.f32.mrf.mxu0
      %v2073 = vadd.f32 %v1960, %v2072
      %2074 = vmatmul.f32.gmra.mxu0 %v1850
      %v2075 = vpop.f32.mrf.mxu0
      %v2076 = vadd.f32 %v1963, %v2075
      %2077 = vmatmul.f32.gmra.mxu0 %v1853
      %v2078 = vpop.f32.mrf.mxu0
      %v2079 = vadd.f32 %v1966, %v2078
      %2080 = vmatmul.f32.gmra.mxu0 %v1856
      %v2081 = vpop.f32.mrf.mxu0
      %v2082 = vadd.f32 %v1969, %v2081
      %2083 = vmatmul.f32.gmra.mxu0 %v1859
      %v2084 = vpop.f32.mrf.mxu0
      %v2085 = vadd.f32 %v1972, %v2084
      %2086 = vmatmul.f32.gmra.mxu0 %v1862
      %v2087 = vpop.f32.mrf.mxu0
      %v2088 = vadd.f32 %v1975, %v2087
      %2089 = vmatmul.f32.gmra.mxu0 %v1865
      %v2090 = vpop.f32.mrf.mxu0
      %v2091 = vadd.f32 %v1978, %v2090
      %2092 = vmatmul.f32.gmra.mxu0 %v1868
      %v2093 = vpop.f32.mrf.mxu0
      %v2094 = vadd.f32 %v1981, %v2093
      %2095 = vmatmul.f32.gmra.mxu0 %v1871
      %v2096 = vpop.f32.mrf.mxu0
      %v2097 = vadd.f32 %v1984, %v2096
      %2098 = vmatmul.f32.gmra.mxu0 %v1874
      %v2099 = vpop.f32.mrf.mxu0
      %v2100 = vadd.f32 %v1987, %v2099
      %2101 = vmatmul.f32.gmra.mxu0 %v1877
      %v2102 = vpop.f32.mrf.mxu0
      %v2103 = vadd.f32 %v1990, %v2102
      %2104 = vmatmul.f32.gmra.mxu0 %v1880
      %v2105 = vpop.f32.mrf.mxu0
      %v2106 = vadd.f32 %v1993, %v2105
      %2107 = vmatmul.f32.gmra.mxu0 %v1883
      %v2108 = vpop.f32.mrf.mxu0
      %v2109 = vadd.f32 %v1996, %v2108
      %2110 = vmatmul.f32.gmra.mxu0 %v1886
      %v2111 = vpop.f32.mrf.mxu0
      %v2112 = vadd.f32 %v1999, %v2111
      %2113 = vmatmul.f32.gmra.mxu0 %v1889
      %v2114 = vpop.f32.mrf.mxu0
      %v2115 = vadd.f32 %v2002, %v2114
      %2116 = vmatmul.f32.gmra.mxu0 %v1892
      %v2117 = vpop.f32.mrf.mxu0
      %v2118 = vadd.f32 %v2005, %v2117
      %2119 = vdwg.mxu0
      %vm2120 = vcmask 64512
      %2121 = vst.msk [vmem:[%s340] sm:$0xff] %vm2120, %v2025
      %2122 = vst.msk [vmem:[%s340 + $0x8] sm:$0xff] %vm2120, %v2028
      %2123 = vst.msk [vmem:[%s340 + $0x10] sm:$0xff] %vm2120, %v2031
      %2124 = vst.msk [vmem:[%s340 + $0x18] sm:$0xff] %vm2120, %v2034
      %2125 = vst.msk [vmem:[%s340 + $0x20] sm:$0xff] %vm2120, %v2037
      %2126 = vst.msk [vmem:[%s340 + $0x28] sm:$0xff] %vm2120, %v2040
      %2127 = vst.msk [vmem:[%s340 + $0x30] sm:$0xff] %vm2120, %v2043
      %2128 = vst.msk [vmem:[%s340 + $0x38] sm:$0xff] %vm2120, %v2046
      %2129 = vst.msk [vmem:[%s340 + $0x40] sm:$0xff] %vm2120, %v2049
      %2130 = vst.msk [vmem:[%s340 + $0x48] sm:$0xff] %vm2120, %v2052
      %2131 = vst.msk [vmem:[%s340 + $0x50] sm:$0xff] %vm2120, %v2055
      %2132 = vst.msk [vmem:[%s340 + $0x58] sm:$0xff] %vm2120, %v2058
      %2133 = vst.msk [vmem:[%s340 + $0x60] sm:$0xff] %vm2120, %v2061
      %2134 = vst.msk [vmem:[%s340 + $0x68] sm:$0xff] %vm2120, %v2064
      %2135 = vst.msk [vmem:[%s340 + $0x70] sm:$0xff] %vm2120, %v2067
      %2136 = vst.msk [vmem:[%s340 + $0x78] sm:$0xff] %vm2120, %v2070
      %2137 = vst.msk [vmem:[%s340 + $0x80] sm:$0xff] %vm2120, %v2073
      %2138 = vst.msk [vmem:[%s340 + $0x88] sm:$0xff] %vm2120, %v2076
      %2139 = vst.msk [vmem:[%s340 + $0x90] sm:$0xff] %vm2120, %v2079
      %2140 = vst.msk [vmem:[%s340 + $0x98] sm:$0xff] %vm2120, %v2082
      %2141 = vst.msk [vmem:[%s340 + $0xa0] sm:$0xff] %vm2120, %v2085
      %2142 = vst.msk [vmem:[%s340 + $0xa8] sm:$0xff] %vm2120, %v2088
      %2143 = vst.msk [vmem:[%s340 + $0xb0] sm:$0xff] %vm2120, %v2091
      %2144 = vst.msk [vmem:[%s340 + $0xb8] sm:$0xff] %vm2120, %v2094
      %2145 = vst.msk [vmem:[%s340 + $0xc0] sm:$0xff] %vm2120, %v2097
      %2146 = vst.msk [vmem:[%s340 + $0xc8] sm:$0xff] %vm2120, %v2100
      %2147 = vst.msk [vmem:[%s340 + $0xd0] sm:$0xff] %vm2120, %v2103
      %2148 = vst.msk [vmem:[%s340 + $0xd8] sm:$0xff] %vm2120, %v2106
      %2149 = vst.msk [vmem:[%s340 + $0xe0] sm:$0xff] %vm2120, %v2109
      %2150 = vst.msk [vmem:[%s340 + $0xe8] sm:$0xff] %vm2120, %v2112
      %2151 = vst.msk [vmem:[%s340 + $0xf0] sm:$0xff] %vm2120, %v2115
      %2152 = vst.msk [vmem:[%s340 + $0xf8] sm:$0xff] %vm2120, %v2118
      %2185 = vrot.lane.b32.xlu0 %v2025, 120
      %v2186 = vpop.permute.xlu0 %2185
      %2187 = vrot.lane.b32.xlu0 %v2028, 120
      %v2188 = vpop.permute.xlu0 %2187
      %2189 = vrot.lane.b32.xlu0 %v2031, 120
      %v2190 = vpop.permute.xlu0 %2189
      %2191 = vrot.lane.b32.xlu0 %v2034, 120
      %v2192 = vpop.permute.xlu0 %2191
      %2193 = vrot.lane.b32.xlu0 %v2037, 120
      %v2194 = vpop.permute.xlu0 %2193
      %2195 = vrot.lane.b32.xlu0 %v2040, 120
      %v2196 = vpop.permute.xlu0 %2195
      %2197 = vrot.lane.b32.xlu0 %v2043, 120
      %v2198 = vpop.permute.xlu0 %2197
      %2199 = vrot.lane.b32.xlu0 %v2046, 120
      %v2200 = vpop.permute.xlu0 %2199
      %2201 = vrot.lane.b32.xlu0 %v2049, 120
      %v2202 = vpop.permute.xlu0 %2201
      %2203 = vrot.lane.b32.xlu0 %v2052, 120
      %v2204 = vpop.permute.xlu0 %2203
      %2205 = vrot.lane.b32.xlu0 %v2055, 120
      %v2206 = vpop.permute.xlu0 %2205
      %2207 = vrot.lane.b32.xlu0 %v2058, 120
      %v2208 = vpop.permute.xlu0 %2207
      %2209 = vrot.lane.b32.xlu0 %v2061, 120
      %v2210 = vpop.permute.xlu0 %2209
      %2211 = vrot.lane.b32.xlu0 %v2064, 120
      %v2212 = vpop.permute.xlu0 %2211
      %2213 = vrot.lane.b32.xlu0 %v2067, 120
      %v2214 = vpop.permute.xlu0 %2213
      %2215 = vrot.lane.b32.xlu0 %v2070, 120
      %v2216 = vpop.permute.xlu0 %2215
      %2217 = vrot.lane.b32.xlu0 %v2073, 120
      %v2218 = vpop.permute.xlu0 %2217
      %2219 = vrot.lane.b32.xlu0 %v2076, 120
      %v2220 = vpop.permute.xlu0 %2219
      %2221 = vrot.lane.b32.xlu0 %v2079, 120
      %v2222 = vpop.permute.xlu0 %2221
      %2223 = vrot.lane.b32.xlu0 %v2082, 120
      %v2224 = vpop.permute.xlu0 %2223
      %2225 = vrot.lane.b32.xlu0 %v2085, 120
      %v2226 = vpop.permute.xlu0 %2225
      %2227 = vrot.lane.b32.xlu0 %v2088, 120
      %v2228 = vpop.permute.xlu0 %2227
      %2229 = vrot.lane.b32.xlu0 %v2091, 120
      %v2230 = vpop.permute.xlu0 %2229
      %2231 = vrot.lane.b32.xlu0 %v2094, 120
      %v2232 = vpop.permute.xlu0 %2231
      %2233 = vrot.lane.b32.xlu0 %v2097, 120
      %v2234 = vpop.permute.xlu0 %2233
      %2235 = vrot.lane.b32.xlu0 %v2100, 120
      %v2236 = vpop.permute.xlu0 %2235
      %2237 = vrot.lane.b32.xlu0 %v2103, 120
      %v2238 = vpop.permute.xlu0 %2237
      %2239 = vrot.lane.b32.xlu0 %v2106, 120
      %v2240 = vpop.permute.xlu0 %2239
      %2241 = vrot.lane.b32.xlu0 %v2109, 120
      %v2242 = vpop.permute.xlu0 %2241
      %2243 = vrot.lane.b32.xlu0 %v2112, 120
      %v2244 = vpop.permute.xlu0 %2243
      %2245 = vrot.lane.b32.xlu0 %v2115, 120
      %v2246 = vpop.permute.xlu0 %2245
      %2247 = vrot.lane.b32.xlu0 %v2118, 120
      %v2248 = vpop.permute.xlu0 %2247
      %2281 = vst.msk [vmem:[%s345] sm:$0xff] %vm2120, %v2186
      %2282 = vst.msk [vmem:[%s345 + $0x8] sm:$0xff] %vm2120, %v2188
      %2283 = vst.msk [vmem:[%s345 + $0x10] sm:$0xff] %vm2120, %v2190
      %2284 = vst.msk [vmem:[%s345 + $0x18] sm:$0xff] %vm2120, %v2192
      %2285 = vst.msk [vmem:[%s345 + $0x20] sm:$0xff] %vm2120, %v2194
      %2286 = vst.msk [vmem:[%s345 + $0x28] sm:$0xff] %vm2120, %v2196
      %2287 = vst.msk [vmem:[%s345 + $0x30] sm:$0xff] %vm2120, %v2198
      %2288 = vst.msk [vmem:[%s345 + $0x38] sm:$0xff] %vm2120, %v2200
      %2289 = vst.msk [vmem:[%s345 + $0x40] sm:$0xff] %vm2120, %v2202
      %2290 = vst.msk [vmem:[%s345 + $0x48] sm:$0xff] %vm2120, %v2204
      %2291 = vst.msk [vmem:[%s345 + $0x50] sm:$0xff] %vm2120, %v2206
      %2292 = vst.msk [vmem:[%s345 + $0x58] sm:$0xff] %vm2120, %v2208
      %2293 = vst.msk [vmem:[%s345 + $0x60] sm:$0xff] %vm2120, %v2210
      %2294 = vst.msk [vmem:[%s345 + $0x68] sm:$0xff] %vm2120, %v2212
      %2295 = vst.msk [vmem:[%s345 + $0x70] sm:$0xff] %vm2120, %v2214
      %2296 = vst.msk [vmem:[%s345 + $0x78] sm:$0xff] %vm2120, %v2216
      %2297 = vst.msk [vmem:[%s345 + $0x80] sm:$0xff] %vm2120, %v2218
      %2298 = vst.msk [vmem:[%s345 + $0x88] sm:$0xff] %vm2120, %v2220
      %2299 = vst.msk [vmem:[%s345 + $0x90] sm:$0xff] %vm2120, %v2222
      %2300 = vst.msk [vmem:[%s345 + $0x98] sm:$0xff] %vm2120, %v2224
      %2301 = vst.msk [vmem:[%s345 + $0xa0] sm:$0xff] %vm2120, %v2226
      %2302 = vst.msk [vmem:[%s345 + $0xa8] sm:$0xff] %vm2120, %v2228
      %2303 = vst.msk [vmem:[%s345 + $0xb0] sm:$0xff] %vm2120, %v2230
      %2304 = vst.msk [vmem:[%s345 + $0xb8] sm:$0xff] %vm2120, %v2232
      %2305 = vst.msk [vmem:[%s345 + $0xc0] sm:$0xff] %vm2120, %v2234
      %2306 = vst.msk [vmem:[%s345 + $0xc8] sm:$0xff] %vm2120, %v2236
      %2307 = vst.msk [vmem:[%s345 + $0xd0] sm:$0xff] %vm2120, %v2238
      %2308 = vst.msk [vmem:[%s345 + $0xd8] sm:$0xff] %vm2120, %v2240
      %2309 = vst.msk [vmem:[%s345 + $0xe0] sm:$0xff] %vm2120, %v2242
      %2310 = vst.msk [vmem:[%s345 + $0xe8] sm:$0xff] %vm2120, %v2244
      %2311 = vst.msk [vmem:[%s345 + $0xf0] sm:$0xff] %vm2120, %v2246
      %2312 = vst.msk [vmem:[%s345 + $0xf8] sm:$0xff] %vm2120, %v2248
      %2313 = vrot.lane.b32.xlu0 %v2025, 112
      %v2314 = vpop.permute.xlu0 %2313
      %2315 = vrot.lane.b32.xlu0 %v2028, 112
      %v2316 = vpop.permute.xlu0 %2315
      %2317 = vrot.lane.b32.xlu0 %v2031, 112
      %v2318 = vpop.permute.xlu0 %2317
      %2319 = vrot.lane.b32.xlu0 %v2034, 112
      %v2320 = vpop.permute.xlu0 %2319
      %2321 = vrot.lane.b32.xlu0 %v2037, 112
      %v2322 = vpop.permute.xlu0 %2321
      %2323 = vrot.lane.b32.xlu0 %v2040, 112
      %v2324 = vpop.permute.xlu0 %2323
      %2325 = vrot.lane.b32.xlu0 %v2043, 112
      %v2326 = vpop.permute.xlu0 %2325
      %2327 = vrot.lane.b32.xlu0 %v2046, 112
      %v2328 = vpop.permute.xlu0 %2327
      %2329 = vrot.lane.b32.xlu0 %v2049, 112
      %v2330 = vpop.permute.xlu0 %2329
      %2331 = vrot.lane.b32.xlu0 %v2052, 112
      %v2332 = vpop.permute.xlu0 %2331
      %2333 = vrot.lane.b32.xlu0 %v2055, 112
      %v2334 = vpop.permute.xlu0 %2333
      %2335 = vrot.lane.b32.xlu0 %v2058, 112
      %v2336 = vpop.permute.xlu0 %2335
      %2337 = vrot.lane.b32.xlu0 %v2061, 112
      %v2338 = vpop.permute.xlu0 %2337
      %2339 = vrot.lane.b32.xlu0 %v2064, 112
      %v2340 = vpop.permute.xlu0 %2339
      %2341 = vrot.lane.b32.xlu0 %v2067, 112
      %v2342 = vpop.permute.xlu0 %2341
      %2343 = vrot.lane.b32.xlu0 %v2070, 112
      %v2344 = vpop.permute.xlu0 %2343
      %2345 = vrot.lane.b32.xlu0 %v2073, 112
      %v2346 = vpop.permute.xlu0 %2345
      %2347 = vrot.lane.b32.xlu0 %v2076, 112
      %v2348 = vpop.permute.xlu0 %2347
      %2349 = vrot.lane.b32.xlu0 %v2079, 112
      %v2350 = vpop.permute.xlu0 %2349
      %2351 = vrot.lane.b32.xlu0 %v2082, 112
      %v2352 = vpop.permute.xlu0 %2351
      %2353 = vrot.lane.b32.xlu0 %v2085, 112
      %v2354 = vpop.permute.xlu0 %2353
      %2355 = vrot.lane.b32.xlu0 %v2088, 112
      %v2356 = vpop.permute.xlu0 %2355
      %2357 = vrot.lane.b32.xlu0 %v2091, 112
      %v2358 = vpop.permute.xlu0 %2357
      %2359 = vrot.lane.b32.xlu0 %v2094, 112
      %v2360 = vpop.permute.xlu0 %2359
      %2361 = vrot.lane.b32.xlu0 %v2097, 112
      %v2362 = vpop.permute.xlu0 %2361
      %2363 = vrot.lane.b32.xlu0 %v2100, 112
      %v2364 = vpop.permute.xlu0 %2363
      %2365 = vrot.lane.b32.xlu0 %v2103, 112
      %v2366 = vpop.permute.xlu0 %2365
      %2367 = vrot.lane.b32.xlu0 %v2106, 112
      %v2368 = vpop.permute.xlu0 %2367
      %2369 = vrot.lane.b32.xlu0 %v2109, 112
      %v2370 = vpop.permute.xlu0 %2369
      %2371 = vrot.lane.b32.xlu0 %v2112, 112
      %v2372 = vpop.permute.xlu0 %2371
      %2373 = vrot.lane.b32.xlu0 %v2115, 112
      %v2374 = vpop.permute.xlu0 %2373
      %2375 = vrot.lane.b32.xlu0 %v2118, 112
      %v2376 = vpop.permute.xlu0 %2375
      %vm2409 = vcmask 31744
      %2410 = vst.msk [vmem:[%s350] sm:$0xff] %vm2409, %v2314
      %2411 = vst.msk [vmem:[%s350 + $0x8] sm:$0xff] %vm2409, %v2316
      %2412 = vst.msk [vmem:[%s350 + $0x10] sm:$0xff] %vm2409, %v2318
      %2413 = vst.msk [vmem:[%s350 + $0x18] sm:$0xff] %vm2409, %v2320
      %2414 = vst.msk [vmem:[%s350 + $0x20] sm:$0xff] %vm2409, %v2322
      %2415 = vst.msk [vmem:[%s350 + $0x28] sm:$0xff] %vm2409, %v2324
      %2416 = vst.msk [vmem:[%s350 + $0x30] sm:$0xff] %vm2409, %v2326
      %2417 = vst.msk [vmem:[%s350 + $0x38] sm:$0xff] %vm2409, %v2328
      %2418 = vst.msk [vmem:[%s350 + $0x40] sm:$0xff] %vm2409, %v2330
      %2419 = vst.msk [vmem:[%s350 + $0x48] sm:$0xff] %vm2409, %v2332
      %2420 = vst.msk [vmem:[%s350 + $0x50] sm:$0xff] %vm2409, %v2334
      %2421 = vst.msk [vmem:[%s350 + $0x58] sm:$0xff] %vm2409, %v2336
      %2422 = vst.msk [vmem:[%s350 + $0x60] sm:$0xff] %vm2409, %v2338
      %2423 = vst.msk [vmem:[%s350 + $0x68] sm:$0xff] %vm2409, %v2340
      %2424 = vst.msk [vmem:[%s350 + $0x70] sm:$0xff] %vm2409, %v2342
      %2425 = vst.msk [vmem:[%s350 + $0x78] sm:$0xff] %vm2409, %v2344
      %2426 = vst.msk [vmem:[%s350 + $0x80] sm:$0xff] %vm2409, %v2346
      %2427 = vst.msk [vmem:[%s350 + $0x88] sm:$0xff] %vm2409, %v2348
      %2428 = vst.msk [vmem:[%s350 + $0x90] sm:$0xff] %vm2409, %v2350
      %2429 = vst.msk [vmem:[%s350 + $0x98] sm:$0xff] %vm2409, %v2352
      %2430 = vst.msk [vmem:[%s350 + $0xa0] sm:$0xff] %vm2409, %v2354
      %2431 = vst.msk [vmem:[%s350 + $0xa8] sm:$0xff] %vm2409, %v2356
      %2432 = vst.msk [vmem:[%s350 + $0xb0] sm:$0xff] %vm2409, %v2358
      %2433 = vst.msk [vmem:[%s350 + $0xb8] sm:$0xff] %vm2409, %v2360
      %2434 = vst.msk [vmem:[%s350 + $0xc0] sm:$0xff] %vm2409, %v2362
      %2435 = vst.msk [vmem:[%s350 + $0xc8] sm:$0xff] %vm2409, %v2364
      %2436 = vst.msk [vmem:[%s350 + $0xd0] sm:$0xff] %vm2409, %v2366
      %2437 = vst.msk [vmem:[%s350 + $0xd8] sm:$0xff] %vm2409, %v2368
      %2438 = vst.msk [vmem:[%s350 + $0xe0] sm:$0xff] %vm2409, %v2370
      %2439 = vst.msk [vmem:[%s350 + $0xe8] sm:$0xff] %vm2409, %v2372
      %2440 = vst.msk [vmem:[%s350 + $0xf0] sm:$0xff] %vm2409, %v2374
      %2441 = vst.msk [vmem:[%s350 + $0xf8] sm:$0xff] %vm2409, %v2376
      %v2442 = vsel %vm2120, %v2025, 0.0
      %v2443 = vsel %vm2120, %v2028, 0.0
      %v2444 = vadd.f32 %v2442, %v2443
      %v2445 = vsel %vm2120, %v2031, 0.0
      %v2446 = vadd.f32 %v2444, %v2445
      %v2447 = vsel %vm2120, %v2034, 0.0
      %v2448 = vadd.f32 %v2446, %v2447
      %v2449 = vsel %vm2120, %v2037, 0.0
      %v2450 = vadd.f32 %v2448, %v2449
      %v2451 = vsel %vm2120, %v2040, 0.0
      %v2452 = vadd.f32 %v2450, %v2451
      %v2453 = vsel %vm2120, %v2043, 0.0
      %v2454 = vadd.f32 %v2452, %v2453
      %v2455 = vsel %vm2120, %v2046, 0.0
      %v2456 = vadd.f32 %v2454, %v2455
      %v2457 = vsel %vm2120, %v2049, 0.0
      %v2458 = vadd.f32 %v2456, %v2457
      %v2459 = vsel %vm2120, %v2052, 0.0
      %v2460 = vadd.f32 %v2458, %v2459
      %v2461 = vsel %vm2120, %v2055, 0.0
      %v2462 = vadd.f32 %v2460, %v2461
      %v2463 = vsel %vm2120, %v2058, 0.0
      %v2464 = vadd.f32 %v2462, %v2463
      %v2465 = vsel %vm2120, %v2061, 0.0
      %v2466 = vadd.f32 %v2464, %v2465
      %v2467 = vsel %vm2120, %v2064, 0.0
      %v2468 = vadd.f32 %v2466, %v2467
      %v2469 = vsel %vm2120, %v2067, 0.0
      %v2470 = vadd.f32 %v2468, %v2469
      %v2471 = vsel %vm2120, %v2070, 0.0
      %v2472 = vadd.f32 %v2470, %v2471
      %v2473 = vsel %vm2120, %v2073, 0.0
      %v2474 = vadd.f32 %v2472, %v2473
      %v2475 = vsel %vm2120, %v2076, 0.0
      %v2476 = vadd.f32 %v2474, %v2475
      %v2477 = vsel %vm2120, %v2079, 0.0
      %v2478 = vadd.f32 %v2476, %v2477
      %v2479 = vsel %vm2120, %v2082, 0.0
      %v2480 = vadd.f32 %v2478, %v2479
      %v2481 = vsel %vm2120, %v2085, 0.0
      %v2482 = vadd.f32 %v2480, %v2481
      %v2483 = vsel %vm2120, %v2088, 0.0
      %v2484 = vadd.f32 %v2482, %v2483
      %v2485 = vsel %vm2120, %v2091, 0.0
      %v2486 = vadd.f32 %v2484, %v2485
      %v2487 = vsel %vm2120, %v2094, 0.0
      %v2488 = vadd.f32 %v2486, %v2487
      %v2489 = vsel %vm2120, %v2097, 0.0
      %v2490 = vadd.f32 %v2488, %v2489
      %v2491 = vsel %vm2120, %v2100, 0.0
      %v2492 = vadd.f32 %v2490, %v2491
      %v2493 = vsel %vm2120, %v2103, 0.0
      %v2494 = vadd.f32 %v2492, %v2493
      %v2495 = vsel %vm2120, %v2106, 0.0
      %v2496 = vadd.f32 %v2494, %v2495
      %v2497 = vsel %vm2120, %v2109, 0.0
      %v2498 = vadd.f32 %v2496, %v2497
      %v2499 = vsel %vm2120, %v2112, 0.0
      %v2500 = vadd.f32 %v2498, %v2499
      %v2501 = vsel %vm2120, %v2115, 0.0
      %v2502 = vadd.f32 %v2500, %v2501
      %v2503 = vsel %vm2120, %v2118, 0.0
      %v2504 = vadd.f32 %v2502, %v2503
      %v2505 = vrot.slane %v2504, 4
      %v2506 = vadd.f32 %v2504, %v2505
      %v2507 = vrot.slane %v2506, 2
      %v2508 = vadd.f32 %v2506, %v2507
      %v2509 = vrot.slane %v2508, 1
      %v2510 = vadd.f32 %v2508, %v2509
      %vm2511 = vcmask 57344
      %2512 = vst.msk [vmem:[%s353] sm:$0x1] %vm2511, %v2510
      %v2513 = vmul.f32 %v2025, %v2025
      %v2514 = vmul.f32 %v2028, %v2028
      %v2515 = vmul.f32 %v2031, %v2031
      %v2516 = vmul.f32 %v2034, %v2034
      %v2517 = vmul.f32 %v2037, %v2037
      %v2518 = vmul.f32 %v2040, %v2040
      %v2519 = vmul.f32 %v2043, %v2043
      %v2520 = vmul.f32 %v2046, %v2046
      %v2521 = vmul.f32 %v2049, %v2049
      %v2522 = vmul.f32 %v2052, %v2052
      %v2523 = vmul.f32 %v2055, %v2055
      %v2524 = vmul.f32 %v2058, %v2058
      %v2525 = vmul.f32 %v2061, %v2061
      %v2526 = vmul.f32 %v2064, %v2064
      %v2527 = vmul.f32 %v2067, %v2067
      %v2528 = vmul.f32 %v2070, %v2070
      %v2529 = vmul.f32 %v2073, %v2073
      %v2530 = vmul.f32 %v2076, %v2076
      %v2531 = vmul.f32 %v2079, %v2079
      %v2532 = vmul.f32 %v2082, %v2082
      %v2533 = vmul.f32 %v2085, %v2085
      %v2534 = vmul.f32 %v2088, %v2088
      %v2535 = vmul.f32 %v2091, %v2091
      %v2536 = vmul.f32 %v2094, %v2094
      %v2537 = vmul.f32 %v2097, %v2097
      %v2538 = vmul.f32 %v2100, %v2100
      %v2539 = vmul.f32 %v2103, %v2103
      %v2540 = vmul.f32 %v2106, %v2106
      %v2541 = vmul.f32 %v2109, %v2109
      %v2542 = vmul.f32 %v2112, %v2112
      %v2543 = vmul.f32 %v2115, %v2115
      %v2544 = vmul.f32 %v2118, %v2118
      %v2545 = vsel %vm2120, %v2513, 0.0
      %v2546 = vsel %vm2120, %v2514, 0.0
      %v2547 = vadd.f32 %v2545, %v2546
      %v2548 = vsel %vm2120, %v2515, 0.0
      %v2549 = vadd.f32 %v2547, %v2548
      %v2550 = vsel %vm2120, %v2516, 0.0
      %v2551 = vadd.f32 %v2549, %v2550
      %v2552 = vsel %vm2120, %v2517, 0.0
      %v2553 = vadd.f32 %v2551, %v2552
      %v2554 = vsel %vm2120, %v2518, 0.0
      %v2555 = vadd.f32 %v2553, %v2554
      %v2556 = vsel %vm2120, %v2519, 0.0
      %v2557 = vadd.f32 %v2555, %v2556
      %v2558 = vsel %vm2120, %v2520, 0.0
      %v2559 = vadd.f32 %v2557, %v2558
      %v2560 = vsel %vm2120, %v2521, 0.0
      %v2561 = vadd.f32 %v2559, %v2560
      %v2562 = vsel %vm2120, %v2522, 0.0
      %v2563 = vadd.f32 %v2561, %v2562
      %v2564 = vsel %vm2120, %v2523, 0.0
      %v2565 = vadd.f32 %v2563, %v2564
      %v2566 = vsel %vm2120, %v2524, 0.0
      %v2567 = vadd.f32 %v2565, %v2566
      %v2568 = vsel %vm2120, %v2525, 0.0
      %v2569 = vadd.f32 %v2567, %v2568
      %v2570 = vsel %vm2120, %v2526, 0.0
      %v2571 = vadd.f32 %v2569, %v2570
      %v2572 = vsel %vm2120, %v2527, 0.0
      %v2573 = vadd.f32 %v2571, %v2572
      %v2574 = vsel %vm2120, %v2528, 0.0
      %v2575 = vadd.f32 %v2573, %v2574
      %v2576 = vsel %vm2120, %v2529, 0.0
      %v2577 = vadd.f32 %v2575, %v2576
      %v2578 = vsel %vm2120, %v2530, 0.0
      %v2579 = vadd.f32 %v2577, %v2578
      %v2580 = vsel %vm2120, %v2531, 0.0
      %v2581 = vadd.f32 %v2579, %v2580
      %v2582 = vsel %vm2120, %v2532, 0.0
      %v2583 = vadd.f32 %v2581, %v2582
      %v2584 = vsel %vm2120, %v2533, 0.0
      %v2585 = vadd.f32 %v2583, %v2584
      %v2586 = vsel %vm2120, %v2534, 0.0
      %v2587 = vadd.f32 %v2585, %v2586
      %v2588 = vsel %vm2120, %v2535, 0.0
      %v2589 = vadd.f32 %v2587, %v2588
      %v2590 = vsel %vm2120, %v2536, 0.0
      %v2591 = vadd.f32 %v2589, %v2590
      %v2592 = vsel %vm2120, %v2537, 0.0
      %v2593 = vadd.f32 %v2591, %v2592
      %v2594 = vsel %vm2120, %v2538, 0.0
      %v2595 = vadd.f32 %v2593, %v2594
      %v2596 = vsel %vm2120, %v2539, 0.0
      %v2597 = vadd.f32 %v2595, %v2596
      %v2598 = vsel %vm2120, %v2540, 0.0
      %v2599 = vadd.f32 %v2597, %v2598
      %v2600 = vsel %vm2120, %v2541, 0.0
      %v2601 = vadd.f32 %v2599, %v2600
      %v2602 = vsel %vm2120, %v2542, 0.0
      %v2603 = vadd.f32 %v2601, %v2602
      %v2604 = vsel %vm2120, %v2543, 0.0
      %v2605 = vadd.f32 %v2603, %v2604
      %v2606 = vsel %vm2120, %v2544, 0.0
      %v2607 = vadd.f32 %v2605, %v2606
      %v2608 = vrot.slane %v2607, 4
      %v2609 = vadd.f32 %v2607, %v2608
      %v2610 = vrot.slane %v2609, 2
      %v2611 = vadd.f32 %v2609, %v2610
      %v2612 = vrot.slane %v2611, 1
      %v2613 = vadd.f32 %v2611, %v2612
      %2614 = vst.msk [vmem:[%s356] sm:$0x1] %vm2511, %v2613
      %vm2615 = vcmask 162944
      %v2616 = vsel %vm2615, %v2025, 0.0
      %v2617 = vsel %vm2615, %v2028, 0.0
      %v2618 = vadd.f32 %v2616, %v2617
      %v2619 = vsel %vm2615, %v2031, 0.0
      %v2620 = vadd.f32 %v2618, %v2619
      %v2621 = vsel %vm2615, %v2034, 0.0
      %v2622 = vadd.f32 %v2620, %v2621
      %v2623 = vsel %vm2615, %v2037, 0.0
      %v2624 = vadd.f32 %v2622, %v2623
      %v2625 = vsel %vm2615, %v2040, 0.0
      %v2626 = vadd.f32 %v2624, %v2625
      %v2627 = vsel %vm2615, %v2043, 0.0
      %v2628 = vadd.f32 %v2626, %v2627
      %v2629 = vsel %vm2615, %v2046, 0.0
      %v2630 = vadd.f32 %v2628, %v2629
      %v2631 = vsel %vm2615, %v2049, 0.0
      %v2632 = vadd.f32 %v2630, %v2631
      %v2633 = vsel %vm2615, %v2052, 0.0
      %v2634 = vadd.f32 %v2632, %v2633
      %v2635 = vsel %vm2615, %v2055, 0.0
      %v2636 = vadd.f32 %v2634, %v2635
      %v2637 = vsel %vm2615, %v2058, 0.0
      %v2638 = vadd.f32 %v2636, %v2637
      %v2639 = vsel %vm2615, %v2061, 0.0
      %v2640 = vadd.f32 %v2638, %v2639
      %v2641 = vsel %vm2615, %v2064, 0.0
      %v2642 = vadd.f32 %v2640, %v2641
      %v2643 = vsel %vm2615, %v2067, 0.0
      %v2644 = vadd.f32 %v2642, %v2643
      %v2645 = vsel %vm2615, %v2070, 0.0
      %v2646 = vadd.f32 %v2644, %v2645
      %v2647 = vsel %vm2615, %v2073, 0.0
      %v2648 = vadd.f32 %v2646, %v2647
      %v2649 = vsel %vm2615, %v2076, 0.0
      %v2650 = vadd.f32 %v2648, %v2649
      %v2651 = vsel %vm2615, %v2079, 0.0
      %v2652 = vadd.f32 %v2650, %v2651
      %v2653 = vsel %vm2615, %v2082, 0.0
      %v2654 = vadd.f32 %v2652, %v2653
      %v2655 = vsel %vm2615, %v2085, 0.0
      %v2656 = vadd.f32 %v2654, %v2655
      %v2657 = vsel %vm2615, %v2088, 0.0
      %v2658 = vadd.f32 %v2656, %v2657
      %v2659 = vsel %vm2615, %v2091, 0.0
      %v2660 = vadd.f32 %v2658, %v2659
      %v2661 = vsel %vm2615, %v2094, 0.0
      %v2662 = vadd.f32 %v2660, %v2661
      %v2663 = vsel %vm2615, %v2097, 0.0
      %v2664 = vadd.f32 %v2662, %v2663
      %v2665 = vsel %vm2615, %v2100, 0.0
      %v2666 = vadd.f32 %v2664, %v2665
      %v2667 = vsel %vm2615, %v2103, 0.0
      %v2668 = vadd.f32 %v2666, %v2667
      %v2669 = vsel %vm2615, %v2106, 0.0
      %v2670 = vadd.f32 %v2668, %v2669
      %v2671 = vsel %vm2615, %v2109, 0.0
      %v2672 = vadd.f32 %v2670, %v2671
      %v2673 = vsel %vm2615, %v2112, 0.0
      %v2674 = vadd.f32 %v2672, %v2673
      %v2675 = vsel %vm2615, %v2115, 0.0
      %v2676 = vadd.f32 %v2674, %v2675
      %v2677 = vsel %vm2615, %v2118, 0.0
      %v2678 = vadd.f32 %v2676, %v2677
      %v2679 = vrot.slane %v2678, 4
      %v2680 = vadd.f32 %v2678, %v2679
      %v2681 = vrot.slane %v2680, 2
      %v2682 = vadd.f32 %v2680, %v2681
      %v2683 = vrot.slane %v2682, 1
      %v2684 = vadd.f32 %v2682, %v2683
      %2686 = vrot.lane.b32.xlu0 %v2684, 112
      %v2687 = vpop.permute.xlu0 %2686
      %vm2689 = vcmask 24576
      %2690 = vst.msk [vmem:[%s359] sm:$0x1] %vm2689, %v2687
      %v2691 = vsel %vm2615, %v2513, 0.0
      %v2692 = vsel %vm2615, %v2514, 0.0
      %v2693 = vadd.f32 %v2691, %v2692
      %v2694 = vsel %vm2615, %v2515, 0.0
      %v2695 = vadd.f32 %v2693, %v2694
      %v2696 = vsel %vm2615, %v2516, 0.0
      %v2697 = vadd.f32 %v2695, %v2696
      %v2698 = vsel %vm2615, %v2517, 0.0
      %v2699 = vadd.f32 %v2697, %v2698
      %v2700 = vsel %vm2615, %v2518, 0.0
      %v2701 = vadd.f32 %v2699, %v2700
      %v2702 = vsel %vm2615, %v2519, 0.0
      %v2703 = vadd.f32 %v2701, %v2702
      %v2704 = vsel %vm2615, %v2520, 0.0
      %v2705 = vadd.f32 %v2703, %v2704
      %v2706 = vsel %vm2615, %v2521, 0.0
      %v2707 = vadd.f32 %v2705, %v2706
      %v2708 = vsel %vm2615, %v2522, 0.0
      %v2709 = vadd.f32 %v2707, %v2708
      %v2710 = vsel %vm2615, %v2523, 0.0
      %v2711 = vadd.f32 %v2709, %v2710
      %v2712 = vsel %vm2615, %v2524, 0.0
      %v2713 = vadd.f32 %v2711, %v2712
      %v2714 = vsel %vm2615, %v2525, 0.0
      %v2715 = vadd.f32 %v2713, %v2714
      %v2716 = vsel %vm2615, %v2526, 0.0
      %v2717 = vadd.f32 %v2715, %v2716
      %v2718 = vsel %vm2615, %v2527, 0.0
      %v2719 = vadd.f32 %v2717, %v2718
      %v2720 = vsel %vm2615, %v2528, 0.0
      %v2721 = vadd.f32 %v2719, %v2720
      %v2722 = vsel %vm2615, %v2529, 0.0
      %v2723 = vadd.f32 %v2721, %v2722
      %v2724 = vsel %vm2615, %v2530, 0.0
      %v2725 = vadd.f32 %v2723, %v2724
      %v2726 = vsel %vm2615, %v2531, 0.0
      %v2727 = vadd.f32 %v2725, %v2726
      %v2728 = vsel %vm2615, %v2532, 0.0
      %v2729 = vadd.f32 %v2727, %v2728
      %v2730 = vsel %vm2615, %v2533, 0.0
      %v2731 = vadd.f32 %v2729, %v2730
      %v2732 = vsel %vm2615, %v2534, 0.0
      %v2733 = vadd.f32 %v2731, %v2732
      %v2734 = vsel %vm2615, %v2535, 0.0
      %v2735 = vadd.f32 %v2733, %v2734
      %v2736 = vsel %vm2615, %v2536, 0.0
      %v2737 = vadd.f32 %v2735, %v2736
      %v2738 = vsel %vm2615, %v2537, 0.0
      %v2739 = vadd.f32 %v2737, %v2738
      %v2740 = vsel %vm2615, %v2538, 0.0
      %v2741 = vadd.f32 %v2739, %v2740
      %v2742 = vsel %vm2615, %v2539, 0.0
      %v2743 = vadd.f32 %v2741, %v2742
      %v2744 = vsel %vm2615, %v2540, 0.0
      %v2745 = vadd.f32 %v2743, %v2744
      %v2746 = vsel %vm2615, %v2541, 0.0
      %v2747 = vadd.f32 %v2745, %v2746
      %v2748 = vsel %vm2615, %v2542, 0.0
      %v2749 = vadd.f32 %v2747, %v2748
      %v2750 = vsel %vm2615, %v2543, 0.0
      %v2751 = vadd.f32 %v2749, %v2750
      %v2752 = vsel %vm2615, %v2544, 0.0
      %v2753 = vadd.f32 %v2751, %v2752
      %v2754 = vrot.slane %v2753, 4
      %v2755 = vadd.f32 %v2753, %v2754
      %v2756 = vrot.slane %v2755, 2
      %v2757 = vadd.f32 %v2755, %v2756
      %v2758 = vrot.slane %v2757, 1
      %v2759 = vadd.f32 %v2757, %v2758
      %2761 = vrot.lane.b32.xlu0 %v2759, 112
      %v2762 = vpop.permute.xlu0 %2761
      %2764 = vst.msk [vmem:[%s362] sm:$0x1] %vm2689, %v2762
      %p2765 = scmp.lt.s32.totalorder %s20, 1
      %s2766 = scalar_select %p2765, %s20, 1
      %s2767 = smul.addr %s2766, 32
      %s2768 = smul.addr %s2767, 8
      %s2769 = scalar_lea.vmem %s2, %s2768
      %p2770 = scmp.lt.s32.totalorder %s20, 1
      %s2771 = scalar_select %p2770, %s20, 1
      %s2772 = smul.addr %s2771, 32
      %s2773 = smul.addr %s2772, 8
      %s2774 = scalar_lea.vmem %s3, %s2773
      %p2775 = scmp.lt.s32.totalorder %s20, 1
      %s2776 = scalar_select %p2775, %s20, 1
      %s2777 = smul.addr %s2776, 32
      %s2778 = smul.addr %s2777, 8
      %s2779 = scalar_lea.vmem %s4, %s2778
      %p2780 = scmp.lt.s32.totalorder %s20, 1
      %s2781 = scalar_select %p2780, %s20, 1
      %s2782 = scalar_lea.vmem %s5, %s2781
      %p2783 = scmp.lt.s32.totalorder %s20, 1
      %s2784 = scalar_select %p2783, %s20, 1
      %s2785 = scalar_lea.vmem %s6, %s2784
      %p2786 = scmp.lt.s32.totalorder %s20, 1
      %s2787 = scalar_select %p2786, %s20, 1
      %s2788 = scalar_lea.vmem %s7, %s2787
      %p2789 = scmp.lt.s32.totalorder %s20, 1
      %s2790 = scalar_select %p2789, %s20, 1
      %s2791 = scalar_lea.vmem %s8, %s2790
      // Predicated region
      $region29: #{_lambda_.7} parent=27 // pred_check
        %p2792 = pneg %p85
      $region30: #{_lambda_.7} parent=27 // pred_check_branch
        %2794 = sbr.rel (%p2792) target = $region32
      $region31: #{_lambda_.7} parent=27 // pred_region
        _
      $region32: #{_lambda_.7} parent=27 // pred_fallthru
        _
      // Predicated region
      $region33: #{_lambda_.7} parent=27 // pred_check
        %p2795 = pneg %p111
      $region34: #{_lambda_.7} parent=27 // pred_check_branch
        %2797 = sbr.rel (%p2795) target = $region36
      $region35: #{_lambda_.7} parent=27 // pred_region
        _
      $region36: #{_lambda_.7} parent=27 // pred_fallthru
        _
      // Predicated region
      $region37: #{_lambda_.7} parent=27 // pred_check
        %p2798 = pneg %p137
      $region38: #{_lambda_.7} parent=27 // pred_check_branch
        %2800 = sbr.rel (%p2798) target = $region40
      $region39: #{_lambda_.7} parent=27 // pred_region
        _
      $region40: #{_lambda_.7} parent=27 // pred_fallthru
        _
      // Predicated region
      $region41: #{_lambda_.7} parent=27 // pred_check
        %p2801 = pneg %p163
      $region42: #{_lambda_.7} parent=27 // pred_check_branch
        %2803 = sbr.rel (%p2801) target = $region44
      $region43: #{_lambda_.7} parent=27 // pred_region
        _
      $region44: #{_lambda_.7} parent=27 // pred_fallthru
        _
      // Predicated region
      $region45: #{_lambda_.7} parent=27 // pred_check
        %p2804 = pneg %p189
      $region46: #{_lambda_.7} parent=27 // pred_check_branch
        %2806 = sbr.rel (%p2804) target = $region48
      $region47: #{_lambda_.7} parent=27 // pred_region
        _
      $region48: #{_lambda_.7} parent=27 // pred_fallthru
        _
      // Predicated region
      $region49: #{_lambda_.7} parent=27 // pred_check
        %p2807 = pneg %p215
      $region50: #{_lambda_.7} parent=27 // pred_check_branch
        %2809 = sbr.rel (%p2807) target = $region52
      $region51: #{_lambda_.7} parent=27 // pred_region
        _
      $region52: #{_lambda_.7} parent=27 // pred_fallthru
        _
      // Predicated region
      $region53: #{_lambda_.7} parent=27 // pred_check
        %p2810 = pneg %p241
      $region54: #{_lambda_.7} parent=27 // pred_check_branch
        %2812 = sbr.rel (%p2810) target = $region56
      $region55: #{_lambda_.7} parent=27 // pred_region
        _
      $region56: #{_lambda_.7} parent=27 // pred_fallthru
        _
    $region28: #{_lambda_.7} parent=5 // pred_fallthru
      _
    %p2813 = scmp.le.s32.totalorder 2, %s15
    // Predicated region
    $region57: #{_lambda_.7} parent=5 // pred_check
      %p2814 = pneg %p2813
    $region58: #{_lambda_.7} parent=5 // pred_check_branch
      %2816 = sbr.rel (%p2814) target = $region60
    $region59: #{_lambda_.7} parent=5 // pred_region
      %s2817 = ssub.s32 %s15, 2
      // Predicated region
      $region61: #{_lambda_.7} parent=59 // pred_check
        %p2818 = pneg %p91
      $region62: #{_lambda_.7} parent=59 // pred_check_branch
        %2820 = sbr.rel (%p2818) target = $region64
      $region63: #{_lambda_.7} parent=59 // pred_region
        %p2821 = scmp.lt.s32.totalorder %s21, 1
        %s2822 = scalar_select %p2821, %s21, 1
        %s2823 = smul.addr %s2822, 32
        %s2824 = smul.addr %s2823, 8
        %s2825 = scalar_lea.vmem %s2, %s2824
      $region64: #{_lambda_.7} parent=59 // pred_fallthru
        _
      // Predicated region
      $region65: #{_lambda_.7} parent=59 // pred_check
        %p2826 = pneg %p117
      $region66: #{_lambda_.7} parent=59 // pred_check_branch
        %2828 = sbr.rel (%p2826) target = $region68
      $region67: #{_lambda_.7} parent=59 // pred_region
        %p2829 = scmp.lt.s32.totalorder %s21, 1
        %s2830 = scalar_select %p2829, %s21, 1
        %s2831 = smul.addr %s2830, 32
        %s2832 = smul.addr %s2831, 8
        %s2833 = scalar_lea.vmem %s3, %s2832
      $region68: #{_lambda_.7} parent=59 // pred_fallthru
        _
      // Predicated region
      $region69: #{_lambda_.7} parent=59 // pred_check
        %p2834 = pneg %p143
      $region70: #{_lambda_.7} parent=59 // pred_check_branch
        %2836 = sbr.rel (%p2834) target = $region72
      $region71: #{_lambda_.7} parent=59 // pred_region
        %p2837 = scmp.lt.s32.totalorder %s21, 1
        %s2838 = scalar_select %p2837, %s21, 1
        %s2839 = smul.addr %s2838, 32
        %s2840 = smul.addr %s2839, 8
        %s2841 = scalar_lea.vmem %s4, %s2840
      $region72: #{_lambda_.7} parent=59 // pred_fallthru
        _
      // Predicated region
      $region73: #{_lambda_.7} parent=59 // pred_check
        %p2842 = pneg %p169
      $region74: #{_lambda_.7} parent=59 // pred_check_branch
        %2844 = sbr.rel (%p2842) target = $region76
      $region75: #{_lambda_.7} parent=59 // pred_region
        %p2845 = scmp.lt.s32.totalorder %s21, 1
        %s2846 = scalar_select %p2845, %s21, 1
        %s2847 = scalar_lea.vmem %s5, %s2846
      $region76: #{_lambda_.7} parent=59 // pred_fallthru
        _
      // Predicated region
      $region77: #{_lambda_.7} parent=59 // pred_check
        %p2848 = pneg %p195
      $region78: #{_lambda_.7} parent=59 // pred_check_branch
        %2850 = sbr.rel (%p2848) target = $region80
      $region79: #{_lambda_.7} parent=59 // pred_region
        %p2851 = scmp.lt.s32.totalorder %s21, 1
        %s2852 = scalar_select %p2851, %s21, 1
        %s2853 = scalar_lea.vmem %s6, %s2852
      $region80: #{_lambda_.7} parent=59 // pred_fallthru
        _
      // Predicated region
      $region81: #{_lambda_.7} parent=59 // pred_check
        %p2854 = pneg %p221
      $region82: #{_lambda_.7} parent=59 // pred_check_branch
        %2856 = sbr.rel (%p2854) target = $region84
      $region83: #{_lambda_.7} parent=59 // pred_region
        %p2857 = scmp.lt.s32.totalorder %s21, 1
        %s2858 = scalar_select %p2857, %s21, 1
        %s2859 = scalar_lea.vmem %s7, %s2858
      $region84: #{_lambda_.7} parent=59 // pred_fallthru
        _
      // Predicated region
      $region85: #{_lambda_.7} parent=59 // pred_check
        %p2860 = pneg %p247
      $region86: #{_lambda_.7} parent=59 // pred_check_branch
        %2862 = sbr.rel (%p2860) target = $region88
      $region87: #{_lambda_.7} parent=59 // pred_region
        %p2863 = scmp.lt.s32.totalorder %s21, 1
        %s2864 = scalar_select %p2863, %s21, 1
        %s2865 = scalar_lea.vmem %s8, %s2864
      $region88: #{_lambda_.7} parent=59 // pred_fallthru
        _
    $region60: #{_lambda_.7} parent=5 // pred_fallthru
      _
  $region6: #{_lambda_.7} parent=0 // loop_footer
    %s19 = sadd.s32 1, %s15
  $region7: #{_lambda_.7} parent=0 // loop_footer_branch
    %14 = sbr.rel target = $region3
  $region8: #{_lambda_.7} parent=0 // loop_exit
    _

// kernel: reverse.0
$region0: #{reverse.0}
  %s0 = inlined_call_operand.vmem [shape: f32[2,4,16,7], index: 0, kind: input, shape index: {}]
  %s1 = inlined_call_operand.vmem [shape: f32[2,4,16,7], index: 1, kind: output, shape index: {}]
  $region1: #{reverse.0} parent=0
    #allocation0 [shape = 'u8[65536]{0}', space=vmem, size = 0x10000, scoped, tag = 'operand span for operand 0']
    #allocation1 [shape = 'u8[32768]{0}', space=vmem, size = 0x8000, scoped, tag = 'operand span for operand 1']
    %s2 = scalar_lea.vmem [#allocation0], 8
    // Predicated region
    $region2: #{reverse.0} parent=1 // pred_check
      _
    $region3: #{reverse.0} parent=1 // pred_check_branch
      %4 = sbr.rel (0) target = $region5
    $region4: #{reverse.0} parent=1 // pred_region
      // Predicated region
      $region6: #{reverse.0} parent=4 // pred_check
        _
      $region7: #{reverse.0} parent=4 // pred_check_branch
        %6 = sbr.rel (0) target = $region9
      $region8: #{reverse.0} parent=4 // pred_region
        // Predicated region
        $region21: #{reverse.0} parent=8 // pred_check
          _
        $region22: #{reverse.0} parent=8 // pred_check_branch
          %36 = sbr.rel (0) target = $region24
        $region23: #{reverse.0} parent=8 // pred_region
          loop: start=0, step=1, limit=1
          $region25: #{reverse.0} parent=23 // loop_pre_header
            _
          $region26: #{reverse.0} parent=23 // loop_header
            %s38 = sphi 0, %s42
            %p39 = scmp.ge.s32.totalorder %s38, 1
            %s43 = sphi %s0, %s0
            %s44 = sphi %s2, %s2
          $region27: #{reverse.0} parent=23 // loop_header_branch
            %41 = sbr.rel (%p39) target = $region31
          $region28: #{reverse.0} parent=23 // loop_body
            %v45 = vld [vmem:[%s43] sm:$0xff]
            %46 = vst [vmem:[%s44] sm:$0xff] %v45
            %v47 = vld [vmem:[%s43 + $0x8] sm:$0xff]
            %48 = vst [vmem:[%s44 + $0x10] sm:$0xff] %v47
            %v49 = vld [vmem:[%s43 + $0x10] sm:$0xff]
            %50 = vst [vmem:[%s44 + $0x20] sm:$0xff] %v49
            %v51 = vld [vmem:[%s43 + $0x18] sm:$0xff]
            %52 = vst [vmem:[%s44 + $0x30] sm:$0xff] %v51
            %v53 = vld [vmem:[%s43 + $0x20] sm:$0xff]
            %54 = vst [vmem:[%s44 + $0x40] sm:$0xff] %v53
            %v55 = vld [vmem:[%s43 + $0x28] sm:$0xff]
            %56 = vst [vmem:[%s44 + $0x50] sm:$0xff] %v55
            %v57 = vld [vmem:[%s43 + $0x30] sm:$0xff]
            %58 = vst [vmem:[%s44 + $0x60] sm:$0xff] %v57
            %v59 = vld [vmem:[%s43 + $0x38] sm:$0xff]
            %60 = vst [vmem:[%s44 + $0x70] sm:$0xff] %v59
          $region29: #{reverse.0} parent=23 // loop_footer
            %s42 = sadd.s32 1, %s38
          $region30: #{reverse.0} parent=23 // loop_footer_branch
            %37 = sbr.rel target = $region26
          $region31: #{reverse.0} parent=23 // loop_exit
            _
        $region24: #{reverse.0} parent=8 // pred_fallthru
          _
        // Predicated region
        $region32: #{reverse.0} parent=8 // pred_check
          _
        $region33: #{reverse.0} parent=8 // pred_check_branch
          %62 = sbr.rel target = $region35
        $region34: #{reverse.0} parent=8 // pred_region
          _
        $region35: #{reverse.0} parent=8 // pred_fallthru
          _
      $region9: #{reverse.0} parent=4 // pred_fallthru
        _
      // Predicated region
      $region10: #{reverse.0} parent=4 // pred_check
        _
      $region11: #{reverse.0} parent=4 // pred_check_branch
        %8 = sbr.rel target = $region13
      $region12: #{reverse.0} parent=4 // pred_region
        %s10 = ssub.s32 256, 1
        loop: start=0, step=1, limit=1
        $region14: #{reverse.0} parent=12 // loop_pre_header
          _
        $region15: #{reverse.0} parent=12 // loop_header
          %s12 = sphi 0, %s16
          %p13 = scmp.ge.s32.totalorder %s12, 1
          %s17 = sphi %s0, %s0
          %s18 = sphi %s2, %s2
        $region16: #{reverse.0} parent=12 // loop_header_branch
          %15 = sbr.rel (%p13) target = $region20
        $region17: #{reverse.0} parent=12 // loop_body
          %v19 = vld [vmem:[%s17] sm:%s10]
          %20 = vst [vmem:[%s18] sm:%s10] %v19
          %v21 = vld [vmem:[%s17 + $0x8] sm:%s10]
          %22 = vst [vmem:[%s18 + $0x10] sm:%s10] %v21
          %v23 = vld [vmem:[%s17 + $0x10] sm:%s10]
          %24 = vst [vmem:[%s18 + $0x20] sm:%s10] %v23
          %v25 = vld [vmem:[%s17 + $0x18] sm:%s10]
          %26 = vst [vmem:[%s18 + $0x30] sm:%s10] %v25
          %v27 = vld [vmem:[%s17 + $0x20] sm:%s10]
          %28 = vst [vmem:[%s18 + $0x40] sm:%s10] %v27
          %v29 = vld [vmem:[%s17 + $0x28] sm:%s10]
          %30 = vst [vmem:[%s18 + $0x50] sm:%s10] %v29
          %v31 = vld [vmem:[%s17 + $0x30] sm:%s10]
          %32 = vst [vmem:[%s18 + $0x60] sm:%s10] %v31
          %v33 = vld [vmem:[%s17 + $0x38] sm:%s10]
          %34 = vst [vmem:[%s18 + $0x70] sm:%s10] %v33
        $region18: #{reverse.0} parent=12 // loop_footer
          %s16 = sadd.s32 1, %s12
        $region19: #{reverse.0} parent=12 // loop_footer_branch
          %11 = sbr.rel target = $region15
        $region20: #{reverse.0} parent=12 // loop_exit
          _
      $region13: #{reverse.0} parent=4 // pred_fallthru
        _
    $region5: #{reverse.0} parent=1 // pred_fallthru
      _
    %63 = vnop
    %s64 = scalar_lea.vmem [#allocation0], 7
    %v65 = vld [vmem:[%s64] ss:$-1 sm:$0xff]
    %v66 = vrot.slane %v65, 1
    %67 = vst [vmem:[#allocation1] sm:$0xff] %v66
    %s68 = scalar_lea.vmem [#allocation0], 8
    %s69 = scalar_lea.vmem %s68, 7 [#allocation0]
    %v70 = vld [vmem:[%s69] ss:$-1 sm:$0xff]
    %v71 = vrot.slane %v70, 1
    %v72 = vlaneseq
    %v73 = vshrl.u32 %v72, 7
    %vm74 = vcmp.lt.s32.totalorder %v73, 7
    %75 = vst.msk [vmem:[#allocation1] sm:$0xff] %vm74, %v71
    %s76 = scalar_lea.vmem [#allocation1], 8
    %s77 = scalar_lea.vmem [#allocation0], 16
    %s78 = scalar_lea.vmem %s77, 7 [#allocation0]
    %v79 = vld [vmem:[%s78] ss:$-1 sm:$0xff]
    %v80 = vrot.slane %v79, 1
    %81 = vst [vmem:[%s76] sm:$0xff] %v80
    %s82 = scalar_lea.vmem %s77, 8 [#allocation0]
    %s83 = scalar_lea.vmem %s82, 7 [#allocation0]
    %v84 = vld [vmem:[%s83] ss:$-1 sm:$0xff]
    %v85 = vrot.slane %v84, 1
    %v86 = vlaneseq
    %v87 = vshrl.u32 %v86, 7
    %vm88 = vcmp.lt.s32.totalorder %v87, 7
    %89 = vst.msk [vmem:[%s76] sm:$0xff] %vm88, %v85
    %s90 = scalar_lea.vmem [#allocation1], 16
    %s91 = scalar_lea.vmem [#allocation0], 32
    %s92 = scalar_lea.vmem %s91, 7 [#allocation0]
    %v93 = vld [vmem:[%s92] ss:$-1 sm:$0xff]
    %v94 = vrot.slane %v93, 1
    %95 = vst [vmem:[%s90] sm:$0xff] %v94
    %s96 = scalar_lea.vmem %s91, 8 [#allocation0]
    %s97 = scalar_lea.vmem %s96, 7 [#allocation0]
    %v98 = vld [vmem:[%s97] ss:$-1 sm:$0xff]
    %v99 = vrot.slane %v98, 1
    %v100 = vlaneseq
    %v101 = vshrl.u32 %v100, 7
    %vm102 = vcmp.lt.s32.totalorder %v101, 7
    %103 = vst.msk [vmem:[%s90] sm:$0xff] %vm102, %v99
    %s104 = scalar_lea.vmem [#allocation1], 24
    %s105 = scalar_lea.vmem [#allocation0], 48
    %s106 = scalar_lea.vmem %s105, 7 [#allocation0]
    %v107 = vld [vmem:[%s106] ss:$-1 sm:$0xff]
    %v108 = vrot.slane %v107, 1
    %109 = vst [vmem:[%s104] sm:$0xff] %v108
    %s110 = scalar_lea.vmem %s105, 8 [#allocation0]
    %s111 = scalar_lea.vmem %s110, 7 [#allocation0]
    %v112 = vld [vmem:[%s111] ss:$-1 sm:$0xff]
    %v113 = vrot.slane %v112, 1
    %v114 = vlaneseq
    %v115 = vshrl.u32 %v114, 7
    %vm116 = vcmp.lt.s32.totalorder %v115, 7
    %117 = vst.msk [vmem:[%s104] sm:$0xff] %vm116, %v113
    %s118 = scalar_lea.vmem [#allocation1], 32
    %s119 = scalar_lea.vmem [#allocation0], 64
    %s120 = scalar_lea.vmem %s119, 7 [#allocation0]
    %v121 = vld [vmem:[%s120] ss:$-1 sm:$0xff]
    %v122 = vrot.slane %v121, 1
    %123 = vst [vmem:[%s118] sm:$0xff] %v122
    %s124 = scalar_lea.vmem %s119, 8 [#allocation0]
    %s125 = scalar_lea.vmem %s124, 7 [#allocation0]
    %v126 = vld [vmem:[%s125] ss:$-1 sm:$0xff]
    %v127 = vrot.slane %v126, 1
    %v128 = vlaneseq
    %v129 = vshrl.u32 %v128, 7
    %vm130 = vcmp.lt.s32.totalorder %v129, 7
    %131 = vst.msk [vmem:[%s118] sm:$0xff] %vm130, %v127
    %s132 = scalar_lea.vmem [#allocation1], 40
    %s133 = scalar_lea.vmem [#allocation0], 80
    %s134 = scalar_lea.vmem %s133, 7 [#allocation0]
    %v135 = vld [vmem:[%s134] ss:$-1 sm:$0xff]
    %v136 = vrot.slane %v135, 1
    %137 = vst [vmem:[%s132] sm:$0xff] %v136
    %s138 = scalar_lea.vmem %s133, 8 [#allocation0]
    %s139 = scalar_lea.vmem %s138, 7 [#allocation0]
    %v140 = vld [vmem:[%s139] ss:$-1 sm:$0xff]
    %v141 = vrot.slane %v140, 1
    %v142 = vlaneseq
    %v143 = vshrl.u32 %v142, 7
    %vm144 = vcmp.lt.s32.totalorder %v143, 7
    %145 = vst.msk [vmem:[%s132] sm:$0xff] %vm144, %v141
    %s146 = scalar_lea.vmem [#allocation1], 48
    %s147 = scalar_lea.vmem [#allocation0], 96
    %s148 = scalar_lea.vmem %s147, 7 [#allocation0]
    %v149 = vld [vmem:[%s148] ss:$-1 sm:$0xff]
    %v150 = vrot.slane %v149, 1
    %151 = vst [vmem:[%s146] sm:$0xff] %v150
    %s152 = scalar_lea.vmem %s147, 8 [#allocation0]
    %s153 = scalar_lea.vmem %s152, 7 [#allocation0]
    %v154 = vld [vmem:[%s153] ss:$-1 sm:$0xff]
    %v155 = vrot.slane %v154, 1
    %v156 = vlaneseq
    %v157 = vshrl.u32 %v156, 7
    %vm158 = vcmp.lt.s32.totalorder %v157, 7
    %159 = vst.msk [vmem:[%s146] sm:$0xff] %vm158, %v155
    %s160 = scalar_lea.vmem [#allocation1], 56
    %s161 = scalar_lea.vmem [#allocation0], 112
    %s162 = scalar_lea.vmem %s161, 7 [#allocation0]
    %v163 = vld [vmem:[%s162] ss:$-1 sm:$0xff]
    %v164 = vrot.slane %v163, 1
    %165 = vst [vmem:[%s160] sm:$0xff] %v164
    %s166 = scalar_lea.vmem %s161, 8 [#allocation0]
    %s167 = scalar_lea.vmem %s166, 7 [#allocation0]
    %v168 = vld [vmem:[%s167] ss:$-1 sm:$0xff]
    %v169 = vrot.slane %v168, 1
    %v170 = vlaneseq
    %v171 = vshrl.u32 %v170, 7
    %vm172 = vcmp.lt.s32.totalorder %v171, 7
    %173 = vst.msk [vmem:[%s160] sm:$0xff] %vm172, %v169
    // Predicated region
    $region36: #{reverse.0} parent=1 // pred_check
      _
    $region37: #{reverse.0} parent=1 // pred_check_branch
      %175 = sbr.rel (0) target = $region39
    $region38: #{reverse.0} parent=1 // pred_region
      // Predicated region
      $region40: #{reverse.0} parent=38 // pred_check
        _
      $region41: #{reverse.0} parent=38 // pred_check_branch
        %177 = sbr.rel (0) target = $region43
      $region42: #{reverse.0} parent=38 // pred_region
        // Predicated region
        $region55: #{reverse.0} parent=42 // pred_check
          _
        $region56: #{reverse.0} parent=42 // pred_check_branch
          %207 = sbr.rel (0) target = $region58
        $region57: #{reverse.0} parent=42 // pred_region
          loop: start=0, step=1, limit=1
          $region59: #{reverse.0} parent=57 // loop_pre_header
            _
          $region60: #{reverse.0} parent=57 // loop_header
            %s209 = sphi 0, %s213
            %p210 = scmp.ge.s32.totalorder %s209, 1
            %s214 = sphi [#allocation1], [#allocation1]
            %s215 = sphi %s1, %s1
          $region61: #{reverse.0} parent=57 // loop_header_branch
            %212 = sbr.rel (%p210) target = $region65
          $region62: #{reverse.0} parent=57 // loop_body
            %v216 = vld [vmem:[%s214] sm:$0xff]
            %217 = vst [vmem:[%s215] sm:$0xff] %v216
            %v218 = vld [vmem:[%s214 + $0x8] sm:$0xff]
            %219 = vst [vmem:[%s215 + $0x8] sm:$0xff] %v218
            %v220 = vld [vmem:[%s214 + $0x10] sm:$0xff]
            %221 = vst [vmem:[%s215 + $0x10] sm:$0xff] %v220
            %v222 = vld [vmem:[%s214 + $0x18] sm:$0xff]
            %223 = vst [vmem:[%s215 + $0x18] sm:$0xff] %v222
            %v224 = vld [vmem:[%s214 + $0x20] sm:$0xff]
            %225 = vst [vmem:[%s215 + $0x20] sm:$0xff] %v224
            %v226 = vld [vmem:[%s214 + $0x28] sm:$0xff]
            %227 = vst [vmem:[%s215 + $0x28] sm:$0xff] %v226
            %v228 = vld [vmem:[%s214 + $0x30] sm:$0xff]
            %229 = vst [vmem:[%s215 + $0x30] sm:$0xff] %v228
            %v230 = vld [vmem:[%s214 + $0x38] sm:$0xff]
            %231 = vst [vmem:[%s215 + $0x38] sm:$0xff] %v230
          $region63: #{reverse.0} parent=57 // loop_footer
            %s213 = sadd.s32 1, %s209
          $region64: #{reverse.0} parent=57 // loop_footer_branch
            %208 = sbr.rel target = $region60
          $region65: #{reverse.0} parent=57 // loop_exit
            _
        $region58: #{reverse.0} parent=42 // pred_fallthru
          _
        // Predicated region
        $region66: #{reverse.0} parent=42 // pred_check
          _
        $region67: #{reverse.0} parent=42 // pred_check_branch
          %233 = sbr.rel target = $region69
        $region68: #{reverse.0} parent=42 // pred_region
          _
        $region69: #{reverse.0} parent=42 // pred_fallthru
          _
      $region43: #{reverse.0} parent=38 // pred_fallthru
        _
      // Predicated region
      $region44: #{reverse.0} parent=38 // pred_check
        _
      $region45: #{reverse.0} parent=38 // pred_check_branch
        %179 = sbr.rel target = $region47
      $region46: #{reverse.0} parent=38 // pred_region
        %s181 = ssub.s32 256, 1
        loop: start=0, step=1, limit=1
        $region48: #{reverse.0} parent=46 // loop_pre_header
          _
        $region49: #{reverse.0} parent=46 // loop_header
          %s183 = sphi 0, %s187
          %p184 = scmp.ge.s32.totalorder %s183, 1
          %s188 = sphi [#allocation1], [#allocation1]
          %s189 = sphi %s1, %s1
        $region50: #{reverse.0} parent=46 // loop_header_branch
          %186 = sbr.rel (%p184) target = $region54
        $region51: #{reverse.0} parent=46 // loop_body
          %v190 = vld [vmem:[%s188] sm:%s181]
          %191 = vst [vmem:[%s189] sm:%s181] %v190
          %v192 = vld [vmem:[%s188 + $0x8] sm:%s181]
          %193 = vst [vmem:[%s189 + $0x8] sm:%s181] %v192
          %v194 = vld [vmem:[%s188 + $0x10] sm:%s181]
          %195 = vst [vmem:[%s189 + $0x10] sm:%s181] %v194
          %v196 = vld [vmem:[%s188 + $0x18] sm:%s181]
          %197 = vst [vmem:[%s189 + $0x18] sm:%s181] %v196
          %v198 = vld [vmem:[%s188 + $0x20] sm:%s181]
          %199 = vst [vmem:[%s189 + $0x20] sm:%s181] %v198
          %v200 = vld [vmem:[%s188 + $0x28] sm:%s181]
          %201 = vst [vmem:[%s189 + $0x28] sm:%s181] %v200
          %v202 = vld [vmem:[%s188 + $0x30] sm:%s181]
          %203 = vst [vmem:[%s189 + $0x30] sm:%s181] %v202
          %v204 = vld [vmem:[%s188 + $0x38] sm:%s181]
          %205 = vst [vmem:[%s189 + $0x38] sm:%s181] %v204
        $region52: #{reverse.0} parent=46 // loop_footer
          %s187 = sadd.s32 1, %s183
        $region53: #{reverse.0} parent=46 // loop_footer_branch
          %182 = sbr.rel target = $region49
        $region54: #{reverse.0} parent=46 // loop_exit
          _
      $region47: #{reverse.0} parent=38 // pred_fallthru
        _
    $region39: #{reverse.0} parent=1 // pred_fallthru
      _
    %234 = vnop

// kernel: _lambda_.8
$region0: #{_lambda_.8}
  #allocation0 [shape = 'u32[]', space=smem, size = 0x4, offset = 0x4, fixed_abs, tag = 'smem constant byte address 0x4 - core index']
  #allocation1 [shape = 'u32[72,128]{1,0:T(1,128)}', space=vmem, size = 0x9000, scoped, tag = 'internal scratch']
  %s0 = inlined_call_operand.vmem [shape: f32[288,8], index: 0, kind: input, shape index: {}]
  %s1 = inlined_call_operand.vmem [shape: f32[8,8], index: 1, kind: input, shape index: {}]
  %s2 = inlined_call_operand.vmem [shape: f32[288,8], index: 2, kind: output, shape index: {0}]
  %s3 = inlined_call_operand.vmem [shape: f32[1,1,8], index: 3, kind: output, shape index: {1}]
  %s4 = inlined_call_operand.vmem [shape: f32[1,1,8], index: 4, kind: output, shape index: {2}]
  %5 = xla_tuple %s2, %s3, %s4
  %s6 = sld [smem:[#allocation0]]
  $region34: #{_lambda_.8} parent=0
    _
  %s8 = ssub.s32 1, %s6
  %s9 = scalar_select 0, %s8, %s6
  // Predicated region
  $region2: #{_lambda_.8} parent=0 // pred_check
    _
  $region3: #{_lambda_.8} parent=0 // pred_check_branch
    %11 = sbr.rel (0) target = $region5
  $region4: #{_lambda_.8} parent=0 // pred_region
    _
  $region5: #{_lambda_.8} parent=0 // pred_fallthru
    _
  // Predicated region
  $region6: #{_lambda_.8} parent=0 // pred_check
    _
  $region7: #{_lambda_.8} parent=0 // pred_check_branch
    %13 = sbr.rel (0) target = $region9
  $region8: #{_lambda_.8} parent=0 // pred_region
    _
  $region9: #{_lambda_.8} parent=0 // pred_fallthru
    _
  %v14 = vld [vmem:[%s0] sm:$0xff]
  %v15 = vld [vmem:[%s0 + $0x8] sm:$0xff]
  %v16 = vld [vmem:[%s0 + $0x10] sm:$0xff]
  %v17 = vld [vmem:[%s0 + $0x18] sm:$0xff]
  %v18 = vld [vmem:[%s0 + $0x20] sm:$0xff]
  %v19 = vld [vmem:[%s0 + $0x28] sm:$0xff]
  %v20 = vld [vmem:[%s0 + $0x30] sm:$0xff]
  %v21 = vld [vmem:[%s0 + $0x38] sm:$0xff]
  %v22 = vld [vmem:[%s0 + $0x40] sm:$0xff]
  %v23 = vld [vmem:[%s0 + $0x48] sm:$0xff]
  %v24 = vld [vmem:[%s0 + $0x50] sm:$0xff]
  %v25 = vld [vmem:[%s0 + $0x58] sm:$0xff]
  %v26 = vld [vmem:[%s0 + $0x60] sm:$0xff]
  %v27 = vld [vmem:[%s0 + $0x68] sm:$0xff]
  %v28 = vld [vmem:[%s0 + $0x70] sm:$0xff]
  %v29 = vld [vmem:[%s0 + $0x78] sm:$0xff]
  %v30 = vld [vmem:[%s0 + $0x80] sm:$0xff]
  %v31 = vld [vmem:[%s0 + $0x88] sm:$0xff]
  %v32 = vld [vmem:[%s0 + $0x90] sm:$0xff]
  %v33 = vld [vmem:[%s0 + $0x98] sm:$0xff]
  %v34 = vld [vmem:[%s0 + $0xa0] sm:$0xff]
  %v35 = vld [vmem:[%s0 + $0xa8] sm:$0xff]
  %v36 = vld [vmem:[%s0 + $0xb0] sm:$0xff]
  %v37 = vld [vmem:[%s0 + $0xb8] sm:$0xff]
  %v38 = vld [vmem:[%s0 + $0xc0] sm:$0xff]
  %v39 = vld [vmem:[%s0 + $0xc8] sm:$0xff]
  %v40 = vld [vmem:[%s0 + $0xd0] sm:$0xff]
  %v41 = vld [vmem:[%s0 + $0xd8] sm:$0xff]
  %v42 = vld [vmem:[%s0 + $0xe0] sm:$0xff]
  %v43 = vld [vmem:[%s0 + $0xe8] sm:$0xff]
  %v44 = vld [vmem:[%s0 + $0xf0] sm:$0xff]
  %v45 = vld [vmem:[%s0 + $0xf8] sm:$0xff]
  %v46 = vld [vmem:[%s0 + $0x100] sm:$0xff]
  %v47 = vld [vmem:[%s0 + $0x108] sm:$0xff]
  %v48 = vld [vmem:[%s0 + $0x110] sm:$0xff]
  %v49 = vld [vmem:[%s0 + $0x118] sm:$0xff]
  %v50 = vld [vmem:[%s1] sm:$0xff]
  %vm51 = vcmask 64512
  %v53 = vsel %vm51, %v14, 0
  %v56 = vsel %vm51, %v15, 0
  %v59 = vsel %vm51, %v16, 0
  %v62 = vsel %vm51, %v17, 0
  %v65 = vsel %vm51, %v18, 0
  %v68 = vsel %vm51, %v19, 0
  %v71 = vsel %vm51, %v20, 0
  %v74 = vsel %vm51, %v21, 0
  %v77 = vsel %vm51, %v22, 0
  %v80 = vsel %vm51, %v23, 0
  %v83 = vsel %vm51, %v24, 0
  %v86 = vsel %vm51, %v25, 0
  %v89 = vsel %vm51, %v26, 0
  %v92 = vsel %vm51, %v27, 0
  %v95 = vsel %vm51, %v28, 0
  %v98 = vsel %vm51, %v29, 0
  %v101 = vsel %vm51, %v30, 0
  %v104 = vsel %vm51, %v31, 0
  %v107 = vsel %vm51, %v32, 0
  %v110 = vsel %vm51, %v33, 0
  %v113 = vsel %vm51, %v34, 0
  %v116 = vsel %vm51, %v35, 0
  %v119 = vsel %vm51, %v36, 0
  %v122 = vsel %vm51, %v37, 0
  %v125 = vsel %vm51, %v38, 0
  %v128 = vsel %vm51, %v39, 0
  %v131 = vsel %vm51, %v40, 0
  %v134 = vsel %vm51, %v41, 0
  %v137 = vsel %vm51, %v42, 0
  %v140 = vsel %vm51, %v43, 0
  %v143 = vsel %vm51, %v44, 0
  %v146 = vsel %vm51, %v45, 0
  %v149 = vsel %vm51, %v46, 0
  %v152 = vsel %vm51, %v47, 0
  %v155 = vsel %vm51, %v48, 0
  %v158 = vsel %vm51, %v49, 0
  %160 = vmatpush.msra.mxu0 0.0
  %161 = vmatpush.msra.mxu0 0.0
  %162 = vmatpush.msra.mxu0 0.0
  %163 = vmatpush.msra.mxu0 0.0
  %164 = vmatpush.msra.mxu0 0.0
  %165 = vmatpush.msra.mxu0 0.0
  %166 = vmatpush.msra.mxu0 0.0
  %167 = vmatpush.msra.mxu0 0.0
  %168 = vmatpush.msra.mxu0 0.0
  %169 = vmatpush.msra.mxu0 0.0
  %170 = vmatpush.msra.mxu0 0.0
  %171 = vmatpush.msra.mxu0 0.0
  %172 = vmatpush.msra.mxu0 0.0
  %173 = vmatpush.msra.mxu0 0.0
  %174 = vmatpush.msra.mxu0 0.0
  %175 = vmatpush.msra.mxu0 %v50
  %176 = vmatmul.f32.gmra.mxu0 %v53
  %v177 = vpop.f32.mrf.mxu0
  %v178 = vadd.f32 0.0, %v177
  %179 = vmatmul.f32.gmra.mxu0 %v56
  %v180 = vpop.f32.mrf.mxu0
  %v181 = vadd.f32 0.0, %v180
  %182 = vmatmul.f32.gmra.mxu0 %v59
  %v183 = vpop.f32.mrf.mxu0
  %v184 = vadd.f32 0.0, %v183
  %185 = vmatmul.f32.gmra.mxu0 %v62
  %v186 = vpop.f32.mrf.mxu0
  %v187 = vadd.f32 0.0, %v186
  %188 = vmatmul.f32.gmra.mxu0 %v65
  %v189 = vpop.f32.mrf.mxu0
  %v190 = vadd.f32 0.0, %v189
  %191 = vmatmul.f32.gmra.mxu0 %v68
  %v192 = vpop.f32.mrf.mxu0
  %v193 = vadd.f32 0.0, %v192
  %194 = vmatmul.f32.gmra.mxu0 %v71
  %v195 = vpop.f32.mrf.mxu0
  %v196 = vadd.f32 0.0, %v195
  %197 = vmatmul.f32.gmra.mxu0 %v74
  %v198 = vpop.f32.mrf.mxu0
  %v199 = vadd.f32 0.0, %v198
  %200 = vmatmul.f32.gmra.mxu0 %v77
  %v201 = vpop.f32.mrf.mxu0
  %v202 = vadd.f32 0.0, %v201
  %203 = vmatmul.f32.gmra.mxu0 %v80
  %v204 = vpop.f32.mrf.mxu0
  %v205 = vadd.f32 0.0, %v204
  %206 = vmatmul.f32.gmra.mxu0 %v83
  %v207 = vpop.f32.mrf.mxu0
  %v208 = vadd.f32 0.0, %v207
  %209 = vmatmul.f32.gmra.mxu0 %v86
  %v210 = vpop.f32.mrf.mxu0
  %v211 = vadd.f32 0.0, %v210
  %212 = vmatmul.f32.gmra.mxu0 %v89
  %v213 = vpop.f32.mrf.mxu0
  %v214 = vadd.f32 0.0, %v213
  %215 = vmatmul.f32.gmra.mxu0 %v92
  %v216 = vpop.f32.mrf.mxu0
  %v217 = vadd.f32 0.0, %v216
  %218 = vmatmul.f32.gmra.mxu0 %v95
  %v219 = vpop.f32.mrf.mxu0
  %v220 = vadd.f32 0.0, %v219
  %221 = vmatmul.f32.gmra.mxu0 %v98
  %v222 = vpop.f32.mrf.mxu0
  %v223 = vadd.f32 0.0, %v222
  %224 = vmatmul.f32.gmra.mxu0 %v101
  %v225 = vpop.f32.mrf.mxu0
  %v226 = vadd.f32 0.0, %v225
  %227 = vmatmul.f32.gmra.mxu0 %v104
  %v228 = vpop.f32.mrf.mxu0
  %v229 = vadd.f32 0.0, %v228
  %230 = vmatmul.f32.gmra.mxu0 %v107
  %v231 = vpop.f32.mrf.mxu0
  %v232 = vadd.f32 0.0, %v231
  %233 = vmatmul.f32.gmra.mxu0 %v110
  %v234 = vpop.f32.mrf.mxu0
  %v235 = vadd.f32 0.0, %v234
  %236 = vmatmul.f32.gmra.mxu0 %v113
  %v237 = vpop.f32.mrf.mxu0
  %v238 = vadd.f32 0.0, %v237
  %239 = vmatmul.f32.gmra.mxu0 %v116
  %v240 = vpop.f32.mrf.mxu0
  %v241 = vadd.f32 0.0, %v240
  %242 = vmatmul.f32.gmra.mxu0 %v119
  %v243 = vpop.f32.mrf.mxu0
  %v244 = vadd.f32 0.0, %v243
  %245 = vmatmul.f32.gmra.mxu0 %v122
  %v246 = vpop.f32.mrf.mxu0
  %v247 = vadd.f32 0.0, %v246
  %248 = vmatmul.f32.gmra.mxu0 %v125
  %v249 = vpop.f32.mrf.mxu0
  %v250 = vadd.f32 0.0, %v249
  %251 = vmatmul.f32.gmra.mxu0 %v128
  %v252 = vpop.f32.mrf.mxu0
  %v253 = vadd.f32 0.0, %v252
  %254 = vmatmul.f32.gmra.mxu0 %v131
  %v255 = vpop.f32.mrf.mxu0
  %v256 = vadd.f32 0.0, %v255
  %257 = vmatmul.f32.gmra.mxu0 %v134
  %v258 = vpop.f32.mrf.mxu0
  %v259 = vadd.f32 0.0, %v258
  %260 = vmatmul.f32.gmra.mxu0 %v137
  %v261 = vpop.f32.mrf.mxu0
  %v262 = vadd.f32 0.0, %v261
  %263 = vmatmul.f32.gmra.mxu0 %v140
  %v264 = vpop.f32.mrf.mxu0
  %v265 = vadd.f32 0.0, %v264
  %266 = vmatmul.f32.gmra.mxu0 %v143
  %v267 = vpop.f32.mrf.mxu0
  %v268 = vadd.f32 0.0, %v267
  %269 = vmatmul.f32.gmra.mxu0 %v146
  %v270 = vpop.f32.mrf.mxu0
  %v271 = vadd.f32 0.0, %v270
  %272 = vmatmul.f32.gmra.mxu0 %v149
  %v273 = vpop.f32.mrf.mxu0
  %v274 = vadd.f32 0.0, %v273
  %275 = vmatmul.f32.gmra.mxu0 %v152
  %v276 = vpop.f32.mrf.mxu0
  %v277 = vadd.f32 0.0, %v276
  %278 = vmatmul.f32.gmra.mxu0 %v155
  %v279 = vpop.f32.mrf.mxu0
  %v280 = vadd.f32 0.0, %v279
  %281 = vmatmul.f32.gmra.mxu0 %v158
  %v282 = vpop.f32.mrf.mxu0
  %v283 = vadd.f32 0.0, %v282
  %284 = vdwg.mxu0
  %285 = vst.msk [vmem:[%s2] sm:$0xff] %vm51, %v178
  %286 = vst.msk [vmem:[%s2 + $0x8] sm:$0xff] %vm51, %v181
  %287 = vst.msk [vmem:[%s2 + $0x10] sm:$0xff] %vm51, %v184
  %288 = vst.msk [vmem:[%s2 + $0x18] sm:$0xff] %vm51, %v187
  %289 = vst.msk [vmem:[%s2 + $0x20] sm:$0xff] %vm51, %v190
  %290 = vst.msk [vmem:[%s2 + $0x28] sm:$0xff] %vm51, %v193
  %291 = vst.msk [vmem:[%s2 + $0x30] sm:$0xff] %vm51, %v196
  %292 = vst.msk [vmem:[%s2 + $0x38] sm:$0xff] %vm51, %v199
  %293 = vst.msk [vmem:[%s2 + $0x40] sm:$0xff] %vm51, %v202
  %294 = vst.msk [vmem:[%s2 + $0x48] sm:$0xff] %vm51, %v205
  %295 = vst.msk [vmem:[%s2 + $0x50] sm:$0xff] %vm51, %v208
  %296 = vst.msk [vmem:[%s2 + $0x58] sm:$0xff] %vm51, %v211
  %297 = vst.msk [vmem:[%s2 + $0x60] sm:$0xff] %vm51, %v214
  %298 = vst.msk [vmem:[%s2 + $0x68] sm:$0xff] %vm51, %v217
  %299 = vst.msk [vmem:[%s2 + $0x70] sm:$0xff] %vm51, %v220
  %300 = vst.msk [vmem:[%s2 + $0x78] sm:$0xff] %vm51, %v223
  %301 = vst.msk [vmem:[%s2 + $0x80] sm:$0xff] %vm51, %v226
  %302 = vst.msk [vmem:[%s2 + $0x88] sm:$0xff] %vm51, %v229
  %303 = vst.msk [vmem:[%s2 + $0x90] sm:$0xff] %vm51, %v232
  %304 = vst.msk [vmem:[%s2 + $0x98] sm:$0xff] %vm51, %v235
  %305 = vst.msk [vmem:[%s2 + $0xa0] sm:$0xff] %vm51, %v238
  %306 = vst.msk [vmem:[%s2 + $0xa8] sm:$0xff] %vm51, %v241
  %307 = vst.msk [vmem:[%s2 + $0xb0] sm:$0xff] %vm51, %v244
  %308 = vst.msk [vmem:[%s2 + $0xb8] sm:$0xff] %vm51, %v247
  %309 = vst.msk [vmem:[%s2 + $0xc0] sm:$0xff] %vm51, %v250
  %310 = vst.msk [vmem:[%s2 + $0xc8] sm:$0xff] %vm51, %v253
  %311 = vst.msk [vmem:[%s2 + $0xd0] sm:$0xff] %vm51, %v256
  %312 = vst.msk [vmem:[%s2 + $0xd8] sm:$0xff] %vm51, %v259
  %313 = vst.msk [vmem:[%s2 + $0xe0] sm:$0xff] %vm51, %v262
  %314 = vst.msk [vmem:[%s2 + $0xe8] sm:$0xff] %vm51, %v265
  %315 = vst.msk [vmem:[%s2 + $0xf0] sm:$0xff] %vm51, %v268
  %316 = vst.msk [vmem:[%s2 + $0xf8] sm:$0xff] %vm51, %v271
  %317 = vst.msk [vmem:[%s2 + $0x100] sm:$0xff] %vm51, %v274
  %318 = vst.msk [vmem:[%s2 + $0x108] sm:$0xff] %vm51, %v277
  %319 = vst.msk [vmem:[%s2 + $0x110] sm:$0xff] %vm51, %v280
  %320 = vst.msk [vmem:[%s2 + $0x118] sm:$0xff] %vm51, %v283
  %v321 = vsel %vm51, %v178, 0.0
  %v322 = vsel %vm51, %v181, 0.0
  %v323 = vadd.f32 %v321, %v322
  %v324 = vsel %vm51, %v184, 0.0
  %v325 = vadd.f32 %v323, %v324
  %v326 = vsel %vm51, %v187, 0.0
  %v327 = vadd.f32 %v325, %v326
  %v328 = vsel %vm51, %v190, 0.0
  %v329 = vadd.f32 %v327, %v328
  %v330 = vsel %vm51, %v193, 0.0
  %v331 = vadd.f32 %v329, %v330
  %v332 = vsel %vm51, %v196, 0.0
  %v333 = vadd.f32 %v331, %v332
  %v334 = vsel %vm51, %v199, 0.0
  %v335 = vadd.f32 %v333, %v334
  %v336 = vsel %vm51, %v202, 0.0
  %v337 = vadd.f32 %v335, %v336
  %v338 = vsel %vm51, %v205, 0.0
  %v339 = vadd.f32 %v337, %v338
  %v340 = vsel %vm51, %v208, 0.0
  %v341 = vadd.f32 %v339, %v340
  %v342 = vsel %vm51, %v211, 0.0
  %v343 = vadd.f32 %v341, %v342
  %v344 = vsel %vm51, %v214, 0.0
  %v345 = vadd.f32 %v343, %v344
  %v346 = vsel %vm51, %v217, 0.0
  %v347 = vadd.f32 %v345, %v346
  %v348 = vsel %vm51, %v220, 0.0
  %v349 = vadd.f32 %v347, %v348
  %v350 = vsel %vm51, %v223, 0.0
  %v351 = vadd.f32 %v349, %v350
  %v352 = vsel %vm51, %v226, 0.0
  %v353 = vadd.f32 %v351, %v352
  %v354 = vsel %vm51, %v229, 0.0
  %v355 = vadd.f32 %v353, %v354
  %v356 = vsel %vm51, %v232, 0.0
  %v357 = vadd.f32 %v355, %v356
  %v358 = vsel %vm51, %v235, 0.0
  %v359 = vadd.f32 %v357, %v358
  %v360 = vsel %vm51, %v238, 0.0
  %v361 = vadd.f32 %v359, %v360
  %v362 = vsel %vm51, %v241, 0.0
  %v363 = vadd.f32 %v361, %v362
  %v364 = vsel %vm51, %v244, 0.0
  %v365 = vadd.f32 %v363, %v364
  %v366 = vsel %vm51, %v247, 0.0
  %v367 = vadd.f32 %v365, %v366
  %v368 = vsel %vm51, %v250, 0.0
  %v369 = vadd.f32 %v367, %v368
  %v370 = vsel %vm51, %v253, 0.0
  %v371 = vadd.f32 %v369, %v370
  %v372 = vsel %vm51, %v256, 0.0
  %v373 = vadd.f32 %v371, %v372
  %v374 = vsel %vm51, %v259, 0.0
  %v375 = vadd.f32 %v373, %v374
  %v376 = vsel %vm51, %v262, 0.0
  %v377 = vadd.f32 %v375, %v376
  %v378 = vsel %vm51, %v265, 0.0
  %v379 = vadd.f32 %v377, %v378
  %v380 = vsel %vm51, %v268, 0.0
  %v381 = vadd.f32 %v379, %v380
  %v382 = vsel %vm51, %v271, 0.0
  %v383 = vadd.f32 %v381, %v382
  %v384 = vsel %vm51, %v274, 0.0
  %v385 = vadd.f32 %v383, %v384
  %v386 = vsel %vm51, %v277, 0.0
  %v387 = vadd.f32 %v385, %v386
  %v388 = vsel %vm51, %v280, 0.0
  %v389 = vadd.f32 %v387, %v388
  %v390 = vsel %vm51, %v283, 0.0
  %v391 = vadd.f32 %v389, %v390
  %v392 = vrot.slane %v391, 4
  %v393 = vadd.f32 %v391, %v392
  %v394 = vrot.slane %v393, 2
  %v395 = vadd.f32 %v393, %v394
  %v396 = vrot.slane %v395, 1
  %v397 = vadd.f32 %v395, %v396
  %vm398 = vcmask 57344
  %399 = vst.msk [vmem:[%s3] sm:$0x1] %vm398, %v397
  %v400 = vmul.f32 %v178, %v178
  %v401 = vmul.f32 %v181, %v181
  %v402 = vmul.f32 %v184, %v184
  %v403 = vmul.f32 %v187, %v187
  %v404 = vmul.f32 %v190, %v190
  %v405 = vmul.f32 %v193, %v193
  %v406 = vmul.f32 %v196, %v196
  %v407 = vmul.f32 %v199, %v199
  %v408 = vmul.f32 %v202, %v202
  %v409 = vmul.f32 %v205, %v205
  %v410 = vmul.f32 %v208, %v208
  %v411 = vmul.f32 %v211, %v211
  %v412 = vmul.f32 %v214, %v214
  %v413 = vmul.f32 %v217, %v217
  %v414 = vmul.f32 %v220, %v220
  %v415 = vmul.f32 %v223, %v223
  %v416 = vmul.f32 %v226, %v226
  %v417 = vmul.f32 %v229, %v229
  %v418 = vmul.f32 %v232, %v232
  %v419 = vmul.f32 %v235, %v235
  %v420 = vmul.f32 %v238, %v238
  %v421 = vmul.f32 %v241, %v241
  %v422 = vmul.f32 %v244, %v244
  %v423 = vmul.f32 %v247, %v247
  %v424 = vmul.f32 %v250, %v250
  %v425 = vmul.f32 %v253, %v253
  %v426 = vmul.f32 %v256, %v256
  %v427 = vmul.f32 %v259, %v259
  %v428 = vmul.f32 %v262, %v262
  %v429 = vmul.f32 %v265, %v265
  %v430 = vmul.f32 %v268, %v268
  %v431 = vmul.f32 %v271, %v271
  %v432 = vmul.f32 %v274, %v274
  %v433 = vmul.f32 %v277, %v277
  %v434 = vmul.f32 %v280, %v280
  %v435 = vmul.f32 %v283, %v283
  %v436 = vsel %vm51, %v400, 0.0
  %v437 = vsel %vm51, %v401, 0.0
  %v438 = vadd.f32 %v436, %v437
  %v439 = vsel %vm51, %v402, 0.0
  %v440 = vadd.f32 %v438, %v439
  %v441 = vsel %vm51, %v403, 0.0
  %v442 = vadd.f32 %v440, %v441
  %v443 = vsel %vm51, %v404, 0.0
  %v444 = vadd.f32 %v442, %v443
  %v445 = vsel %vm51, %v405, 0.0
  %v446 = vadd.f32 %v444, %v445
  %v447 = vsel %vm51, %v406, 0.0
  %v448 = vadd.f32 %v446, %v447
  %v449 = vsel %vm51, %v407, 0.0
  %v450 = vadd.f32 %v448, %v449
  %v451 = vsel %vm51, %v408, 0.0
  %v452 = vadd.f32 %v450, %v451
  %v453 = vsel %vm51, %v409, 0.0
  %v454 = vadd.f32 %v452, %v453
  %v455 = vsel %vm51, %v410, 0.0
  %v456 = vadd.f32 %v454, %v455
  %v457 = vsel %vm51, %v411, 0.0
  %v458 = vadd.f32 %v456, %v457
  %v459 = vsel %vm51, %v412, 0.0
  %v460 = vadd.f32 %v458, %v459
  %v461 = vsel %vm51, %v413, 0.0
  %v462 = vadd.f32 %v460, %v461
  %v463 = vsel %vm51, %v414, 0.0
  %v464 = vadd.f32 %v462, %v463
  %v465 = vsel %vm51, %v415, 0.0
  %v466 = vadd.f32 %v464, %v465
  %v467 = vsel %vm51, %v416, 0.0
  %v468 = vadd.f32 %v466, %v467
  %v469 = vsel %vm51, %v417, 0.0
  %v470 = vadd.f32 %v468, %v469
  %v471 = vsel %vm51, %v418, 0.0
  %v472 = vadd.f32 %v470, %v471
  %v473 = vsel %vm51, %v419, 0.0
  %v474 = vadd.f32 %v472, %v473
  %v475 = vsel %vm51, %v420, 0.0
  %v476 = vadd.f32 %v474, %v475
  %v477 = vsel %vm51, %v421, 0.0
  %v478 = vadd.f32 %v476, %v477
  %v479 = vsel %vm51, %v422, 0.0
  %v480 = vadd.f32 %v478, %v479
  %v481 = vsel %vm51, %v423, 0.0
  %v482 = vadd.f32 %v480, %v481
  %v483 = vsel %vm51, %v424, 0.0
  %v484 = vadd.f32 %v482, %v483
  %v485 = vsel %vm51, %v425, 0.0
  %v486 = vadd.f32 %v484, %v485
  %v487 = vsel %vm51, %v426, 0.0
  %v488 = vadd.f32 %v486, %v487
  %v489 = vsel %vm51, %v427, 0.0
  %v490 = vadd.f32 %v488, %v489
  %v491 = vsel %vm51, %v428, 0.0
  %v492 = vadd.f32 %v490, %v491
  %v493 = vsel %vm51, %v429, 0.0
  %v494 = vadd.f32 %v492, %v493
  %v495 = vsel %vm51, %v430, 0.0
  %v496 = vadd.f32 %v494, %v495
  %v497 = vsel %vm51, %v431, 0.0
  %v498 = vadd.f32 %v496, %v497
  %v499 = vsel %vm51, %v432, 0.0
  %v500 = vadd.f32 %v498, %v499
  %v501 = vsel %vm51, %v433, 0.0
  %v502 = vadd.f32 %v500, %v501
  %v503 = vsel %vm51, %v434, 0.0
  %v504 = vadd.f32 %v502, %v503
  %v505 = vsel %vm51, %v435, 0.0
  %v506 = vadd.f32 %v504, %v505
  %v507 = vrot.slane %v506, 4
  %v508 = vadd.f32 %v506, %v507
  %v509 = vrot.slane %v508, 2
  %v510 = vadd.f32 %v508, %v509
  %v511 = vrot.slane %v510, 1
  %v512 = vadd.f32 %v510, %v511
  %513 = vst.msk [vmem:[%s4] sm:$0x1] %vm398, %v512
  // Predicated region
  $region10: #{_lambda_.8} parent=0 // pred_check
    _
  $region11: #{_lambda_.8} parent=0 // pred_check_branch
    %515 = sbr.rel (0) target = $region13
  $region12: #{_lambda_.8} parent=0 // pred_region
    _
  $region13: #{_lambda_.8} parent=0 // pred_fallthru
    _
  // Predicated region
  $region14: #{_lambda_.8} parent=0 // pred_check
    _
  $region15: #{_lambda_.8} parent=0 // pred_check_branch
    %517 = sbr.rel (0) target = $region17
  $region16: #{_lambda_.8} parent=0 // pred_region
    _
  $region17: #{_lambda_.8} parent=0 // pred_fallthru
    _
  // Predicated region
  $region18: #{_lambda_.8} parent=0 // pred_check
    _
  $region19: #{_lambda_.8} parent=0 // pred_check_branch
    %519 = sbr.rel (0) target = $region21
  $region20: #{_lambda_.8} parent=0 // pred_region
    _
  $region21: #{_lambda_.8} parent=0 // pred_fallthru
    _
  // Predicated region
  $region22: #{_lambda_.8} parent=0 // pred_check
    _
  $region23: #{_lambda_.8} parent=0 // pred_check_branch
    %521 = sbr.rel (0) target = $region25
  $region24: #{_lambda_.8} parent=0 // pred_region
    _
  $region25: #{_lambda_.8} parent=0 // pred_fallthru
    _
  // Predicated region
  $region26: #{_lambda_.8} parent=0 // pred_check
    _
  $region27: #{_lambda_.8} parent=0 // pred_check_branch
    %523 = sbr.rel (0) target = $region29
  $region28: #{_lambda_.8} parent=0 // pred_region
    _
  $region29: #{_lambda_.8} parent=0 // pred_fallthru
    _
  // Predicated region
  $region30: #{_lambda_.8} parent=0 // pred_check
    _
  $region31: #{_lambda_.8} parent=0 // pred_check_branch
    %525 = sbr.rel (0) target = $region33
  $region32: #{_lambda_.8} parent=0 // pred_region
    _
  $region33: #{_lambda_.8} parent=0 // pred_fallthru
    _

// kernel: reverse.1
$region0: #{reverse.1}
  %s0 = inlined_call_operand.vmem [shape: f32[2,4,8,3], index: 0, kind: input, shape index: {}]
  %s1 = inlined_call_operand.vmem [shape: f32[2,4,8,3], index: 1, kind: output, shape index: {}]
  $region1: #{reverse.1} parent=0
    #allocation0 [shape = 'u8[65536]{0}', space=vmem, size = 0x10000, scoped, tag = 'operand span for operand 0']
    #allocation1 [shape = 'u8[32768]{0}', space=vmem, size = 0x8000, scoped, tag = 'packed  for operand 0']
    #allocation2 [shape = 'u8[32768]{0}', space=vmem, size = 0x8000, scoped, tag = 'operand span for operand 1']
    #allocation3 [shape = 'u8[16384]{0}', space=vmem, size = 0x4000, scoped, tag = 'packed  for operand 1']
    %s2 = scalar_lea.vmem [#allocation1], 4
    // Predicated region
    $region2: #{reverse.1} parent=1 // pred_check
      _
    $region3: #{reverse.1} parent=1 // pred_check_branch
      %4 = sbr.rel (0) target = $region5
    $region4: #{reverse.1} parent=1 // pred_region
      // Predicated region
      $region6: #{reverse.1} parent=4 // pred_check
        _
      $region7: #{reverse.1} parent=4 // pred_check_branch
        %6 = sbr.rel target = $region9
      $region8: #{reverse.1} parent=4 // pred_region
        // Predicated region
        $region21: #{reverse.1} parent=8 // pred_check
          _
        $region22: #{reverse.1} parent=8 // pred_check_branch
          %36 = sbr.rel (0) target = $region24
        $region23: #{reverse.1} parent=8 // pred_region
          loop: start=0, step=1, limit=1
          $region25: #{reverse.1} parent=23 // loop_pre_header
            _
          $region26: #{reverse.1} parent=23 // loop_header
            %s38 = sphi 0, %s42
            %p39 = scmp.ge.s32.totalorder %s38, 1
            %s43 = sphi %s0, %s0
            %s44 = sphi %s2, %s2
          $region27: #{reverse.1} parent=23 // loop_header_branch
            %41 = sbr.rel (%p39) target = $region31
          $region28: #{reverse.1} parent=23 // loop_body
            _
          $region29: #{reverse.1} parent=23 // loop_footer
            %s42 = sadd.s32 1, %s38
          $region30: #{reverse.1} parent=23 // loop_footer_branch
            %37 = sbr.rel target = $region26
          $region31: #{reverse.1} parent=23 // loop_exit
            _
          %s46 = ssub.s32 16, 1
          loop: start=0, step=1, limit=1
          $region32: #{reverse.1} parent=23 // loop_pre_header
            _
          $region33: #{reverse.1} parent=23 // loop_header
            %s48 = sphi 0, %s52
            %p49 = scmp.ge.s32.totalorder %s48, 1
            %s53 = sphi %s0, %s0
            %s54 = sphi %s2, %s2
          $region34: #{reverse.1} parent=23 // loop_header_branch
            %51 = sbr.rel (%p49) target = $region38
          $region35: #{reverse.1} parent=23 // loop_body
            %v55 = vld [vmem:[%s53] sm:%s46]
            %56 = vst [vmem:[%s54] sm:%s46] %v55
            %v57 = vld [vmem:[%s53 + $0x4] sm:%s46]
            %58 = vst [vmem:[%s54 + $0x8] sm:%s46] %v57
            %v59 = vld [vmem:[%s53 + $0x8] sm:%s46]
            %60 = vst [vmem:[%s54 + $0x10] sm:%s46] %v59
            %v61 = vld [vmem:[%s53 + $0xc] sm:%s46]
            %62 = vst [vmem:[%s54 + $0x18] sm:%s46] %v61
            %v63 = vld [vmem:[%s53 + $0x10] sm:%s46]
            %64 = vst [vmem:[%s54 + $0x20] sm:%s46] %v63
            %v65 = vld [vmem:[%s53 + $0x14] sm:%s46]
            %66 = vst [vmem:[%s54 + $0x28] sm:%s46] %v65
            %v67 = vld [vmem:[%s53 + $0x18] sm:%s46]
            %68 = vst [vmem:[%s54 + $0x30] sm:%s46] %v67
            %v69 = vld [vmem:[%s53 + $0x1c] sm:%s46]
            %70 = vst [vmem:[%s54 + $0x38] sm:%s46] %v69
          $region36: #{reverse.1} parent=23 // loop_footer
            %s52 = sadd.s32 1, %s48
          $region37: #{reverse.1} parent=23 // loop_footer_branch
            %47 = sbr.rel target = $region33
          $region38: #{reverse.1} parent=23 // loop_exit
            _
        $region24: #{reverse.1} parent=8 // pred_fallthru
          _
      $region9: #{reverse.1} parent=4 // pred_fallthru
        _
      // Predicated region
      $region10: #{reverse.1} parent=4 // pred_check
        _
      $region11: #{reverse.1} parent=4 // pred_check_branch
        %8 = sbr.rel (0) target = $region13
      $region12: #{reverse.1} parent=4 // pred_region
        %s10 = ssub.s32 16, 1
        loop: start=0, step=1, limit=1
        $region14: #{reverse.1} parent=12 // loop_pre_header
          _
        $region15: #{reverse.1} parent=12 // loop_header
          %s12 = sphi 0, %s16
          %p13 = scmp.ge.s32.totalorder %s12, 1
          %s17 = sphi %s0, %s0
          %s18 = sphi %s2, %s2
        $region16: #{reverse.1} parent=12 // loop_header_branch
          %15 = sbr.rel (%p13) target = $region20
        $region17: #{reverse.1} parent=12 // loop_body
          %v19 = vld [vmem:[%s17] sm:%s10]
          %20 = vst [vmem:[%s18] sm:%s10] %v19
          %v21 = vld [vmem:[%s17 + $0x4] sm:%s10]
          %22 = vst [vmem:[%s18 + $0x8] sm:%s10] %v21
          %v23 = vld [vmem:[%s17 + $0x8] sm:%s10]
          %24 = vst [vmem:[%s18 + $0x10] sm:%s10] %v23
          %v25 = vld [vmem:[%s17 + $0xc] sm:%s10]
          %26 = vst [vmem:[%s18 + $0x18] sm:%s10] %v25
          %v27 = vld [vmem:[%s17 + $0x10] sm:%s10]
          %28 = vst [vmem:[%s18 + $0x20] sm:%s10] %v27
          %v29 = vld [vmem:[%s17 + $0x14] sm:%s10]
          %30 = vst [vmem:[%s18 + $0x28] sm:%s10] %v29
          %v31 = vld [vmem:[%s17 + $0x18] sm:%s10]
          %32 = vst [vmem:[%s18 + $0x30] sm:%s10] %v31
          %v33 = vld [vmem:[%s17 + $0x1c] sm:%s10]
          %34 = vst [vmem:[%s18 + $0x38] sm:%s10] %v33
        $region18: #{reverse.1} parent=12 // loop_footer
          %s16 = sadd.s32 1, %s12
        $region19: #{reverse.1} parent=12 // loop_footer_branch
          %11 = sbr.rel target = $region15
        $region20: #{reverse.1} parent=12 // loop_exit
          _
      $region13: #{reverse.1} parent=4 // pred_fallthru
        _
    $region5: #{reverse.1} parent=1 // pred_fallthru
      _
    %71 = vnop
    %s73 = ssub.s32 16, 1
    %s74 = scalar_lea.vmem [#allocation1], 60
    %v75 = vld [vmem:[%s74] sm:%s73]
    %s76 = scalar_lea.vmem [#allocation0], 120
    %77 = vst [vmem:[%s76] sm:%s73] %v75
    %s78 = scalar_lea.vmem [#allocation1], 56
    %v79 = vld [vmem:[%s78] sm:%s73]
    %s80 = scalar_lea.vmem [#allocation0], 112
    %81 = vst [vmem:[%s80] sm:%s73] %v79
    %s82 = scalar_lea.vmem [#allocation1], 52
    %v83 = vld [vmem:[%s82] sm:%s73]
    %s84 = scalar_lea.vmem [#allocation0], 104
    %85 = vst [vmem:[%s84] sm:%s73] %v83
    %s86 = scalar_lea.vmem [#allocation1], 48
    %v87 = vld [vmem:[%s86] sm:%s73]
    %s88 = scalar_lea.vmem [#allocation0], 96
    %89 = vst [vmem:[%s88] sm:%s73] %v87
    %s90 = scalar_lea.vmem [#allocation1], 44
    %v91 = vld [vmem:[%s90] sm:%s73]
    %s92 = scalar_lea.vmem [#allocation0], 88
    %93 = vst [vmem:[%s92] sm:%s73] %v91
    %s94 = scalar_lea.vmem [#allocation1], 40
    %v95 = vld [vmem:[%s94] sm:%s73]
    %s96 = scalar_lea.vmem [#allocation0], 80
    %97 = vst [vmem:[%s96] sm:%s73] %v95
    %s98 = scalar_lea.vmem [#allocation1], 36
    %v99 = vld [vmem:[%s98] sm:%s73]
    %s100 = scalar_lea.vmem [#allocation0], 72
    %101 = vst [vmem:[%s100] sm:%s73] %v99
    %s102 = scalar_lea.vmem [#allocation1], 32
    %v103 = vld [vmem:[%s102] sm:%s73]
    %s104 = scalar_lea.vmem [#allocation0], 64
    %105 = vst [vmem:[%s104] sm:%s73] %v103
    %s106 = scalar_lea.vmem [#allocation1], 28
    %v107 = vld [vmem:[%s106] sm:%s73]
    %s108 = scalar_lea.vmem [#allocation0], 56
    %109 = vst [vmem:[%s108] sm:%s73] %v107
    %s110 = scalar_lea.vmem [#allocation1], 24
    %v111 = vld [vmem:[%s110] sm:%s73]
    %s112 = scalar_lea.vmem [#allocation0], 48
    %113 = vst [vmem:[%s112] sm:%s73] %v111
    %s114 = scalar_lea.vmem [#allocation1], 20
    %v115 = vld [vmem:[%s114] sm:%s73]
    %s116 = scalar_lea.vmem [#allocation0], 40
    %117 = vst [vmem:[%s116] sm:%s73] %v115
    %s118 = scalar_lea.vmem [#allocation1], 16
    %v119 = vld [vmem:[%s118] sm:%s73]
    %s120 = scalar_lea.vmem [#allocation0], 32
    %121 = vst [vmem:[%s120] sm:%s73] %v119
    %s122 = scalar_lea.vmem [#allocation1], 12
    %v123 = vld [vmem:[%s122] sm:%s73]
    %s124 = scalar_lea.vmem [#allocation0], 24
    %125 = vst [vmem:[%s124] sm:%s73] %v123
    %s126 = scalar_lea.vmem [#allocation1], 8
    %v127 = vld [vmem:[%s126] sm:%s73]
    %s128 = scalar_lea.vmem [#allocation0], 16
    %129 = vst [vmem:[%s128] sm:%s73] %v127
    %s130 = scalar_lea.vmem [#allocation1], 4
    %v131 = vld [vmem:[%s130] sm:%s73]
    %s132 = scalar_lea.vmem [#allocation0], 8
    %133 = vst [vmem:[%s132] sm:%s73] %v131
    %v134 = vld [vmem:[#allocation1] sm:%s73]
    %135 = vst [vmem:[#allocation0] sm:%s73] %v134
    %s136 = scalar_lea.vmem [#allocation0], 7
    %v137 = vld [vmem:[%s136] ss:$-1 sm:$0xff]
    %v138 = vrot.slane %v137, 5
    %139 = vst [vmem:[#allocation2] sm:$0xff] %v138
    %s140 = scalar_lea.vmem [#allocation0], 8
    %s141 = scalar_lea.vmem %s140, 7 [#allocation0]
    %v142 = vld [vmem:[%s141] ss:$-1 sm:$0xff]
    %v143 = vrot.slane %v142, 5
    %v144 = vlaneseq
    %v145 = vshrl.u32 %v144, 7
    %vm146 = vcmp.lt.s32.totalorder %v145, 3
    %147 = vst.msk [vmem:[#allocation2] sm:$0xff] %vm146, %v143
    %s148 = scalar_lea.vmem [#allocation2], 8
    %s149 = scalar_lea.vmem [#allocation0], 16
    %s150 = scalar_lea.vmem %s149, 7 [#allocation0]
    %v151 = vld [vmem:[%s150] ss:$-1 sm:$0xff]
    %v152 = vrot.slane %v151, 5
    %153 = vst [vmem:[%s148] sm:$0xff] %v152
    %s154 = scalar_lea.vmem %s149, 8 [#allocation0]
    %s155 = scalar_lea.vmem %s154, 7 [#allocation0]
    %v156 = vld [vmem:[%s155] ss:$-1 sm:$0xff]
    %v157 = vrot.slane %v156, 5
    %v158 = vlaneseq
    %v159 = vshrl.u32 %v158, 7
    %vm160 = vcmp.lt.s32.totalorder %v159, 3
    %161 = vst.msk [vmem:[%s148] sm:$0xff] %vm160, %v157
    %s162 = scalar_lea.vmem [#allocation2], 16
    %s163 = scalar_lea.vmem [#allocation0], 32
    %s164 = scalar_lea.vmem %s163, 7 [#allocation0]
    %v165 = vld [vmem:[%s164] ss:$-1 sm:$0xff]
    %v166 = vrot.slane %v165, 5
    %167 = vst [vmem:[%s162] sm:$0xff] %v166
    %s168 = scalar_lea.vmem %s163, 8 [#allocation0]
    %s169 = scalar_lea.vmem %s168, 7 [#allocation0]
    %v170 = vld [vmem:[%s169] ss:$-1 sm:$0xff]
    %v171 = vrot.slane %v170, 5
    %v172 = vlaneseq
    %v173 = vshrl.u32 %v172, 7
    %vm174 = vcmp.lt.s32.totalorder %v173, 3
    %175 = vst.msk [vmem:[%s162] sm:$0xff] %vm174, %v171
    %s176 = scalar_lea.vmem [#allocation2], 24
    %s177 = scalar_lea.vmem [#allocation0], 48
    %s178 = scalar_lea.vmem %s177, 7 [#allocation0]
    %v179 = vld [vmem:[%s178] ss:$-1 sm:$0xff]
    %v180 = vrot.slane %v179, 5
    %181 = vst [vmem:[%s176] sm:$0xff] %v180
    %s182 = scalar_lea.vmem %s177, 8 [#allocation0]
    %s183 = scalar_lea.vmem %s182, 7 [#allocation0]
    %v184 = vld [vmem:[%s183] ss:$-1 sm:$0xff]
    %v185 = vrot.slane %v184, 5
    %v186 = vlaneseq
    %v187 = vshrl.u32 %v186, 7
    %vm188 = vcmp.lt.s32.totalorder %v187, 3
    %189 = vst.msk [vmem:[%s176] sm:$0xff] %vm188, %v185
    %s190 = scalar_lea.vmem [#allocation2], 32
    %s191 = scalar_lea.vmem [#allocation0], 64
    %s192 = scalar_lea.vmem %s191, 7 [#allocation0]
    %v193 = vld [vmem:[%s192] ss:$-1 sm:$0xff]
    %v194 = vrot.slane %v193, 5
    %195 = vst [vmem:[%s190] sm:$0xff] %v194
    %s196 = scalar_lea.vmem %s191, 8 [#allocation0]
    %s197 = scalar_lea.vmem %s196, 7 [#allocation0]
    %v198 = vld [vmem:[%s197] ss:$-1 sm:$0xff]
    %v199 = vrot.slane %v198, 5
    %v200 = vlaneseq
    %v201 = vshrl.u32 %v200, 7
    %vm202 = vcmp.lt.s32.totalorder %v201, 3
    %203 = vst.msk [vmem:[%s190] sm:$0xff] %vm202, %v199
    %s204 = scalar_lea.vmem [#allocation2], 40
    %s205 = scalar_lea.vmem [#allocation0], 80
    %s206 = scalar_lea.vmem %s205, 7 [#allocation0]
    %v207 = vld [vmem:[%s206] ss:$-1 sm:$0xff]
    %v208 = vrot.slane %v207, 5
    %209 = vst [vmem:[%s204] sm:$0xff] %v208
    %s210 = scalar_lea.vmem %s205, 8 [#allocation0]
    %s211 = scalar_lea.vmem %s210, 7 [#allocation0]
    %v212 = vld [vmem:[%s211] ss:$-1 sm:$0xff]
    %v213 = vrot.slane %v212, 5
    %v214 = vlaneseq
    %v215 = vshrl.u32 %v214, 7
    %vm216 = vcmp.lt.s32.totalorder %v215, 3
    %217 = vst.msk [vmem:[%s204] sm:$0xff] %vm216, %v213
    %s218 = scalar_lea.vmem [#allocation2], 48
    %s219 = scalar_lea.vmem [#allocation0], 96
    %s220 = scalar_lea.vmem %s219, 7 [#allocation0]
    %v221 = vld [vmem:[%s220] ss:$-1 sm:$0xff]
    %v222 = vrot.slane %v221, 5
    %223 = vst [vmem:[%s218] sm:$0xff] %v222
    %s224 = scalar_lea.vmem %s219, 8 [#allocation0]
    %s225 = scalar_lea.vmem %s224, 7 [#allocation0]
    %v226 = vld [vmem:[%s225] ss:$-1 sm:$0xff]
    %v227 = vrot.slane %v226, 5
    %v228 = vlaneseq
    %v229 = vshrl.u32 %v228, 7
    %vm230 = vcmp.lt.s32.totalorder %v229, 3
    %231 = vst.msk [vmem:[%s218] sm:$0xff] %vm230, %v227
    %s232 = scalar_lea.vmem [#allocation2], 56
    %s233 = scalar_lea.vmem [#allocation0], 112
    %s234 = scalar_lea.vmem %s233, 7 [#allocation0]
    %v235 = vld [vmem:[%s234] ss:$-1 sm:$0xff]
    %v236 = vrot.slane %v235, 5
    %237 = vst [vmem:[%s232] sm:$0xff] %v236
    %s238 = scalar_lea.vmem %s233, 8 [#allocation0]
    %s239 = scalar_lea.vmem %s238, 7 [#allocation0]
    %v240 = vld [vmem:[%s239] ss:$-1 sm:$0xff]
    %v241 = vrot.slane %v240, 5
    %v242 = vlaneseq
    %v243 = vshrl.u32 %v242, 7
    %vm244 = vcmp.lt.s32.totalorder %v243, 3
    %245 = vst.msk [vmem:[%s232] sm:$0xff] %vm244, %v241
    %s247 = ssub.s32 16, 1
    %v248 = vld [vmem:[#allocation2] sm:%s247]
    %s250 = ssub.s32 16, 1
    %251 = vst [vmem:[#allocation3] sm:%s250] %v248
    %s252 = scalar_lea.vmem [#allocation2], 8
    %v253 = vld [vmem:[%s252] sm:%s247]
    %s255 = ssub.s32 16, 1
    %s256 = scalar_lea.vmem [#allocation3], 4
    %257 = vst [vmem:[%s256] sm:%s255] %v253
    %s258 = scalar_lea.vmem [#allocation2], 16
    %v259 = vld [vmem:[%s258] sm:%s247]
    %s261 = ssub.s32 16, 1
    %s262 = scalar_lea.vmem [#allocation3], 8
    %263 = vst [vmem:[%s262] sm:%s261] %v259
    %s264 = scalar_lea.vmem [#allocation2], 24
    %v265 = vld [vmem:[%s264] sm:%s247]
    %s267 = ssub.s32 16, 1
    %s268 = scalar_lea.vmem [#allocation3], 12
    %269 = vst [vmem:[%s268] sm:%s267] %v265
    %s270 = scalar_lea.vmem [#allocation2], 32
    %v271 = vld [vmem:[%s270] sm:%s247]
    %s273 = ssub.s32 16, 1
    %s274 = scalar_lea.vmem [#allocation3], 16
    %275 = vst [vmem:[%s274] sm:%s273] %v271
    %s276 = scalar_lea.vmem [#allocation2], 40
    %v277 = vld [vmem:[%s276] sm:%s247]
    %s279 = ssub.s32 16, 1
    %s280 = scalar_lea.vmem [#allocation3], 20
    %281 = vst [vmem:[%s280] sm:%s279] %v277
    %s282 = scalar_lea.vmem [#allocation2], 48
    %v283 = vld [vmem:[%s282] sm:%s247]
    %s285 = ssub.s32 16, 1
    %s286 = scalar_lea.vmem [#allocation3], 24
    %287 = vst [vmem:[%s286] sm:%s285] %v283
    %s288 = scalar_lea.vmem [#allocation2], 56
    %v289 = vld [vmem:[%s288] sm:%s247]
    %s291 = ssub.s32 16, 1
    %s292 = scalar_lea.vmem [#allocation3], 28
    %293 = vst [vmem:[%s292] sm:%s291] %v289
    // Predicated region
    $region39: #{reverse.1} parent=1 // pred_check
      _
    $region40: #{reverse.1} parent=1 // pred_check_branch
      %295 = sbr.rel (0) target = $region42
    $region41: #{reverse.1} parent=1 // pred_region
      // Predicated region
      $region43: #{reverse.1} parent=41 // pred_check
        _
      $region44: #{reverse.1} parent=41 // pred_check_branch
        %297 = sbr.rel target = $region46
      $region45: #{reverse.1} parent=41 // pred_region
        // Predicated region
        $region58: #{reverse.1} parent=45 // pred_check
          _
        $region59: #{reverse.1} parent=45 // pred_check_branch
          %327 = sbr.rel (0) target = $region61
        $region60: #{reverse.1} parent=45 // pred_region
          loop: start=0, step=1, limit=1
          $region62: #{reverse.1} parent=60 // loop_pre_header
            _
          $region63: #{reverse.1} parent=60 // loop_header
            %s329 = sphi 0, %s333
            %p330 = scmp.ge.s32.totalorder %s329, 1
            %s334 = sphi [#allocation3], [#allocation3]
            %s335 = sphi %s1, %s1
          $region64: #{reverse.1} parent=60 // loop_header_branch
            %332 = sbr.rel (%p330) target = $region68
          $region65: #{reverse.1} parent=60 // loop_body
            _
          $region66: #{reverse.1} parent=60 // loop_footer
            %s333 = sadd.s32 1, %s329
          $region67: #{reverse.1} parent=60 // loop_footer_branch
            %328 = sbr.rel target = $region63
          $region68: #{reverse.1} parent=60 // loop_exit
            _
          %s337 = ssub.s32 16, 1
          loop: start=0, step=1, limit=1
          $region69: #{reverse.1} parent=60 // loop_pre_header
            _
          $region70: #{reverse.1} parent=60 // loop_header
            %s339 = sphi 0, %s343
            %p340 = scmp.ge.s32.totalorder %s339, 1
            %s344 = sphi [#allocation3], [#allocation3]
            %s345 = sphi %s1, %s1
          $region71: #{reverse.1} parent=60 // loop_header_branch
            %342 = sbr.rel (%p340) target = $region75
          $region72: #{reverse.1} parent=60 // loop_body
            %v346 = vld [vmem:[%s344] sm:%s337]
            %347 = vst [vmem:[%s345] sm:%s337] %v346
            %v348 = vld [vmem:[%s344 + $0x4] sm:%s337]
            %349 = vst [vmem:[%s345 + $0x4] sm:%s337] %v348
            %v350 = vld [vmem:[%s344 + $0x8] sm:%s337]
            %351 = vst [vmem:[%s345 + $0x8] sm:%s337] %v350
            %v352 = vld [vmem:[%s344 + $0xc] sm:%s337]
            %353 = vst [vmem:[%s345 + $0xc] sm:%s337] %v352
            %v354 = vld [vmem:[%s344 + $0x10] sm:%s337]
            %355 = vst [vmem:[%s345 + $0x10] sm:%s337] %v354
            %v356 = vld [vmem:[%s344 + $0x14] sm:%s337]
            %357 = vst [vmem:[%s345 + $0x14] sm:%s337] %v356
            %v358 = vld [vmem:[%s344 + $0x18] sm:%s337]
            %359 = vst [vmem:[%s345 + $0x18] sm:%s337] %v358
            %v360 = vld [vmem:[%s344 + $0x1c] sm:%s337]
            %361 = vst [vmem:[%s345 + $0x1c] sm:%s337] %v360
          $region73: #{reverse.1} parent=60 // loop_footer
            %s343 = sadd.s32 1, %s339
          $region74: #{reverse.1} parent=60 // loop_footer_branch
            %338 = sbr.rel target = $region70
          $region75: #{reverse.1} parent=60 // loop_exit
            _
        $region61: #{reverse.1} parent=45 // pred_fallthru
          _
      $region46: #{reverse.1} parent=41 // pred_fallthru
        _
      // Predicated region
      $region47: #{reverse.1} parent=41 // pred_check
        _
      $region48: #{reverse.1} parent=41 // pred_check_branch
        %299 = sbr.rel (0) target = $region50
      $region49: #{reverse.1} parent=41 // pred_region
        %s301 = ssub.s32 16, 1
        loop: start=0, step=1, limit=1
        $region51: #{reverse.1} parent=49 // loop_pre_header
          _
        $region52: #{reverse.1} parent=49 // loop_header
          %s303 = sphi 0, %s307
          %p304 = scmp.ge.s32.totalorder %s303, 1
          %s308 = sphi [#allocation3], [#allocation3]
          %s309 = sphi %s1, %s1
        $region53: #{reverse.1} parent=49 // loop_header_branch
          %306 = sbr.rel (%p304) target = $region57
        $region54: #{reverse.1} parent=49 // loop_body
          %v310 = vld [vmem:[%s308] sm:%s301]
          %311 = vst [vmem:[%s309] sm:%s301] %v310
          %v312 = vld [vmem:[%s308 + $0x4] sm:%s301]
          %313 = vst [vmem:[%s309 + $0x4] sm:%s301] %v312
          %v314 = vld [vmem:[%s308 + $0x8] sm:%s301]
          %315 = vst [vmem:[%s309 + $0x8] sm:%s301] %v314
          %v316 = vld [vmem:[%s308 + $0xc] sm:%s301]
          %317 = vst [vmem:[%s309 + $0xc] sm:%s301] %v316
          %v318 = vld [vmem:[%s308 + $0x10] sm:%s301]
          %319 = vst [vmem:[%s309 + $0x10] sm:%s301] %v318
          %v320 = vld [vmem:[%s308 + $0x14] sm:%s301]
          %321 = vst [vmem:[%s309 + $0x14] sm:%s301] %v320
          %v322 = vld [vmem:[%s308 + $0x18] sm:%s301]
          %323 = vst [vmem:[%s309 + $0x18] sm:%s301] %v322
          %v324 = vld [vmem:[%s308 + $0x1c] sm:%s301]
          %325 = vst [vmem:[%s309 + $0x1c] sm:%s301] %v324
        $region55: #{reverse.1} parent=49 // loop_footer
          %s307 = sadd.s32 1, %s303
        $region56: #{reverse.1} parent=49 // loop_footer_branch
          %302 = sbr.rel target = $region52
        $region57: #{reverse.1} parent=49 // loop_exit
          _
      $region50: #{reverse.1} parent=41 // pred_fallthru
        _
    $region42: #{reverse.1} parent=1 // pred_fallthru
      _
    %362 = vnop

// kernel: _lambda_.9
$region0: #{_lambda_.9}
  #allocation0 [shape = 'u32[]', space=smem, size = 0x4, offset = 0x4, fixed_abs, tag = 'smem constant byte address 0x4 - core index']
  #allocation1 [shape = 'u32[72,128]{1,0:T(1,128)}', space=vmem, size = 0x9000, scoped, tag = 'internal scratch']
  %s0 = inlined_call_operand.vmem [shape: f32[80,8], index: 0, kind: input, shape index: {}]
  %s1 = inlined_call_operand.vmem [shape: f32[8,8], index: 1, kind: input, shape index: {}]
  %s2 = inlined_call_operand.vmem [shape: f32[80,8], index: 2, kind: output, shape index: {0}]
  %s3 = inlined_call_operand.vmem [shape: f32[1,1,8], index: 3, kind: output, shape index: {1}]
  %s4 = inlined_call_operand.vmem [shape: f32[1,1,8], index: 4, kind: output, shape index: {2}]
  %5 = xla_tuple %s2, %s3, %s4
  %s6 = sld [smem:[#allocation0]]
  $region34: #{_lambda_.9} parent=0
    _
  %s8 = ssub.s32 1, %s6
  %s9 = scalar_select 0, %s8, %s6
  // Predicated region
  $region2: #{_lambda_.9} parent=0 // pred_check
    _
  $region3: #{_lambda_.9} parent=0 // pred_check_branch
    %11 = sbr.rel (0) target = $region5
  $region4: #{_lambda_.9} parent=0 // pred_region
    _
  $region5: #{_lambda_.9} parent=0 // pred_fallthru
    _
  // Predicated region
  $region6: #{_lambda_.9} parent=0 // pred_check
    _
  $region7: #{_lambda_.9} parent=0 // pred_check_branch
    %13 = sbr.rel (0) target = $region9
  $region8: #{_lambda_.9} parent=0 // pred_region
    _
  $region9: #{_lambda_.9} parent=0 // pred_fallthru
    _
  %v14 = vld [vmem:[%s0] sm:$0xff]
  %v15 = vld [vmem:[%s0 + $0x8] sm:$0xff]
  %v16 = vld [vmem:[%s0 + $0x10] sm:$0xff]
  %v17 = vld [vmem:[%s0 + $0x18] sm:$0xff]
  %v18 = vld [vmem:[%s0 + $0x20] sm:$0xff]
  %v19 = vld [vmem:[%s0 + $0x28] sm:$0xff]
  %v20 = vld [vmem:[%s0 + $0x30] sm:$0xff]
  %v21 = vld [vmem:[%s0 + $0x38] sm:$0xff]
  %v22 = vld [vmem:[%s0 + $0x40] sm:$0xff]
  %v23 = vld [vmem:[%s0 + $0x48] sm:$0xff]
  %v24 = vld [vmem:[%s1] sm:$0xff]
  %vm25 = vcmask 64512
  %v27 = vsel %vm25, %v14, 0
  %v30 = vsel %vm25, %v15, 0
  %v33 = vsel %vm25, %v16, 0
  %v36 = vsel %vm25, %v17, 0
  %v39 = vsel %vm25, %v18, 0
  %v42 = vsel %vm25, %v19, 0
  %v45 = vsel %vm25, %v20, 0
  %v48 = vsel %vm25, %v21, 0
  %v51 = vsel %vm25, %v22, 0
  %v54 = vsel %vm25, %v23, 0
  %56 = vmatpush.msra.mxu0 0.0
  %57 = vmatpush.msra.mxu0 0.0
  %58 = vmatpush.msra.mxu0 0.0
  %59 = vmatpush.msra.mxu0 0.0
  %60 = vmatpush.msra.mxu0 0.0
  %61 = vmatpush.msra.mxu0 0.0
  %62 = vmatpush.msra.mxu0 0.0
  %63 = vmatpush.msra.mxu0 0.0
  %64 = vmatpush.msra.mxu0 0.0
  %65 = vmatpush.msra.mxu0 0.0
  %66 = vmatpush.msra.mxu0 0.0
  %67 = vmatpush.msra.mxu0 0.0
  %68 = vmatpush.msra.mxu0 0.0
  %69 = vmatpush.msra.mxu0 0.0
  %70 = vmatpush.msra.mxu0 0.0
  %71 = vmatpush.msra.mxu0 %v24
  %72 = vmatmul.f32.gmra.mxu0 %v27
  %v73 = vpop.f32.mrf.mxu0
  %v74 = vadd.f32 0.0, %v73
  %75 = vmatmul.f32.gmra.mxu0 %v30
  %v76 = vpop.f32.mrf.mxu0
  %v77 = vadd.f32 0.0, %v76
  %78 = vmatmul.f32.gmra.mxu0 %v33
  %v79 = vpop.f32.mrf.mxu0
  %v80 = vadd.f32 0.0, %v79
  %81 = vmatmul.f32.gmra.mxu0 %v36
  %v82 = vpop.f32.mrf.mxu0
  %v83 = vadd.f32 0.0, %v82
  %84 = vmatmul.f32.gmra.mxu0 %v39
  %v85 = vpop.f32.mrf.mxu0
  %v86 = vadd.f32 0.0, %v85
  %87 = vmatmul.f32.gmra.mxu0 %v42
  %v88 = vpop.f32.mrf.mxu0
  %v89 = vadd.f32 0.0, %v88
  %90 = vmatmul.f32.gmra.mxu0 %v45
  %v91 = vpop.f32.mrf.mxu0
  %v92 = vadd.f32 0.0, %v91
  %93 = vmatmul.f32.gmra.mxu0 %v48
  %v94 = vpop.f32.mrf.mxu0
  %v95 = vadd.f32 0.0, %v94
  %96 = vmatmul.f32.gmra.mxu0 %v51
  %v97 = vpop.f32.mrf.mxu0
  %v98 = vadd.f32 0.0, %v97
  %99 = vmatmul.f32.gmra.mxu0 %v54
  %v100 = vpop.f32.mrf.mxu0
  %v101 = vadd.f32 0.0, %v100
  %102 = vdwg.mxu0
  %103 = vst.msk [vmem:[%s2] sm:$0xff] %vm25, %v74
  %104 = vst.msk [vmem:[%s2 + $0x8] sm:$0xff] %vm25, %v77
  %105 = vst.msk [vmem:[%s2 + $0x10] sm:$0xff] %vm25, %v80
  %106 = vst.msk [vmem:[%s2 + $0x18] sm:$0xff] %vm25, %v83
  %107 = vst.msk [vmem:[%s2 + $0x20] sm:$0xff] %vm25, %v86
  %108 = vst.msk [vmem:[%s2 + $0x28] sm:$0xff] %vm25, %v89
  %109 = vst.msk [vmem:[%s2 + $0x30] sm:$0xff] %vm25, %v92
  %110 = vst.msk [vmem:[%s2 + $0x38] sm:$0xff] %vm25, %v95
  %111 = vst.msk [vmem:[%s2 + $0x40] sm:$0xff] %vm25, %v98
  %112 = vst.msk [vmem:[%s2 + $0x48] sm:$0xff] %vm25, %v101
  %v113 = vsel %vm25, %v74, 0.0
  %v114 = vsel %vm25, %v77, 0.0
  %v115 = vadd.f32 %v113, %v114
  %v116 = vsel %vm25, %v80, 0.0
  %v117 = vadd.f32 %v115, %v116
  %v118 = vsel %vm25, %v83, 0.0
  %v119 = vadd.f32 %v117, %v118
  %v120 = vsel %vm25, %v86, 0.0
  %v121 = vadd.f32 %v119, %v120
  %v122 = vsel %vm25, %v89, 0.0
  %v123 = vadd.f32 %v121, %v122
  %v124 = vsel %vm25, %v92, 0.0
  %v125 = vadd.f32 %v123, %v124
  %v126 = vsel %vm25, %v95, 0.0
  %v127 = vadd.f32 %v125, %v126
  %v128 = vsel %vm25, %v98, 0.0
  %v129 = vadd.f32 %v127, %v128
  %v130 = vsel %vm25, %v101, 0.0
  %v131 = vadd.f32 %v129, %v130
  %v132 = vrot.slane %v131, 4
  %v133 = vadd.f32 %v131, %v132
  %v134 = vrot.slane %v133, 2
  %v135 = vadd.f32 %v133, %v134
  %v136 = vrot.slane %v135, 1
  %v137 = vadd.f32 %v135, %v136
  %vm138 = vcmask 57344
  %139 = vst.msk [vmem:[%s3] sm:$0x1] %vm138, %v137
  %v140 = vmul.f32 %v74, %v74
  %v141 = vmul.f32 %v77, %v77
  %v142 = vmul.f32 %v80, %v80
  %v143 = vmul.f32 %v83, %v83
  %v144 = vmul.f32 %v86, %v86
  %v145 = vmul.f32 %v89, %v89
  %v146 = vmul.f32 %v92, %v92
  %v147 = vmul.f32 %v95, %v95
  %v148 = vmul.f32 %v98, %v98
  %v149 = vmul.f32 %v101, %v101
  %v150 = vsel %vm25, %v140, 0.0
  %v151 = vsel %vm25, %v141, 0.0
  %v152 = vadd.f32 %v150, %v151
  %v153 = vsel %vm25, %v142, 0.0
  %v154 = vadd.f32 %v152, %v153
  %v155 = vsel %vm25, %v143, 0.0
  %v156 = vadd.f32 %v154, %v155
  %v157 = vsel %vm25, %v144, 0.0
  %v158 = vadd.f32 %v156, %v157
  %v159 = vsel %vm25, %v145, 0.0
  %v160 = vadd.f32 %v158, %v159
  %v161 = vsel %vm25, %v146, 0.0
  %v162 = vadd.f32 %v160, %v161
  %v163 = vsel %vm25, %v147, 0.0
  %v164 = vadd.f32 %v162, %v163
  %v165 = vsel %vm25, %v148, 0.0
  %v166 = vadd.f32 %v164, %v165
  %v167 = vsel %vm25, %v149, 0.0
  %v168 = vadd.f32 %v166, %v167
  %v169 = vrot.slane %v168, 4
  %v170 = vadd.f32 %v168, %v169
  %v171 = vrot.slane %v170, 2
  %v172 = vadd.f32 %v170, %v171
  %v173 = vrot.slane %v172, 1
  %v174 = vadd.f32 %v172, %v173
  %175 = vst.msk [vmem:[%s4] sm:$0x1] %vm138, %v174
  // Predicated region
  $region10: #{_lambda_.9} parent=0 // pred_check
    _
  $region11: #{_lambda_.9} parent=0 // pred_check_branch
    %177 = sbr.rel (0) target = $region13
  $region12: #{_lambda_.9} parent=0 // pred_region
    _
  $region13: #{_lambda_.9} parent=0 // pred_fallthru
    _
  // Predicated region
  $region14: #{_lambda_.9} parent=0 // pred_check
    _
  $region15: #{_lambda_.9} parent=0 // pred_check_branch
    %179 = sbr.rel (0) target = $region17
  $region16: #{_lambda_.9} parent=0 // pred_region
    _
  $region17: #{_lambda_.9} parent=0 // pred_fallthru
    _
  // Predicated region
  $region18: #{_lambda_.9} parent=0 // pred_check
    _
  $region19: #{_lambda_.9} parent=0 // pred_check_branch
    %181 = sbr.rel (0) target = $region21
  $region20: #{_lambda_.9} parent=0 // pred_region
    _
  $region21: #{_lambda_.9} parent=0 // pred_fallthru
    _
  // Predicated region
  $region22: #{_lambda_.9} parent=0 // pred_check
    _
  $region23: #{_lambda_.9} parent=0 // pred_check_branch
    %183 = sbr.rel (0) target = $region25
  $region24: #{_lambda_.9} parent=0 // pred_region
    _
  $region25: #{_lambda_.9} parent=0 // pred_fallthru
    _
  // Predicated region
  $region26: #{_lambda_.9} parent=0 // pred_check
    _
  $region27: #{_lambda_.9} parent=0 // pred_check_branch
    %185 = sbr.rel (0) target = $region29
  $region28: #{_lambda_.9} parent=0 // pred_region
    _
  $region29: #{_lambda_.9} parent=0 // pred_fallthru
    _
  // Predicated region
  $region30: #{_lambda_.9} parent=0 // pred_check
    _
  $region31: #{_lambda_.9} parent=0 // pred_check_branch
    %187 = sbr.rel (0) target = $region33
  $region32: #{_lambda_.9} parent=0 // pred_region
    _
  $region33: #{_lambda_.9} parent=0 // pred_fallthru
    _

// kernel: tile.9
$region0: #{tile.9}
  %s0 = inlined_call_operand.vmem [shape: f32[2,2,8,2,8,4], index: 0, kind: input, shape index: {}]
  %s1 = inlined_call_operand.vmem [shape: f32[2,16,16,4], index: 1, kind: output, shape index: {}]
  $region1: #{tile.9} parent=0
    #allocation0 [shape = 'u8[524288]{0}', space=vmem, size = 0x80000, scoped, tag = 'scoped mem for input reshape']
    %s3 = ssub.s32 4, 1
    %s4 = scalar_lea.vmem %s0, 254
    %v5 = vld [vmem:[%s4] sm:%s3]
    %s6 = scalar_lea.vmem [#allocation0], 1016
    %7 = vst [vmem:[%s6] sm:%s3] %v5
    %s8 = scalar_lea.vmem %s0, 252
    %v9 = vld [vmem:[%s8] sm:%s3]
    %s10 = scalar_lea.vmem [#allocation0], 1008
    %11 = vst [vmem:[%s10] sm:%s3] %v9
    %s12 = scalar_lea.vmem %s0, 250
    %v13 = vld [vmem:[%s12] sm:%s3]
    %s14 = scalar_lea.vmem [#allocation0], 1000
    %15 = vst [vmem:[%s14] sm:%s3] %v13
    %s16 = scalar_lea.vmem %s0, 248
    %v17 = vld [vmem:[%s16] sm:%s3]
    %s18 = scalar_lea.vmem [#allocation0], 992
    %19 = vst [vmem:[%s18] sm:%s3] %v17
    %s20 = scalar_lea.vmem %s0, 246
    %v21 = vld [vmem:[%s20] sm:%s3]
    %s22 = scalar_lea.vmem [#allocation0], 984
    %23 = vst [vmem:[%s22] sm:%s3] %v21
    %s24 = scalar_lea.vmem %s0, 244
    %v25 = vld [vmem:[%s24] sm:%s3]
    %s26 = scalar_lea.vmem [#allocation0], 976
    %27 = vst [vmem:[%s26] sm:%s3] %v25
    %s28 = scalar_lea.vmem %s0, 242
    %v29 = vld [vmem:[%s28] sm:%s3]
    %s30 = scalar_lea.vmem [#allocation0], 968
    %31 = vst [vmem:[%s30] sm:%s3] %v29
    %s32 = scalar_lea.vmem %s0, 240
    %v33 = vld [vmem:[%s32] sm:%s3]
    %s34 = scalar_lea.vmem [#allocation0], 960
    %35 = vst [vmem:[%s34] sm:%s3] %v33
    %s36 = scalar_lea.vmem %s0, 238
    %v37 = vld [vmem:[%s36] sm:%s3]
    %s38 = scalar_lea.vmem [#allocation0], 952
    %39 = vst [vmem:[%s38] sm:%s3] %v37
    %s40 = scalar_lea.vmem %s0, 236
    %v41 = vld [vmem:[%s40] sm:%s3]
    %s42 = scalar_lea.vmem [#allocation0], 944
    %43 = vst [vmem:[%s42] sm:%s3] %v41
    %s44 = scalar_lea.vmem %s0, 234
    %v45 = vld [vmem:[%s44] sm:%s3]
    %s46 = scalar_lea.vmem [#allocation0], 936
    %47 = vst [vmem:[%s46] sm:%s3] %v45
    %s48 = scalar_lea.vmem %s0, 232
    %v49 = vld [vmem:[%s48] sm:%s3]
    %s50 = scalar_lea.vmem [#allocation0], 928
    %51 = vst [vmem:[%s50] sm:%s3] %v49
    %s52 = scalar_lea.vmem %s0, 230
    %v53 = vld [vmem:[%s52] sm:%s3]
    %s54 = scalar_lea.vmem [#allocation0], 920
    %55 = vst [vmem:[%s54] sm:%s3] %v53
    %s56 = scalar_lea.vmem %s0, 228
    %v57 = vld [vmem:[%s56] sm:%s3]
    %s58 = scalar_lea.vmem [#allocation0], 912
    %59 = vst [vmem:[%s58] sm:%s3] %v57
    %s60 = scalar_lea.vmem %s0, 226
    %v61 = vld [vmem:[%s60] sm:%s3]
    %s62 = scalar_lea.vmem [#allocation0], 904
    %63 = vst [vmem:[%s62] sm:%s3] %v61
    %s64 = scalar_lea.vmem %s0, 224
    %v65 = vld [vmem:[%s64] sm:%s3]
    %s66 = scalar_lea.vmem [#allocation0], 896
    %67 = vst [vmem:[%s66] sm:%s3] %v65
    %s68 = scalar_lea.vmem %s0, 222
    %v69 = vld [vmem:[%s68] sm:%s3]
    %s70 = scalar_lea.vmem [#allocation0], 888
    %71 = vst [vmem:[%s70] sm:%s3] %v69
    %s72 = scalar_lea.vmem %s0, 220
    %v73 = vld [vmem:[%s72] sm:%s3]
    %s74 = scalar_lea.vmem [#allocation0], 880
    %75 = vst [vmem:[%s74] sm:%s3] %v73
    %s76 = scalar_lea.vmem %s0, 218
    %v77 = vld [vmem:[%s76] sm:%s3]
    %s78 = scalar_lea.vmem [#allocation0], 872
    %79 = vst [vmem:[%s78] sm:%s3] %v77
    %s80 = scalar_lea.vmem %s0, 216
    %v81 = vld [vmem:[%s80] sm:%s3]
    %s82 = scalar_lea.vmem [#allocation0], 864
    %83 = vst [vmem:[%s82] sm:%s3] %v81
    %s84 = scalar_lea.vmem %s0, 214
    %v85 = vld [vmem:[%s84] sm:%s3]
    %s86 = scalar_lea.vmem [#allocation0], 856
    %87 = vst [vmem:[%s86] sm:%s3] %v85
    %s88 = scalar_lea.vmem %s0, 212
    %v89 = vld [vmem:[%s88] sm:%s3]
    %s90 = scalar_lea.vmem [#allocation0], 848
    %91 = vst [vmem:[%s90] sm:%s3] %v89
    %s92 = scalar_lea.vmem %s0, 210
    %v93 = vld [vmem:[%s92] sm:%s3]
    %s94 = scalar_lea.vmem [#allocation0], 840
    %95 = vst [vmem:[%s94] sm:%s3] %v93
    %s96 = scalar_lea.vmem %s0, 208
    %v97 = vld [vmem:[%s96] sm:%s3]
    %s98 = scalar_lea.vmem [#allocation0], 832
    %99 = vst [vmem:[%s98] sm:%s3] %v97
    %s100 = scalar_lea.vmem %s0, 206
    %v101 = vld [vmem:[%s100] sm:%s3]
    %s102 = scalar_lea.vmem [#allocation0], 824
    %103 = vst [vmem:[%s102] sm:%s3] %v101
    %s104 = scalar_lea.vmem %s0, 204
    %v105 = vld [vmem:[%s104] sm:%s3]
    %s106 = scalar_lea.vmem [#allocation0], 816
    %107 = vst [vmem:[%s106] sm:%s3] %v105
    %s108 = scalar_lea.vmem %s0, 202
    %v109 = vld [vmem:[%s108] sm:%s3]
    %s110 = scalar_lea.vmem [#allocation0], 808
    %111 = vst [vmem:[%s110] sm:%s3] %v109
    %s112 = scalar_lea.vmem %s0, 200
    %v113 = vld [vmem:[%s112] sm:%s3]
    %s114 = scalar_lea.vmem [#allocation0], 800
    %115 = vst [vmem:[%s114] sm:%s3] %v113
    %s116 = scalar_lea.vmem %s0, 198
    %v117 = vld [vmem:[%s116] sm:%s3]
    %s118 = scalar_lea.vmem [#allocation0], 792
    %119 = vst [vmem:[%s118] sm:%s3] %v117
    %s120 = scalar_lea.vmem %s0, 196
    %v121 = vld [vmem:[%s120] sm:%s3]
    %s122 = scalar_lea.vmem [#allocation0], 784
    %123 = vst [vmem:[%s122] sm:%s3] %v121
    %s124 = scalar_lea.vmem %s0, 194
    %v125 = vld [vmem:[%s124] sm:%s3]
    %s126 = scalar_lea.vmem [#allocation0], 776
    %127 = vst [vmem:[%s126] sm:%s3] %v125
    %s128 = scalar_lea.vmem %s0, 192
    %v129 = vld [vmem:[%s128] sm:%s3]
    %s130 = scalar_lea.vmem [#allocation0], 768
    %131 = vst [vmem:[%s130] sm:%s3] %v129
    %s132 = scalar_lea.vmem %s0, 190
    %v133 = vld [vmem:[%s132] sm:%s3]
    %s134 = scalar_lea.vmem [#allocation0], 760
    %135 = vst [vmem:[%s134] sm:%s3] %v133
    %s136 = scalar_lea.vmem %s0, 188
    %v137 = vld [vmem:[%s136] sm:%s3]
    %s138 = scalar_lea.vmem [#allocation0], 752
    %139 = vst [vmem:[%s138] sm:%s3] %v137
    %s140 = scalar_lea.vmem %s0, 186
    %v141 = vld [vmem:[%s140] sm:%s3]
    %s142 = scalar_lea.vmem [#allocation0], 744
    %143 = vst [vmem:[%s142] sm:%s3] %v141
    %s144 = scalar_lea.vmem %s0, 184
    %v145 = vld [vmem:[%s144] sm:%s3]
    %s146 = scalar_lea.vmem [#allocation0], 736
    %147 = vst [vmem:[%s146] sm:%s3] %v145
    %s148 = scalar_lea.vmem %s0, 182
    %v149 = vld [vmem:[%s148] sm:%s3]
    %s150 = scalar_lea.vmem [#allocation0], 728
    %151 = vst [vmem:[%s150] sm:%s3] %v149
    %s152 = scalar_lea.vmem %s0, 180
    %v153 = vld [vmem:[%s152] sm:%s3]
    %s154 = scalar_lea.vmem [#allocation0], 720
    %155 = vst [vmem:[%s154] sm:%s3] %v153
    %s156 = scalar_lea.vmem %s0, 178
    %v157 = vld [vmem:[%s156] sm:%s3]
    %s158 = scalar_lea.vmem [#allocation0], 712
    %159 = vst [vmem:[%s158] sm:%s3] %v157
    %s160 = scalar_lea.vmem %s0, 176
    %v161 = vld [vmem:[%s160] sm:%s3]
    %s162 = scalar_lea.vmem [#allocation0], 704
    %163 = vst [vmem:[%s162] sm:%s3] %v161
    %s164 = scalar_lea.vmem %s0, 174
    %v165 = vld [vmem:[%s164] sm:%s3]
    %s166 = scalar_lea.vmem [#allocation0], 696
    %167 = vst [vmem:[%s166] sm:%s3] %v165
    %s168 = scalar_lea.vmem %s0, 172
    %v169 = vld [vmem:[%s168] sm:%s3]
    %s170 = scalar_lea.vmem [#allocation0], 688
    %171 = vst [vmem:[%s170] sm:%s3] %v169
    %s172 = scalar_lea.vmem %s0, 170
    %v173 = vld [vmem:[%s172] sm:%s3]
    %s174 = scalar_lea.vmem [#allocation0], 680
    %175 = vst [vmem:[%s174] sm:%s3] %v173
    %s176 = scalar_lea.vmem %s0, 168
    %v177 = vld [vmem:[%s176] sm:%s3]
    %s178 = scalar_lea.vmem [#allocation0], 672
    %179 = vst [vmem:[%s178] sm:%s3] %v177
    %s180 = scalar_lea.vmem %s0, 166
    %v181 = vld [vmem:[%s180] sm:%s3]
    %s182 = scalar_lea.vmem [#allocation0], 664
    %183 = vst [vmem:[%s182] sm:%s3] %v181
    %s184 = scalar_lea.vmem %s0, 164
    %v185 = vld [vmem:[%s184] sm:%s3]
    %s186 = scalar_lea.vmem [#allocation0], 656
    %187 = vst [vmem:[%s186] sm:%s3] %v185
    %s188 = scalar_lea.vmem %s0, 162
    %v189 = vld [vmem:[%s188] sm:%s3]
    %s190 = scalar_lea.vmem [#allocation0], 648
    %191 = vst [vmem:[%s190] sm:%s3] %v189
    %s192 = scalar_lea.vmem %s0, 160
    %v193 = vld [vmem:[%s192] sm:%s3]
    %s194 = scalar_lea.vmem [#allocation0], 640
    %195 = vst [vmem:[%s194] sm:%s3] %v193
    %s196 = scalar_lea.vmem %s0, 158
    %v197 = vld [vmem:[%s196] sm:%s3]
    %s198 = scalar_lea.vmem [#allocation0], 632
    %199 = vst [vmem:[%s198] sm:%s3] %v197
    %s200 = scalar_lea.vmem %s0, 156
    %v201 = vld [vmem:[%s200] sm:%s3]
    %s202 = scalar_lea.vmem [#allocation0], 624
    %203 = vst [vmem:[%s202] sm:%s3] %v201
    %s204 = scalar_lea.vmem %s0, 154
    %v205 = vld [vmem:[%s204] sm:%s3]
    %s206 = scalar_lea.vmem [#allocation0], 616
    %207 = vst [vmem:[%s206] sm:%s3] %v205
    %s208 = scalar_lea.vmem %s0, 152
    %v209 = vld [vmem:[%s208] sm:%s3]
    %s210 = scalar_lea.vmem [#allocation0], 608
    %211 = vst [vmem:[%s210] sm:%s3] %v209
    %s212 = scalar_lea.vmem %s0, 150
    %v213 = vld [vmem:[%s212] sm:%s3]
    %s214 = scalar_lea.vmem [#allocation0], 600
    %215 = vst [vmem:[%s214] sm:%s3] %v213
    %s216 = scalar_lea.vmem %s0, 148
    %v217 = vld [vmem:[%s216] sm:%s3]
    %s218 = scalar_lea.vmem [#allocation0], 592
    %219 = vst [vmem:[%s218] sm:%s3] %v217
    %s220 = scalar_lea.vmem %s0, 146
    %v221 = vld [vmem:[%s220] sm:%s3]
    %s222 = scalar_lea.vmem [#allocation0], 584
    %223 = vst [vmem:[%s222] sm:%s3] %v221
    %s224 = scalar_lea.vmem %s0, 144
    %v225 = vld [vmem:[%s224] sm:%s3]
    %s226 = scalar_lea.vmem [#allocation0], 576
    %227 = vst [vmem:[%s226] sm:%s3] %v225
    %s228 = scalar_lea.vmem %s0, 142
    %v229 = vld [vmem:[%s228] sm:%s3]
    %s230 = scalar_lea.vmem [#allocation0], 568
    %231 = vst [vmem:[%s230] sm:%s3] %v229
    %s232 = scalar_lea.vmem %s0, 140
    %v233 = vld [vmem:[%s232] sm:%s3]
    %s234 = scalar_lea.vmem [#allocation0], 560
    %235 = vst [vmem:[%s234] sm:%s3] %v233
    %s236 = scalar_lea.vmem %s0, 138
    %v237 = vld [vmem:[%s236] sm:%s3]
    %s238 = scalar_lea.vmem [#allocation0], 552
    %239 = vst [vmem:[%s238] sm:%s3] %v237
    %s240 = scalar_lea.vmem %s0, 136
    %v241 = vld [vmem:[%s240] sm:%s3]
    %s242 = scalar_lea.vmem [#allocation0], 544
    %243 = vst [vmem:[%s242] sm:%s3] %v241
    %s244 = scalar_lea.vmem %s0, 134
    %v245 = vld [vmem:[%s244] sm:%s3]
    %s246 = scalar_lea.vmem [#allocation0], 536
    %247 = vst [vmem:[%s246] sm:%s3] %v245
    %s248 = scalar_lea.vmem %s0, 132
    %v249 = vld [vmem:[%s248] sm:%s3]
    %s250 = scalar_lea.vmem [#allocation0], 528
    %251 = vst [vmem:[%s250] sm:%s3] %v249
    %s252 = scalar_lea.vmem %s0, 130
    %v253 = vld [vmem:[%s252] sm:%s3]
    %s254 = scalar_lea.vmem [#allocation0], 520
    %255 = vst [vmem:[%s254] sm:%s3] %v253
    %s256 = scalar_lea.vmem %s0, 128
    %v257 = vld [vmem:[%s256] sm:%s3]
    %s258 = scalar_lea.vmem [#allocation0], 512
    %259 = vst [vmem:[%s258] sm:%s3] %v257
    %s260 = scalar_lea.vmem %s0, 126
    %v261 = vld [vmem:[%s260] sm:%s3]
    %s262 = scalar_lea.vmem [#allocation0], 504
    %263 = vst [vmem:[%s262] sm:%s3] %v261
    %s264 = scalar_lea.vmem %s0, 124
    %v265 = vld [vmem:[%s264] sm:%s3]
    %s266 = scalar_lea.vmem [#allocation0], 496
    %267 = vst [vmem:[%s266] sm:%s3] %v265
    %s268 = scalar_lea.vmem %s0, 122
    %v269 = vld [vmem:[%s268] sm:%s3]
    %s270 = scalar_lea.vmem [#allocation0], 488
    %271 = vst [vmem:[%s270] sm:%s3] %v269
    %s272 = scalar_lea.vmem %s0, 120
    %v273 = vld [vmem:[%s272] sm:%s3]
    %s274 = scalar_lea.vmem [#allocation0], 480
    %275 = vst [vmem:[%s274] sm:%s3] %v273
    %s276 = scalar_lea.vmem %s0, 118
    %v277 = vld [vmem:[%s276] sm:%s3]
    %s278 = scalar_lea.vmem [#allocation0], 472
    %279 = vst [vmem:[%s278] sm:%s3] %v277
    %s280 = scalar_lea.vmem %s0, 116
    %v281 = vld [vmem:[%s280] sm:%s3]
    %s282 = scalar_lea.vmem [#allocation0], 464
    %283 = vst [vmem:[%s282] sm:%s3] %v281
    %s284 = scalar_lea.vmem %s0, 114
    %v285 = vld [vmem:[%s284] sm:%s3]
    %s286 = scalar_lea.vmem [#allocation0], 456
    %287 = vst [vmem:[%s286] sm:%s3] %v285
    %s288 = scalar_lea.vmem %s0, 112
    %v289 = vld [vmem:[%s288] sm:%s3]
    %s290 = scalar_lea.vmem [#allocation0], 448
    %291 = vst [vmem:[%s290] sm:%s3] %v289
    %s292 = scalar_lea.vmem %s0, 110
    %v293 = vld [vmem:[%s292] sm:%s3]
    %s294 = scalar_lea.vmem [#allocation0], 440
    %295 = vst [vmem:[%s294] sm:%s3] %v293
    %s296 = scalar_lea.vmem %s0, 108
    %v297 = vld [vmem:[%s296] sm:%s3]
    %s298 = scalar_lea.vmem [#allocation0], 432
    %299 = vst [vmem:[%s298] sm:%s3] %v297
    %s300 = scalar_lea.vmem %s0, 106
    %v301 = vld [vmem:[%s300] sm:%s3]
    %s302 = scalar_lea.vmem [#allocation0], 424
    %303 = vst [vmem:[%s302] sm:%s3] %v301
    %s304 = scalar_lea.vmem %s0, 104
    %v305 = vld [vmem:[%s304] sm:%s3]
    %s306 = scalar_lea.vmem [#allocation0], 416
    %307 = vst [vmem:[%s306] sm:%s3] %v305
    %s308 = scalar_lea.vmem %s0, 102
    %v309 = vld [vmem:[%s308] sm:%s3]
    %s310 = scalar_lea.vmem [#allocation0], 408
    %311 = vst [vmem:[%s310] sm:%s3] %v309
    %s312 = scalar_lea.vmem %s0, 100
    %v313 = vld [vmem:[%s312] sm:%s3]
    %s314 = scalar_lea.vmem [#allocation0], 400
    %315 = vst [vmem:[%s314] sm:%s3] %v313
    %s316 = scalar_lea.vmem %s0, 98
    %v317 = vld [vmem:[%s316] sm:%s3]
    %s318 = scalar_lea.vmem [#allocation0], 392
    %319 = vst [vmem:[%s318] sm:%s3] %v317
    %s320 = scalar_lea.vmem %s0, 96
    %v321 = vld [vmem:[%s320] sm:%s3]
    %s322 = scalar_lea.vmem [#allocation0], 384
    %323 = vst [vmem:[%s322] sm:%s3] %v321
    %s324 = scalar_lea.vmem %s0, 94
    %v325 = vld [vmem:[%s324] sm:%s3]
    %s326 = scalar_lea.vmem [#allocation0], 376
    %327 = vst [vmem:[%s326] sm:%s3] %v325
    %s328 = scalar_lea.vmem %s0, 92
    %v329 = vld [vmem:[%s328] sm:%s3]
    %s330 = scalar_lea.vmem [#allocation0], 368
    %331 = vst [vmem:[%s330] sm:%s3] %v329
    %s332 = scalar_lea.vmem %s0, 90
    %v333 = vld [vmem:[%s332] sm:%s3]
    %s334 = scalar_lea.vmem [#allocation0], 360
    %335 = vst [vmem:[%s334] sm:%s3] %v333
    %s336 = scalar_lea.vmem %s0, 88
    %v337 = vld [vmem:[%s336] sm:%s3]
    %s338 = scalar_lea.vmem [#allocation0], 352
    %339 = vst [vmem:[%s338] sm:%s3] %v337
    %s340 = scalar_lea.vmem %s0, 86
    %v341 = vld [vmem:[%s340] sm:%s3]
    %s342 = scalar_lea.vmem [#allocation0], 344
    %343 = vst [vmem:[%s342] sm:%s3] %v341
    %s344 = scalar_lea.vmem %s0, 84
    %v345 = vld [vmem:[%s344] sm:%s3]
    %s346 = scalar_lea.vmem [#allocation0], 336
    %347 = vst [vmem:[%s346] sm:%s3] %v345
    %s348 = scalar_lea.vmem %s0, 82
    %v349 = vld [vmem:[%s348] sm:%s3]
    %s350 = scalar_lea.vmem [#allocation0], 328
    %351 = vst [vmem:[%s350] sm:%s3] %v349
    %s352 = scalar_lea.vmem %s0, 80
    %v353 = vld [vmem:[%s352] sm:%s3]
    %s354 = scalar_lea.vmem [#allocation0], 320
    %355 = vst [vmem:[%s354] sm:%s3] %v353
    %s356 = scalar_lea.vmem %s0, 78
    %v357 = vld [vmem:[%s356] sm:%s3]
    %s358 = scalar_lea.vmem [#allocation0], 312
    %359 = vst [vmem:[%s358] sm:%s3] %v357
    %s360 = scalar_lea.vmem %s0, 76
    %v361 = vld [vmem:[%s360] sm:%s3]
    %s362 = scalar_lea.vmem [#allocation0], 304
    %363 = vst [vmem:[%s362] sm:%s3] %v361
    %s364 = scalar_lea.vmem %s0, 74
    %v365 = vld [vmem:[%s364] sm:%s3]
    %s366 = scalar_lea.vmem [#allocation0], 296
    %367 = vst [vmem:[%s366] sm:%s3] %v365
    %s368 = scalar_lea.vmem %s0, 72
    %v369 = vld [vmem:[%s368] sm:%s3]
    %s370 = scalar_lea.vmem [#allocation0], 288
    %371 = vst [vmem:[%s370] sm:%s3] %v369
    %s372 = scalar_lea.vmem %s0, 70
    %v373 = vld [vmem:[%s372] sm:%s3]
    %s374 = scalar_lea.vmem [#allocation0], 280
    %375 = vst [vmem:[%s374] sm:%s3] %v373
    %s376 = scalar_lea.vmem %s0, 68
    %v377 = vld [vmem:[%s376] sm:%s3]
    %s378 = scalar_lea.vmem [#allocation0], 272
    %379 = vst [vmem:[%s378] sm:%s3] %v377
    %s380 = scalar_lea.vmem %s0, 66
    %v381 = vld [vmem:[%s380] sm:%s3]
    %s382 = scalar_lea.vmem [#allocation0], 264
    %383 = vst [vmem:[%s382] sm:%s3] %v381
    %s384 = scalar_lea.vmem %s0, 64
    %v385 = vld [vmem:[%s384] sm:%s3]
    %s386 = scalar_lea.vmem [#allocation0], 256
    %387 = vst [vmem:[%s386] sm:%s3] %v385
    %s388 = scalar_lea.vmem %s0, 62
    %v389 = vld [vmem:[%s388] sm:%s3]
    %s390 = scalar_lea.vmem [#allocation0], 248
    %391 = vst [vmem:[%s390] sm:%s3] %v389
    %s392 = scalar_lea.vmem %s0, 60
    %v393 = vld [vmem:[%s392] sm:%s3]
    %s394 = scalar_lea.vmem [#allocation0], 240
    %395 = vst [vmem:[%s394] sm:%s3] %v393
    %s396 = scalar_lea.vmem %s0, 58
    %v397 = vld [vmem:[%s396] sm:%s3]
    %s398 = scalar_lea.vmem [#allocation0], 232
    %399 = vst [vmem:[%s398] sm:%s3] %v397
    %s400 = scalar_lea.vmem %s0, 56
    %v401 = vld [vmem:[%s400] sm:%s3]
    %s402 = scalar_lea.vmem [#allocation0], 224
    %403 = vst [vmem:[%s402] sm:%s3] %v401
    %s404 = scalar_lea.vmem %s0, 54
    %v405 = vld [vmem:[%s404] sm:%s3]
    %s406 = scalar_lea.vmem [#allocation0], 216
    %407 = vst [vmem:[%s406] sm:%s3] %v405
    %s408 = scalar_lea.vmem %s0, 52
    %v409 = vld [vmem:[%s408] sm:%s3]
    %s410 = scalar_lea.vmem [#allocation0], 208
    %411 = vst [vmem:[%s410] sm:%s3] %v409
    %s412 = scalar_lea.vmem %s0, 50
    %v413 = vld [vmem:[%s412] sm:%s3]
    %s414 = scalar_lea.vmem [#allocation0], 200
    %415 = vst [vmem:[%s414] sm:%s3] %v413
    %s416 = scalar_lea.vmem %s0, 48
    %v417 = vld [vmem:[%s416] sm:%s3]
    %s418 = scalar_lea.vmem [#allocation0], 192
    %419 = vst [vmem:[%s418] sm:%s3] %v417
    %s420 = scalar_lea.vmem %s0, 46
    %v421 = vld [vmem:[%s420] sm:%s3]
    %s422 = scalar_lea.vmem [#allocation0], 184
    %423 = vst [vmem:[%s422] sm:%s3] %v421
    %s424 = scalar_lea.vmem %s0, 44
    %v425 = vld [vmem:[%s424] sm:%s3]
    %s426 = scalar_lea.vmem [#allocation0], 176
    %427 = vst [vmem:[%s426] sm:%s3] %v425
    %s428 = scalar_lea.vmem %s0, 42
    %v429 = vld [vmem:[%s428] sm:%s3]
    %s430 = scalar_lea.vmem [#allocation0], 168
    %431 = vst [vmem:[%s430] sm:%s3] %v429
    %s432 = scalar_lea.vmem %s0, 40
    %v433 = vld [vmem:[%s432] sm:%s3]
    %s434 = scalar_lea.vmem [#allocation0], 160
    %435 = vst [vmem:[%s434] sm:%s3] %v433
    %s436 = scalar_lea.vmem %s0, 38
    %v437 = vld [vmem:[%s436] sm:%s3]
    %s438 = scalar_lea.vmem [#allocation0], 152
    %439 = vst [vmem:[%s438] sm:%s3] %v437
    %s440 = scalar_lea.vmem %s0, 36
    %v441 = vld [vmem:[%s440] sm:%s3]
    %s442 = scalar_lea.vmem [#allocation0], 144
    %443 = vst [vmem:[%s442] sm:%s3] %v441
    %s444 = scalar_lea.vmem %s0, 34
    %v445 = vld [vmem:[%s444] sm:%s3]
    %s446 = scalar_lea.vmem [#allocation0], 136
    %447 = vst [vmem:[%s446] sm:%s3] %v445
    %s448 = scalar_lea.vmem %s0, 32
    %v449 = vld [vmem:[%s448] sm:%s3]
    %s450 = scalar_lea.vmem [#allocation0], 128
    %451 = vst [vmem:[%s450] sm:%s3] %v449
    %s452 = scalar_lea.vmem %s0, 30
    %v453 = vld [vmem:[%s452] sm:%s3]
    %s454 = scalar_lea.vmem [#allocation0], 120
    %455 = vst [vmem:[%s454] sm:%s3] %v453
    %s456 = scalar_lea.vmem %s0, 28
    %v457 = vld [vmem:[%s456] sm:%s3]
    %s458 = scalar_lea.vmem [#allocation0], 112
    %459 = vst [vmem:[%s458] sm:%s3] %v457
    %s460 = scalar_lea.vmem %s0, 26
    %v461 = vld [vmem:[%s460] sm:%s3]
    %s462 = scalar_lea.vmem [#allocation0], 104
    %463 = vst [vmem:[%s462] sm:%s3] %v461
    %s464 = scalar_lea.vmem %s0, 24
    %v465 = vld [vmem:[%s464] sm:%s3]
    %s466 = scalar_lea.vmem [#allocation0], 96
    %467 = vst [vmem:[%s466] sm:%s3] %v465
    %s468 = scalar_lea.vmem %s0, 22
    %v469 = vld [vmem:[%s468] sm:%s3]
    %s470 = scalar_lea.vmem [#allocation0], 88
    %471 = vst [vmem:[%s470] sm:%s3] %v469
    %s472 = scalar_lea.vmem %s0, 20
    %v473 = vld [vmem:[%s472] sm:%s3]
    %s474 = scalar_lea.vmem [#allocation0], 80
    %475 = vst [vmem:[%s474] sm:%s3] %v473
    %s476 = scalar_lea.vmem %s0, 18
    %v477 = vld [vmem:[%s476] sm:%s3]
    %s478 = scalar_lea.vmem [#allocation0], 72
    %479 = vst [vmem:[%s478] sm:%s3] %v477
    %s480 = scalar_lea.vmem %s0, 16
    %v481 = vld [vmem:[%s480] sm:%s3]
    %s482 = scalar_lea.vmem [#allocation0], 64
    %483 = vst [vmem:[%s482] sm:%s3] %v481
    %s484 = scalar_lea.vmem %s0, 14
    %v485 = vld [vmem:[%s484] sm:%s3]
    %s486 = scalar_lea.vmem [#allocation0], 56
    %487 = vst [vmem:[%s486] sm:%s3] %v485
    %s488 = scalar_lea.vmem %s0, 12
    %v489 = vld [vmem:[%s488] sm:%s3]
    %s490 = scalar_lea.vmem [#allocation0], 48
    %491 = vst [vmem:[%s490] sm:%s3] %v489
    %s492 = scalar_lea.vmem %s0, 10
    %v493 = vld [vmem:[%s492] sm:%s3]
    %s494 = scalar_lea.vmem [#allocation0], 40
    %495 = vst [vmem:[%s494] sm:%s3] %v493
    %s496 = scalar_lea.vmem %s0, 8
    %v497 = vld [vmem:[%s496] sm:%s3]
    %s498 = scalar_lea.vmem [#allocation0], 32
    %499 = vst [vmem:[%s498] sm:%s3] %v497
    %s500 = scalar_lea.vmem %s0, 6
    %v501 = vld [vmem:[%s500] sm:%s3]
    %s502 = scalar_lea.vmem [#allocation0], 24
    %503 = vst [vmem:[%s502] sm:%s3] %v501
    %s504 = scalar_lea.vmem %s0, 4
    %v505 = vld [vmem:[%s504] sm:%s3]
    %s506 = scalar_lea.vmem [#allocation0], 16
    %507 = vst [vmem:[%s506] sm:%s3] %v505
    %s508 = scalar_lea.vmem %s0, 2
    %v509 = vld [vmem:[%s508] sm:%s3]
    %s510 = scalar_lea.vmem [#allocation0], 8
    %511 = vst [vmem:[%s510] sm:%s3] %v509
    %v512 = vld [vmem:[%s0] sm:%s3]
    %513 = vst [vmem:[#allocation0] sm:%s3] %v512
    %v514 = vld [vmem:[#allocation0] ss:$8 sm:$0xf]
    %v515 = vld [vmem:[#allocation0] ss:$8 sm:$0xf0]
    %vm516 = vcmask 1047556
    %v517 = vsel %vm516, %v515, %v514
    %vm518 = vcmask 64512
    %519 = vst.msk [vmem:[%s1] sm:$0xff] %vm518, %v517
    %s520 = scalar_lea.vmem [#allocation0], 64
    %v521 = vld [vmem:[%s520] ss:$8 sm:$0xf]
    %s522 = scalar_lea.vmem [#allocation0], 64
    %v523 = vld [vmem:[%s522] ss:$8 sm:$0xf0]
    %vm524 = vcmask 1047556
    %v525 = vsel %vm524, %v523, %v521
    %vm526 = vcmask 64512
    %s527 = scalar_lea.vmem %s1, 8
    %528 = vst.msk [vmem:[%s527] sm:$0xff] %vm526, %v525
    %s529 = scalar_lea.vmem [#allocation0], 128
    %v530 = vld [vmem:[%s529] ss:$8 sm:$0xf]
    %s531 = scalar_lea.vmem [#allocation0], 128
    %v532 = vld [vmem:[%s531] ss:$8 sm:$0xf0]
    %vm533 = vcmask 1047556
    %v534 = vsel %vm533, %v532, %v530
    %vm535 = vcmask 64512
    %s536 = scalar_lea.vmem %s1, 16
    %537 = vst.msk [vmem:[%s536] sm:$0xff] %vm535, %v534
    %s538 = scalar_lea.vmem [#allocation0], 192
    %v539 = vld [vmem:[%s538] ss:$8 sm:$0xf]
    %s540 = scalar_lea.vmem [#allocation0], 192
    %v541 = vld [vmem:[%s540] ss:$8 sm:$0xf0]
    %vm542 = vcmask 1047556
    %v543 = vsel %vm542, %v541, %v539
    %vm544 = vcmask 64512
    %s545 = scalar_lea.vmem %s1, 24
    %546 = vst.msk [vmem:[%s545] sm:$0xff] %vm544, %v543
    %s547 = scalar_lea.vmem [#allocation0], 256
    %v548 = vld [vmem:[%s547] ss:$8 sm:$0xf]
    %s549 = scalar_lea.vmem [#allocation0], 256
    %v550 = vld [vmem:[%s549] ss:$8 sm:$0xf0]
    %vm551 = vcmask 1047556
    %v552 = vsel %vm551, %v550, %v548
    %vm553 = vcmask 64512
    %s554 = scalar_lea.vmem %s1, 32
    %555 = vst.msk [vmem:[%s554] sm:$0xff] %vm553, %v552
    %s556 = scalar_lea.vmem [#allocation0], 320
    %v557 = vld [vmem:[%s556] ss:$8 sm:$0xf]
    %s558 = scalar_lea.vmem [#allocation0], 320
    %v559 = vld [vmem:[%s558] ss:$8 sm:$0xf0]
    %vm560 = vcmask 1047556
    %v561 = vsel %vm560, %v559, %v557
    %vm562 = vcmask 64512
    %s563 = scalar_lea.vmem %s1, 40
    %564 = vst.msk [vmem:[%s563] sm:$0xff] %vm562, %v561
    %s565 = scalar_lea.vmem [#allocation0], 384
    %v566 = vld [vmem:[%s565] ss:$8 sm:$0xf]
    %s567 = scalar_lea.vmem [#allocation0], 384
    %v568 = vld [vmem:[%s567] ss:$8 sm:$0xf0]
    %vm569 = vcmask 1047556
    %v570 = vsel %vm569, %v568, %v566
    %vm571 = vcmask 64512
    %s572 = scalar_lea.vmem %s1, 48
    %573 = vst.msk [vmem:[%s572] sm:$0xff] %vm571, %v570
    %s574 = scalar_lea.vmem [#allocation0], 448
    %v575 = vld [vmem:[%s574] ss:$8 sm:$0xf]
    %s576 = scalar_lea.vmem [#allocation0], 448
    %v577 = vld [vmem:[%s576] ss:$8 sm:$0xf0]
    %vm578 = vcmask 1047556
    %v579 = vsel %vm578, %v577, %v575
    %vm580 = vcmask 64512
    %s581 = scalar_lea.vmem %s1, 56
    %582 = vst.msk [vmem:[%s581] sm:$0xff] %vm580, %v579
    %s583 = scalar_lea.vmem [#allocation0], 512
    %v584 = vld [vmem:[%s583] ss:$8 sm:$0xf]
    %s585 = scalar_lea.vmem [#allocation0], 512
    %v586 = vld [vmem:[%s585] ss:$8 sm:$0xf0]
    %vm587 = vcmask 1047556
    %v588 = vsel %vm587, %v586, %v584
    %vm589 = vcmask 64512
    %s590 = scalar_lea.vmem %s1, 64
    %591 = vst.msk [vmem:[%s590] sm:$0xff] %vm589, %v588
    %s592 = scalar_lea.vmem [#allocation0], 576
    %v593 = vld [vmem:[%s592] ss:$8 sm:$0xf]
    %s594 = scalar_lea.vmem [#allocation0], 576
    %v595 = vld [vmem:[%s594] ss:$8 sm:$0xf0]
    %vm596 = vcmask 1047556
    %v597 = vsel %vm596, %v595, %v593
    %vm598 = vcmask 64512
    %s599 = scalar_lea.vmem %s1, 72
    %600 = vst.msk [vmem:[%s599] sm:$0xff] %vm598, %v597
    %s601 = scalar_lea.vmem [#allocation0], 640
    %v602 = vld [vmem:[%s601] ss:$8 sm:$0xf]
    %s603 = scalar_lea.vmem [#allocation0], 640
    %v604 = vld [vmem:[%s603] ss:$8 sm:$0xf0]
    %vm605 = vcmask 1047556
    %v606 = vsel %vm605, %v604, %v602
    %vm607 = vcmask 64512
    %s608 = scalar_lea.vmem %s1, 80
    %609 = vst.msk [vmem:[%s608] sm:$0xff] %vm607, %v606
    %s610 = scalar_lea.vmem [#allocation0], 704
    %v611 = vld [vmem:[%s610] ss:$8 sm:$0xf]
    %s612 = scalar_lea.vmem [#allocation0], 704
    %v613 = vld [vmem:[%s612] ss:$8 sm:$0xf0]
    %vm614 = vcmask 1047556
    %v615 = vsel %vm614, %v613, %v611
    %vm616 = vcmask 64512
    %s617 = scalar_lea.vmem %s1, 88
    %618 = vst.msk [vmem:[%s617] sm:$0xff] %vm616, %v615
    %s619 = scalar_lea.vmem [#allocation0], 768
    %v620 = vld [vmem:[%s619] ss:$8 sm:$0xf]
    %s621 = scalar_lea.vmem [#allocation0], 768
    %v622 = vld [vmem:[%s621] ss:$8 sm:$0xf0]
    %vm623 = vcmask 1047556
    %v624 = vsel %vm623, %v622, %v620
    %vm625 = vcmask 64512
    %s626 = scalar_lea.vmem %s1, 96
    %627 = vst.msk [vmem:[%s626] sm:$0xff] %vm625, %v624
    %s628 = scalar_lea.vmem [#allocation0], 832
    %v629 = vld [vmem:[%s628] ss:$8 sm:$0xf]
    %s630 = scalar_lea.vmem [#allocation0], 832
    %v631 = vld [vmem:[%s630] ss:$8 sm:$0xf0]
    %vm632 = vcmask 1047556
    %v633 = vsel %vm632, %v631, %v629
    %vm634 = vcmask 64512
    %s635 = scalar_lea.vmem %s1, 104
    %636 = vst.msk [vmem:[%s635] sm:$0xff] %vm634, %v633
    %s637 = scalar_lea.vmem [#allocation0], 896
    %v638 = vld [vmem:[%s637] ss:$8 sm:$0xf]
    %s639 = scalar_lea.vmem [#allocation0], 896
    %v640 = vld [vmem:[%s639] ss:$8 sm:$0xf0]
    %vm641 = vcmask 1047556
    %v642 = vsel %vm641, %v640, %v638
    %vm643 = vcmask 64512
    %s644 = scalar_lea.vmem %s1, 112
    %645 = vst.msk [vmem:[%s644] sm:$0xff] %vm643, %v642
    %s646 = scalar_lea.vmem [#allocation0], 960
    %v647 = vld [vmem:[%s646] ss:$8 sm:$0xf]
    %s648 = scalar_lea.vmem [#allocation0], 960
    %v649 = vld [vmem:[%s648] ss:$8 sm:$0xf0]
    %vm650 = vcmask 1047556
    %v651 = vsel %vm650, %v649, %v647
    %vm652 = vcmask 64512
    %s653 = scalar_lea.vmem %s1, 120
    %654 = vst.msk [vmem:[%s653] sm:$0xff] %vm652, %v651
    %s655 = scalar_lea.vmem [#allocation0], 1
    %v656 = vld [vmem:[%s655] ss:$8 sm:$0xf]
    %s657 = scalar_lea.vmem [#allocation0], 1
    %v658 = vld [vmem:[%s657] ss:$8 sm:$0xf0]
    %vm659 = vcmask 1047556
    %v660 = vsel %vm659, %v658, %v656
    %661 = vrot.lane.b32.xlu0 %v660, 8
    %v662 = vpop.permute.xlu0 %661
    %vm663 = vcmask 130112
    %664 = vst.msk [vmem:[%s1] sm:$0xff] %vm663, %v662
    %s665 = scalar_lea.vmem [#allocation0], 257
    %v666 = vld [vmem:[%s665] ss:$8 sm:$0xf]
    %s667 = scalar_lea.vmem [#allocation0], 257
    %v668 = vld [vmem:[%s667] ss:$8 sm:$0xf0]
    %vm669 = vcmask 1047556
    %v670 = vsel %vm669, %v668, %v666
    %671 = vrot.lane.b32.xlu0 %v670, 8
    %v672 = vpop.permute.xlu0 %671
    %vm673 = vcmask 130112
    %s674 = scalar_lea.vmem %s1, 32
    %675 = vst.msk [vmem:[%s674] sm:$0xff] %vm673, %v672
    %s676 = scalar_lea.vmem [#allocation0], 513
    %v677 = vld [vmem:[%s676] ss:$8 sm:$0xf]
    %s678 = scalar_lea.vmem [#allocation0], 513
    %v679 = vld [vmem:[%s678] ss:$8 sm:$0xf0]
    %vm680 = vcmask 1047556
    %v681 = vsel %vm680, %v679, %v677
    %682 = vrot.lane.b32.xlu0 %v681, 8
    %v683 = vpop.permute.xlu0 %682
    %vm684 = vcmask 130112
    %s685 = scalar_lea.vmem %s1, 64
    %686 = vst.msk [vmem:[%s685] sm:$0xff] %vm684, %v683
    %s687 = scalar_lea.vmem [#allocation0], 769
    %v688 = vld [vmem:[%s687] ss:$8 sm:$0xf]
    %s689 = scalar_lea.vmem [#allocation0], 769
    %v690 = vld [vmem:[%s689] ss:$8 sm:$0xf0]
    %vm691 = vcmask 1047556
    %v692 = vsel %vm691, %v690, %v688
    %693 = vrot.lane.b32.xlu0 %v692, 8
    %v694 = vpop.permute.xlu0 %693
    %vm695 = vcmask 130112
    %s696 = scalar_lea.vmem %s1, 96
    %697 = vst.msk [vmem:[%s696] sm:$0xff] %vm695, %v694
    %s698 = scalar_lea.vmem [#allocation0], 65
    %v699 = vld [vmem:[%s698] ss:$8 sm:$0xf]
    %s700 = scalar_lea.vmem [#allocation0], 65
    %v701 = vld [vmem:[%s700] ss:$8 sm:$0xf0]
    %vm702 = vcmask 1047556
    %v703 = vsel %vm702, %v701, %v699
    %704 = vrot.lane.b32.xlu0 %v703, 8
    %v705 = vpop.permute.xlu0 %704
    %vm706 = vcmask 130112
    %s707 = scalar_lea.vmem %s1, 8
    %708 = vst.msk [vmem:[%s707] sm:$0xff] %vm706, %v705
    %s709 = scalar_lea.vmem [#allocation0], 321
    %v710 = vld [vmem:[%s709] ss:$8 sm:$0xf]
    %s711 = scalar_lea.vmem [#allocation0], 321
    %v712 = vld [vmem:[%s711] ss:$8 sm:$0xf0]
    %vm713 = vcmask 1047556
    %v714 = vsel %vm713, %v712, %v710
    %715 = vrot.lane.b32.xlu0 %v714, 8
    %v716 = vpop.permute.xlu0 %715
    %vm717 = vcmask 130112
    %s718 = scalar_lea.vmem %s1, 40
    %719 = vst.msk [vmem:[%s718] sm:$0xff] %vm717, %v716
    %s720 = scalar_lea.vmem [#allocation0], 577
    %v721 = vld [vmem:[%s720] ss:$8 sm:$0xf]
    %s722 = scalar_lea.vmem [#allocation0], 577
    %v723 = vld [vmem:[%s722] ss:$8 sm:$0xf0]
    %vm724 = vcmask 1047556
    %v725 = vsel %vm724, %v723, %v721
    %726 = vrot.lane.b32.xlu0 %v725, 8
    %v727 = vpop.permute.xlu0 %726
    %vm728 = vcmask 130112
    %s729 = scalar_lea.vmem %s1, 72
    %730 = vst.msk [vmem:[%s729] sm:$0xff] %vm728, %v727
    %s731 = scalar_lea.vmem [#allocation0], 833
    %v732 = vld [vmem:[%s731] ss:$8 sm:$0xf]
    %s733 = scalar_lea.vmem [#allocation0], 833
    %v734 = vld [vmem:[%s733] ss:$8 sm:$0xf0]
    %vm735 = vcmask 1047556
    %v736 = vsel %vm735, %v734, %v732
    %737 = vrot.lane.b32.xlu0 %v736, 8
    %v738 = vpop.permute.xlu0 %737
    %vm739 = vcmask 130112
    %s740 = scalar_lea.vmem %s1, 104
    %741 = vst.msk [vmem:[%s740] sm:$0xff] %vm739, %v738
    %s742 = scalar_lea.vmem [#allocation0], 129
    %v743 = vld [vmem:[%s742] ss:$8 sm:$0xf]
    %s744 = scalar_lea.vmem [#allocation0], 129
    %v745 = vld [vmem:[%s744] ss:$8 sm:$0xf0]
    %vm746 = vcmask 1047556
    %v747 = vsel %vm746, %v745, %v743
    %748 = vrot.lane.b32.xlu0 %v747, 8
    %v749 = vpop.permute.xlu0 %748
    %vm750 = vcmask 130112
    %s751 = scalar_lea.vmem %s1, 16
    %752 = vst.msk [vmem:[%s751] sm:$0xff] %vm750, %v749
    %s753 = scalar_lea.vmem [#allocation0], 385
    %v754 = vld [vmem:[%s753] ss:$8 sm:$0xf]
    %s755 = scalar_lea.vmem [#allocation0], 385
    %v756 = vld [vmem:[%s755] ss:$8 sm:$0xf0]
    %vm757 = vcmask 1047556
    %v758 = vsel %vm757, %v756, %v754
    %759 = vrot.lane.b32.xlu0 %v758, 8
    %v760 = vpop.permute.xlu0 %759
    %vm761 = vcmask 130112
    %s762 = scalar_lea.vmem %s1, 48
    %763 = vst.msk [vmem:[%s762] sm:$0xff] %vm761, %v760
    %s764 = scalar_lea.vmem [#allocation0], 641
    %v765 = vld [vmem:[%s764] ss:$8 sm:$0xf]
    %s766 = scalar_lea.vmem [#allocation0], 641
    %v767 = vld [vmem:[%s766] ss:$8 sm:$0xf0]
    %vm768 = vcmask 1047556
    %v769 = vsel %vm768, %v767, %v765
    %770 = vrot.lane.b32.xlu0 %v769, 8
    %v771 = vpop.permute.xlu0 %770
    %vm772 = vcmask 130112
    %s773 = scalar_lea.vmem %s1, 80
    %774 = vst.msk [vmem:[%s773] sm:$0xff] %vm772, %v771
    %s775 = scalar_lea.vmem [#allocation0], 897
    %v776 = vld [vmem:[%s775] ss:$8 sm:$0xf]
    %s777 = scalar_lea.vmem [#allocation0], 897
    %v778 = vld [vmem:[%s777] ss:$8 sm:$0xf0]
    %vm779 = vcmask 1047556
    %v780 = vsel %vm779, %v778, %v776
    %781 = vrot.lane.b32.xlu0 %v780, 8
    %v782 = vpop.permute.xlu0 %781
    %vm783 = vcmask 130112
    %s784 = scalar_lea.vmem %s1, 112
    %785 = vst.msk [vmem:[%s784] sm:$0xff] %vm783, %v782
    %s786 = scalar_lea.vmem [#allocation0], 193
    %v787 = vld [vmem:[%s786] ss:$8 sm:$0xf]
    %s788 = scalar_lea.vmem [#allocation0], 193
    %v789 = vld [vmem:[%s788] ss:$8 sm:$0xf0]
    %vm790 = vcmask 1047556
    %v791 = vsel %vm790, %v789, %v787
    %792 = vrot.lane.b32.xlu0 %v791, 8
    %v793 = vpop.permute.xlu0 %792
    %vm794 = vcmask 130112
    %s795 = scalar_lea.vmem %s1, 24
    %796 = vst.msk [vmem:[%s795] sm:$0xff] %vm794, %v793
    %s797 = scalar_lea.vmem [#allocation0], 449
    %v798 = vld [vmem:[%s797] ss:$8 sm:$0xf]
    %s799 = scalar_lea.vmem [#allocation0], 449
    %v800 = vld [vmem:[%s799] ss:$8 sm:$0xf0]
    %vm801 = vcmask 1047556
    %v802 = vsel %vm801, %v800, %v798
    %803 = vrot.lane.b32.xlu0 %v802, 8
    %v804 = vpop.permute.xlu0 %803
    %vm805 = vcmask 130112
    %s806 = scalar_lea.vmem %s1, 56
    %807 = vst.msk [vmem:[%s806] sm:$0xff] %vm805, %v804
    %s808 = scalar_lea.vmem [#allocation0], 705
    %v809 = vld [vmem:[%s808] ss:$8 sm:$0xf]
    %s810 = scalar_lea.vmem [#allocation0], 705
    %v811 = vld [vmem:[%s810] ss:$8 sm:$0xf0]
    %vm812 = vcmask 1047556
    %v813 = vsel %vm812, %v811, %v809
    %814 = vrot.lane.b32.xlu0 %v813, 8
    %v815 = vpop.permute.xlu0 %814
    %vm816 = vcmask 130112
    %s817 = scalar_lea.vmem %s1, 88
    %818 = vst.msk [vmem:[%s817] sm:$0xff] %vm816, %v815
    %s819 = scalar_lea.vmem [#allocation0], 961
    %v820 = vld [vmem:[%s819] ss:$8 sm:$0xf]
    %s821 = scalar_lea.vmem [#allocation0], 961
    %v822 = vld [vmem:[%s821] ss:$8 sm:$0xf0]
    %vm823 = vcmask 1047556
    %v824 = vsel %vm823, %v822, %v820
    %825 = vrot.lane.b32.xlu0 %v824, 8
    %v826 = vpop.permute.xlu0 %825
    %vm827 = vcmask 130112
    %s828 = scalar_lea.vmem %s1, 120
    %829 = vst.msk [vmem:[%s828] sm:$0xff] %vm827, %v826

// kernel: _lambda_.10
$region0: #{_lambda_.10}
  #allocation0 [shape = 'u32[]', space=smem, size = 0x4, offset = 0x4, fixed_abs, tag = 'smem constant byte address 0x4 - core index']
  #allocation1 [shape = 'u32[72,128]{1,0:T(1,128)}', space=vmem, size = 0x9000, scoped, tag = 'internal scratch']
  %s0 = inlined_call_operand.vmem [shape: f32[512,4], index: 0, kind: input, shape index: {}]
  %s1 = inlined_call_operand.vmem [shape: f32[4,8], index: 1, kind: input, shape index: {}]
  %s2 = inlined_call_operand.vmem [shape: f32[512,8], index: 2, kind: input, shape index: {}]
  %s3 = inlined_call_operand.vmem [shape: f32[512,8], index: 3, kind: output, shape index: {0}]
  %s4 = inlined_call_operand.vmem [shape: f32[1,1,8], index: 4, kind: output, shape index: {1}]
  %s5 = inlined_call_operand.vmem [shape: f32[1,1,8], index: 5, kind: output, shape index: {2}]
  %6 = xla_tuple %s3, %s4, %s5
  %s7 = sld [smem:[#allocation0]]
  $region38: #{_lambda_.10} parent=0
    _
  %s9 = ssub.s32 1, %s7
  %s10 = scalar_select 0, %s9, %s7
  // Predicated region
  $region2: #{_lambda_.10} parent=0 // pred_check
    _
  $region3: #{_lambda_.10} parent=0 // pred_check_branch
    %12 = sbr.rel (0) target = $region5
  $region4: #{_lambda_.10} parent=0 // pred_region
    _
  $region5: #{_lambda_.10} parent=0 // pred_fallthru
    _
  // Predicated region
  $region6: #{_lambda_.10} parent=0 // pred_check
    _
  $region7: #{_lambda_.10} parent=0 // pred_check_branch
    %14 = sbr.rel (0) target = $region9
  $region8: #{_lambda_.10} parent=0 // pred_region
    _
  $region9: #{_lambda_.10} parent=0 // pred_fallthru
    _
  // Predicated region
  $region10: #{_lambda_.10} parent=0 // pred_check
    _
  $region11: #{_lambda_.10} parent=0 // pred_check_branch
    %16 = sbr.rel (0) target = $region13
  $region12: #{_lambda_.10} parent=0 // pred_region
    _
  $region13: #{_lambda_.10} parent=0 // pred_fallthru
    _
  %v17 = vld [vmem:[%s0] sm:$0xff]
  %v18 = vld [vmem:[%s0 + $0x8] sm:$0xff]
  %v19 = vld [vmem:[%s0 + $0x10] sm:$0xff]
  %v20 = vld [vmem:[%s0 + $0x18] sm:$0xff]
  %v21 = vld [vmem:[%s0 + $0x20] sm:$0xff]
  %v22 = vld [vmem:[%s0 + $0x28] sm:$0xff]
  %v23 = vld [vmem:[%s0 + $0x30] sm:$0xff]
  %v24 = vld [vmem:[%s0 + $0x38] sm:$0xff]
  %v25 = vld [vmem:[%s0 + $0x40] sm:$0xff]
  %v26 = vld [vmem:[%s0 + $0x48] sm:$0xff]
  %v27 = vld [vmem:[%s0 + $0x50] sm:$0xff]
  %v28 = vld [vmem:[%s0 + $0x58] sm:$0xff]
  %v29 = vld [vmem:[%s0 + $0x60] sm:$0xff]
  %v30 = vld [vmem:[%s0 + $0x68] sm:$0xff]
  %v31 = vld [vmem:[%s0 + $0x70] sm:$0xff]
  %v32 = vld [vmem:[%s0 + $0x78] sm:$0xff]
  %v33 = vld [vmem:[%s0 + $0x80] sm:$0xff]
  %v34 = vld [vmem:[%s0 + $0x88] sm:$0xff]
  %v35 = vld [vmem:[%s0 + $0x90] sm:$0xff]
  %v36 = vld [vmem:[%s0 + $0x98] sm:$0xff]
  %v37 = vld [vmem:[%s0 + $0xa0] sm:$0xff]
  %v38 = vld [vmem:[%s0 + $0xa8] sm:$0xff]
  %v39 = vld [vmem:[%s0 + $0xb0] sm:$0xff]
  %v40 = vld [vmem:[%s0 + $0xb8] sm:$0xff]
  %v41 = vld [vmem:[%s0 + $0xc0] sm:$0xff]
  %v42 = vld [vmem:[%s0 + $0xc8] sm:$0xff]
  %v43 = vld [vmem:[%s0 + $0xd0] sm:$0xff]
  %v44 = vld [vmem:[%s0 + $0xd8] sm:$0xff]
  %v45 = vld [vmem:[%s0 + $0xe0] sm:$0xff]
  %v46 = vld [vmem:[%s0 + $0xe8] sm:$0xff]
  %v47 = vld [vmem:[%s0 + $0xf0] sm:$0xff]
  %v48 = vld [vmem:[%s0 + $0xf8] sm:$0xff]
  %v49 = vld [vmem:[%s0 + $0x100] sm:$0xff]
  %v50 = vld [vmem:[%s0 + $0x108] sm:$0xff]
  %v51 = vld [vmem:[%s0 + $0x110] sm:$0xff]
  %v52 = vld [vmem:[%s0 + $0x118] sm:$0xff]
  %v53 = vld [vmem:[%s0 + $0x120] sm:$0xff]
  %v54 = vld [vmem:[%s0 + $0x128] sm:$0xff]
  %v55 = vld [vmem:[%s0 + $0x130] sm:$0xff]
  %v56 = vld [vmem:[%s0 + $0x138] sm:$0xff]
  %v57 = vld [vmem:[%s0 + $0x140] sm:$0xff]
  %v58 = vld [vmem:[%s0 + $0x148] sm:$0xff]
  %v59 = vld [vmem:[%s0 + $0x150] sm:$0xff]
  %v60 = vld [vmem:[%s0 + $0x158] sm:$0xff]
  %v61 = vld [vmem:[%s0 + $0x160] sm:$0xff]
  %v62 = vld [vmem:[%s0 + $0x168] sm:$0xff]
  %v63 = vld [vmem:[%s0 + $0x170] sm:$0xff]
  %v64 = vld [vmem:[%s0 + $0x178] sm:$0xff]
  %v65 = vld [vmem:[%s0 + $0x180] sm:$0xff]
  %v66 = vld [vmem:[%s0 + $0x188] sm:$0xff]
  %v67 = vld [vmem:[%s0 + $0x190] sm:$0xff]
  %v68 = vld [vmem:[%s0 + $0x198] sm:$0xff]
  %v69 = vld [vmem:[%s0 + $0x1a0] sm:$0xff]
  %v70 = vld [vmem:[%s0 + $0x1a8] sm:$0xff]
  %v71 = vld [vmem:[%s0 + $0x1b0] sm:$0xff]
  %v72 = vld [vmem:[%s0 + $0x1b8] sm:$0xff]
  %v73 = vld [vmem:[%s0 + $0x1c0] sm:$0xff]
  %v74 = vld [vmem:[%s0 + $0x1c8] sm:$0xff]
  %v75 = vld [vmem:[%s0 + $0x1d0] sm:$0xff]
  %v76 = vld [vmem:[%s0 + $0x1d8] sm:$0xff]
  %v77 = vld [vmem:[%s0 + $0x1e0] sm:$0xff]
  %v78 = vld [vmem:[%s0 + $0x1e8] sm:$0xff]
  %v79 = vld [vmem:[%s0 + $0x1f0] sm:$0xff]
  %v80 = vld [vmem:[%s0 + $0x1f8] sm:$0xff]
  %v81 = vld [vmem:[%s1] sm:$0xf]
  %v82 = vld [vmem:[%s2] sm:$0xff]
  %v83 = vld [vmem:[%s2 + $0x8] sm:$0xff]
  %v84 = vld [vmem:[%s2 + $0x10] sm:$0xff]
  %v85 = vld [vmem:[%s2 + $0x18] sm:$0xff]
  %v86 = vld [vmem:[%s2 + $0x20] sm:$0xff]
  %v87 = vld [vmem:[%s2 + $0x28] sm:$0xff]
  %v88 = vld [vmem:[%s2 + $0x30] sm:$0xff]
  %v89 = vld [vmem:[%s2 + $0x38] sm:$0xff]
  %v90 = vld [vmem:[%s2 + $0x40] sm:$0xff]
  %v91 = vld [vmem:[%s2 + $0x48] sm:$0xff]
  %v92 = vld [vmem:[%s2 + $0x50] sm:$0xff]
  %v93 = vld [vmem:[%s2 + $0x58] sm:$0xff]
  %v94 = vld [vmem:[%s2 + $0x60] sm:$0xff]
  %v95 = vld [vmem:[%s2 + $0x68] sm:$0xff]
  %v96 = vld [vmem:[%s2 + $0x70] sm:$0xff]
  %v97 = vld [vmem:[%s2 + $0x78] sm:$0xff]
  %v98 = vld [vmem:[%s2 + $0x80] sm:$0xff]
  %v99 = vld [vmem:[%s2 + $0x88] sm:$0xff]
  %v100 = vld [vmem:[%s2 + $0x90] sm:$0xff]
  %v101 = vld [vmem:[%s2 + $0x98] sm:$0xff]
  %v102 = vld [vmem:[%s2 + $0xa0] sm:$0xff]
  %v103 = vld [vmem:[%s2 + $0xa8] sm:$0xff]
  %v104 = vld [vmem:[%s2 + $0xb0] sm:$0xff]
  %v105 = vld [vmem:[%s2 + $0xb8] sm:$0xff]
  %v106 = vld [vmem:[%s2 + $0xc0] sm:$0xff]
  %v107 = vld [vmem:[%s2 + $0xc8] sm:$0xff]
  %v108 = vld [vmem:[%s2 + $0xd0] sm:$0xff]
  %v109 = vld [vmem:[%s2 + $0xd8] sm:$0xff]
  %v110 = vld [vmem:[%s2 + $0xe0] sm:$0xff]
  %v111 = vld [vmem:[%s2 + $0xe8] sm:$0xff]
  %v112 = vld [vmem:[%s2 + $0xf0] sm:$0xff]
  %v113 = vld [vmem:[%s2 + $0xf8] sm:$0xff]
  %v114 = vld [vmem:[%s2 + $0x100] sm:$0xff]
  %v115 = vld [vmem:[%s2 + $0x108] sm:$0xff]
  %v116 = vld [vmem:[%s2 + $0x110] sm:$0xff]
  %v117 = vld [vmem:[%s2 + $0x118] sm:$0xff]
  %v118 = vld [vmem:[%s2 + $0x120] sm:$0xff]
  %v119 = vld [vmem:[%s2 + $0x128] sm:$0xff]
  %v120 = vld [vmem:[%s2 + $0x130] sm:$0xff]
  %v121 = vld [vmem:[%s2 + $0x138] sm:$0xff]
  %v122 = vld [vmem:[%s2 + $0x140] sm:$0xff]
  %v123 = vld [vmem:[%s2 + $0x148] sm:$0xff]
  %v124 = vld [vmem:[%s2 + $0x150] sm:$0xff]
  %v125 = vld [vmem:[%s2 + $0x158] sm:$0xff]
  %v126 = vld [vmem:[%s2 + $0x160] sm:$0xff]
  %v127 = vld [vmem:[%s2 + $0x168] sm:$0xff]
  %v128 = vld [vmem:[%s2 + $0x170] sm:$0xff]
  %v129 = vld [vmem:[%s2 + $0x178] sm:$0xff]
  %v130 = vld [vmem:[%s2 + $0x180] sm:$0xff]
  %v131 = vld [vmem:[%s2 + $0x188] sm:$0xff]
  %v132 = vld [vmem:[%s2 + $0x190] sm:$0xff]
  %v133 = vld [vmem:[%s2 + $0x198] sm:$0xff]
  %v134 = vld [vmem:[%s2 + $0x1a0] sm:$0xff]
  %v135 = vld [vmem:[%s2 + $0x1a8] sm:$0xff]
  %v136 = vld [vmem:[%s2 + $0x1b0] sm:$0xff]
  %v137 = vld [vmem:[%s2 + $0x1b8] sm:$0xff]
  %v138 = vld [vmem:[%s2 + $0x1c0] sm:$0xff]
  %v139 = vld [vmem:[%s2 + $0x1c8] sm:$0xff]
  %v140 = vld [vmem:[%s2 + $0x1d0] sm:$0xff]
  %v141 = vld [vmem:[%s2 + $0x1d8] sm:$0xff]
  %v142 = vld [vmem:[%s2 + $0x1e0] sm:$0xff]
  %v143 = vld [vmem:[%s2 + $0x1e8] sm:$0xff]
  %v144 = vld [vmem:[%s2 + $0x1f0] sm:$0xff]
  %v145 = vld [vmem:[%s2 + $0x1f8] sm:$0xff]
  %vm146 = vcmask 31744
  %v148 = vsel %vm146, %v17, 0
  %v151 = vsel %vm146, %v18, 0
  %v154 = vsel %vm146, %v19, 0
  %v157 = vsel %vm146, %v20, 0
  %v160 = vsel %vm146, %v21, 0
  %v163 = vsel %vm146, %v22, 0
  %v166 = vsel %vm146, %v23, 0
  %v169 = vsel %vm146, %v24, 0
  %v172 = vsel %vm146, %v25, 0
  %v175 = vsel %vm146, %v26, 0
  %v178 = vsel %vm146, %v27, 0
  %v181 = vsel %vm146, %v28, 0
  %v184 = vsel %vm146, %v29, 0
  %v187 = vsel %vm146, %v30, 0
  %v190 = vsel %vm146, %v31, 0
  %v193 = vsel %vm146, %v32, 0
  %v196 = vsel %vm146, %v33, 0
  %v199 = vsel %vm146, %v34, 0
  %v202 = vsel %vm146, %v35, 0
  %v205 = vsel %vm146, %v36, 0
  %v208 = vsel %vm146, %v37, 0
  %v211 = vsel %vm146, %v38, 0
  %v214 = vsel %vm146, %v39, 0
  %v217 = vsel %vm146, %v40, 0
  %v220 = vsel %vm146, %v41, 0
  %v223 = vsel %vm146, %v42, 0
  %v226 = vsel %vm146, %v43, 0
  %v229 = vsel %vm146, %v44, 0
  %v232 = vsel %vm146, %v45, 0
  %v235 = vsel %vm146, %v46, 0
  %v238 = vsel %vm146, %v47, 0
  %v241 = vsel %vm146, %v48, 0
  %v244 = vsel %vm146, %v49, 0
  %v247 = vsel %vm146, %v50, 0
  %v250 = vsel %vm146, %v51, 0
  %v253 = vsel %vm146, %v52, 0
  %v256 = vsel %vm146, %v53, 0
  %v259 = vsel %vm146, %v54, 0
  %v262 = vsel %vm146, %v55, 0
  %v265 = vsel %vm146, %v56, 0
  %v268 = vsel %vm146, %v57, 0
  %v271 = vsel %vm146, %v58, 0
  %v274 = vsel %vm146, %v59, 0
  %v277 = vsel %vm146, %v60, 0
  %v280 = vsel %vm146, %v61, 0
  %v283 = vsel %vm146, %v62, 0
  %v286 = vsel %vm146, %v63, 0
  %v289 = vsel %vm146, %v64, 0
  %v292 = vsel %vm146, %v65, 0
  %v295 = vsel %vm146, %v66, 0
  %v298 = vsel %vm146, %v67, 0
  %v301 = vsel %vm146, %v68, 0
  %v304 = vsel %vm146, %v69, 0
  %v307 = vsel %vm146, %v70, 0
  %v310 = vsel %vm146, %v71, 0
  %v313 = vsel %vm146, %v72, 0
  %v316 = vsel %vm146, %v73, 0
  %v319 = vsel %vm146, %v74, 0
  %v322 = vsel %vm146, %v75, 0
  %v325 = vsel %vm146, %v76, 0
  %v328 = vsel %vm146, %v77, 0
  %v331 = vsel %vm146, %v78, 0
  %v334 = vsel %vm146, %v79, 0
  %v337 = vsel %vm146, %v80, 0
  %vm339 = vcmask 1043456
  %v341 = vsel %vm339, %v81, 0
  %343 = vmatpush.msra.mxu0 0.0
  %344 = vmatpush.msra.mxu0 0.0
  %345 = vmatpush.msra.mxu0 0.0
  %346 = vmatpush.msra.mxu0 0.0
  %347 = vmatpush.msra.mxu0 0.0
  %348 = vmatpush.msra.mxu0 0.0
  %349 = vmatpush.msra.mxu0 0.0
  %350 = vmatpush.msra.mxu0 0.0
  %351 = vmatpush.msra.mxu0 0.0
  %352 = vmatpush.msra.mxu0 0.0
  %353 = vmatpush.msra.mxu0 0.0
  %354 = vmatpush.msra.mxu0 0.0
  %355 = vmatpush.msra.mxu0 0.0
  %356 = vmatpush.msra.mxu0 0.0
  %357 = vmatpush.msra.mxu0 0.0
  %358 = vmatpush.msra.mxu0 %v341
  %359 = vmatmul.f32.gmra.mxu0 %v148
  %v360 = vpop.f32.mrf.mxu0
  %v361 = vadd.f32 %v82, %v360
  %362 = vmatmul.f32.gmra.mxu0 %v151
  %v363 = vpop.f32.mrf.mxu0
  %v364 = vadd.f32 %v83, %v363
  %365 = vmatmul.f32.gmra.mxu0 %v154
  %v366 = vpop.f32.mrf.mxu0
  %v367 = vadd.f32 %v84, %v366
  %368 = vmatmul.f32.gmra.mxu0 %v157
  %v369 = vpop.f32.mrf.mxu0
  %v370 = vadd.f32 %v85, %v369
  %371 = vmatmul.f32.gmra.mxu0 %v160
  %v372 = vpop.f32.mrf.mxu0
  %v373 = vadd.f32 %v86, %v372
  %374 = vmatmul.f32.gmra.mxu0 %v163
  %v375 = vpop.f32.mrf.mxu0
  %v376 = vadd.f32 %v87, %v375
  %377 = vmatmul.f32.gmra.mxu0 %v166
  %v378 = vpop.f32.mrf.mxu0
  %v379 = vadd.f32 %v88, %v378
  %380 = vmatmul.f32.gmra.mxu0 %v169
  %v381 = vpop.f32.mrf.mxu0
  %v382 = vadd.f32 %v89, %v381
  %383 = vmatmul.f32.gmra.mxu0 %v172
  %v384 = vpop.f32.mrf.mxu0
  %v385 = vadd.f32 %v90, %v384
  %386 = vmatmul.f32.gmra.mxu0 %v175
  %v387 = vpop.f32.mrf.mxu0
  %v388 = vadd.f32 %v91, %v387
  %389 = vmatmul.f32.gmra.mxu0 %v178
  %v390 = vpop.f32.mrf.mxu0
  %v391 = vadd.f32 %v92, %v390
  %392 = vmatmul.f32.gmra.mxu0 %v181
  %v393 = vpop.f32.mrf.mxu0
  %v394 = vadd.f32 %v93, %v393
  %395 = vmatmul.f32.gmra.mxu0 %v184
  %v396 = vpop.f32.mrf.mxu0
  %v397 = vadd.f32 %v94, %v396
  %398 = vmatmul.f32.gmra.mxu0 %v187
  %v399 = vpop.f32.mrf.mxu0
  %v400 = vadd.f32 %v95, %v399
  %401 = vmatmul.f32.gmra.mxu0 %v190
  %v402 = vpop.f32.mrf.mxu0
  %v403 = vadd.f32 %v96, %v402
  %404 = vmatmul.f32.gmra.mxu0 %v193
  %v405 = vpop.f32.mrf.mxu0
  %v406 = vadd.f32 %v97, %v405
  %407 = vmatmul.f32.gmra.mxu0 %v196
  %v408 = vpop.f32.mrf.mxu0
  %v409 = vadd.f32 %v98, %v408
  %410 = vmatmul.f32.gmra.mxu0 %v199
  %v411 = vpop.f32.mrf.mxu0
  %v412 = vadd.f32 %v99, %v411
  %413 = vmatmul.f32.gmra.mxu0 %v202
  %v414 = vpop.f32.mrf.mxu0
  %v415 = vadd.f32 %v100, %v414
  %416 = vmatmul.f32.gmra.mxu0 %v205
  %v417 = vpop.f32.mrf.mxu0
  %v418 = vadd.f32 %v101, %v417
  %419 = vmatmul.f32.gmra.mxu0 %v208
  %v420 = vpop.f32.mrf.mxu0
  %v421 = vadd.f32 %v102, %v420
  %422 = vmatmul.f32.gmra.mxu0 %v211
  %v423 = vpop.f32.mrf.mxu0
  %v424 = vadd.f32 %v103, %v423
  %425 = vmatmul.f32.gmra.mxu0 %v214
  %v426 = vpop.f32.mrf.mxu0
  %v427 = vadd.f32 %v104, %v426
  %428 = vmatmul.f32.gmra.mxu0 %v217
  %v429 = vpop.f32.mrf.mxu0
  %v430 = vadd.f32 %v105, %v429
  %431 = vmatmul.f32.gmra.mxu0 %v220
  %v432 = vpop.f32.mrf.mxu0
  %v433 = vadd.f32 %v106, %v432
  %434 = vmatmul.f32.gmra.mxu0 %v223
  %v435 = vpop.f32.mrf.mxu0
  %v436 = vadd.f32 %v107, %v435
  %437 = vmatmul.f32.gmra.mxu0 %v226
  %v438 = vpop.f32.mrf.mxu0
  %v439 = vadd.f32 %v108, %v438
  %440 = vmatmul.f32.gmra.mxu0 %v229
  %v441 = vpop.f32.mrf.mxu0
  %v442 = vadd.f32 %v109, %v441
  %443 = vmatmul.f32.gmra.mxu0 %v232
  %v444 = vpop.f32.mrf.mxu0
  %v445 = vadd.f32 %v110, %v444
  %446 = vmatmul.f32.gmra.mxu0 %v235
  %v447 = vpop.f32.mrf.mxu0
  %v448 = vadd.f32 %v111, %v447
  %449 = vmatmul.f32.gmra.mxu0 %v238
  %v450 = vpop.f32.mrf.mxu0
  %v451 = vadd.f32 %v112, %v450
  %452 = vmatmul.f32.gmra.mxu0 %v241
  %v453 = vpop.f32.mrf.mxu0
  %v454 = vadd.f32 %v113, %v453
  %455 = vmatmul.f32.gmra.mxu0 %v244
  %v456 = vpop.f32.mrf.mxu0
  %v457 = vadd.f32 %v114, %v456
  %458 = vmatmul.f32.gmra.mxu0 %v247
  %v459 = vpop.f32.mrf.mxu0
  %v460 = vadd.f32 %v115, %v459
  %461 = vmatmul.f32.gmra.mxu0 %v250
  %v462 = vpop.f32.mrf.mxu0
  %v463 = vadd.f32 %v116, %v462
  %464 = vmatmul.f32.gmra.mxu0 %v253
  %v465 = vpop.f32.mrf.mxu0
  %v466 = vadd.f32 %v117, %v465
  %467 = vmatmul.f32.gmra.mxu0 %v256
  %v468 = vpop.f32.mrf.mxu0
  %v469 = vadd.f32 %v118, %v468
  %470 = vmatmul.f32.gmra.mxu0 %v259
  %v471 = vpop.f32.mrf.mxu0
  %v472 = vadd.f32 %v119, %v471
  %473 = vmatmul.f32.gmra.mxu0 %v262
  %v474 = vpop.f32.mrf.mxu0
  %v475 = vadd.f32 %v120, %v474
  %476 = vmatmul.f32.gmra.mxu0 %v265
  %v477 = vpop.f32.mrf.mxu0
  %v478 = vadd.f32 %v121, %v477
  %479 = vmatmul.f32.gmra.mxu0 %v268
  %v480 = vpop.f32.mrf.mxu0
  %v481 = vadd.f32 %v122, %v480
  %482 = vmatmul.f32.gmra.mxu0 %v271
  %v483 = vpop.f32.mrf.mxu0
  %v484 = vadd.f32 %v123, %v483
  %485 = vmatmul.f32.gmra.mxu0 %v274
  %v486 = vpop.f32.mrf.mxu0
  %v487 = vadd.f32 %v124, %v486
  %488 = vmatmul.f32.gmra.mxu0 %v277
  %v489 = vpop.f32.mrf.mxu0
  %v490 = vadd.f32 %v125, %v489
  %491 = vmatmul.f32.gmra.mxu0 %v280
  %v492 = vpop.f32.mrf.mxu0
  %v493 = vadd.f32 %v126, %v492
  %494 = vmatmul.f32.gmra.mxu0 %v283
  %v495 = vpop.f32.mrf.mxu0
  %v496 = vadd.f32 %v127, %v495
  %497 = vmatmul.f32.gmra.mxu0 %v286
  %v498 = vpop.f32.mrf.mxu0
  %v499 = vadd.f32 %v128, %v498
  %500 = vmatmul.f32.gmra.mxu0 %v289
  %v501 = vpop.f32.mrf.mxu0
  %v502 = vadd.f32 %v129, %v501
  %503 = vmatmul.f32.gmra.mxu0 %v292
  %v504 = vpop.f32.mrf.mxu0
  %v505 = vadd.f32 %v130, %v504
  %506 = vmatmul.f32.gmra.mxu0 %v295
  %v507 = vpop.f32.mrf.mxu0
  %v508 = vadd.f32 %v131, %v507
  %509 = vmatmul.f32.gmra.mxu0 %v298
  %v510 = vpop.f32.mrf.mxu0
  %v511 = vadd.f32 %v132, %v510
  %512 = vmatmul.f32.gmra.mxu0 %v301
  %v513 = vpop.f32.mrf.mxu0
  %v514 = vadd.f32 %v133, %v513
  %515 = vmatmul.f32.gmra.mxu0 %v304
  %v516 = vpop.f32.mrf.mxu0
  %v517 = vadd.f32 %v134, %v516
  %518 = vmatmul.f32.gmra.mxu0 %v307
  %v519 = vpop.f32.mrf.mxu0
  %v520 = vadd.f32 %v135, %v519
  %521 = vmatmul.f32.gmra.mxu0 %v310
  %v522 = vpop.f32.mrf.mxu0
  %v523 = vadd.f32 %v136, %v522
  %524 = vmatmul.f32.gmra.mxu0 %v313
  %v525 = vpop.f32.mrf.mxu0
  %v526 = vadd.f32 %v137, %v525
  %527 = vmatmul.f32.gmra.mxu0 %v316
  %v528 = vpop.f32.mrf.mxu0
  %v529 = vadd.f32 %v138, %v528
  %530 = vmatmul.f32.gmra.mxu0 %v319
  %v531 = vpop.f32.mrf.mxu0
  %v532 = vadd.f32 %v139, %v531
  %533 = vmatmul.f32.gmra.mxu0 %v322
  %v534 = vpop.f32.mrf.mxu0
  %v535 = vadd.f32 %v140, %v534
  %536 = vmatmul.f32.gmra.mxu0 %v325
  %v537 = vpop.f32.mrf.mxu0
  %v538 = vadd.f32 %v141, %v537
  %539 = vmatmul.f32.gmra.mxu0 %v328
  %v540 = vpop.f32.mrf.mxu0
  %v541 = vadd.f32 %v142, %v540
  %542 = vmatmul.f32.gmra.mxu0 %v331
  %v543 = vpop.f32.mrf.mxu0
  %v544 = vadd.f32 %v143, %v543
  %545 = vmatmul.f32.gmra.mxu0 %v334
  %v546 = vpop.f32.mrf.mxu0
  %v547 = vadd.f32 %v144, %v546
  %548 = vmatmul.f32.gmra.mxu0 %v337
  %v549 = vpop.f32.mrf.mxu0
  %v550 = vadd.f32 %v145, %v549
  %551 = vdwg.mxu0
  %vm552 = vcmask 64512
  %553 = vst.msk [vmem:[%s3] sm:$0xff] %vm552, %v361
  %554 = vst.msk [vmem:[%s3 + $0x8] sm:$0xff] %vm552, %v364
  %555 = vst.msk [vmem:[%s3 + $0x10] sm:$0xff] %vm552, %v367
  %556 = vst.msk [vmem:[%s3 + $0x18] sm:$0xff] %vm552, %v370
  %557 = vst.msk [vmem:[%s3 + $0x20] sm:$0xff] %vm552, %v373
  %558 = vst.msk [vmem:[%s3 + $0x28] sm:$0xff] %vm552, %v376
  %559 = vst.msk [vmem:[%s3 + $0x30] sm:$0xff] %vm552, %v379
  %560 = vst.msk [vmem:[%s3 + $0x38] sm:$0xff] %vm552, %v382
  %561 = vst.msk [vmem:[%s3 + $0x40] sm:$0xff] %vm552, %v385
  %562 = vst.msk [vmem:[%s3 + $0x48] sm:$0xff] %vm552, %v388
  %563 = vst.msk [vmem:[%s3 + $0x50] sm:$0xff] %vm552, %v391
  %564 = vst.msk [vmem:[%s3 + $0x58] sm:$0xff] %vm552, %v394
  %565 = vst.msk [vmem:[%s3 + $0x60] sm:$0xff] %vm552, %v397
  %566 = vst.msk [vmem:[%s3 + $0x68] sm:$0xff] %vm552, %v400
  %567 = vst.msk [vmem:[%s3 + $0x70] sm:$0xff] %vm552, %v403
  %568 = vst.msk [vmem:[%s3 + $0x78] sm:$0xff] %vm552, %v406
  %569 = vst.msk [vmem:[%s3 + $0x80] sm:$0xff] %vm552, %v409
  %570 = vst.msk [vmem:[%s3 + $0x88] sm:$0xff] %vm552, %v412
  %571 = vst.msk [vmem:[%s3 + $0x90] sm:$0xff] %vm552, %v415
  %572 = vst.msk [vmem:[%s3 + $0x98] sm:$0xff] %vm552, %v418
  %573 = vst.msk [vmem:[%s3 + $0xa0] sm:$0xff] %vm552, %v421
  %574 = vst.msk [vmem:[%s3 + $0xa8] sm:$0xff] %vm552, %v424
  %575 = vst.msk [vmem:[%s3 + $0xb0] sm:$0xff] %vm552, %v427
  %576 = vst.msk [vmem:[%s3 + $0xb8] sm:$0xff] %vm552, %v430
  %577 = vst.msk [vmem:[%s3 + $0xc0] sm:$0xff] %vm552, %v433
  %578 = vst.msk [vmem:[%s3 + $0xc8] sm:$0xff] %vm552, %v436
  %579 = vst.msk [vmem:[%s3 + $0xd0] sm:$0xff] %vm552, %v439
  %580 = vst.msk [vmem:[%s3 + $0xd8] sm:$0xff] %vm552, %v442
  %581 = vst.msk [vmem:[%s3 + $0xe0] sm:$0xff] %vm552, %v445
  %582 = vst.msk [vmem:[%s3 + $0xe8] sm:$0xff] %vm552, %v448
  %583 = vst.msk [vmem:[%s3 + $0xf0] sm:$0xff] %vm552, %v451
  %584 = vst.msk [vmem:[%s3 + $0xf8] sm:$0xff] %vm552, %v454
  %585 = vst.msk [vmem:[%s3 + $0x100] sm:$0xff] %vm552, %v457
  %586 = vst.msk [vmem:[%s3 + $0x108] sm:$0xff] %vm552, %v460
  %587 = vst.msk [vmem:[%s3 + $0x110] sm:$0xff] %vm552, %v463
  %588 = vst.msk [vmem:[%s3 + $0x118] sm:$0xff] %vm552, %v466
  %589 = vst.msk [vmem:[%s3 + $0x120] sm:$0xff] %vm552, %v469
  %590 = vst.msk [vmem:[%s3 + $0x128] sm:$0xff] %vm552, %v472
  %591 = vst.msk [vmem:[%s3 + $0x130] sm:$0xff] %vm552, %v475
  %592 = vst.msk [vmem:[%s3 + $0x138] sm:$0xff] %vm552, %v478
  %593 = vst.msk [vmem:[%s3 + $0x140] sm:$0xff] %vm552, %v481
  %594 = vst.msk [vmem:[%s3 + $0x148] sm:$0xff] %vm552, %v484
  %595 = vst.msk [vmem:[%s3 + $0x150] sm:$0xff] %vm552, %v487
  %596 = vst.msk [vmem:[%s3 + $0x158] sm:$0xff] %vm552, %v490
  %597 = vst.msk [vmem:[%s3 + $0x160] sm:$0xff] %vm552, %v493
  %598 = vst.msk [vmem:[%s3 + $0x168] sm:$0xff] %vm552, %v496
  %599 = vst.msk [vmem:[%s3 + $0x170] sm:$0xff] %vm552, %v499
  %600 = vst.msk [vmem:[%s3 + $0x178] sm:$0xff] %vm552, %v502
  %601 = vst.msk [vmem:[%s3 + $0x180] sm:$0xff] %vm552, %v505
  %602 = vst.msk [vmem:[%s3 + $0x188] sm:$0xff] %vm552, %v508
  %603 = vst.msk [vmem:[%s3 + $0x190] sm:$0xff] %vm552, %v511
  %604 = vst.msk [vmem:[%s3 + $0x198] sm:$0xff] %vm552, %v514
  %605 = vst.msk [vmem:[%s3 + $0x1a0] sm:$0xff] %vm552, %v517
  %606 = vst.msk [vmem:[%s3 + $0x1a8] sm:$0xff] %vm552, %v520
  %607 = vst.msk [vmem:[%s3 + $0x1b0] sm:$0xff] %vm552, %v523
  %608 = vst.msk [vmem:[%s3 + $0x1b8] sm:$0xff] %vm552, %v526
  %609 = vst.msk [vmem:[%s3 + $0x1c0] sm:$0xff] %vm552, %v529
  %610 = vst.msk [vmem:[%s3 + $0x1c8] sm:$0xff] %vm552, %v532
  %611 = vst.msk [vmem:[%s3 + $0x1d0] sm:$0xff] %vm552, %v535
  %612 = vst.msk [vmem:[%s3 + $0x1d8] sm:$0xff] %vm552, %v538
  %613 = vst.msk [vmem:[%s3 + $0x1e0] sm:$0xff] %vm552, %v541
  %614 = vst.msk [vmem:[%s3 + $0x1e8] sm:$0xff] %vm552, %v544
  %615 = vst.msk [vmem:[%s3 + $0x1f0] sm:$0xff] %vm552, %v547
  %616 = vst.msk [vmem:[%s3 + $0x1f8] sm:$0xff] %vm552, %v550
  %v617 = vsel %vm552, %v361, 0.0
  %v618 = vsel %vm552, %v364, 0.0
  %v619 = vadd.f32 %v617, %v618
  %v620 = vsel %vm552, %v367, 0.0
  %v621 = vadd.f32 %v619, %v620
  %v622 = vsel %vm552, %v370, 0.0
  %v623 = vadd.f32 %v621, %v622
  %v624 = vsel %vm552, %v373, 0.0
  %v625 = vadd.f32 %v623, %v624
  %v626 = vsel %vm552, %v376, 0.0
  %v627 = vadd.f32 %v625, %v626
  %v628 = vsel %vm552, %v379, 0.0
  %v629 = vadd.f32 %v627, %v628
  %v630 = vsel %vm552, %v382, 0.0
  %v631 = vadd.f32 %v629, %v630
  %v632 = vsel %vm552, %v385, 0.0
  %v633 = vadd.f32 %v631, %v632
  %v634 = vsel %vm552, %v388, 0.0
  %v635 = vadd.f32 %v633, %v634
  %v636 = vsel %vm552, %v391, 0.0
  %v637 = vadd.f32 %v635, %v636
  %v638 = vsel %vm552, %v394, 0.0
  %v639 = vadd.f32 %v637, %v638
  %v640 = vsel %vm552, %v397, 0.0
  %v641 = vadd.f32 %v639, %v640
  %v642 = vsel %vm552, %v400, 0.0
  %v643 = vadd.f32 %v641, %v642
  %v644 = vsel %vm552, %v403, 0.0
  %v645 = vadd.f32 %v643, %v644
  %v646 = vsel %vm552, %v406, 0.0
  %v647 = vadd.f32 %v645, %v646
  %v648 = vsel %vm552, %v409, 0.0
  %v649 = vadd.f32 %v647, %v648
  %v650 = vsel %vm552, %v412, 0.0
  %v651 = vadd.f32 %v649, %v650
  %v652 = vsel %vm552, %v415, 0.0
  %v653 = vadd.f32 %v651, %v652
  %v654 = vsel %vm552, %v418, 0.0
  %v655 = vadd.f32 %v653, %v654
  %v656 = vsel %vm552, %v421, 0.0
  %v657 = vadd.f32 %v655, %v656
  %v658 = vsel %vm552, %v424, 0.0
  %v659 = vadd.f32 %v657, %v658
  %v660 = vsel %vm552, %v427, 0.0
  %v661 = vadd.f32 %v659, %v660
  %v662 = vsel %vm552, %v430, 0.0
  %v663 = vadd.f32 %v661, %v662
  %v664 = vsel %vm552, %v433, 0.0
  %v665 = vadd.f32 %v663, %v664
  %v666 = vsel %vm552, %v436, 0.0
  %v667 = vadd.f32 %v665, %v666
  %v668 = vsel %vm552, %v439, 0.0
  %v669 = vadd.f32 %v667, %v668
  %v670 = vsel %vm552, %v442, 0.0
  %v671 = vadd.f32 %v669, %v670
  %v672 = vsel %vm552, %v445, 0.0
  %v673 = vadd.f32 %v671, %v672
  %v674 = vsel %vm552, %v448, 0.0
  %v675 = vadd.f32 %v673, %v674
  %v676 = vsel %vm552, %v451, 0.0
  %v677 = vadd.f32 %v675, %v676
  %v678 = vsel %vm552, %v454, 0.0
  %v679 = vadd.f32 %v677, %v678
  %v680 = vsel %vm552, %v457, 0.0
  %v681 = vadd.f32 %v679, %v680
  %v682 = vsel %vm552, %v460, 0.0
  %v683 = vadd.f32 %v681, %v682
  %v684 = vsel %vm552, %v463, 0.0
  %v685 = vadd.f32 %v683, %v684
  %v686 = vsel %vm552, %v466, 0.0
  %v687 = vadd.f32 %v685, %v686
  %v688 = vsel %vm552, %v469, 0.0
  %v689 = vadd.f32 %v687, %v688
  %v690 = vsel %vm552, %v472, 0.0
  %v691 = vadd.f32 %v689, %v690
  %v692 = vsel %vm552, %v475, 0.0
  %v693 = vadd.f32 %v691, %v692
  %v694 = vsel %vm552, %v478, 0.0
  %v695 = vadd.f32 %v693, %v694
  %v696 = vsel %vm552, %v481, 0.0
  %v697 = vadd.f32 %v695, %v696
  %v698 = vsel %vm552, %v484, 0.0
  %v699 = vadd.f32 %v697, %v698
  %v700 = vsel %vm552, %v487, 0.0
  %v701 = vadd.f32 %v699, %v700
  %v702 = vsel %vm552, %v490, 0.0
  %v703 = vadd.f32 %v701, %v702
  %v704 = vsel %vm552, %v493, 0.0
  %v705 = vadd.f32 %v703, %v704
  %v706 = vsel %vm552, %v496, 0.0
  %v707 = vadd.f32 %v705, %v706
  %v708 = vsel %vm552, %v499, 0.0
  %v709 = vadd.f32 %v707, %v708
  %v710 = vsel %vm552, %v502, 0.0
  %v711 = vadd.f32 %v709, %v710
  %v712 = vsel %vm552, %v505, 0.0
  %v713 = vadd.f32 %v711, %v712
  %v714 = vsel %vm552, %v508, 0.0
  %v715 = vadd.f32 %v713, %v714
  %v716 = vsel %vm552, %v511, 0.0
  %v717 = vadd.f32 %v715, %v716
  %v718 = vsel %vm552, %v514, 0.0
  %v719 = vadd.f32 %v717, %v718
  %v720 = vsel %vm552, %v517, 0.0
  %v721 = vadd.f32 %v719, %v720
  %v722 = vsel %vm552, %v520, 0.0
  %v723 = vadd.f32 %v721, %v722
  %v724 = vsel %vm552, %v523, 0.0
  %v725 = vadd.f32 %v723, %v724
  %v726 = vsel %vm552, %v526, 0.0
  %v727 = vadd.f32 %v725, %v726
  %v728 = vsel %vm552, %v529, 0.0
  %v729 = vadd.f32 %v727, %v728
  %v730 = vsel %vm552, %v532, 0.0
  %v731 = vadd.f32 %v729, %v730
  %v732 = vsel %vm552, %v535, 0.0
  %v733 = vadd.f32 %v731, %v732
  %v734 = vsel %vm552, %v538, 0.0
  %v735 = vadd.f32 %v733, %v734
  %v736 = vsel %vm552, %v541, 0.0
  %v737 = vadd.f32 %v735, %v736
  %v738 = vsel %vm552, %v544, 0.0
  %v739 = vadd.f32 %v737, %v738
  %v740 = vsel %vm552, %v547, 0.0
  %v741 = vadd.f32 %v739, %v740
  %v742 = vsel %vm552, %v550, 0.0
  %v743 = vadd.f32 %v741, %v742
  %v744 = vrot.slane %v743, 4
  %v745 = vadd.f32 %v743, %v744
  %v746 = vrot.slane %v745, 2
  %v747 = vadd.f32 %v745, %v746
  %v748 = vrot.slane %v747, 1
  %v749 = vadd.f32 %v747, %v748
  %vm750 = vcmask 57344
  %751 = vst.msk [vmem:[%s4] sm:$0x1] %vm750, %v749
  %v752 = vmul.f32 %v361, %v361
  %v753 = vmul.f32 %v364, %v364
  %v754 = vmul.f32 %v367, %v367
  %v755 = vmul.f32 %v370, %v370
  %v756 = vmul.f32 %v373, %v373
  %v757 = vmul.f32 %v376, %v376
  %v758 = vmul.f32 %v379, %v379
  %v759 = vmul.f32 %v382, %v382
  %v760 = vmul.f32 %v385, %v385
  %v761 = vmul.f32 %v388, %v388
  %v762 = vmul.f32 %v391, %v391
  %v763 = vmul.f32 %v394, %v394
  %v764 = vmul.f32 %v397, %v397
  %v765 = vmul.f32 %v400, %v400
  %v766 = vmul.f32 %v403, %v403
  %v767 = vmul.f32 %v406, %v406
  %v768 = vmul.f32 %v409, %v409
  %v769 = vmul.f32 %v412, %v412
  %v770 = vmul.f32 %v415, %v415
  %v771 = vmul.f32 %v418, %v418
  %v772 = vmul.f32 %v421, %v421
  %v773 = vmul.f32 %v424, %v424
  %v774 = vmul.f32 %v427, %v427
  %v775 = vmul.f32 %v430, %v430
  %v776 = vmul.f32 %v433, %v433
  %v777 = vmul.f32 %v436, %v436
  %v778 = vmul.f32 %v439, %v439
  %v779 = vmul.f32 %v442, %v442
  %v780 = vmul.f32 %v445, %v445
  %v781 = vmul.f32 %v448, %v448
  %v782 = vmul.f32 %v451, %v451
  %v783 = vmul.f32 %v454, %v454
  %v784 = vmul.f32 %v457, %v457
  %v785 = vmul.f32 %v460, %v460
  %v786 = vmul.f32 %v463, %v463
  %v787 = vmul.f32 %v466, %v466
  %v788 = vmul.f32 %v469, %v469
  %v789 = vmul.f32 %v472, %v472
  %v790 = vmul.f32 %v475, %v475
  %v791 = vmul.f32 %v478, %v478
  %v792 = vmul.f32 %v481, %v481
  %v793 = vmul.f32 %v484, %v484
  %v794 = vmul.f32 %v487, %v487
  %v795 = vmul.f32 %v490, %v490
  %v796 = vmul.f32 %v493, %v493
  %v797 = vmul.f32 %v496, %v496
  %v798 = vmul.f32 %v499, %v499
  %v799 = vmul.f32 %v502, %v502
  %v800 = vmul.f32 %v505, %v505
  %v801 = vmul.f32 %v508, %v508
  %v802 = vmul.f32 %v511, %v511
  %v803 = vmul.f32 %v514, %v514
  %v804 = vmul.f32 %v517, %v517
  %v805 = vmul.f32 %v520, %v520
  %v806 = vmul.f32 %v523, %v523
  %v807 = vmul.f32 %v526, %v526
  %v808 = vmul.f32 %v529, %v529
  %v809 = vmul.f32 %v532, %v532
  %v810 = vmul.f32 %v535, %v535
  %v811 = vmul.f32 %v538, %v538
  %v812 = vmul.f32 %v541, %v541
  %v813 = vmul.f32 %v544, %v544
  %v814 = vmul.f32 %v547, %v547
  %v815 = vmul.f32 %v550, %v550
  %v816 = vsel %vm552, %v752, 0.0
  %v817 = vsel %vm552, %v753, 0.0
  %v818 = vadd.f32 %v816, %v817
  %v819 = vsel %vm552, %v754, 0.0
  %v820 = vadd.f32 %v818, %v819
  %v821 = vsel %vm552, %v755, 0.0
  %v822 = vadd.f32 %v820, %v821
  %v823 = vsel %vm552, %v756, 0.0
  %v824 = vadd.f32 %v822, %v823
  %v825 = vsel %vm552, %v757, 0.0
  %v826 = vadd.f32 %v824, %v825
  %v827 = vsel %vm552, %v758, 0.0
  %v828 = vadd.f32 %v826, %v827
  %v829 = vsel %vm552, %v759, 0.0
  %v830 = vadd.f32 %v828, %v829
  %v831 = vsel %vm552, %v760, 0.0
  %v832 = vadd.f32 %v830, %v831
  %v833 = vsel %vm552, %v761, 0.0
  %v834 = vadd.f32 %v832, %v833
  %v835 = vsel %vm552, %v762, 0.0
  %v836 = vadd.f32 %v834, %v835
  %v837 = vsel %vm552, %v763, 0.0
  %v838 = vadd.f32 %v836, %v837
  %v839 = vsel %vm552, %v764, 0.0
  %v840 = vadd.f32 %v838, %v839
  %v841 = vsel %vm552, %v765, 0.0
  %v842 = vadd.f32 %v840, %v841
  %v843 = vsel %vm552, %v766, 0.0
  %v844 = vadd.f32 %v842, %v843
  %v845 = vsel %vm552, %v767, 0.0
  %v846 = vadd.f32 %v844, %v845
  %v847 = vsel %vm552, %v768, 0.0
  %v848 = vadd.f32 %v846, %v847
  %v849 = vsel %vm552, %v769, 0.0
  %v850 = vadd.f32 %v848, %v849
  %v851 = vsel %vm552, %v770, 0.0
  %v852 = vadd.f32 %v850, %v851
  %v853 = vsel %vm552, %v771, 0.0
  %v854 = vadd.f32 %v852, %v853
  %v855 = vsel %vm552, %v772, 0.0
  %v856 = vadd.f32 %v854, %v855
  %v857 = vsel %vm552, %v773, 0.0
  %v858 = vadd.f32 %v856, %v857
  %v859 = vsel %vm552, %v774, 0.0
  %v860 = vadd.f32 %v858, %v859
  %v861 = vsel %vm552, %v775, 0.0
  %v862 = vadd.f32 %v860, %v861
  %v863 = vsel %vm552, %v776, 0.0
  %v864 = vadd.f32 %v862, %v863
  %v865 = vsel %vm552, %v777, 0.0
  %v866 = vadd.f32 %v864, %v865
  %v867 = vsel %vm552, %v778, 0.0
  %v868 = vadd.f32 %v866, %v867
  %v869 = vsel %vm552, %v779, 0.0
  %v870 = vadd.f32 %v868, %v869
  %v871 = vsel %vm552, %v780, 0.0
  %v872 = vadd.f32 %v870, %v871
  %v873 = vsel %vm552, %v781, 0.0
  %v874 = vadd.f32 %v872, %v873
  %v875 = vsel %vm552, %v782, 0.0
  %v876 = vadd.f32 %v874, %v875
  %v877 = vsel %vm552, %v783, 0.0
  %v878 = vadd.f32 %v876, %v877
  %v879 = vsel %vm552, %v784, 0.0
  %v880 = vadd.f32 %v878, %v879
  %v881 = vsel %vm552, %v785, 0.0
  %v882 = vadd.f32 %v880, %v881
  %v883 = vsel %vm552, %v786, 0.0
  %v884 = vadd.f32 %v882, %v883
  %v885 = vsel %vm552, %v787, 0.0
  %v886 = vadd.f32 %v884, %v885
  %v887 = vsel %vm552, %v788, 0.0
  %v888 = vadd.f32 %v886, %v887
  %v889 = vsel %vm552, %v789, 0.0
  %v890 = vadd.f32 %v888, %v889
  %v891 = vsel %vm552, %v790, 0.0
  %v892 = vadd.f32 %v890, %v891
  %v893 = vsel %vm552, %v791, 0.0
  %v894 = vadd.f32 %v892, %v893
  %v895 = vsel %vm552, %v792, 0.0
  %v896 = vadd.f32 %v894, %v895
  %v897 = vsel %vm552, %v793, 0.0
  %v898 = vadd.f32 %v896, %v897
  %v899 = vsel %vm552, %v794, 0.0
  %v900 = vadd.f32 %v898, %v899
  %v901 = vsel %vm552, %v795, 0.0
  %v902 = vadd.f32 %v900, %v901
  %v903 = vsel %vm552, %v796, 0.0
  %v904 = vadd.f32 %v902, %v903
  %v905 = vsel %vm552, %v797, 0.0
  %v906 = vadd.f32 %v904, %v905
  %v907 = vsel %vm552, %v798, 0.0
  %v908 = vadd.f32 %v906, %v907
  %v909 = vsel %vm552, %v799, 0.0
  %v910 = vadd.f32 %v908, %v909
  %v911 = vsel %vm552, %v800, 0.0
  %v912 = vadd.f32 %v910, %v911
  %v913 = vsel %vm552, %v801, 0.0
  %v914 = vadd.f32 %v912, %v913
  %v915 = vsel %vm552, %v802, 0.0
  %v916 = vadd.f32 %v914, %v915
  %v917 = vsel %vm552, %v803, 0.0
  %v918 = vadd.f32 %v916, %v917
  %v919 = vsel %vm552, %v804, 0.0
  %v920 = vadd.f32 %v918, %v919
  %v921 = vsel %vm552, %v805, 0.0
  %v922 = vadd.f32 %v920, %v921
  %v923 = vsel %vm552, %v806, 0.0
  %v924 = vadd.f32 %v922, %v923
  %v925 = vsel %vm552, %v807, 0.0
  %v926 = vadd.f32 %v924, %v925
  %v927 = vsel %vm552, %v808, 0.0
  %v928 = vadd.f32 %v926, %v927
  %v929 = vsel %vm552, %v809, 0.0
  %v930 = vadd.f32 %v928, %v929
  %v931 = vsel %vm552, %v810, 0.0
  %v932 = vadd.f32 %v930, %v931
  %v933 = vsel %vm552, %v811, 0.0
  %v934 = vadd.f32 %v932, %v933
  %v935 = vsel %vm552, %v812, 0.0
  %v936 = vadd.f32 %v934, %v935
  %v937 = vsel %vm552, %v813, 0.0
  %v938 = vadd.f32 %v936, %v937
  %v939 = vsel %vm552, %v814, 0.0
  %v940 = vadd.f32 %v938, %v939
  %v941 = vsel %vm552, %v815, 0.0
  %v942 = vadd.f32 %v940, %v941
  %v943 = vrot.slane %v942, 4
  %v944 = vadd.f32 %v942, %v943
  %v945 = vrot.slane %v944, 2
  %v946 = vadd.f32 %v944, %v945
  %v947 = vrot.slane %v946, 1
  %v948 = vadd.f32 %v946, %v947
  %949 = vst.msk [vmem:[%s5] sm:$0x1] %vm750, %v948
  // Predicated region
  $region14: #{_lambda_.10} parent=0 // pred_check
    _
  $region15: #{_lambda_.10} parent=0 // pred_check_branch
    %951 = sbr.rel (0) target = $region17
  $region16: #{_lambda_.10} parent=0 // pred_region
    _
  $region17: #{_lambda_.10} parent=0 // pred_fallthru
    _
  // Predicated region
  $region18: #{_lambda_.10} parent=0 // pred_check
    _
  $region19: #{_lambda_.10} parent=0 // pred_check_branch
    %953 = sbr.rel (0) target = $region21
  $region20: #{_lambda_.10} parent=0 // pred_region
    _
  $region21: #{_lambda_.10} parent=0 // pred_fallthru
    _
  // Predicated region
  $region22: #{_lambda_.10} parent=0 // pred_check
    _
  $region23: #{_lambda_.10} parent=0 // pred_check_branch
    %955 = sbr.rel (0) target = $region25
  $region24: #{_lambda_.10} parent=0 // pred_region
    _
  $region25: #{_lambda_.10} parent=0 // pred_fallthru
    _
  // Predicated region
  $region26: #{_lambda_.10} parent=0 // pred_check
    _
  $region27: #{_lambda_.10} parent=0 // pred_check_branch
    %957 = sbr.rel (0) target = $region29
  $region28: #{_lambda_.10} parent=0 // pred_region
    _
  $region29: #{_lambda_.10} parent=0 // pred_fallthru
    _
  // Predicated region
  $region30: #{_lambda_.10} parent=0 // pred_check
    _
  $region31: #{_lambda_.10} parent=0 // pred_check_branch
    %959 = sbr.rel (0) target = $region33
  $region32: #{_lambda_.10} parent=0 // pred_region
    _
  $region33: #{_lambda_.10} parent=0 // pred_fallthru
    _
  // Predicated region
  $region34: #{_lambda_.10} parent=0 // pred_check
    _
  $region35: #{_lambda_.10} parent=0 // pred_check_branch
    %961 = sbr.rel (0) target = $region37
  $region36: #{_lambda_.10} parent=0 // pred_region
    _
  $region37: #{_lambda_.10} parent=0 // pred_fallthru
    _

// kernel: _lambda_.11
$region0: #{_lambda_.11}
  #allocation0 [shape = 'u32[]', space=smem, size = 0x4, offset = 0x4, fixed_abs, tag = 'smem constant byte address 0x4 - core index']
  #allocation1 [shape = 'u32[72,128]{1,0:T(1,128)}', space=vmem, size = 0x9000, scoped, tag = 'internal scratch']
  %s0 = inlined_call_operand.vmem [shape: f32[512,8], index: 0, kind: input, shape index: {}]
  %s1 = inlined_call_operand.vmem [shape: f32[512,8], index: 1, kind: input, shape index: {}]
  %s2 = inlined_call_operand.vmem [shape: f32[512,16], index: 2, kind: input, shape index: {}]
  %s3 = inlined_call_operand.vmem [shape: f32[4,8], index: 3, kind: input, shape index: {}]
  %s4 = inlined_call_operand.vmem [shape: f32[8,8], index: 4, kind: input, shape index: {}]
  %s5 = inlined_call_operand.vmem [shape: f32[1,8], index: 5, kind: input, shape index: {}]
  %s6 = inlined_call_operand.vmem [shape: f32[512,8], index: 6, kind: output, shape index: {0}]
  %s7 = inlined_call_operand.vmem [shape: f32[512,8], index: 7, kind: output, shape index: {1}]
  %8 = xla_tuple %s6, %s7
  %s9 = sld [smem:[#allocation0]]
  $region42: #{_lambda_.11} parent=0
    _
  %s11 = ssub.s32 1, %s9
  %s12 = scalar_select 0, %s11, %s9
  // Predicated region
  $region2: #{_lambda_.11} parent=0 // pred_check
    _
  $region3: #{_lambda_.11} parent=0 // pred_check_branch
    %14 = sbr.rel (0) target = $region5
  $region4: #{_lambda_.11} parent=0 // pred_region
    _
  $region5: #{_lambda_.11} parent=0 // pred_fallthru
    _
  // Predicated region
  $region6: #{_lambda_.11} parent=0 // pred_check
    _
  $region7: #{_lambda_.11} parent=0 // pred_check_branch
    %16 = sbr.rel (0) target = $region9
  $region8: #{_lambda_.11} parent=0 // pred_region
    _
  $region9: #{_lambda_.11} parent=0 // pred_fallthru
    _
  // Predicated region
  $region10: #{_lambda_.11} parent=0 // pred_check
    _
  $region11: #{_lambda_.11} parent=0 // pred_check_branch
    %18 = sbr.rel (0) target = $region13
  $region12: #{_lambda_.11} parent=0 // pred_region
    _
  $region13: #{_lambda_.11} parent=0 // pred_fallthru
    _
  // Predicated region
  $region14: #{_lambda_.11} parent=0 // pred_check
    _
  $region15: #{_lambda_.11} parent=0 // pred_check_branch
    %20 = sbr.rel (0) target = $region17
  $region16: #{_lambda_.11} parent=0 // pred_region
    _
  $region17: #{_lambda_.11} parent=0 // pred_fallthru
    _
  // Predicated region
  $region18: #{_lambda_.11} parent=0 // pred_check
    _
  $region19: #{_lambda_.11} parent=0 // pred_check_branch
    %22 = sbr.rel (0) target = $region21
  $region20: #{_lambda_.11} parent=0 // pred_region
    _
  $region21: #{_lambda_.11} parent=0 // pred_fallthru
    _
  // Predicated region
  $region22: #{_lambda_.11} parent=0 // pred_check
    _
  $region23: #{_lambda_.11} parent=0 // pred_check_branch
    %24 = sbr.rel (0) target = $region25
  $region24: #{_lambda_.11} parent=0 // pred_region
    _
  $region25: #{_lambda_.11} parent=0 // pred_fallthru
    _
  %v25 = vld [vmem:[%s0] sm:$0xff]
  %v26 = vld [vmem:[%s0 + $0x8] sm:$0xff]
  %v27 = vld [vmem:[%s0 + $0x10] sm:$0xff]
  %v28 = vld [vmem:[%s0 + $0x18] sm:$0xff]
  %v29 = vld [vmem:[%s0 + $0x20] sm:$0xff]
  %v30 = vld [vmem:[%s0 + $0x28] sm:$0xff]
  %v31 = vld [vmem:[%s0 + $0x30] sm:$0xff]
  %v32 = vld [vmem:[%s0 + $0x38] sm:$0xff]
  %v33 = vld [vmem:[%s0 + $0x40] sm:$0xff]
  %v34 = vld [vmem:[%s0 + $0x48] sm:$0xff]
  %v35 = vld [vmem:[%s0 + $0x50] sm:$0xff]
  %v36 = vld [vmem:[%s0 + $0x58] sm:$0xff]
  %v37 = vld [vmem:[%s0 + $0x60] sm:$0xff]
  %v38 = vld [vmem:[%s0 + $0x68] sm:$0xff]
  %v39 = vld [vmem:[%s0 + $0x70] sm:$0xff]
  %v40 = vld [vmem:[%s0 + $0x78] sm:$0xff]
  %v41 = vld [vmem:[%s0 + $0x80] sm:$0xff]
  %v42 = vld [vmem:[%s0 + $0x88] sm:$0xff]
  %v43 = vld [vmem:[%s0 + $0x90] sm:$0xff]
  %v44 = vld [vmem:[%s0 + $0x98] sm:$0xff]
  %v45 = vld [vmem:[%s0 + $0xa0] sm:$0xff]
  %v46 = vld [vmem:[%s0 + $0xa8] sm:$0xff]
  %v47 = vld [vmem:[%s0 + $0xb0] sm:$0xff]
  %v48 = vld [vmem:[%s0 + $0xb8] sm:$0xff]
  %v49 = vld [vmem:[%s0 + $0xc0] sm:$0xff]
  %v50 = vld [vmem:[%s0 + $0xc8] sm:$0xff]
  %v51 = vld [vmem:[%s0 + $0xd0] sm:$0xff]
  %v52 = vld [vmem:[%s0 + $0xd8] sm:$0xff]
  %v53 = vld [vmem:[%s0 + $0xe0] sm:$0xff]
  %v54 = vld [vmem:[%s0 + $0xe8] sm:$0xff]
  %v55 = vld [vmem:[%s0 + $0xf0] sm:$0xff]
  %v56 = vld [vmem:[%s0 + $0xf8] sm:$0xff]
  %v57 = vld [vmem:[%s0 + $0x100] sm:$0xff]
  %v58 = vld [vmem:[%s0 + $0x108] sm:$0xff]
  %v59 = vld [vmem:[%s0 + $0x110] sm:$0xff]
  %v60 = vld [vmem:[%s0 + $0x118] sm:$0xff]
  %v61 = vld [vmem:[%s0 + $0x120] sm:$0xff]
  %v62 = vld [vmem:[%s0 + $0x128] sm:$0xff]
  %v63 = vld [vmem:[%s0 + $0x130] sm:$0xff]
  %v64 = vld [vmem:[%s0 + $0x138] sm:$0xff]
  %v65 = vld [vmem:[%s0 + $0x140] sm:$0xff]
  %v66 = vld [vmem:[%s0 + $0x148] sm:$0xff]
  %v67 = vld [vmem:[%s0 + $0x150] sm:$0xff]
  %v68 = vld [vmem:[%s0 + $0x158] sm:$0xff]
  %v69 = vld [vmem:[%s0 + $0x160] sm:$0xff]
  %v70 = vld [vmem:[%s0 + $0x168] sm:$0xff]
  %v71 = vld [vmem:[%s0 + $0x170] sm:$0xff]
  %v72 = vld [vmem:[%s0 + $0x178] sm:$0xff]
  %v73 = vld [vmem:[%s0 + $0x180] sm:$0xff]
  %v74 = vld [vmem:[%s0 + $0x188] sm:$0xff]
  %v75 = vld [vmem:[%s0 + $0x190] sm:$0xff]
  %v76 = vld [vmem:[%s0 + $0x198] sm:$0xff]
  %v77 = vld [vmem:[%s0 + $0x1a0] sm:$0xff]
  %v78 = vld [vmem:[%s0 + $0x1a8] sm:$0xff]
  %v79 = vld [vmem:[%s0 + $0x1b0] sm:$0xff]
  %v80 = vld [vmem:[%s0 + $0x1b8] sm:$0xff]
  %v81 = vld [vmem:[%s0 + $0x1c0] sm:$0xff]
  %v82 = vld [vmem:[%s0 + $0x1c8] sm:$0xff]
  %v83 = vld [vmem:[%s0 + $0x1d0] sm:$0xff]
  %v84 = vld [vmem:[%s0 + $0x1d8] sm:$0xff]
  %v85 = vld [vmem:[%s0 + $0x1e0] sm:$0xff]
  %v86 = vld [vmem:[%s0 + $0x1e8] sm:$0xff]
  %v87 = vld [vmem:[%s0 + $0x1f0] sm:$0xff]
  %v88 = vld [vmem:[%s0 + $0x1f8] sm:$0xff]
  %v89 = vld [vmem:[%s3] sm:$0x1]
  %v90 = vperm.slane %v89, 0
  %v91 = vmul.f32 %v25, %v90
  %v92 = vmul.f32 %v26, %v90
  %v93 = vmul.f32 %v27, %v90
  %v94 = vmul.f32 %v28, %v90
  %v95 = vmul.f32 %v29, %v90
  %v96 = vmul.f32 %v30, %v90
  %v97 = vmul.f32 %v31, %v90
  %v98 = vmul.f32 %v32, %v90
  %v99 = vmul.f32 %v33, %v90
  %v100 = vmul.f32 %v34, %v90
  %v101 = vmul.f32 %v35, %v90
  %v102 = vmul.f32 %v36, %v90
  %v103 = vmul.f32 %v37, %v90
  %v104 = vmul.f32 %v38, %v90
  %v105 = vmul.f32 %v39, %v90
  %v106 = vmul.f32 %v40, %v90
  %v107 = vmul.f32 %v41, %v90
  %v108 = vmul.f32 %v42, %v90
  %v109 = vmul.f32 %v43, %v90
  %v110 = vmul.f32 %v44, %v90
  %v111 = vmul.f32 %v45, %v90
  %v112 = vmul.f32 %v46, %v90
  %v113 = vmul.f32 %v47, %v90
  %v114 = vmul.f32 %v48, %v90
  %v115 = vmul.f32 %v49, %v90
  %v116 = vmul.f32 %v50, %v90
  %v117 = vmul.f32 %v51, %v90
  %v118 = vmul.f32 %v52, %v90
  %v119 = vmul.f32 %v53, %v90
  %v120 = vmul.f32 %v54, %v90
  %v121 = vmul.f32 %v55, %v90
  %v122 = vmul.f32 %v56, %v90
  %v123 = vmul.f32 %v57, %v90
  %v124 = vmul.f32 %v58, %v90
  %v125 = vmul.f32 %v59, %v90
  %v126 = vmul.f32 %v60, %v90
  %v127 = vmul.f32 %v61, %v90
  %v128 = vmul.f32 %v62, %v90
  %v129 = vmul.f32 %v63, %v90
  %v130 = vmul.f32 %v64, %v90
  %v131 = vmul.f32 %v65, %v90
  %v132 = vmul.f32 %v66, %v90
  %v133 = vmul.f32 %v67, %v90
  %v134 = vmul.f32 %v68, %v90
  %v135 = vmul.f32 %v69, %v90
  %v136 = vmul.f32 %v70, %v90
  %v137 = vmul.f32 %v71, %v90
  %v138 = vmul.f32 %v72, %v90
  %v139 = vmul.f32 %v73, %v90
  %v140 = vmul.f32 %v74, %v90
  %v141 = vmul.f32 %v75, %v90
  %v142 = vmul.f32 %v76, %v90
  %v143 = vmul.f32 %v77, %v90
  %v144 = vmul.f32 %v78, %v90
  %v145 = vmul.f32 %v79, %v90
  %v146 = vmul.f32 %v80, %v90
  %v147 = vmul.f32 %v81, %v90
  %v148 = vmul.f32 %v82, %v90
  %v149 = vmul.f32 %v83, %v90
  %v150 = vmul.f32 %v84, %v90
  %v151 = vmul.f32 %v85, %v90
  %v152 = vmul.f32 %v86, %v90
  %v153 = vmul.f32 %v87, %v90
  %v154 = vmul.f32 %v88, %v90
  %v155 = vld [vmem:[%s3 + $0x1] sm:$0x1]
  %v156 = vperm.slane %v155, 0
  %v157 = vadd.f32 %v91, %v156
  %v158 = vadd.f32 %v92, %v156
  %v159 = vadd.f32 %v93, %v156
  %v160 = vadd.f32 %v94, %v156
  %v161 = vadd.f32 %v95, %v156
  %v162 = vadd.f32 %v96, %v156
  %v163 = vadd.f32 %v97, %v156
  %v164 = vadd.f32 %v98, %v156
  %v165 = vadd.f32 %v99, %v156
  %v166 = vadd.f32 %v100, %v156
  %v167 = vadd.f32 %v101, %v156
  %v168 = vadd.f32 %v102, %v156
  %v169 = vadd.f32 %v103, %v156
  %v170 = vadd.f32 %v104, %v156
  %v171 = vadd.f32 %v105, %v156
  %v172 = vadd.f32 %v106, %v156
  %v173 = vadd.f32 %v107, %v156
  %v174 = vadd.f32 %v108, %v156
  %v175 = vadd.f32 %v109, %v156
  %v176 = vadd.f32 %v110, %v156
  %v177 = vadd.f32 %v111, %v156
  %v178 = vadd.f32 %v112, %v156
  %v179 = vadd.f32 %v113, %v156
  %v180 = vadd.f32 %v114, %v156
  %v181 = vadd.f32 %v115, %v156
  %v182 = vadd.f32 %v116, %v156
  %v183 = vadd.f32 %v117, %v156
  %v184 = vadd.f32 %v118, %v156
  %v185 = vadd.f32 %v119, %v156
  %v186 = vadd.f32 %v120, %v156
  %v187 = vadd.f32 %v121, %v156
  %v188 = vadd.f32 %v122, %v156
  %v189 = vadd.f32 %v123, %v156
  %v190 = vadd.f32 %v124, %v156
  %v191 = vadd.f32 %v125, %v156
  %v192 = vadd.f32 %v126, %v156
  %v193 = vadd.f32 %v127, %v156
  %v194 = vadd.f32 %v128, %v156
  %v195 = vadd.f32 %v129, %v156
  %v196 = vadd.f32 %v130, %v156
  %v197 = vadd.f32 %v131, %v156
  %v198 = vadd.f32 %v132, %v156
  %v199 = vadd.f32 %v133, %v156
  %v200 = vadd.f32 %v134, %v156
  %v201 = vadd.f32 %v135, %v156
  %v202 = vadd.f32 %v136, %v156
  %v203 = vadd.f32 %v137, %v156
  %v204 = vadd.f32 %v138, %v156
  %v205 = vadd.f32 %v139, %v156
  %v206 = vadd.f32 %v140, %v156
  %v207 = vadd.f32 %v141, %v156
  %v208 = vadd.f32 %v142, %v156
  %v209 = vadd.f32 %v143, %v156
  %v210 = vadd.f32 %v144, %v156
  %v211 = vadd.f32 %v145, %v156
  %v212 = vadd.f32 %v146, %v156
  %v213 = vadd.f32 %v147, %v156
  %v214 = vadd.f32 %v148, %v156
  %v215 = vadd.f32 %v149, %v156
  %v216 = vadd.f32 %v150, %v156
  %v217 = vadd.f32 %v151, %v156
  %v218 = vadd.f32 %v152, %v156
  %v219 = vadd.f32 %v153, %v156
  %v220 = vadd.f32 %v154, %v156
  %v221 = vmax.f32 %v157, 0.0
  %v222 = vmax.f32 %v158, 0.0
  %v223 = vmax.f32 %v159, 0.0
  %v224 = vmax.f32 %v160, 0.0
  %v225 = vmax.f32 %v161, 0.0
  %v226 = vmax.f32 %v162, 0.0
  %v227 = vmax.f32 %v163, 0.0
  %v228 = vmax.f32 %v164, 0.0
  %v229 = vmax.f32 %v165, 0.0
  %v230 = vmax.f32 %v166, 0.0
  %v231 = vmax.f32 %v167, 0.0
  %v232 = vmax.f32 %v168, 0.0
  %v233 = vmax.f32 %v169, 0.0
  %v234 = vmax.f32 %v170, 0.0
  %v235 = vmax.f32 %v171, 0.0
  %v236 = vmax.f32 %v172, 0.0
  %v237 = vmax.f32 %v173, 0.0
  %v238 = vmax.f32 %v174, 0.0
  %v239 = vmax.f32 %v175, 0.0
  %v240 = vmax.f32 %v176, 0.0
  %v241 = vmax.f32 %v177, 0.0
  %v242 = vmax.f32 %v178, 0.0
  %v243 = vmax.f32 %v179, 0.0
  %v244 = vmax.f32 %v180, 0.0
  %v245 = vmax.f32 %v181, 0.0
  %v246 = vmax.f32 %v182, 0.0
  %v247 = vmax.f32 %v183, 0.0
  %v248 = vmax.f32 %v184, 0.0
  %v249 = vmax.f32 %v185, 0.0
  %v250 = vmax.f32 %v186, 0.0
  %v251 = vmax.f32 %v187, 0.0
  %v252 = vmax.f32 %v188, 0.0
  %v253 = vmax.f32 %v189, 0.0
  %v254 = vmax.f32 %v190, 0.0
  %v255 = vmax.f32 %v191, 0.0
  %v256 = vmax.f32 %v192, 0.0
  %v257 = vmax.f32 %v193, 0.0
  %v258 = vmax.f32 %v194, 0.0
  %v259 = vmax.f32 %v195, 0.0
  %v260 = vmax.f32 %v196, 0.0
  %v261 = vmax.f32 %v197, 0.0
  %v262 = vmax.f32 %v198, 0.0
  %v263 = vmax.f32 %v199, 0.0
  %v264 = vmax.f32 %v200, 0.0
  %v265 = vmax.f32 %v201, 0.0
  %v266 = vmax.f32 %v202, 0.0
  %v267 = vmax.f32 %v203, 0.0
  %v268 = vmax.f32 %v204, 0.0
  %v269 = vmax.f32 %v205, 0.0
  %v270 = vmax.f32 %v206, 0.0
  %v271 = vmax.f32 %v207, 0.0
  %v272 = vmax.f32 %v208, 0.0
  %v273 = vmax.f32 %v209, 0.0
  %v274 = vmax.f32 %v210, 0.0
  %v275 = vmax.f32 %v211, 0.0
  %v276 = vmax.f32 %v212, 0.0
  %v277 = vmax.f32 %v213, 0.0
  %v278 = vmax.f32 %v214, 0.0
  %v279 = vmax.f32 %v215, 0.0
  %v280 = vmax.f32 %v216, 0.0
  %v281 = vmax.f32 %v217, 0.0
  %v282 = vmax.f32 %v218, 0.0
  %v283 = vmax.f32 %v219, 0.0
  %v284 = vmax.f32 %v220, 0.0
  %v285 = vld [vmem:[%s2] sm:$0xff]
  %v286 = vld [vmem:[%s2 + $0x8] sm:$0xff]
  %v287 = vld [vmem:[%s2 + $0x10] sm:$0xff]
  %v288 = vld [vmem:[%s2 + $0x18] sm:$0xff]
  %v289 = vld [vmem:[%s2 + $0x20] sm:$0xff]
  %v290 = vld [vmem:[%s2 + $0x28] sm:$0xff]
  %v291 = vld [vmem:[%s2 + $0x30] sm:$0xff]
  %v292 = vld [vmem:[%s2 + $0x38] sm:$0xff]
  %v293 = vld [vmem:[%s2 + $0x40] sm:$0xff]
  %v294 = vld [vmem:[%s2 + $0x48] sm:$0xff]
  %v295 = vld [vmem:[%s2 + $0x50] sm:$0xff]
  %v296 = vld [vmem:[%s2 + $0x58] sm:$0xff]
  %v297 = vld [vmem:[%s2 + $0x60] sm:$0xff]
  %v298 = vld [vmem:[%s2 + $0x68] sm:$0xff]
  %v299 = vld [vmem:[%s2 + $0x70] sm:$0xff]
  %v300 = vld [vmem:[%s2 + $0x78] sm:$0xff]
  %v301 = vld [vmem:[%s2 + $0x80] sm:$0xff]
  %v302 = vld [vmem:[%s2 + $0x88] sm:$0xff]
  %v303 = vld [vmem:[%s2 + $0x90] sm:$0xff]
  %v304 = vld [vmem:[%s2 + $0x98] sm:$0xff]
  %v305 = vld [vmem:[%s2 + $0xa0] sm:$0xff]
  %v306 = vld [vmem:[%s2 + $0xa8] sm:$0xff]
  %v307 = vld [vmem:[%s2 + $0xb0] sm:$0xff]
  %v308 = vld [vmem:[%s2 + $0xb8] sm:$0xff]
  %v309 = vld [vmem:[%s2 + $0xc0] sm:$0xff]
  %v310 = vld [vmem:[%s2 + $0xc8] sm:$0xff]
  %v311 = vld [vmem:[%s2 + $0xd0] sm:$0xff]
  %v312 = vld [vmem:[%s2 + $0xd8] sm:$0xff]
  %v313 = vld [vmem:[%s2 + $0xe0] sm:$0xff]
  %v314 = vld [vmem:[%s2 + $0xe8] sm:$0xff]
  %v315 = vld [vmem:[%s2 + $0xf0] sm:$0xff]
  %v316 = vld [vmem:[%s2 + $0xf8] sm:$0xff]
  %v317 = vld [vmem:[%s2 + $0x100] sm:$0xff]
  %v318 = vld [vmem:[%s2 + $0x108] sm:$0xff]
  %v319 = vld [vmem:[%s2 + $0x110] sm:$0xff]
  %v320 = vld [vmem:[%s2 + $0x118] sm:$0xff]
  %v321 = vld [vmem:[%s2 + $0x120] sm:$0xff]
  %v322 = vld [vmem:[%s2 + $0x128] sm:$0xff]
  %v323 = vld [vmem:[%s2 + $0x130] sm:$0xff]
  %v324 = vld [vmem:[%s2 + $0x138] sm:$0xff]
  %v325 = vld [vmem:[%s2 + $0x140] sm:$0xff]
  %v326 = vld [vmem:[%s2 + $0x148] sm:$0xff]
  %v327 = vld [vmem:[%s2 + $0x150] sm:$0xff]
  %v328 = vld [vmem:[%s2 + $0x158] sm:$0xff]
  %v329 = vld [vmem:[%s2 + $0x160] sm:$0xff]
  %v330 = vld [vmem:[%s2 + $0x168] sm:$0xff]
  %v331 = vld [vmem:[%s2 + $0x170] sm:$0xff]
  %v332 = vld [vmem:[%s2 + $0x178] sm:$0xff]
  %v333 = vld [vmem:[%s2 + $0x180] sm:$0xff]
  %v334 = vld [vmem:[%s2 + $0x188] sm:$0xff]
  %v335 = vld [vmem:[%s2 + $0x190] sm:$0xff]
  %v336 = vld [vmem:[%s2 + $0x198] sm:$0xff]
  %v337 = vld [vmem:[%s2 + $0x1a0] sm:$0xff]
  %v338 = vld [vmem:[%s2 + $0x1a8] sm:$0xff]
  %v339 = vld [vmem:[%s2 + $0x1b0] sm:$0xff]
  %v340 = vld [vmem:[%s2 + $0x1b8] sm:$0xff]
  %v341 = vld [vmem:[%s2 + $0x1c0] sm:$0xff]
  %v342 = vld [vmem:[%s2 + $0x1c8] sm:$0xff]
  %v343 = vld [vmem:[%s2 + $0x1d0] sm:$0xff]
  %v344 = vld [vmem:[%s2 + $0x1d8] sm:$0xff]
  %v345 = vld [vmem:[%s2 + $0x1e0] sm:$0xff]
  %v346 = vld [vmem:[%s2 + $0x1e8] sm:$0xff]
  %v347 = vld [vmem:[%s2 + $0x1f0] sm:$0xff]
  %v348 = vld [vmem:[%s2 + $0x1f8] sm:$0xff]
  %v349 = vadd.f32 %v221, %v285
  %v350 = vadd.f32 %v222, %v286
  %v351 = vadd.f32 %v223, %v287
  %v352 = vadd.f32 %v224, %v288
  %v353 = vadd.f32 %v225, %v289
  %v354 = vadd.f32 %v226, %v290
  %v355 = vadd.f32 %v227, %v291
  %v356 = vadd.f32 %v228, %v292
  %v357 = vadd.f32 %v229, %v293
  %v358 = vadd.f32 %v230, %v294
  %v359 = vadd.f32 %v231, %v295
  %v360 = vadd.f32 %v232, %v296
  %v361 = vadd.f32 %v233, %v297
  %v362 = vadd.f32 %v234, %v298
  %v363 = vadd.f32 %v235, %v299
  %v364 = vadd.f32 %v236, %v300
  %v365 = vadd.f32 %v237, %v301
  %v366 = vadd.f32 %v238, %v302
  %v367 = vadd.f32 %v239, %v303
  %v368 = vadd.f32 %v240, %v304
  %v369 = vadd.f32 %v241, %v305
  %v370 = vadd.f32 %v242, %v306
  %v371 = vadd.f32 %v243, %v307
  %v372 = vadd.f32 %v244, %v308
  %v373 = vadd.f32 %v245, %v309
  %v374 = vadd.f32 %v246, %v310
  %v375 = vadd.f32 %v247, %v311
  %v376 = vadd.f32 %v248, %v312
  %v377 = vadd.f32 %v249, %v313
  %v378 = vadd.f32 %v250, %v314
  %v379 = vadd.f32 %v251, %v315
  %v380 = vadd.f32 %v252, %v316
  %v381 = vadd.f32 %v253, %v317
  %v382 = vadd.f32 %v254, %v318
  %v383 = vadd.f32 %v255, %v319
  %v384 = vadd.f32 %v256, %v320
  %v385 = vadd.f32 %v257, %v321
  %v386 = vadd.f32 %v258, %v322
  %v387 = vadd.f32 %v259, %v323
  %v388 = vadd.f32 %v260, %v324
  %v389 = vadd.f32 %v261, %v325
  %v390 = vadd.f32 %v262, %v326
  %v391 = vadd.f32 %v263, %v327
  %v392 = vadd.f32 %v264, %v328
  %v393 = vadd.f32 %v265, %v329
  %v394 = vadd.f32 %v266, %v330
  %v395 = vadd.f32 %v267, %v331
  %v396 = vadd.f32 %v268, %v332
  %v397 = vadd.f32 %v269, %v333
  %v398 = vadd.f32 %v270, %v334
  %v399 = vadd.f32 %v271, %v335
  %v400 = vadd.f32 %v272, %v336
  %v401 = vadd.f32 %v273, %v337
  %v402 = vadd.f32 %v274, %v338
  %v403 = vadd.f32 %v275, %v339
  %v404 = vadd.f32 %v276, %v340
  %v405 = vadd.f32 %v277, %v341
  %v406 = vadd.f32 %v278, %v342
  %v407 = vadd.f32 %v279, %v343
  %v408 = vadd.f32 %v280, %v344
  %v409 = vadd.f32 %v281, %v345
  %v410 = vadd.f32 %v282, %v346
  %v411 = vadd.f32 %v283, %v347
  %v412 = vadd.f32 %v284, %v348
  %v413 = vld [vmem:[%s1] sm:$0xff]
  %v414 = vld [vmem:[%s1 + $0x8] sm:$0xff]
  %v415 = vld [vmem:[%s1 + $0x10] sm:$0xff]
  %v416 = vld [vmem:[%s1 + $0x18] sm:$0xff]
  %v417 = vld [vmem:[%s1 + $0x20] sm:$0xff]
  %v418 = vld [vmem:[%s1 + $0x28] sm:$0xff]
  %v419 = vld [vmem:[%s1 + $0x30] sm:$0xff]
  %v420 = vld [vmem:[%s1 + $0x38] sm:$0xff]
  %v421 = vld [vmem:[%s1 + $0x40] sm:$0xff]
  %v422 = vld [vmem:[%s1 + $0x48] sm:$0xff]
  %v423 = vld [vmem:[%s1 + $0x50] sm:$0xff]
  %v424 = vld [vmem:[%s1 + $0x58] sm:$0xff]
  %v425 = vld [vmem:[%s1 + $0x60] sm:$0xff]
  %v426 = vld [vmem:[%s1 + $0x68] sm:$0xff]
  %v427 = vld [vmem:[%s1 + $0x70] sm:$0xff]
  %v428 = vld [vmem:[%s1 + $0x78] sm:$0xff]
  %v429 = vld [vmem:[%s1 + $0x80] sm:$0xff]
  %v430 = vld [vmem:[%s1 + $0x88] sm:$0xff]
  %v431 = vld [vmem:[%s1 + $0x90] sm:$0xff]
  %v432 = vld [vmem:[%s1 + $0x98] sm:$0xff]
  %v433 = vld [vmem:[%s1 + $0xa0] sm:$0xff]
  %v434 = vld [vmem:[%s1 + $0xa8] sm:$0xff]
  %v435 = vld [vmem:[%s1 + $0xb0] sm:$0xff]
  %v436 = vld [vmem:[%s1 + $0xb8] sm:$0xff]
  %v437 = vld [vmem:[%s1 + $0xc0] sm:$0xff]
  %v438 = vld [vmem:[%s1 + $0xc8] sm:$0xff]
  %v439 = vld [vmem:[%s1 + $0xd0] sm:$0xff]
  %v440 = vld [vmem:[%s1 + $0xd8] sm:$0xff]
  %v441 = vld [vmem:[%s1 + $0xe0] sm:$0xff]
  %v442 = vld [vmem:[%s1 + $0xe8] sm:$0xff]
  %v443 = vld [vmem:[%s1 + $0xf0] sm:$0xff]
  %v444 = vld [vmem:[%s1 + $0xf8] sm:$0xff]
  %v445 = vld [vmem:[%s1 + $0x100] sm:$0xff]
  %v446 = vld [vmem:[%s1 + $0x108] sm:$0xff]
  %v447 = vld [vmem:[%s1 + $0x110] sm:$0xff]
  %v448 = vld [vmem:[%s1 + $0x118] sm:$0xff]
  %v449 = vld [vmem:[%s1 + $0x120] sm:$0xff]
  %v450 = vld [vmem:[%s1 + $0x128] sm:$0xff]
  %v451 = vld [vmem:[%s1 + $0x130] sm:$0xff]
  %v452 = vld [vmem:[%s1 + $0x138] sm:$0xff]
  %v453 = vld [vmem:[%s1 + $0x140] sm:$0xff]
  %v454 = vld [vmem:[%s1 + $0x148] sm:$0xff]
  %v455 = vld [vmem:[%s1 + $0x150] sm:$0xff]
  %v456 = vld [vmem:[%s1 + $0x158] sm:$0xff]
  %v457 = vld [vmem:[%s1 + $0x160] sm:$0xff]
  %v458 = vld [vmem:[%s1 + $0x168] sm:$0xff]
  %v459 = vld [vmem:[%s1 + $0x170] sm:$0xff]
  %v460 = vld [vmem:[%s1 + $0x178] sm:$0xff]
  %v461 = vld [vmem:[%s1 + $0x180] sm:$0xff]
  %v462 = vld [vmem:[%s1 + $0x188] sm:$0xff]
  %v463 = vld [vmem:[%s1 + $0x190] sm:$0xff]
  %v464 = vld [vmem:[%s1 + $0x198] sm:$0xff]
  %v465 = vld [vmem:[%s1 + $0x1a0] sm:$0xff]
  %v466 = vld [vmem:[%s1 + $0x1a8] sm:$0xff]
  %v467 = vld [vmem:[%s1 + $0x1b0] sm:$0xff]
  %v468 = vld [vmem:[%s1 + $0x1b8] sm:$0xff]
  %v469 = vld [vmem:[%s1 + $0x1c0] sm:$0xff]
  %v470 = vld [vmem:[%s1 + $0x1c8] sm:$0xff]
  %v471 = vld [vmem:[%s1 + $0x1d0] sm:$0xff]
  %v472 = vld [vmem:[%s1 + $0x1d8] sm:$0xff]
  %v473 = vld [vmem:[%s1 + $0x1e0] sm:$0xff]
  %v474 = vld [vmem:[%s1 + $0x1e8] sm:$0xff]
  %v475 = vld [vmem:[%s1 + $0x1f0] sm:$0xff]
  %v476 = vld [vmem:[%s1 + $0x1f8] sm:$0xff]
  %v477 = vld [vmem:[%s3 + $0x2] sm:$0x1]
  %v478 = vperm.slane %v477, 0
  %v479 = vmul.f32 %v413, %v478
  %v480 = vmul.f32 %v414, %v478
  %v481 = vmul.f32 %v415, %v478
  %v482 = vmul.f32 %v416, %v478
  %v483 = vmul.f32 %v417, %v478
  %v484 = vmul.f32 %v418, %v478
  %v485 = vmul.f32 %v419, %v478
  %v486 = vmul.f32 %v420, %v478
  %v487 = vmul.f32 %v421, %v478
  %v488 = vmul.f32 %v422, %v478
  %v489 = vmul.f32 %v423, %v478
  %v490 = vmul.f32 %v424, %v478
  %v491 = vmul.f32 %v425, %v478
  %v492 = vmul.f32 %v426, %v478
  %v493 = vmul.f32 %v427, %v478
  %v494 = vmul.f32 %v428, %v478
  %v495 = vmul.f32 %v429, %v478
  %v496 = vmul.f32 %v430, %v478
  %v497 = vmul.f32 %v431, %v478
  %v498 = vmul.f32 %v432, %v478
  %v499 = vmul.f32 %v433, %v478
  %v500 = vmul.f32 %v434, %v478
  %v501 = vmul.f32 %v435, %v478
  %v502 = vmul.f32 %v436, %v478
  %v503 = vmul.f32 %v437, %v478
  %v504 = vmul.f32 %v438, %v478
  %v505 = vmul.f32 %v439, %v478
  %v506 = vmul.f32 %v440, %v478
  %v507 = vmul.f32 %v441, %v478
  %v508 = vmul.f32 %v442, %v478
  %v509 = vmul.f32 %v443, %v478
  %v510 = vmul.f32 %v444, %v478
  %v511 = vmul.f32 %v445, %v478
  %v512 = vmul.f32 %v446, %v478
  %v513 = vmul.f32 %v447, %v478
  %v514 = vmul.f32 %v448, %v478
  %v515 = vmul.f32 %v449, %v478
  %v516 = vmul.f32 %v450, %v478
  %v517 = vmul.f32 %v451, %v478
  %v518 = vmul.f32 %v452, %v478
  %v519 = vmul.f32 %v453, %v478
  %v520 = vmul.f32 %v454, %v478
  %v521 = vmul.f32 %v455, %v478
  %v522 = vmul.f32 %v456, %v478
  %v523 = vmul.f32 %v457, %v478
  %v524 = vmul.f32 %v458, %v478
  %v525 = vmul.f32 %v459, %v478
  %v526 = vmul.f32 %v460, %v478
  %v527 = vmul.f32 %v461, %v478
  %v528 = vmul.f32 %v462, %v478
  %v529 = vmul.f32 %v463, %v478
  %v530 = vmul.f32 %v464, %v478
  %v531 = vmul.f32 %v465, %v478
  %v532 = vmul.f32 %v466, %v478
  %v533 = vmul.f32 %v467, %v478
  %v534 = vmul.f32 %v468, %v478
  %v535 = vmul.f32 %v469, %v478
  %v536 = vmul.f32 %v470, %v478
  %v537 = vmul.f32 %v471, %v478
  %v538 = vmul.f32 %v472, %v478
  %v539 = vmul.f32 %v473, %v478
  %v540 = vmul.f32 %v474, %v478
  %v541 = vmul.f32 %v475, %v478
  %v542 = vmul.f32 %v476, %v478
  %v543 = vld [vmem:[%s3 + $0x3] sm:$0x1]
  %v544 = vperm.slane %v543, 0
  %v545 = vadd.f32 %v479, %v544
  %v546 = vadd.f32 %v480, %v544
  %v547 = vadd.f32 %v481, %v544
  %v548 = vadd.f32 %v482, %v544
  %v549 = vadd.f32 %v483, %v544
  %v550 = vadd.f32 %v484, %v544
  %v551 = vadd.f32 %v485, %v544
  %v552 = vadd.f32 %v486, %v544
  %v553 = vadd.f32 %v487, %v544
  %v554 = vadd.f32 %v488, %v544
  %v555 = vadd.f32 %v489, %v544
  %v556 = vadd.f32 %v490, %v544
  %v557 = vadd.f32 %v491, %v544
  %v558 = vadd.f32 %v492, %v544
  %v559 = vadd.f32 %v493, %v544
  %v560 = vadd.f32 %v494, %v544
  %v561 = vadd.f32 %v495, %v544
  %v562 = vadd.f32 %v496, %v544
  %v563 = vadd.f32 %v497, %v544
  %v564 = vadd.f32 %v498, %v544
  %v565 = vadd.f32 %v499, %v544
  %v566 = vadd.f32 %v500, %v544
  %v567 = vadd.f32 %v501, %v544
  %v568 = vadd.f32 %v502, %v544
  %v569 = vadd.f32 %v503, %v544
  %v570 = vadd.f32 %v504, %v544
  %v571 = vadd.f32 %v505, %v544
  %v572 = vadd.f32 %v506, %v544
  %v573 = vadd.f32 %v507, %v544
  %v574 = vadd.f32 %v508, %v544
  %v575 = vadd.f32 %v509, %v544
  %v576 = vadd.f32 %v510, %v544
  %v577 = vadd.f32 %v511, %v544
  %v578 = vadd.f32 %v512, %v544
  %v579 = vadd.f32 %v513, %v544
  %v580 = vadd.f32 %v514, %v544
  %v581 = vadd.f32 %v515, %v544
  %v582 = vadd.f32 %v516, %v544
  %v583 = vadd.f32 %v517, %v544
  %v584 = vadd.f32 %v518, %v544
  %v585 = vadd.f32 %v519, %v544
  %v586 = vadd.f32 %v520, %v544
  %v587 = vadd.f32 %v521, %v544
  %v588 = vadd.f32 %v522, %v544
  %v589 = vadd.f32 %v523, %v544
  %v590 = vadd.f32 %v524, %v544
  %v591 = vadd.f32 %v525, %v544
  %v592 = vadd.f32 %v526, %v544
  %v593 = vadd.f32 %v527, %v544
  %v594 = vadd.f32 %v528, %v544
  %v595 = vadd.f32 %v529, %v544
  %v596 = vadd.f32 %v530, %v544
  %v597 = vadd.f32 %v531, %v544
  %v598 = vadd.f32 %v532, %v544
  %v599 = vadd.f32 %v533, %v544
  %v600 = vadd.f32 %v534, %v544
  %v601 = vadd.f32 %v535, %v544
  %v602 = vadd.f32 %v536, %v544
  %v603 = vadd.f32 %v537, %v544
  %v604 = vadd.f32 %v538, %v544
  %v605 = vadd.f32 %v539, %v544
  %v606 = vadd.f32 %v540, %v544
  %v607 = vadd.f32 %v541, %v544
  %v608 = vadd.f32 %v542, %v544
  %v609 = vmax.f32 %v545, 0.0
  %v610 = vmax.f32 %v546, 0.0
  %v611 = vmax.f32 %v547, 0.0
  %v612 = vmax.f32 %v548, 0.0
  %v613 = vmax.f32 %v549, 0.0
  %v614 = vmax.f32 %v550, 0.0
  %v615 = vmax.f32 %v551, 0.0
  %v616 = vmax.f32 %v552, 0.0
  %v617 = vmax.f32 %v553, 0.0
  %v618 = vmax.f32 %v554, 0.0
  %v619 = vmax.f32 %v555, 0.0
  %v620 = vmax.f32 %v556, 0.0
  %v621 = vmax.f32 %v557, 0.0
  %v622 = vmax.f32 %v558, 0.0
  %v623 = vmax.f32 %v559, 0.0
  %v624 = vmax.f32 %v560, 0.0
  %v625 = vmax.f32 %v561, 0.0
  %v626 = vmax.f32 %v562, 0.0
  %v627 = vmax.f32 %v563, 0.0
  %v628 = vmax.f32 %v564, 0.0
  %v629 = vmax.f32 %v565, 0.0
  %v630 = vmax.f32 %v566, 0.0
  %v631 = vmax.f32 %v567, 0.0
  %v632 = vmax.f32 %v568, 0.0
  %v633 = vmax.f32 %v569, 0.0
  %v634 = vmax.f32 %v570, 0.0
  %v635 = vmax.f32 %v571, 0.0
  %v636 = vmax.f32 %v572, 0.0
  %v637 = vmax.f32 %v573, 0.0
  %v638 = vmax.f32 %v574, 0.0
  %v639 = vmax.f32 %v575, 0.0
  %v640 = vmax.f32 %v576, 0.0
  %v641 = vmax.f32 %v577, 0.0
  %v642 = vmax.f32 %v578, 0.0
  %v643 = vmax.f32 %v579, 0.0
  %v644 = vmax.f32 %v580, 0.0
  %v645 = vmax.f32 %v581, 0.0
  %v646 = vmax.f32 %v582, 0.0
  %v647 = vmax.f32 %v583, 0.0
  %v648 = vmax.f32 %v584, 0.0
  %v649 = vmax.f32 %v585, 0.0
  %v650 = vmax.f32 %v586, 0.0
  %v651 = vmax.f32 %v587, 0.0
  %v652 = vmax.f32 %v588, 0.0
  %v653 = vmax.f32 %v589, 0.0
  %v654 = vmax.f32 %v590, 0.0
  %v655 = vmax.f32 %v591, 0.0
  %v656 = vmax.f32 %v592, 0.0
  %v657 = vmax.f32 %v593, 0.0
  %v658 = vmax.f32 %v594, 0.0
  %v659 = vmax.f32 %v595, 0.0
  %v660 = vmax.f32 %v596, 0.0
  %v661 = vmax.f32 %v597, 0.0
  %v662 = vmax.f32 %v598, 0.0
  %v663 = vmax.f32 %v599, 0.0
  %v664 = vmax.f32 %v600, 0.0
  %v665 = vmax.f32 %v601, 0.0
  %v666 = vmax.f32 %v602, 0.0
  %v667 = vmax.f32 %v603, 0.0
  %v668 = vmax.f32 %v604, 0.0
  %v669 = vmax.f32 %v605, 0.0
  %v670 = vmax.f32 %v606, 0.0
  %v671 = vmax.f32 %v607, 0.0
  %v672 = vmax.f32 %v608, 0.0
  %737 = vrot.lane.b32.xlu0 %v285, 120
  %v738 = vpop.permute.xlu0 %737
  %739 = vrot.lane.b32.xlu0 %v286, 120
  %v740 = vpop.permute.xlu0 %739
  %741 = vrot.lane.b32.xlu0 %v287, 120
  %v742 = vpop.permute.xlu0 %741
  %743 = vrot.lane.b32.xlu0 %v288, 120
  %v744 = vpop.permute.xlu0 %743
  %745 = vrot.lane.b32.xlu0 %v289, 120
  %v746 = vpop.permute.xlu0 %745
  %747 = vrot.lane.b32.xlu0 %v290, 120
  %v748 = vpop.permute.xlu0 %747
  %749 = vrot.lane.b32.xlu0 %v291, 120
  %v750 = vpop.permute.xlu0 %749
  %751 = vrot.lane.b32.xlu0 %v292, 120
  %v752 = vpop.permute.xlu0 %751
  %753 = vrot.lane.b32.xlu0 %v293, 120
  %v754 = vpop.permute.xlu0 %753
  %755 = vrot.lane.b32.xlu0 %v294, 120
  %v756 = vpop.permute.xlu0 %755
  %757 = vrot.lane.b32.xlu0 %v295, 120
  %v758 = vpop.permute.xlu0 %757
  %759 = vrot.lane.b32.xlu0 %v296, 120
  %v760 = vpop.permute.xlu0 %759
  %761 = vrot.lane.b32.xlu0 %v297, 120
  %v762 = vpop.permute.xlu0 %761
  %763 = vrot.lane.b32.xlu0 %v298, 120
  %v764 = vpop.permute.xlu0 %763
  %765 = vrot.lane.b32.xlu0 %v299, 120
  %v766 = vpop.permute.xlu0 %765
  %767 = vrot.lane.b32.xlu0 %v300, 120
  %v768 = vpop.permute.xlu0 %767
  %769 = vrot.lane.b32.xlu0 %v301, 120
  %v770 = vpop.permute.xlu0 %769
  %771 = vrot.lane.b32.xlu0 %v302, 120
  %v772 = vpop.permute.xlu0 %771
  %773 = vrot.lane.b32.xlu0 %v303, 120
  %v774 = vpop.permute.xlu0 %773
  %775 = vrot.lane.b32.xlu0 %v304, 120
  %v776 = vpop.permute.xlu0 %775
  %777 = vrot.lane.b32.xlu0 %v305, 120
  %v778 = vpop.permute.xlu0 %777
  %779 = vrot.lane.b32.xlu0 %v306, 120
  %v780 = vpop.permute.xlu0 %779
  %781 = vrot.lane.b32.xlu0 %v307, 120
  %v782 = vpop.permute.xlu0 %781
  %783 = vrot.lane.b32.xlu0 %v308, 120
  %v784 = vpop.permute.xlu0 %783
  %785 = vrot.lane.b32.xlu0 %v309, 120
  %v786 = vpop.permute.xlu0 %785
  %787 = vrot.lane.b32.xlu0 %v310, 120
  %v788 = vpop.permute.xlu0 %787
  %789 = vrot.lane.b32.xlu0 %v311, 120
  %v790 = vpop.permute.xlu0 %789
  %791 = vrot.lane.b32.xlu0 %v312, 120
  %v792 = vpop.permute.xlu0 %791
  %793 = vrot.lane.b32.xlu0 %v313, 120
  %v794 = vpop.permute.xlu0 %793
  %795 = vrot.lane.b32.xlu0 %v314, 120
  %v796 = vpop.permute.xlu0 %795
  %797 = vrot.lane.b32.xlu0 %v315, 120
  %v798 = vpop.permute.xlu0 %797
  %799 = vrot.lane.b32.xlu0 %v316, 120
  %v800 = vpop.permute.xlu0 %799
  %801 = vrot.lane.b32.xlu0 %v317, 120
  %v802 = vpop.permute.xlu0 %801
  %803 = vrot.lane.b32.xlu0 %v318, 120
  %v804 = vpop.permute.xlu0 %803
  %805 = vrot.lane.b32.xlu0 %v319, 120
  %v806 = vpop.permute.xlu0 %805
  %807 = vrot.lane.b32.xlu0 %v320, 120
  %v808 = vpop.permute.xlu0 %807
  %809 = vrot.lane.b32.xlu0 %v321, 120
  %v810 = vpop.permute.xlu0 %809
  %811 = vrot.lane.b32.xlu0 %v322, 120
  %v812 = vpop.permute.xlu0 %811
  %813 = vrot.lane.b32.xlu0 %v323, 120
  %v814 = vpop.permute.xlu0 %813
  %815 = vrot.lane.b32.xlu0 %v324, 120
  %v816 = vpop.permute.xlu0 %815
  %817 = vrot.lane.b32.xlu0 %v325, 120
  %v818 = vpop.permute.xlu0 %817
  %819 = vrot.lane.b32.xlu0 %v326, 120
  %v820 = vpop.permute.xlu0 %819
  %821 = vrot.lane.b32.xlu0 %v327, 120
  %v822 = vpop.permute.xlu0 %821
  %823 = vrot.lane.b32.xlu0 %v328, 120
  %v824 = vpop.permute.xlu0 %823
  %825 = vrot.lane.b32.xlu0 %v329, 120
  %v826 = vpop.permute.xlu0 %825
  %827 = vrot.lane.b32.xlu0 %v330, 120
  %v828 = vpop.permute.xlu0 %827
  %829 = vrot.lane.b32.xlu0 %v331, 120
  %v830 = vpop.permute.xlu0 %829
  %831 = vrot.lane.b32.xlu0 %v332, 120
  %v832 = vpop.permute.xlu0 %831
  %833 = vrot.lane.b32.xlu0 %v333, 120
  %v834 = vpop.permute.xlu0 %833
  %835 = vrot.lane.b32.xlu0 %v334, 120
  %v836 = vpop.permute.xlu0 %835
  %837 = vrot.lane.b32.xlu0 %v335, 120
  %v838 = vpop.permute.xlu0 %837
  %839 = vrot.lane.b32.xlu0 %v336, 120
  %v840 = vpop.permute.xlu0 %839
  %841 = vrot.lane.b32.xlu0 %v337, 120
  %v842 = vpop.permute.xlu0 %841
  %843 = vrot.lane.b32.xlu0 %v338, 120
  %v844 = vpop.permute.xlu0 %843
  %845 = vrot.lane.b32.xlu0 %v339, 120
  %v846 = vpop.permute.xlu0 %845
  %847 = vrot.lane.b32.xlu0 %v340, 120
  %v848 = vpop.permute.xlu0 %847
  %849 = vrot.lane.b32.xlu0 %v341, 120
  %v850 = vpop.permute.xlu0 %849
  %851 = vrot.lane.b32.xlu0 %v342, 120
  %v852 = vpop.permute.xlu0 %851
  %853 = vrot.lane.b32.xlu0 %v343, 120
  %v854 = vpop.permute.xlu0 %853
  %855 = vrot.lane.b32.xlu0 %v344, 120
  %v856 = vpop.permute.xlu0 %855
  %857 = vrot.lane.b32.xlu0 %v345, 120
  %v858 = vpop.permute.xlu0 %857
  %859 = vrot.lane.b32.xlu0 %v346, 120
  %v860 = vpop.permute.xlu0 %859
  %861 = vrot.lane.b32.xlu0 %v347, 120
  %v862 = vpop.permute.xlu0 %861
  %863 = vrot.lane.b32.xlu0 %v348, 120
  %v864 = vpop.permute.xlu0 %863
  %v929 = vadd.f32 %v609, %v738
  %v930 = vadd.f32 %v610, %v740
  %v931 = vadd.f32 %v611, %v742
  %v932 = vadd.f32 %v612, %v744
  %v933 = vadd.f32 %v613, %v746
  %v934 = vadd.f32 %v614, %v748
  %v935 = vadd.f32 %v615, %v750
  %v936 = vadd.f32 %v616, %v752
  %v937 = vadd.f32 %v617, %v754
  %v938 = vadd.f32 %v618, %v756
  %v939 = vadd.f32 %v619, %v758
  %v940 = vadd.f32 %v620, %v760
  %v941 = vadd.f32 %v621, %v762
  %v942 = vadd.f32 %v622, %v764
  %v943 = vadd.f32 %v623, %v766
  %v944 = vadd.f32 %v624, %v768
  %v945 = vadd.f32 %v625, %v770
  %v946 = vadd.f32 %v626, %v772
  %v947 = vadd.f32 %v627, %v774
  %v948 = vadd.f32 %v628, %v776
  %v949 = vadd.f32 %v629, %v778
  %v950 = vadd.f32 %v630, %v780
  %v951 = vadd.f32 %v631, %v782
  %v952 = vadd.f32 %v632, %v784
  %v953 = vadd.f32 %v633, %v786
  %v954 = vadd.f32 %v634, %v788
  %v955 = vadd.f32 %v635, %v790
  %v956 = vadd.f32 %v636, %v792
  %v957 = vadd.f32 %v637, %v794
  %v958 = vadd.f32 %v638, %v796
  %v959 = vadd.f32 %v639, %v798
  %v960 = vadd.f32 %v640, %v800
  %v961 = vadd.f32 %v641, %v802
  %v962 = vadd.f32 %v642, %v804
  %v963 = vadd.f32 %v643, %v806
  %v964 = vadd.f32 %v644, %v808
  %v965 = vadd.f32 %v645, %v810
  %v966 = vadd.f32 %v646, %v812
  %v967 = vadd.f32 %v647, %v814
  %v968 = vadd.f32 %v648, %v816
  %v969 = vadd.f32 %v649, %v818
  %v970 = vadd.f32 %v650, %v820
  %v971 = vadd.f32 %v651, %v822
  %v972 = vadd.f32 %v652, %v824
  %v973 = vadd.f32 %v653, %v826
  %v974 = vadd.f32 %v654, %v828
  %v975 = vadd.f32 %v655, %v830
  %v976 = vadd.f32 %v656, %v832
  %v977 = vadd.f32 %v657, %v834
  %v978 = vadd.f32 %v658, %v836
  %v979 = vadd.f32 %v659, %v838
  %v980 = vadd.f32 %v660, %v840
  %v981 = vadd.f32 %v661, %v842
  %v982 = vadd.f32 %v662, %v844
  %v983 = vadd.f32 %v663, %v846
  %v984 = vadd.f32 %v664, %v848
  %v985 = vadd.f32 %v665, %v850
  %v986 = vadd.f32 %v666, %v852
  %v987 = vadd.f32 %v667, %v854
  %v988 = vadd.f32 %v668, %v856
  %v989 = vadd.f32 %v669, %v858
  %v990 = vadd.f32 %v670, %v860
  %v991 = vadd.f32 %v671, %v862
  %v992 = vadd.f32 %v672, %v864
  %v993 = vld [vmem:[%s4] sm:$0xff]
  %v994 = vld [vmem:[%s5] sm:$0x1]
  %v996 = vperm.slane %v994, 0
  %vm998 = vcmask 64512
  %v1000 = vsel %vm998, %v349, 0
  %v1003 = vsel %vm998, %v350, 0
  %v1006 = vsel %vm998, %v351, 0
  %v1009 = vsel %vm998, %v352, 0
  %v1012 = vsel %vm998, %v353, 0
  %v1015 = vsel %vm998, %v354, 0
  %v1018 = vsel %vm998, %v355, 0
  %v1021 = vsel %vm998, %v356, 0
  %v1024 = vsel %vm998, %v357, 0
  %v1027 = vsel %vm998, %v358, 0
  %v1030 = vsel %vm998, %v359, 0
  %v1033 = vsel %vm998, %v360, 0
  %v1036 = vsel %vm998, %v361, 0
  %v1039 = vsel %vm998, %v362, 0
  %v1042 = vsel %vm998, %v363, 0
  %v1045 = vsel %vm998, %v364, 0
  %v1048 = vsel %vm998, %v365, 0
  %v1051 = vsel %vm998, %v366, 0
  %v1054 = vsel %vm998, %v367, 0
  %v1057 = vsel %vm998, %v368, 0
  %v1060 = vsel %vm998, %v369, 0
  %v1063 = vsel %vm998, %v370, 0
  %v1066 = vsel %vm998, %v371, 0
  %v1069 = vsel %vm998, %v372, 0
  %v1072 = vsel %vm998, %v373, 0
  %v1075 = vsel %vm998, %v374, 0
  %v1078 = vsel %vm998, %v375, 0
  %v1081 = vsel %vm998, %v376, 0
  %v1084 = vsel %vm998, %v377, 0
  %v1087 = vsel %vm998, %v378, 0
  %v1090 = vsel %vm998, %v379, 0
  %v1093 = vsel %vm998, %v380, 0
  %v1096 = vsel %vm998, %v381, 0
  %v1099 = vsel %vm998, %v382, 0
  %v1102 = vsel %vm998, %v383, 0
  %v1105 = vsel %vm998, %v384, 0
  %v1108 = vsel %vm998, %v385, 0
  %v1111 = vsel %vm998, %v386, 0
  %v1114 = vsel %vm998, %v387, 0
  %v1117 = vsel %vm998, %v388, 0
  %v1120 = vsel %vm998, %v389, 0
  %v1123 = vsel %vm998, %v390, 0
  %v1126 = vsel %vm998, %v391, 0
  %v1129 = vsel %vm998, %v392, 0
  %v1132 = vsel %vm998, %v393, 0
  %v1135 = vsel %vm998, %v394, 0
  %v1138 = vsel %vm998, %v395, 0
  %v1141 = vsel %vm998, %v396, 0
  %v1144 = vsel %vm998, %v397, 0
  %v1147 = vsel %vm998, %v398, 0
  %v1150 = vsel %vm998, %v399, 0
  %v1153 = vsel %vm998, %v400, 0
  %v1156 = vsel %vm998, %v401, 0
  %v1159 = vsel %vm998, %v402, 0
  %v1162 = vsel %vm998, %v403, 0
  %v1165 = vsel %vm998, %v404, 0
  %v1168 = vsel %vm998, %v405, 0
  %v1171 = vsel %vm998, %v406, 0
  %v1174 = vsel %vm998, %v407, 0
  %v1177 = vsel %vm998, %v408, 0
  %v1180 = vsel %vm998, %v409, 0
  %v1183 = vsel %vm998, %v410, 0
  %v1186 = vsel %vm998, %v411, 0
  %v1189 = vsel %vm998, %v412, 0
  %v1192 = vsel %vm998, %v929, 0
  %v1195 = vsel %vm998, %v930, 0
  %v1198 = vsel %vm998, %v931, 0
  %v1201 = vsel %vm998, %v932, 0
  %v1204 = vsel %vm998, %v933, 0
  %v1207 = vsel %vm998, %v934, 0
  %v1210 = vsel %vm998, %v935, 0
  %v1213 = vsel %vm998, %v936, 0
  %v1216 = vsel %vm998, %v937, 0
  %v1219 = vsel %vm998, %v938, 0
  %v1222 = vsel %vm998, %v939, 0
  %v1225 = vsel %vm998, %v940, 0
  %v1228 = vsel %vm998, %v941, 0
  %v1231 = vsel %vm998, %v942, 0
  %v1234 = vsel %vm998, %v943, 0
  %v1237 = vsel %vm998, %v944, 0
  %v1240 = vsel %vm998, %v945, 0
  %v1243 = vsel %vm998, %v946, 0
  %v1246 = vsel %vm998, %v947, 0
  %v1249 = vsel %vm998, %v948, 0
  %v1252 = vsel %vm998, %v949, 0
  %v1255 = vsel %vm998, %v950, 0
  %v1258 = vsel %vm998, %v951, 0
  %v1261 = vsel %vm998, %v952, 0
  %v1264 = vsel %vm998, %v953, 0
  %v1267 = vsel %vm998, %v954, 0
  %v1270 = vsel %vm998, %v955, 0
  %v1273 = vsel %vm998, %v956, 0
  %v1276 = vsel %vm998, %v957, 0
  %v1279 = vsel %vm998, %v958, 0
  %v1282 = vsel %vm998, %v959, 0
  %v1285 = vsel %vm998, %v960, 0
  %v1288 = vsel %vm998, %v961, 0
  %v1291 = vsel %vm998, %v962, 0
  %v1294 = vsel %vm998, %v963, 0
  %v1297 = vsel %vm998, %v964, 0
  %v1300 = vsel %vm998, %v965, 0
  %v1303 = vsel %vm998, %v966, 0
  %v1306 = vsel %vm998, %v967, 0
  %v1309 = vsel %vm998, %v968, 0
  %v1312 = vsel %vm998, %v969, 0
  %v1315 = vsel %vm998, %v970, 0
  %v1318 = vsel %vm998, %v971, 0
  %v1321 = vsel %vm998, %v972, 0
  %v1324 = vsel %vm998, %v973, 0
  %v1327 = vsel %vm998, %v974, 0
  %v1330 = vsel %vm998, %v975, 0
  %v1333 = vsel %vm998, %v976, 0
  %v1336 = vsel %vm998, %v977, 0
  %v1339 = vsel %vm998, %v978, 0
  %v1342 = vsel %vm998, %v979, 0
  %v1345 = vsel %vm998, %v980, 0
  %v1348 = vsel %vm998, %v981, 0
  %v1351 = vsel %vm998, %v982, 0
  %v1354 = vsel %vm998, %v983, 0
  %v1357 = vsel %vm998, %v984, 0
  %v1360 = vsel %vm998, %v985, 0
  %v1363 = vsel %vm998, %v986, 0
  %v1366 = vsel %vm998, %v987, 0
  %v1369 = vsel %vm998, %v988, 0
  %v1372 = vsel %vm998, %v989, 0
  %v1375 = vsel %vm998, %v990, 0
  %v1378 = vsel %vm998, %v991, 0
  %v1381 = vsel %vm998, %v992, 0
  %1383 = vmatpush.msra.mxu0 0.0
  %1384 = vmatpush.msra.mxu0 0.0
  %1385 = vmatpush.msra.mxu0 0.0
  %1386 = vmatpush.msra.mxu0 0.0
  %1387 = vmatpush.msra.mxu0 0.0
  %1388 = vmatpush.msra.mxu0 0.0
  %1389 = vmatpush.msra.mxu0 0.0
  %1390 = vmatpush.msra.mxu0 0.0
  %1391 = vmatpush.msra.mxu0 0.0
  %1392 = vmatpush.msra.mxu0 0.0
  %1393 = vmatpush.msra.mxu0 0.0
  %1394 = vmatpush.msra.mxu0 0.0
  %1395 = vmatpush.msra.mxu0 0.0
  %1396 = vmatpush.msra.mxu0 0.0
  %1397 = vmatpush.msra.mxu0 0.0
  %1398 = vmatpush.msra.mxu0 %v993
  %1399 = vmatmul.f32.gmra.mxu0 %v1000
  %v1400 = vpop.f32.mrf.mxu0
  %v1401 = vadd.f32 %v996, %v1400
  %1402 = vmatmul.f32.gmra.mxu0 %v1003
  %v1403 = vpop.f32.mrf.mxu0
  %v1404 = vadd.f32 %v996, %v1403
  %1405 = vmatmul.f32.gmra.mxu0 %v1006
  %v1406 = vpop.f32.mrf.mxu0
  %v1407 = vadd.f32 %v996, %v1406
  %1408 = vmatmul.f32.gmra.mxu0 %v1009
  %v1409 = vpop.f32.mrf.mxu0
  %v1410 = vadd.f32 %v996, %v1409
  %1411 = vmatmul.f32.gmra.mxu0 %v1012
  %v1412 = vpop.f32.mrf.mxu0
  %v1413 = vadd.f32 %v996, %v1412
  %1414 = vmatmul.f32.gmra.mxu0 %v1015
  %v1415 = vpop.f32.mrf.mxu0
  %v1416 = vadd.f32 %v996, %v1415
  %1417 = vmatmul.f32.gmra.mxu0 %v1018
  %v1418 = vpop.f32.mrf.mxu0
  %v1419 = vadd.f32 %v996, %v1418
  %1420 = vmatmul.f32.gmra.mxu0 %v1021
  %v1421 = vpop.f32.mrf.mxu0
  %v1422 = vadd.f32 %v996, %v1421
  %1423 = vmatmul.f32.gmra.mxu0 %v1024
  %v1424 = vpop.f32.mrf.mxu0
  %v1425 = vadd.f32 %v996, %v1424
  %1426 = vmatmul.f32.gmra.mxu0 %v1027
  %v1427 = vpop.f32.mrf.mxu0
  %v1428 = vadd.f32 %v996, %v1427
  %1429 = vmatmul.f32.gmra.mxu0 %v1030
  %v1430 = vpop.f32.mrf.mxu0
  %v1431 = vadd.f32 %v996, %v1430
  %1432 = vmatmul.f32.gmra.mxu0 %v1033
  %v1433 = vpop.f32.mrf.mxu0
  %v1434 = vadd.f32 %v996, %v1433
  %1435 = vmatmul.f32.gmra.mxu0 %v1036
  %v1436 = vpop.f32.mrf.mxu0
  %v1437 = vadd.f32 %v996, %v1436
  %1438 = vmatmul.f32.gmra.mxu0 %v1039
  %v1439 = vpop.f32.mrf.mxu0
  %v1440 = vadd.f32 %v996, %v1439
  %1441 = vmatmul.f32.gmra.mxu0 %v1042
  %v1442 = vpop.f32.mrf.mxu0
  %v1443 = vadd.f32 %v996, %v1442
  %1444 = vmatmul.f32.gmra.mxu0 %v1045
  %v1445 = vpop.f32.mrf.mxu0
  %v1446 = vadd.f32 %v996, %v1445
  %1447 = vmatmul.f32.gmra.mxu0 %v1048
  %v1448 = vpop.f32.mrf.mxu0
  %v1449 = vadd.f32 %v996, %v1448
  %1450 = vmatmul.f32.gmra.mxu0 %v1051
  %v1451 = vpop.f32.mrf.mxu0
  %v1452 = vadd.f32 %v996, %v1451
  %1453 = vmatmul.f32.gmra.mxu0 %v1054
  %v1454 = vpop.f32.mrf.mxu0
  %v1455 = vadd.f32 %v996, %v1454
  %1456 = vmatmul.f32.gmra.mxu0 %v1057
  %v1457 = vpop.f32.mrf.mxu0
  %v1458 = vadd.f32 %v996, %v1457
  %1459 = vmatmul.f32.gmra.mxu0 %v1060
  %v1460 = vpop.f32.mrf.mxu0
  %v1461 = vadd.f32 %v996, %v1460
  %1462 = vmatmul.f32.gmra.mxu0 %v1063
  %v1463 = vpop.f32.mrf.mxu0
  %v1464 = vadd.f32 %v996, %v1463
  %1465 = vmatmul.f32.gmra.mxu0 %v1066
  %v1466 = vpop.f32.mrf.mxu0
  %v1467 = vadd.f32 %v996, %v1466
  %1468 = vmatmul.f32.gmra.mxu0 %v1069
  %v1469 = vpop.f32.mrf.mxu0
  %v1470 = vadd.f32 %v996, %v1469
  %1471 = vmatmul.f32.gmra.mxu0 %v1072
  %v1472 = vpop.f32.mrf.mxu0
  %v1473 = vadd.f32 %v996, %v1472
  %1474 = vmatmul.f32.gmra.mxu0 %v1075
  %v1475 = vpop.f32.mrf.mxu0
  %v1476 = vadd.f32 %v996, %v1475
  %1477 = vmatmul.f32.gmra.mxu0 %v1078
  %v1478 = vpop.f32.mrf.mxu0
  %v1479 = vadd.f32 %v996, %v1478
  %1480 = vmatmul.f32.gmra.mxu0 %v1081
  %v1481 = vpop.f32.mrf.mxu0
  %v1482 = vadd.f32 %v996, %v1481
  %1483 = vmatmul.f32.gmra.mxu0 %v1084
  %v1484 = vpop.f32.mrf.mxu0
  %v1485 = vadd.f32 %v996, %v1484
  %1486 = vmatmul.f32.gmra.mxu0 %v1087
  %v1487 = vpop.f32.mrf.mxu0
  %v1488 = vadd.f32 %v996, %v1487
  %1489 = vmatmul.f32.gmra.mxu0 %v1090
  %v1490 = vpop.f32.mrf.mxu0
  %v1491 = vadd.f32 %v996, %v1490
  %1492 = vmatmul.f32.gmra.mxu0 %v1093
  %v1493 = vpop.f32.mrf.mxu0
  %v1494 = vadd.f32 %v996, %v1493
  %1495 = vmatmul.f32.gmra.mxu0 %v1096
  %v1496 = vpop.f32.mrf.mxu0
  %v1497 = vadd.f32 %v996, %v1496
  %1498 = vmatmul.f32.gmra.mxu0 %v1099
  %v1499 = vpop.f32.mrf.mxu0
  %v1500 = vadd.f32 %v996, %v1499
  %1501 = vmatmul.f32.gmra.mxu0 %v1102
  %v1502 = vpop.f32.mrf.mxu0
  %v1503 = vadd.f32 %v996, %v1502
  %1504 = vmatmul.f32.gmra.mxu0 %v1105
  %v1505 = vpop.f32.mrf.mxu0
  %v1506 = vadd.f32 %v996, %v1505
  %1507 = vmatmul.f32.gmra.mxu0 %v1108
  %v1508 = vpop.f32.mrf.mxu0
  %v1509 = vadd.f32 %v996, %v1508
  %1510 = vmatmul.f32.gmra.mxu0 %v1111
  %v1511 = vpop.f32.mrf.mxu0
  %v1512 = vadd.f32 %v996, %v1511
  %1513 = vmatmul.f32.gmra.mxu0 %v1114
  %v1514 = vpop.f32.mrf.mxu0
  %v1515 = vadd.f32 %v996, %v1514
  %1516 = vmatmul.f32.gmra.mxu0 %v1117
  %v1517 = vpop.f32.mrf.mxu0
  %v1518 = vadd.f32 %v996, %v1517
  %1519 = vmatmul.f32.gmra.mxu0 %v1120
  %v1520 = vpop.f32.mrf.mxu0
  %v1521 = vadd.f32 %v996, %v1520
  %1522 = vmatmul.f32.gmra.mxu0 %v1123
  %v1523 = vpop.f32.mrf.mxu0
  %v1524 = vadd.f32 %v996, %v1523
  %1525 = vmatmul.f32.gmra.mxu0 %v1126
  %v1526 = vpop.f32.mrf.mxu0
  %v1527 = vadd.f32 %v996, %v1526
  %1528 = vmatmul.f32.gmra.mxu0 %v1129
  %v1529 = vpop.f32.mrf.mxu0
  %v1530 = vadd.f32 %v996, %v1529
  %1531 = vmatmul.f32.gmra.mxu0 %v1132
  %v1532 = vpop.f32.mrf.mxu0
  %v1533 = vadd.f32 %v996, %v1532
  %1534 = vmatmul.f32.gmra.mxu0 %v1135
  %v1535 = vpop.f32.mrf.mxu0
  %v1536 = vadd.f32 %v996, %v1535
  %1537 = vmatmul.f32.gmra.mxu0 %v1138
  %v1538 = vpop.f32.mrf.mxu0
  %v1539 = vadd.f32 %v996, %v1538
  %1540 = vmatmul.f32.gmra.mxu0 %v1141
  %v1541 = vpop.f32.mrf.mxu0
  %v1542 = vadd.f32 %v996, %v1541
  %1543 = vmatmul.f32.gmra.mxu0 %v1144
  %v1544 = vpop.f32.mrf.mxu0
  %v1545 = vadd.f32 %v996, %v1544
  %1546 = vmatmul.f32.gmra.mxu0 %v1147
  %v1547 = vpop.f32.mrf.mxu0
  %v1548 = vadd.f32 %v996, %v1547
  %1549 = vmatmul.f32.gmra.mxu0 %v1150
  %v1550 = vpop.f32.mrf.mxu0
  %v1551 = vadd.f32 %v996, %v1550
  %1552 = vmatmul.f32.gmra.mxu0 %v1153
  %v1553 = vpop.f32.mrf.mxu0
  %v1554 = vadd.f32 %v996, %v1553
  %1555 = vmatmul.f32.gmra.mxu0 %v1156
  %v1556 = vpop.f32.mrf.mxu0
  %v1557 = vadd.f32 %v996, %v1556
  %1558 = vmatmul.f32.gmra.mxu0 %v1159
  %v1559 = vpop.f32.mrf.mxu0
  %v1560 = vadd.f32 %v996, %v1559
  %1561 = vmatmul.f32.gmra.mxu0 %v1162
  %v1562 = vpop.f32.mrf.mxu0
  %v1563 = vadd.f32 %v996, %v1562
  %1564 = vmatmul.f32.gmra.mxu0 %v1165
  %v1565 = vpop.f32.mrf.mxu0
  %v1566 = vadd.f32 %v996, %v1565
  %1567 = vmatmul.f32.gmra.mxu0 %v1168
  %v1568 = vpop.f32.mrf.mxu0
  %v1569 = vadd.f32 %v996, %v1568
  %1570 = vmatmul.f32.gmra.mxu0 %v1171
  %v1571 = vpop.f32.mrf.mxu0
  %v1572 = vadd.f32 %v996, %v1571
  %1573 = vmatmul.f32.gmra.mxu0 %v1174
  %v1574 = vpop.f32.mrf.mxu0
  %v1575 = vadd.f32 %v996, %v1574
  %1576 = vmatmul.f32.gmra.mxu0 %v1177
  %v1577 = vpop.f32.mrf.mxu0
  %v1578 = vadd.f32 %v996, %v1577
  %1579 = vmatmul.f32.gmra.mxu0 %v1180
  %v1580 = vpop.f32.mrf.mxu0
  %v1581 = vadd.f32 %v996, %v1580
  %1582 = vmatmul.f32.gmra.mxu0 %v1183
  %v1583 = vpop.f32.mrf.mxu0
  %v1584 = vadd.f32 %v996, %v1583
  %1585 = vmatmul.f32.gmra.mxu0 %v1186
  %v1586 = vpop.f32.mrf.mxu0
  %v1587 = vadd.f32 %v996, %v1586
  %1588 = vmatmul.f32.gmra.mxu0 %v1189
  %v1589 = vpop.f32.mrf.mxu0
  %v1590 = vadd.f32 %v996, %v1589
  %1591 = vmatmul.f32.gmra.mxu0 %v1192
  %v1592 = vpop.f32.mrf.mxu0
  %v1593 = vadd.f32 %v996, %v1592
  %1594 = vmatmul.f32.gmra.mxu0 %v1195
  %v1595 = vpop.f32.mrf.mxu0
  %v1596 = vadd.f32 %v996, %v1595
  %1597 = vmatmul.f32.gmra.mxu0 %v1198
  %v1598 = vpop.f32.mrf.mxu0
  %v1599 = vadd.f32 %v996, %v1598
  %1600 = vmatmul.f32.gmra.mxu0 %v1201
  %v1601 = vpop.f32.mrf.mxu0
  %v1602 = vadd.f32 %v996, %v1601
  %1603 = vmatmul.f32.gmra.mxu0 %v1204
  %v1604 = vpop.f32.mrf.mxu0
  %v1605 = vadd.f32 %v996, %v1604
  %1606 = vmatmul.f32.gmra.mxu0 %v1207
  %v1607 = vpop.f32.mrf.mxu0
  %v1608 = vadd.f32 %v996, %v1607
  %1609 = vmatmul.f32.gmra.mxu0 %v1210
  %v1610 = vpop.f32.mrf.mxu0
  %v1611 = vadd.f32 %v996, %v1610
  %1612 = vmatmul.f32.gmra.mxu0 %v1213
  %v1613 = vpop.f32.mrf.mxu0
  %v1614 = vadd.f32 %v996, %v1613
  %1615 = vmatmul.f32.gmra.mxu0 %v1216
  %v1616 = vpop.f32.mrf.mxu0
  %v1617 = vadd.f32 %v996, %v1616
  %1618 = vmatmul.f32.gmra.mxu0 %v1219
  %v1619 = vpop.f32.mrf.mxu0
  %v1620 = vadd.f32 %v996, %v1619
  %1621 = vmatmul.f32.gmra.mxu0 %v1222
  %v1622 = vpop.f32.mrf.mxu0
  %v1623 = vadd.f32 %v996, %v1622
  %1624 = vmatmul.f32.gmra.mxu0 %v1225
  %v1625 = vpop.f32.mrf.mxu0
  %v1626 = vadd.f32 %v996, %v1625
  %1627 = vmatmul.f32.gmra.mxu0 %v1228
  %v1628 = vpop.f32.mrf.mxu0
  %v1629 = vadd.f32 %v996, %v1628
  %1630 = vmatmul.f32.gmra.mxu0 %v1231
  %v1631 = vpop.f32.mrf.mxu0
  %v1632 = vadd.f32 %v996, %v1631
  %1633 = vmatmul.f32.gmra.mxu0 %v1234
  %v1634 = vpop.f32.mrf.mxu0
  %v1635 = vadd.f32 %v996, %v1634
  %1636 = vmatmul.f32.gmra.mxu0 %v1237
  %v1637 = vpop.f32.mrf.mxu0
  %v1638 = vadd.f32 %v996, %v1637
  %1639 = vmatmul.f32.gmra.mxu0 %v1240
  %v1640 = vpop.f32.mrf.mxu0
  %v1641 = vadd.f32 %v996, %v1640
  %1642 = vmatmul.f32.gmra.mxu0 %v1243
  %v1643 = vpop.f32.mrf.mxu0
  %v1644 = vadd.f32 %v996, %v1643
  %1645 = vmatmul.f32.gmra.mxu0 %v1246
  %v1646 = vpop.f32.mrf.mxu0
  %v1647 = vadd.f32 %v996, %v1646
  %1648 = vmatmul.f32.gmra.mxu0 %v1249
  %v1649 = vpop.f32.mrf.mxu0
  %v1650 = vadd.f32 %v996, %v1649
  %1651 = vmatmul.f32.gmra.mxu0 %v1252
  %v1652 = vpop.f32.mrf.mxu0
  %v1653 = vadd.f32 %v996, %v1652
  %1654 = vmatmul.f32.gmra.mxu0 %v1255
  %v1655 = vpop.f32.mrf.mxu0
  %v1656 = vadd.f32 %v996, %v1655
  %1657 = vmatmul.f32.gmra.mxu0 %v1258
  %v1658 = vpop.f32.mrf.mxu0
  %v1659 = vadd.f32 %v996, %v1658
  %1660 = vmatmul.f32.gmra.mxu0 %v1261
  %v1661 = vpop.f32.mrf.mxu0
  %v1662 = vadd.f32 %v996, %v1661
  %1663 = vmatmul.f32.gmra.mxu0 %v1264
  %v1664 = vpop.f32.mrf.mxu0
  %v1665 = vadd.f32 %v996, %v1664
  %1666 = vmatmul.f32.gmra.mxu0 %v1267
  %v1667 = vpop.f32.mrf.mxu0
  %v1668 = vadd.f32 %v996, %v1667
  %1669 = vmatmul.f32.gmra.mxu0 %v1270
  %v1670 = vpop.f32.mrf.mxu0
  %v1671 = vadd.f32 %v996, %v1670
  %1672 = vmatmul.f32.gmra.mxu0 %v1273
  %v1673 = vpop.f32.mrf.mxu0
  %v1674 = vadd.f32 %v996, %v1673
  %1675 = vmatmul.f32.gmra.mxu0 %v1276
  %v1676 = vpop.f32.mrf.mxu0
  %v1677 = vadd.f32 %v996, %v1676
  %1678 = vmatmul.f32.gmra.mxu0 %v1279
  %v1679 = vpop.f32.mrf.mxu0
  %v1680 = vadd.f32 %v996, %v1679
  %1681 = vmatmul.f32.gmra.mxu0 %v1282
  %v1682 = vpop.f32.mrf.mxu0
  %v1683 = vadd.f32 %v996, %v1682
  %1684 = vmatmul.f32.gmra.mxu0 %v1285
  %v1685 = vpop.f32.mrf.mxu0
  %v1686 = vadd.f32 %v996, %v1685
  %1687 = vmatmul.f32.gmra.mxu0 %v1288
  %v1688 = vpop.f32.mrf.mxu0
  %v1689 = vadd.f32 %v996, %v1688
  %1690 = vmatmul.f32.gmra.mxu0 %v1291
  %v1691 = vpop.f32.mrf.mxu0
  %v1692 = vadd.f32 %v996, %v1691
  %1693 = vmatmul.f32.gmra.mxu0 %v1294
  %v1694 = vpop.f32.mrf.mxu0
  %v1695 = vadd.f32 %v996, %v1694
  %1696 = vmatmul.f32.gmra.mxu0 %v1297
  %v1697 = vpop.f32.mrf.mxu0
  %v1698 = vadd.f32 %v996, %v1697
  %1699 = vmatmul.f32.gmra.mxu0 %v1300
  %v1700 = vpop.f32.mrf.mxu0
  %v1701 = vadd.f32 %v996, %v1700
  %1702 = vmatmul.f32.gmra.mxu0 %v1303
  %v1703 = vpop.f32.mrf.mxu0
  %v1704 = vadd.f32 %v996, %v1703
  %1705 = vmatmul.f32.gmra.mxu0 %v1306
  %v1706 = vpop.f32.mrf.mxu0
  %v1707 = vadd.f32 %v996, %v1706
  %1708 = vmatmul.f32.gmra.mxu0 %v1309
  %v1709 = vpop.f32.mrf.mxu0
  %v1710 = vadd.f32 %v996, %v1709
  %1711 = vmatmul.f32.gmra.mxu0 %v1312
  %v1712 = vpop.f32.mrf.mxu0
  %v1713 = vadd.f32 %v996, %v1712
  %1714 = vmatmul.f32.gmra.mxu0 %v1315
  %v1715 = vpop.f32.mrf.mxu0
  %v1716 = vadd.f32 %v996, %v1715
  %1717 = vmatmul.f32.gmra.mxu0 %v1318
  %v1718 = vpop.f32.mrf.mxu0
  %v1719 = vadd.f32 %v996, %v1718
  %1720 = vmatmul.f32.gmra.mxu0 %v1321
  %v1721 = vpop.f32.mrf.mxu0
  %v1722 = vadd.f32 %v996, %v1721
  %1723 = vmatmul.f32.gmra.mxu0 %v1324
  %v1724 = vpop.f32.mrf.mxu0
  %v1725 = vadd.f32 %v996, %v1724
  %1726 = vmatmul.f32.gmra.mxu0 %v1327
  %v1727 = vpop.f32.mrf.mxu0
  %v1728 = vadd.f32 %v996, %v1727
  %1729 = vmatmul.f32.gmra.mxu0 %v1330
  %v1730 = vpop.f32.mrf.mxu0
  %v1731 = vadd.f32 %v996, %v1730
  %1732 = vmatmul.f32.gmra.mxu0 %v1333
  %v1733 = vpop.f32.mrf.mxu0
  %v1734 = vadd.f32 %v996, %v1733
  %1735 = vmatmul.f32.gmra.mxu0 %v1336
  %v1736 = vpop.f32.mrf.mxu0
  %v1737 = vadd.f32 %v996, %v1736
  %1738 = vmatmul.f32.gmra.mxu0 %v1339
  %v1739 = vpop.f32.mrf.mxu0
  %v1740 = vadd.f32 %v996, %v1739
  %1741 = vmatmul.f32.gmra.mxu0 %v1342
  %v1742 = vpop.f32.mrf.mxu0
  %v1743 = vadd.f32 %v996, %v1742
  %1744 = vmatmul.f32.gmra.mxu0 %v1345
  %v1745 = vpop.f32.mrf.mxu0
  %v1746 = vadd.f32 %v996, %v1745
  %1747 = vmatmul.f32.gmra.mxu0 %v1348
  %v1748 = vpop.f32.mrf.mxu0
  %v1749 = vadd.f32 %v996, %v1748
  %1750 = vmatmul.f32.gmra.mxu0 %v1351
  %v1751 = vpop.f32.mrf.mxu0
  %v1752 = vadd.f32 %v996, %v1751
  %1753 = vmatmul.f32.gmra.mxu0 %v1354
  %v1754 = vpop.f32.mrf.mxu0
  %v1755 = vadd.f32 %v996, %v1754
  %1756 = vmatmul.f32.gmra.mxu0 %v1357
  %v1757 = vpop.f32.mrf.mxu0
  %v1758 = vadd.f32 %v996, %v1757
  %1759 = vmatmul.f32.gmra.mxu0 %v1360
  %v1760 = vpop.f32.mrf.mxu0
  %v1761 = vadd.f32 %v996, %v1760
  %1762 = vmatmul.f32.gmra.mxu0 %v1363
  %v1763 = vpop.f32.mrf.mxu0
  %v1764 = vadd.f32 %v996, %v1763
  %1765 = vmatmul.f32.gmra.mxu0 %v1366
  %v1766 = vpop.f32.mrf.mxu0
  %v1767 = vadd.f32 %v996, %v1766
  %1768 = vmatmul.f32.gmra.mxu0 %v1369
  %v1769 = vpop.f32.mrf.mxu0
  %v1770 = vadd.f32 %v996, %v1769
  %1771 = vmatmul.f32.gmra.mxu0 %v1372
  %v1772 = vpop.f32.mrf.mxu0
  %v1773 = vadd.f32 %v996, %v1772
  %1774 = vmatmul.f32.gmra.mxu0 %v1375
  %v1775 = vpop.f32.mrf.mxu0
  %v1776 = vadd.f32 %v996, %v1775
  %1777 = vmatmul.f32.gmra.mxu0 %v1378
  %v1778 = vpop.f32.mrf.mxu0
  %v1779 = vadd.f32 %v996, %v1778
  %1780 = vmatmul.f32.gmra.mxu0 %v1381
  %v1781 = vpop.f32.mrf.mxu0
  %v1782 = vadd.f32 %v996, %v1781
  %1783 = vdwg.mxu0
  %1784 = vst.msk [vmem:[%s6] sm:$0xff] %vm998, %v1401
  %1785 = vst.msk [vmem:[%s6 + $0x8] sm:$0xff] %vm998, %v1404
  %1786 = vst.msk [vmem:[%s6 + $0x10] sm:$0xff] %vm998, %v1407
  %1787 = vst.msk [vmem:[%s6 + $0x18] sm:$0xff] %vm998, %v1410
  %1788 = vst.msk [vmem:[%s6 + $0x20] sm:$0xff] %vm998, %v1413
  %1789 = vst.msk [vmem:[%s6 + $0x28] sm:$0xff] %vm998, %v1416
  %1790 = vst.msk [vmem:[%s6 + $0x30] sm:$0xff] %vm998, %v1419
  %1791 = vst.msk [vmem:[%s6 + $0x38] sm:$0xff] %vm998, %v1422
  %1792 = vst.msk [vmem:[%s6 + $0x40] sm:$0xff] %vm998, %v1425
  %1793 = vst.msk [vmem:[%s6 + $0x48] sm:$0xff] %vm998, %v1428
  %1794 = vst.msk [vmem:[%s6 + $0x50] sm:$0xff] %vm998, %v1431
  %1795 = vst.msk [vmem:[%s6 + $0x58] sm:$0xff] %vm998, %v1434
  %1796 = vst.msk [vmem:[%s6 + $0x60] sm:$0xff] %vm998, %v1437
  %1797 = vst.msk [vmem:[%s6 + $0x68] sm:$0xff] %vm998, %v1440
  %1798 = vst.msk [vmem:[%s6 + $0x70] sm:$0xff] %vm998, %v1443
  %1799 = vst.msk [vmem:[%s6 + $0x78] sm:$0xff] %vm998, %v1446
  %1800 = vst.msk [vmem:[%s6 + $0x80] sm:$0xff] %vm998, %v1449
  %1801 = vst.msk [vmem:[%s6 + $0x88] sm:$0xff] %vm998, %v1452
  %1802 = vst.msk [vmem:[%s6 + $0x90] sm:$0xff] %vm998, %v1455
  %1803 = vst.msk [vmem:[%s6 + $0x98] sm:$0xff] %vm998, %v1458
  %1804 = vst.msk [vmem:[%s6 + $0xa0] sm:$0xff] %vm998, %v1461
  %1805 = vst.msk [vmem:[%s6 + $0xa8] sm:$0xff] %vm998, %v1464
  %1806 = vst.msk [vmem:[%s6 + $0xb0] sm:$0xff] %vm998, %v1467
  %1807 = vst.msk [vmem:[%s6 + $0xb8] sm:$0xff] %vm998, %v1470
  %1808 = vst.msk [vmem:[%s6 + $0xc0] sm:$0xff] %vm998, %v1473
  %1809 = vst.msk [vmem:[%s6 + $0xc8] sm:$0xff] %vm998, %v1476
  %1810 = vst.msk [vmem:[%s6 + $0xd0] sm:$0xff] %vm998, %v1479
  %1811 = vst.msk [vmem:[%s6 + $0xd8] sm:$0xff] %vm998, %v1482
  %1812 = vst.msk [vmem:[%s6 + $0xe0] sm:$0xff] %vm998, %v1485
  %1813 = vst.msk [vmem:[%s6 + $0xe8] sm:$0xff] %vm998, %v1488
  %1814 = vst.msk [vmem:[%s6 + $0xf0] sm:$0xff] %vm998, %v1491
  %1815 = vst.msk [vmem:[%s6 + $0xf8] sm:$0xff] %vm998, %v1494
  %1816 = vst.msk [vmem:[%s6 + $0x100] sm:$0xff] %vm998, %v1497
  %1817 = vst.msk [vmem:[%s6 + $0x108] sm:$0xff] %vm998, %v1500
  %1818 = vst.msk [vmem:[%s6 + $0x110] sm:$0xff] %vm998, %v1503
  %1819 = vst.msk [vmem:[%s6 + $0x118] sm:$0xff] %vm998, %v1506
  %1820 = vst.msk [vmem:[%s6 + $0x120] sm:$0xff] %vm998, %v1509
  %1821 = vst.msk [vmem:[%s6 + $0x128] sm:$0xff] %vm998, %v1512
  %1822 = vst.msk [vmem:[%s6 + $0x130] sm:$0xff] %vm998, %v1515
  %1823 = vst.msk [vmem:[%s6 + $0x138] sm:$0xff] %vm998, %v1518
  %1824 = vst.msk [vmem:[%s6 + $0x140] sm:$0xff] %vm998, %v1521
  %1825 = vst.msk [vmem:[%s6 + $0x148] sm:$0xff] %vm998, %v1524
  %1826 = vst.msk [vmem:[%s6 + $0x150] sm:$0xff] %vm998, %v1527
  %1827 = vst.msk [vmem:[%s6 + $0x158] sm:$0xff] %vm998, %v1530
  %1828 = vst.msk [vmem:[%s6 + $0x160] sm:$0xff] %vm998, %v1533
  %1829 = vst.msk [vmem:[%s6 + $0x168] sm:$0xff] %vm998, %v1536
  %1830 = vst.msk [vmem:[%s6 + $0x170] sm:$0xff] %vm998, %v1539
  %1831 = vst.msk [vmem:[%s6 + $0x178] sm:$0xff] %vm998, %v1542
  %1832 = vst.msk [vmem:[%s6 + $0x180] sm:$0xff] %vm998, %v1545
  %1833 = vst.msk [vmem:[%s6 + $0x188] sm:$0xff] %vm998, %v1548
  %1834 = vst.msk [vmem:[%s6 + $0x190] sm:$0xff] %vm998, %v1551
  %1835 = vst.msk [vmem:[%s6 + $0x198] sm:$0xff] %vm998, %v1554
  %1836 = vst.msk [vmem:[%s6 + $0x1a0] sm:$0xff] %vm998, %v1557
  %1837 = vst.msk [vmem:[%s6 + $0x1a8] sm:$0xff] %vm998, %v1560
  %1838 = vst.msk [vmem:[%s6 + $0x1b0] sm:$0xff] %vm998, %v1563
  %1839 = vst.msk [vmem:[%s6 + $0x1b8] sm:$0xff] %vm998, %v1566
  %1840 = vst.msk [vmem:[%s6 + $0x1c0] sm:$0xff] %vm998, %v1569
  %1841 = vst.msk [vmem:[%s6 + $0x1c8] sm:$0xff] %vm998, %v1572
  %1842 = vst.msk [vmem:[%s6 + $0x1d0] sm:$0xff] %vm998, %v1575
  %1843 = vst.msk [vmem:[%s6 + $0x1d8] sm:$0xff] %vm998, %v1578
  %1844 = vst.msk [vmem:[%s6 + $0x1e0] sm:$0xff] %vm998, %v1581
  %1845 = vst.msk [vmem:[%s6 + $0x1e8] sm:$0xff] %vm998, %v1584
  %1846 = vst.msk [vmem:[%s6 + $0x1f0] sm:$0xff] %vm998, %v1587
  %1847 = vst.msk [vmem:[%s6 + $0x1f8] sm:$0xff] %vm998, %v1590
  %1848 = vst.msk [vmem:[%s7] sm:$0xff] %vm998, %v1593
  %1849 = vst.msk [vmem:[%s7 + $0x8] sm:$0xff] %vm998, %v1596
  %1850 = vst.msk [vmem:[%s7 + $0x10] sm:$0xff] %vm998, %v1599
  %1851 = vst.msk [vmem:[%s7 + $0x18] sm:$0xff] %vm998, %v1602
  %1852 = vst.msk [vmem:[%s7 + $0x20] sm:$0xff] %vm998, %v1605
  %1853 = vst.msk [vmem:[%s7 + $0x28] sm:$0xff] %vm998, %v1608
  %1854 = vst.msk [vmem:[%s7 + $0x30] sm:$0xff] %vm998, %v1611
  %1855 = vst.msk [vmem:[%s7 + $0x38] sm:$0xff] %vm998, %v1614
  %1856 = vst.msk [vmem:[%s7 + $0x40] sm:$0xff] %vm998, %v1617
  %1857 = vst.msk [vmem:[%s7 + $0x48] sm:$0xff] %vm998, %v1620
  %1858 = vst.msk [vmem:[%s7 + $0x50] sm:$0xff] %vm998, %v1623
  %1859 = vst.msk [vmem:[%s7 + $0x58] sm:$0xff] %vm998, %v1626
  %1860 = vst.msk [vmem:[%s7 + $0x60] sm:$0xff] %vm998, %v1629
  %1861 = vst.msk [vmem:[%s7 + $0x68] sm:$0xff] %vm998, %v1632
  %1862 = vst.msk [vmem:[%s7 + $0x70] sm:$0xff] %vm998, %v1635
  %1863 = vst.msk [vmem:[%s7 + $0x78] sm:$0xff] %vm998, %v1638
  %1864 = vst.msk [vmem:[%s7 + $0x80] sm:$0xff] %vm998, %v1641
  %1865 = vst.msk [vmem:[%s7 + $0x88] sm:$0xff] %vm998, %v1644
  %1866 = vst.msk [vmem:[%s7 + $0x90] sm:$0xff] %vm998, %v1647
  %1867 = vst.msk [vmem:[%s7 + $0x98] sm:$0xff] %vm998, %v1650
  %1868 = vst.msk [vmem:[%s7 + $0xa0] sm:$0xff] %vm998, %v1653
  %1869 = vst.msk [vmem:[%s7 + $0xa8] sm:$0xff] %vm998, %v1656
  %1870 = vst.msk [vmem:[%s7 + $0xb0] sm:$0xff] %vm998, %v1659
  %1871 = vst.msk [vmem:[%s7 + $0xb8] sm:$0xff] %vm998, %v1662
  %1872 = vst.msk [vmem:[%s7 + $0xc0] sm:$0xff] %vm998, %v1665
  %1873 = vst.msk [vmem:[%s7 + $0xc8] sm:$0xff] %vm998, %v1668
  %1874 = vst.msk [vmem:[%s7 + $0xd0] sm:$0xff] %vm998, %v1671
  %1875 = vst.msk [vmem:[%s7 + $0xd8] sm:$0xff] %vm998, %v1674
  %1876 = vst.msk [vmem:[%s7 + $0xe0] sm:$0xff] %vm998, %v1677
  %1877 = vst.msk [vmem:[%s7 + $0xe8] sm:$0xff] %vm998, %v1680
  %1878 = vst.msk [vmem:[%s7 + $0xf0] sm:$0xff] %vm998, %v1683
  %1879 = vst.msk [vmem:[%s7 + $0xf8] sm:$0xff] %vm998, %v1686
  %1880 = vst.msk [vmem:[%s7 + $0x100] sm:$0xff] %vm998, %v1689
  %1881 = vst.msk [vmem:[%s7 + $0x108] sm:$0xff] %vm998, %v1692
  %1882 = vst.msk [vmem:[%s7 + $0x110] sm:$0xff] %vm998, %v1695
  %1883 = vst.msk [vmem:[%s7 + $0x118] sm:$0xff] %vm998, %v1698
  %1884 = vst.msk [vmem:[%s7 + $0x120] sm:$0xff] %vm998, %v1701
  %1885 = vst.msk [vmem:[%s7 + $0x128] sm:$0xff] %vm998, %v1704
  %1886 = vst.msk [vmem:[%s7 + $0x130] sm:$0xff] %vm998, %v1707
  %1887 = vst.msk [vmem:[%s7 + $0x138] sm:$0xff] %vm998, %v1710
  %1888 = vst.msk [vmem:[%s7 + $0x140] sm:$0xff] %vm998, %v1713
  %1889 = vst.msk [vmem:[%s7 + $0x148] sm:$0xff] %vm998, %v1716
  %1890 = vst.msk [vmem:[%s7 + $0x150] sm:$0xff] %vm998, %v1719
  %1891 = vst.msk [vmem:[%s7 + $0x158] sm:$0xff] %vm998, %v1722
  %1892 = vst.msk [vmem:[%s7 + $0x160] sm:$0xff] %vm998, %v1725
  %1893 = vst.msk [vmem:[%s7 + $0x168] sm:$0xff] %vm998, %v1728
  %1894 = vst.msk [vmem:[%s7 + $0x170] sm:$0xff] %vm998, %v1731
  %1895 = vst.msk [vmem:[%s7 + $0x178] sm:$0xff] %vm998, %v1734
  %1896 = vst.msk [vmem:[%s7 + $0x180] sm:$0xff] %vm998, %v1737
  %1897 = vst.msk [vmem:[%s7 + $0x188] sm:$0xff] %vm998, %v1740
  %1898 = vst.msk [vmem:[%s7 + $0x190] sm:$0xff] %vm998, %v1743
  %1899 = vst.msk [vmem:[%s7 + $0x198] sm:$0xff] %vm998, %v1746
  %1900 = vst.msk [vmem:[%s7 + $0x1a0] sm:$0xff] %vm998, %v1749
  %1901 = vst.msk [vmem:[%s7 + $0x1a8] sm:$0xff] %vm998, %v1752
  %1902 = vst.msk [vmem:[%s7 + $0x1b0] sm:$0xff] %vm998, %v1755
  %1903 = vst.msk [vmem:[%s7 + $0x1b8] sm:$0xff] %vm998, %v1758
  %1904 = vst.msk [vmem:[%s7 + $0x1c0] sm:$0xff] %vm998, %v1761
  %1905 = vst.msk [vmem:[%s7 + $0x1c8] sm:$0xff] %vm998, %v1764
  %1906 = vst.msk [vmem:[%s7 + $0x1d0] sm:$0xff] %vm998, %v1767
  %1907 = vst.msk [vmem:[%s7 + $0x1d8] sm:$0xff] %vm998, %v1770
  %1908 = vst.msk [vmem:[%s7 + $0x1e0] sm:$0xff] %vm998, %v1773
  %1909 = vst.msk [vmem:[%s7 + $0x1e8] sm:$0xff] %vm998, %v1776
  %1910 = vst.msk [vmem:[%s7 + $0x1f0] sm:$0xff] %vm998, %v1779
  %1911 = vst.msk [vmem:[%s7 + $0x1f8] sm:$0xff] %vm998, %v1782
  // Predicated region
  $region26: #{_lambda_.11} parent=0 // pred_check
    _
  $region27: #{_lambda_.11} parent=0 // pred_check_branch
    %1913 = sbr.rel (0) target = $region29
  $region28: #{_lambda_.11} parent=0 // pred_region
    _
  $region29: #{_lambda_.11} parent=0 // pred_fallthru
    _
  // Predicated region
  $region30: #{_lambda_.11} parent=0 // pred_check
    _
  $region31: #{_lambda_.11} parent=0 // pred_check_branch
    %1915 = sbr.rel (0) target = $region33
  $region32: #{_lambda_.11} parent=0 // pred_region
    _
  $region33: #{_lambda_.11} parent=0 // pred_fallthru
    _
  // Predicated region
  $region34: #{_lambda_.11} parent=0 // pred_check
    _
  $region35: #{_lambda_.11} parent=0 // pred_check_branch
    %1917 = sbr.rel (0) target = $region37
  $region36: #{_lambda_.11} parent=0 // pred_region
    _
  $region37: #{_lambda_.11} parent=0 // pred_fallthru
    _
  // Predicated region
  $region38: #{_lambda_.11} parent=0 // pred_check
    _
  $region39: #{_lambda_.11} parent=0 // pred_check_branch
    %1919 = sbr.rel (0) target = $region41
  $region40: #{_lambda_.11} parent=0 // pred_region
    _
  $region41: #{_lambda_.11} parent=0 // pred_fallthru
    _

</llo_original>
